<compile_context>
chip_gen: v6e
topology: v6e:2x2x1
jax: 0.10.0
libtpu: 0.0.40
codegen_flags: <defaults>
</compile_context>

<pallas_src>
import jax
import jax.numpy as jnp
from jax.experimental import pallas as pl
from jax.experimental.pallas import tpu as pltpu


def _round_up(x, m):
    return ((x + m - 1) // m) * m


# --------------------------- fused Pallas kernel -----------------------------

def _make_fused_kernel(gather_narrow_taps):
    def kernel(xa_ref, xe_ref, wa_ref, we_ref, b3_ref, wp_ref, bp_ref, o_ref):
        # xa_ref: (1, H+2, W+2, Ca) bf16  folded interm branch (ones ch. last)
        # xe_ref: (1, H+2, W+2, Ce) bf16  2x-upsampled end branch
        # wa_ref: (9*Ca, Co) bf16         3x3 weights, taps flattened along K
        # we_ref: (9*Ce, Co) bf16
        # b3_ref: (1, Co) f32
        # wp_ref: (Co, Cop) bf16          pred weights, classes padded to 128
        # bp_ref: (1, Cop) f32
        # o_ref : (1, th, W, Cop) f32     lane-dense prediction output tile
        _, th, W, cop = o_ref.shape
        ca = xa_ref.shape[-1]
        ce = xe_ref.shape[-1]
        row0 = pl.program_id(1) * th

        # (th+2)-row halo window of the resident padded image for this tile.
        slab_a = xa_ref[0, pl.ds(row0, th + 2), :, :]
        slab_e = xe_ref[0, pl.ds(row0, th + 2), :, :]

        # TODO(synk): dx != 0 tap slices are sublane-misaligned copies; a
        # pltpu.roll along W would move that shuffle onto the idle XLU.
        def tap(slab, dy, dx):
            return slab[dy:dy + th, dx:dx + W, :]

        def branch(slab, w_ref, c):
            if gather_narrow_taps and c <= 64:
                # Narrow branch: gather all 9 shifted taps along K and issue
                # ONE MXU dot instead of 9 weight-load passes with tiny K.
                patch = jnp.concatenate(
                    [tap(slab, dy, dx) for dy in range(3) for dx in range(3)],
                    axis=-1).reshape(th * W, 9 * c)
                return jnp.dot(patch, w_ref[...],
                               preferred_element_type=jnp.float32)
            # Wide branch: one dot per tap (K = c already fills the MXU).
            acc = None
            for t, (dy, dx) in enumerate(
                    (a, b) for a in range(3) for b in range(3)):
                p = tap(slab, dy, dx).reshape(th * W, c)
                d = jnp.dot(p, w_ref[t * c:(t + 1) * c, :],
                            preferred_element_type=jnp.float32)
                acc = d if acc is None else acc + d
            return acc

        # Functional (vreg) accumulator: no VMEM read-modify-write traffic.
        # TODO(synk): on v5e, split Co into 128-wide halves here to match the
        # 4x128^2 MXU and halve accumulator vreg pressure.
        y = branch(slab_a, wa_ref, ca) + branch(slab_e, we_ref, ce) + b3_ref[...]

        # Fused prediction 1x1 conv epilogue (lane-dense 128-wide output).
        pred = jnp.dot(y.astype(wp_ref.dtype), wp_ref[...],
                       preferred_element_type=jnp.float32) + bp_ref[...]
        o_ref[0] = pred.reshape(th, W, cop).astype(o_ref.dtype)

    return kernel


def _vmem_limit_bytes():
    # v5e/v6e have 128 MiB of VMEM, v7x 64 MiB; keep ~1/4 headroom.
    cap = 64 * 1024 * 1024
    try:
        cap = int(pltpu.get_tpu_info().vmem_capacity_bytes)
    except Exception:
        pass
    return int(min(max((cap * 3) // 4, 32 * 1024 * 1024), 96 * 1024 * 1024))


def _pick_tile_h(H, n_batch, per_row_bytes, budget_bytes):
    """Largest divisor of H whose per-step working set fits the budget,
    preferring choices that keep >= 2 total grid steps (pipelining/megacore)."""
    divisors = [d for d in range(1, H + 1) if H % d == 0]
    fitting = [d for d in divisors if d * per_row_bytes <= budget_bytes] or [1]
    multi = [d for d in fitting if n_batch * (H // d) >= 2]
    return max(multi or fitting)


def fused_conv3x3_pred(xa, xe, wa_flat, we_flat, b3, wp, bp, *,
                       tile_h=None, gather_narrow_taps=True):
    """One pallas_call: 3x3 'same' conv over the virtual channel-concat of xa
    and xe (never materialized) + the fused 1x1 prediction head."""
    N, H, W, Ca = xa.shape
    Ce = xe.shape[-1]
    Co = wa_flat.shape[-1]
    Cop = wp.shape[-1]

    # Zero 'same' padding (cheap XLA glue on the small-channel raw inputs).
    xa_p = jnp.pad(xa, ((0, 0), (1, 1), (1, 1), (0, 0)))
    xe_p = jnp.pad(xe, ((0, 0), (1, 1), (1, 1), (0, 0)))

    vmem_limit = _vmem_limit_bytes()
    if tile_h is None:
        resident = (2 * (H + 2) * (W + 2) * (Ca + Ce) * 2        # images (x2 buf)
                    + 2 * 2 * (wa_flat.size + we_flat.size + wp.size)
                    + 4 * (Co + Cop))
        per_row = W * (9 * (Ca + Ce) * 2    # gathered bf16 taps
                       + Co * 4             # f32 conv accumulator
                       + 2 * Cop * 4)       # double-buffered f32 output
        tile_h = _pick_tile_h(H, N, per_row, max(per_row, vmem_limit - resident))
    th = tile_h
    nH = H // th

    # TODO(synk): for images too large to keep one whole padded batch element
    # resident in VMEM, switch the H axis to a pl.Element halo window
    # (index_map returning i*th) instead of whole-image blocks.
    return pl.pallas_call(
        _make_fused_kernel(gather_narrow_taps),
        out_shape=jax.ShapeDtypeStruct((N, H, W, Cop), jnp.float32),
        grid_spec=pltpu.PrefetchScalarGridSpec(
            num_scalar_prefetch=0,
            grid=(N, nH),
            in_specs=[
                # Whole padded image per batch element; block index is
                # constant along the row-tile axis, so Pallas DMAs each image
                # once (no halo-duplicated slab copies in HBM).
                pl.BlockSpec((1, H + 2, W + 2, Ca), lambda n, i: (n, 0, 0, 0)),
                pl.BlockSpec((1, H + 2, W + 2, Ce), lambda n, i: (n, 0, 0, 0)),
                # Weights / biases are grid-resident (constant index maps).
                # (pipeline_mode=pl.Buffered(1) would also drop their second
                # buffer; left at the default for lowering robustness.)
                pl.BlockSpec((9 * Ca, Co), lambda n, i: (0, 0)),
                pl.BlockSpec((9 * Ce, Co), lambda n, i: (0, 0)),
                pl.BlockSpec((1, Co), lambda n, i: (0, 0)),
                pl.BlockSpec((Co, Cop), lambda n, i: (0, 0)),
                pl.BlockSpec((1, Cop), lambda n, i: (0, 0)),
            ],
            out_specs=pl.BlockSpec((1, th, W, Cop), lambda n, i: (n, i, 0, 0)),
        ),
        compiler_params=pltpu.CompilerParams(
            dimension_semantics=("parallel", "parallel"),
            vmem_limit_bytes=int(vmem_limit)),
    )(xa_p, xe_p, wa_flat, we_flat,
      b3.reshape(1, Co).astype(jnp.float32),
      wp, bp.reshape(1, Cop).astype(jnp.float32))


# ------------------------------ glue (plain JAX) -----------------------------

def upsample_nearest(x_nhwc, s):
    # Pure data movement: broadcast + reshape (no repeat copies).
    N, H, W, C = x_nhwc.shape
    x = jnp.broadcast_to(x_nhwc[:, :, None, :, None, :], (N, H, s, W, s, C))
    return x.reshape(N, H * s, W * s, C)


def upsample_nearest_nchw(x_nchw, s):
    N, C, H, W = x_nchw.shape
    x = jnp.broadcast_to(x_nchw[:, :, :, None, :, None], (N, C, H, s, W, s))
    return x.reshape(N, C, H * s, W * s)


# ------------------------------ Decoder -------------------------------------

def init_decoder_params(key, inp_chs_interm, inp_chs_end, num_classes):
    k1, k2, k3, k4, k5, k6 = jax.random.split(key, 6)
    s = 0.05
    return {
        # conv_1_1_interm: Conv2d(inp_chs_interm -> 256, k=1)
        "w_interm": s * jax.random.normal(k1, (inp_chs_interm, 256), jnp.float32),
        "b_interm": s * jax.random.normal(k2, (256,), jnp.float32),
        # conv_3_3: Conv2d(256 + inp_chs_end -> 256, k=3, padding='same') HWIO
        "w_3x3": s * jax.random.normal(k3, (3, 3, 256 + inp_chs_end, 256), jnp.float32),
        "b_3x3": s * jax.random.normal(k4, (256,), jnp.float32),
        # conv_1_1_pred: Conv2d(256 -> num_classes, k=1)
        "w_pred": s * jax.random.normal(k5, (256, num_classes), jnp.float32),
        "b_pred": s * jax.random.normal(k6, (num_classes,), jnp.float32),
    }


def decoder_forward(params, interm_out_nchw, end_out_nchw, *,
                    gather_narrow_taps=True):
    cdt = jnp.bfloat16

    # NCHW (PyTorch) -> NHWC (kernel layout), bf16 matmul operands.
    interm = jnp.transpose(interm_out_nchw, (0, 2, 3, 1)).astype(cdt)
    end = jnp.transpose(end_out_nchw, (0, 2, 3, 1)).astype(cdt)

    cin = params["w_interm"].shape[0]
    mid = params["w_interm"].shape[1]            # 256 (conv_1_1_interm out)
    ce = end.shape[-1]
    w3 = params["w_3x3"]                          # (3,3, mid+ce, 256) HWIO
    # Cin split of conv_3_3: [conv_1_1_interm output | upsampled end_out],
    # matching torch.cat((interm, end), dim=1).
    assert w3.shape[2] == mid + ce, "unexpected conv_3_3 input-channel split"
    co = w3.shape[-1]
    nc = params["w_pred"].shape[1]
    cop = _round_up(max(nc, 1), 128)              # lane-dense pred head

    # Fold conv_1_1_interm into the 3x3 weights (exact: the ones channel
    # carries b_interm and its zero 'same' padding matches the reference's
    # zero-padded x1). TODO(synk): if inp_chs_interm >> 256, keep a separate
    # 1x1 Pallas matmul instead (fold raises per-tap K to Cin+1).
    w_aug = jnp.concatenate([params["w_interm"],
                             params["b_interm"][None, :]], axis=0)   # (cin+1, mid)
    wa = jnp.einsum("ck,yxko->yxco", w_aug, w3[:, :, :mid, :],
                    precision=jax.lax.Precision.HIGHEST)             # (3,3,cin+1,co)
    wa_flat = wa.reshape(9 * (cin + 1), co).astype(cdt)
    we_flat = w3[:, :, mid:, :].reshape(9 * ce, co).astype(cdt)
    wp = jnp.pad(params["w_pred"], ((0, 0), (0, cop - nc))).astype(cdt)
    bp = jnp.pad(params["b_pred"], (0, cop - nc))

    # interm branch: raw input + ones channel (carries the folded 1x1 bias).
    xa = jnp.concatenate([interm, jnp.ones_like(interm[..., :1])], axis=-1)
    # end branch: nearest 2x upsample (broadcast+reshape glue).
    xe = upsample_nearest(end, 2)

    # Single fused kernel: 3x3 conv over the virtual concat + prediction head.
    pred = fused_conv3x3_pred(xa, xe, wa_flat, we_flat, params["b_3x3"],
                              wp, bp,
                              gather_narrow_taps=gather_narrow_taps)[..., :nc]

    # NHWC -> NCHW on the LOW-RES prediction, then 8x nearest upsample in
    # NCHW (pointwise conv and transpose commute exactly with nearest
    # upsampling, so the 64x larger tensor is never transposed or convolved).
    pred_nchw = jnp.transpose(pred, (0, 3, 1, 2))
    return upsample_nearest_nchw(pred_nchw, 8)


# --------------------------- pure-JAX reference ------------------------------

def decoder_reference(params, interm_nchw, end_nchw):
    interm = jnp.transpose(interm_nchw, (0, 2, 3, 1))
    end = jnp.transpose(end_nchw, (0, 2, 3, 1))

    def conv(x, w, b, pad):
        return jax.lax.conv_general_dilated(
            x, w, window_strides=(1, 1), padding=pad,
            dimension_numbers=("NHWC", "HWIO", "NHWC")) + b

    x1 = conv(interm, params["w_interm"][None, None], params["b_interm"], "VALID")
    end_up = upsample_nearest(end, 2)
    cat = jnp.concatenate([x1, end_up], axis=-1)
    y = conv(cat, params["w_3x3"], params["b_3x3"], "SAME")
    y_up = upsample_nearest(y, 8)
    out = conv(y_up, params["w_pred"][None, None], params["b_pred"], "VALID")
    return jnp.transpose(out, (0, 3, 1, 2))


# ------------------------------ main -----------------------------------------

if __name__ == "__main__":
    inp_chs_interm, inp_chs_end, num_classes = 4, 4, 3
    N, H, W = 2, 16, 16             # interm spatial; end is H/2 x W/2

    key = jax.random.PRNGKey(0)
    kp, ki, ke = jax.random.split(key, 3)
    params = init_decoder_params(kp, inp_chs_interm, inp_chs_end, num_classes)

    interm_out = jax.random.normal(ki, (N, inp_chs_interm, H, W), jnp.float32)
    end_out = jax.random.normal(ke, (N, inp_chs_end, H // 2, W // 2), jnp.float32)

    fwd = jax.jit(decoder_forward, static_argnames=("gather_narrow_taps",))
    try:
        out = jax.block_until_ready(
            fwd(params, interm_out, end_out, gather_narrow_taps=True))
    except Exception:
        # Lowering-robustness fallback: per-tap dots instead of the single
        # gathered-K dot per branch (same math, a few more MXU passes).
        out = jax.block_until_ready(
            fwd(params, interm_out, end_out, gather_narrow_taps=False))

    expected_shape = (N, num_classes, 8 * H, 8 * W)
    assert out.shape == expected_shape, (out.shape, expected_shape)

    ref = jax.block_until_ready(decoder_reference(params, interm_out, end_out))
    max_err = float(jnp.max(jnp.abs(out - ref)))
    if max_err > 5e-2:
        raise AssertionError(f"mismatch vs reference, max abs err = {max_err}")

    print("KERNEL_OK")
</pallas_src>

<mosaic_0001>
module attributes {stable_mosaic.version = 11 : i64} {
  func.func @kernel(%arg0: i32, %arg1: i32, %arg2: memref<1x18x18x5xbf16, #tpu.memory_space<vmem>>, %arg3: memref<1x18x18x4xbf16, #tpu.memory_space<vmem>>, %arg4: memref<45x256xbf16, #tpu.memory_space<vmem>>, %arg5: memref<36x256xbf16, #tpu.memory_space<vmem>>, %arg6: memref<1x256xf32, #tpu.memory_space<vmem>>, %arg7: memref<256x128xbf16, #tpu.memory_space<vmem>>, %arg8: memref<1x128xf32, #tpu.memory_space<vmem>>, %arg9: memref<1x16x16x128xf32, #tpu.memory_space<vmem>>) attributes {dimension_semantics = [#tpu.dimension_semantics<parallel>, #tpu.dimension_semantics<parallel>], iteration_bounds = array<i64: 2, 1>, scalar_prefetch = 0 : i64, scratch_operands = 0 : i64, tpu.core_type = #tpu.core_type<tc>, window_params = [{transform_indices = @transform_0, window_bounds = array<i64: 1, 18, 18, 5>}, {transform_indices = @transform_1, window_bounds = array<i64: 1, 18, 18, 4>}, {pipeline_mode = #tpu.pipeline_mode<synchronous>, transform_indices = @transform_2, window_bounds = array<i64: 45, 256>}, {pipeline_mode = #tpu.pipeline_mode<synchronous>, transform_indices = @transform_3, window_bounds = array<i64: 36, 256>}, {pipeline_mode = #tpu.pipeline_mode<synchronous>, transform_indices = @transform_4, window_bounds = array<i64: 1, 256>}, {pipeline_mode = #tpu.pipeline_mode<synchronous>, transform_indices = @transform_5, window_bounds = array<i64: 256, 128>}, {pipeline_mode = #tpu.pipeline_mode<synchronous>, transform_indices = @transform_6, window_bounds = array<i64: 1, 128>}, {transform_indices = @transform_7, window_bounds = array<i64: 1, 16, 16, 128>}]} {
    %c16_i32 = arith.constant 16 : i32
    %0 = arith.muli %arg1, %c16_i32 : i32
    %c0 = arith.constant 0 : index
    %1 = arith.index_cast %0 : i32 to index
    %c0_0 = arith.constant 0 : index
    %c0_1 = arith.constant 0 : index
    %2 = vector.load %arg2[%c0, %1, %c0_0, %c0_1] : memref<1x18x18x5xbf16, #tpu.memory_space<vmem>>, vector<1x18x18x5xbf16>
    %3 = vector.shape_cast %2 : vector<1x18x18x5xbf16> to vector<18x18x5xbf16>
    %c0_2 = arith.constant 0 : index
    %4 = arith.index_cast %0 : i32 to index
    %c0_3 = arith.constant 0 : index
    %c0_4 = arith.constant 0 : index
    %5 = vector.load %arg3[%c0_2, %4, %c0_3, %c0_4] : memref<1x18x18x4xbf16, #tpu.memory_space<vmem>>, vector<1x18x18x4xbf16>
    %6 = vector.shape_cast %5 : vector<1x18x18x4xbf16> to vector<18x18x4xbf16>
    %7 = vector.extract_strided_slice %3 {offsets = [0, 0, 0], sizes = [16, 16, 5], strides = [1, 1, 1]} : vector<18x18x5xbf16> to vector<16x16x5xbf16>
    %8 = vector.extract_strided_slice %3 {offsets = [0, 1, 0], sizes = [16, 16, 5], strides = [1, 1, 1]} : vector<18x18x5xbf16> to vector<16x16x5xbf16>
    %9 = vector.extract_strided_slice %3 {offsets = [0, 2, 0], sizes = [16, 16, 5], strides = [1, 1, 1]} : vector<18x18x5xbf16> to vector<16x16x5xbf16>
    %10 = vector.extract_strided_slice %3 {offsets = [1, 0, 0], sizes = [16, 16, 5], strides = [1, 1, 1]} : vector<18x18x5xbf16> to vector<16x16x5xbf16>
    %11 = vector.extract_strided_slice %3 {offsets = [1, 1, 0], sizes = [16, 16, 5], strides = [1, 1, 1]} : vector<18x18x5xbf16> to vector<16x16x5xbf16>
    %12 = vector.extract_strided_slice %3 {offsets = [1, 2, 0], sizes = [16, 16, 5], strides = [1, 1, 1]} : vector<18x18x5xbf16> to vector<16x16x5xbf16>
    %13 = vector.extract_strided_slice %3 {offsets = [2, 0, 0], sizes = [16, 16, 5], strides = [1, 1, 1]} : vector<18x18x5xbf16> to vector<16x16x5xbf16>
    %14 = vector.extract_strided_slice %3 {offsets = [2, 1, 0], sizes = [16, 16, 5], strides = [1, 1, 1]} : vector<18x18x5xbf16> to vector<16x16x5xbf16>
    %15 = vector.extract_strided_slice %3 {offsets = [2, 2, 0], sizes = [16, 16, 5], strides = [1, 1, 1]} : vector<18x18x5xbf16> to vector<16x16x5xbf16>
    %16 = tpu.concatenate %7, %8, %9, %10, %11, %12, %13, %14, %15 in 2 : vector<16x16x5xbf16>, vector<16x16x5xbf16>, vector<16x16x5xbf16>, vector<16x16x5xbf16>, vector<16x16x5xbf16>, vector<16x16x5xbf16>, vector<16x16x5xbf16>, vector<16x16x5xbf16>, vector<16x16x5xbf16> -> vector<16x16x45xbf16>
    %17 = vector.shape_cast %16 : vector<16x16x45xbf16> to vector<256x45xbf16>
    %c0_5 = arith.constant 0 : index
    %c0_6 = arith.constant 0 : index
    %18 = vector.load %arg4[%c0_5, %c0_6] : memref<45x256xbf16, #tpu.memory_space<vmem>>, vector<45x256xbf16>
    %cst = arith.constant dense<0.000000e+00> : vector<256x256xf32>
    %19 = tpu.matmul %17, %18, %cst {dimension_numbers = #tpu.dot_dimension_numbers<[1], [0], [0], [1], [0, 0, 1, 1], [], []>} : vector<256x45xbf16>, vector<45x256xbf16>, vector<256x256xf32> -> vector<256x256xf32>
    %20 = vector.extract_strided_slice %6 {offsets = [0, 0, 0], sizes = [16, 16, 4], strides = [1, 1, 1]} : vector<18x18x4xbf16> to vector<16x16x4xbf16>
    %21 = vector.extract_strided_slice %6 {offsets = [0, 1, 0], sizes = [16, 16, 4], strides = [1, 1, 1]} : vector<18x18x4xbf16> to vector<16x16x4xbf16>
    %22 = vector.extract_strided_slice %6 {offsets = [0, 2, 0], sizes = [16, 16, 4], strides = [1, 1, 1]} : vector<18x18x4xbf16> to vector<16x16x4xbf16>
    %23 = vector.extract_strided_slice %6 {offsets = [1, 0, 0], sizes = [16, 16, 4], strides = [1, 1, 1]} : vector<18x18x4xbf16> to vector<16x16x4xbf16>
    %24 = vector.extract_strided_slice %6 {offsets = [1, 1, 0], sizes = [16, 16, 4], strides = [1, 1, 1]} : vector<18x18x4xbf16> to vector<16x16x4xbf16>
    %25 = vector.extract_strided_slice %6 {offsets = [1, 2, 0], sizes = [16, 16, 4], strides = [1, 1, 1]} : vector<18x18x4xbf16> to vector<16x16x4xbf16>
    %26 = vector.extract_strided_slice %6 {offsets = [2, 0, 0], sizes = [16, 16, 4], strides = [1, 1, 1]} : vector<18x18x4xbf16> to vector<16x16x4xbf16>
    %27 = vector.extract_strided_slice %6 {offsets = [2, 1, 0], sizes = [16, 16, 4], strides = [1, 1, 1]} : vector<18x18x4xbf16> to vector<16x16x4xbf16>
    %28 = vector.extract_strided_slice %6 {offsets = [2, 2, 0], sizes = [16, 16, 4], strides = [1, 1, 1]} : vector<18x18x4xbf16> to vector<16x16x4xbf16>
    %29 = tpu.concatenate %20, %21, %22, %23, %24, %25, %26, %27, %28 in 2 : vector<16x16x4xbf16>, vector<16x16x4xbf16>, vector<16x16x4xbf16>, vector<16x16x4xbf16>, vector<16x16x4xbf16>, vector<16x16x4xbf16>, vector<16x16x4xbf16>, vector<16x16x4xbf16>, vector<16x16x4xbf16> -> vector<16x16x36xbf16>
    %30 = vector.shape_cast %29 : vector<16x16x36xbf16> to vector<256x36xbf16>
    %c0_7 = arith.constant 0 : index
    %c0_8 = arith.constant 0 : index
    %31 = vector.load %arg5[%c0_7, %c0_8] : memref<36x256xbf16, #tpu.memory_space<vmem>>, vector<36x256xbf16>
    %cst_9 = arith.constant dense<0.000000e+00> : vector<256x256xf32>
    %32 = tpu.matmul %30, %31, %cst_9 {dimension_numbers = #tpu.dot_dimension_numbers<[1], [0], [0], [1], [0, 0, 1, 1], [], []>} : vector<256x36xbf16>, vector<36x256xbf16>, vector<256x256xf32> -> vector<256x256xf32>
    %33 = arith.addf %19, %32 : vector<256x256xf32>
    %c0_10 = arith.constant 0 : index
    %c0_11 = arith.constant 0 : index
    %34 = vector.load %arg6[%c0_10, %c0_11] : memref<1x256xf32, #tpu.memory_space<vmem>>, vector<1x256xf32>
    %35 = vector.broadcast %34 : vector<1x256xf32> to vector<256x256xf32>
    %36 = arith.addf %33, %35 : vector<256x256xf32>
    %37 = arith.truncf %36 : vector<256x256xf32> to vector<256x256xbf16>
    %c0_12 = arith.constant 0 : index
    %c0_13 = arith.constant 0 : index
    %38 = vector.load %arg7[%c0_12, %c0_13] : memref<256x128xbf16, #tpu.memory_space<vmem>>, vector<256x128xbf16>
    %cst_14 = arith.constant dense<0.000000e+00> : vector<256x128xf32>
    %39 = tpu.matmul %37, %38, %cst_14 {dimension_numbers = #tpu.dot_dimension_numbers<[1], [0], [0], [1], [0, 0, 1, 1], [], []>} : vector<256x256xbf16>, vector<256x128xbf16>, vector<256x128xf32> -> vector<256x128xf32>
    %c0_15 = arith.constant 0 : index
    %c0_16 = arith.constant 0 : index
    %40 = vector.load %arg8[%c0_15, %c0_16] : memref<1x128xf32, #tpu.memory_space<vmem>>, vector<1x128xf32>
    %41 = vector.broadcast %40 : vector<1x128xf32> to vector<256x128xf32>
    %42 = arith.addf %39, %41 : vector<256x128xf32>
    %43 = vector.shape_cast %42 : vector<256x128xf32> to vector<16x16x128xf32>
    %c0_17 = arith.constant 0 : index
    %c0_18 = arith.constant 0 : index
    %c0_19 = arith.constant 0 : index
    %c0_20 = arith.constant 0 : index
    %44 = vector.load %arg9[%c0_17, %c0_18, %c0_19, %c0_20] : memref<1x16x16x128xf32, #tpu.memory_space<vmem>>, vector<1x16x16x128xf32>
    %45 = vector.shape_cast %44 : vector<1x16x16x128xf32> to vector<16x16x128xf32>
    %46 = vector.shape_cast %43 : vector<16x16x128xf32> to vector<1x16x16x128xf32>
    tpu.vector_store %arg9[%c0_17, %c0_18, %c0_19, %c0_20], %46 {strides = array<i32>} : memref<1x16x16x128xf32, #tpu.memory_space<vmem>>, vector<1x16x16x128xf32>,
    return
  }
  func.func @transform_0(%arg0: i32, %arg1: i32) -> (i32, i32, i32, i32) {
    %c0_i32 = arith.constant 0 : i32
    %c0_i32_0 = arith.constant 0 : i32
    %c0_i32_1 = arith.constant 0 : i32
    %c0_i32_2 = arith.constant 0 : i32
    return %arg0, %c0_i32, %c0_i32_0, %c0_i32_1 : i32, i32, i32, i32
  }
  func.func @transform_1(%arg0: i32, %arg1: i32) -> (i32, i32, i32, i32) {
    %c0_i32 = arith.constant 0 : i32
    %c0_i32_0 = arith.constant 0 : i32
    %c0_i32_1 = arith.constant 0 : i32
    %c0_i32_2 = arith.constant 0 : i32
    return %arg0, %c0_i32, %c0_i32_0, %c0_i32_1 : i32, i32, i32, i32
  }
  func.func @transform_2(%arg0: i32, %arg1: i32) -> (i32, i32) {
    %c0_i32 = arith.constant 0 : i32
    %c0_i32_0 = arith.constant 0 : i32
    %c0_i32_1 = arith.constant 0 : i32
    return %c0_i32, %c0_i32_0 : i32, i32
  }
  func.func @transform_3(%arg0: i32, %arg1: i32) -> (i32, i32) {
    %c0_i32 = arith.constant 0 : i32
    %c0_i32_0 = arith.constant 0 : i32
    %c0_i32_1 = arith.constant 0 : i32
    return %c0_i32, %c0_i32_0 : i32, i32
  }
  func.func @transform_4(%arg0: i32, %arg1: i32) -> (i32, i32) {
    %c0_i32 = arith.constant 0 : i32
    %c0_i32_0 = arith.constant 0 : i32
    %c0_i32_1 = arith.constant 0 : i32
    return %c0_i32, %c0_i32_0 : i32, i32
  }
  func.func @transform_5(%arg0: i32, %arg1: i32) -> (i32, i32) {
    %c0_i32 = arith.constant 0 : i32
    %c0_i32_0 = arith.constant 0 : i32
    %c0_i32_1 = arith.constant 0 : i32
    return %c0_i32, %c0_i32_0 : i32, i32
  }
  func.func @transform_6(%arg0: i32, %arg1: i32) -> (i32, i32) {
    %c0_i32 = arith.constant 0 : i32
    %c0_i32_0 = arith.constant 0 : i32
    %c0_i32_1 = arith.constant 0 : i32
    return %c0_i32, %c0_i32_0 : i32, i32
  }
  func.func @transform_7(%arg0: i32, %arg1: i32) -> (i32, i32, i32, i32) {
    %c0_i32 = arith.constant 0 : i32
    %c0_i32_0 = arith.constant 0 : i32
    %c0_i32_1 = arith.constant 0 : i32
    return %arg0, %arg1, %c0_i32, %c0_i32_0 : i32, i32, i32, i32
  }
}

module attributes {stable_mosaic.version = 11 : i64} {
  func.func @kernel(%arg0: i32, %arg1: i32, %arg2: memref<1x18x18x5xbf16, #tpu.memory_space<vmem>>, %arg3: memref<1x18x18x4xbf16, #tpu.memory_space<vmem>>, %arg4: memref<45x256xbf16, #tpu.memory_space<vmem>>, %arg5: memref<36x256xbf16, #tpu.memory_space<vmem>>, %arg6: memref<1x256xf32, #tpu.memory_space<vmem>>, %arg7: memref<256x128xbf16, #tpu.memory_space<vmem>>, %arg8: memref<1x128xf32, #tpu.memory_space<vmem>>, %arg9: memref<1x16x16x128xf32, #tpu.memory_space<vmem>>) attributes {dimension_semantics = [#tpu.dimension_semantics<parallel>, #tpu.dimension_semantics<parallel>], iteration_bounds = array<i64: 2, 1>, scalar_prefetch = 0 : i64, scratch_operands = 0 : i64, tpu.core_type = #tpu.core_type<tc>, window_params = [{transform_indices = @transform_0, window_bounds = array<i64: 1, 18, 18, 5>}, {transform_indices = @transform_1, window_bounds = array<i64: 1, 18, 18, 4>}, {pipeline_mode = #tpu.pipeline_mode<synchronous>, transform_indices = @transform_2, window_bounds = array<i64: 45, 256>}, {pipeline_mode = #tpu.pipeline_mode<synchronous>, transform_indices = @transform_3, window_bounds = array<i64: 36, 256>}, {pipeline_mode = #tpu.pipeline_mode<synchronous>, transform_indices = @transform_4, window_bounds = array<i64: 1, 256>}, {pipeline_mode = #tpu.pipeline_mode<synchronous>, transform_indices = @transform_5, window_bounds = array<i64: 256, 128>}, {pipeline_mode = #tpu.pipeline_mode<synchronous>, transform_indices = @transform_6, window_bounds = array<i64: 1, 128>}, {transform_indices = @transform_7, window_bounds = array<i64: 1, 16, 16, 128>}]} {
    %c16_i32 = arith.constant 16 : i32
    %0 = arith.muli %arg1, %c16_i32 : i32
    %c0 = arith.constant 0 : index
    %1 = arith.index_cast %0 : i32 to index
    %c0_0 = arith.constant 0 : index
    %c0_1 = arith.constant 0 : index
    %2 = vector.load %arg2[%c0, %1, %c0_0, %c0_1] : memref<1x18x18x5xbf16, #tpu.memory_space<vmem>>, vector<1x18x18x5xbf16>
    %3 = vector.shape_cast %2 : vector<1x18x18x5xbf16> to vector<18x18x5xbf16>
    %c0_2 = arith.constant 0 : index
    %4 = arith.index_cast %0 : i32 to index
    %c0_3 = arith.constant 0 : index
    %c0_4 = arith.constant 0 : index
    %5 = vector.load %arg3[%c0_2, %4, %c0_3, %c0_4] : memref<1x18x18x4xbf16, #tpu.memory_space<vmem>>, vector<1x18x18x4xbf16>
    %6 = vector.shape_cast %5 : vector<1x18x18x4xbf16> to vector<18x18x4xbf16>
    %7 = vector.extract_strided_slice %3 {offsets = [0, 0, 0], sizes = [16, 16, 5], strides = [1, 1, 1]} : vector<18x18x5xbf16> to vector<16x16x5xbf16>
    %8 = vector.shape_cast %7 : vector<16x16x5xbf16> to vector<256x5xbf16>
    %c0_5 = arith.constant 0 : index
    %c0_6 = arith.constant 0 : index
    %9 = vector.load %arg4[%c0_5, %c0_6] : memref<45x256xbf16, #tpu.memory_space<vmem>>, vector<5x256xbf16>
    %cst = arith.constant dense<0.000000e+00> : vector<256x256xf32>
    %10 = tpu.matmul %8, %9, %cst {dimension_numbers = #tpu.dot_dimension_numbers<[1], [0], [0], [1], [0, 0, 1, 1], [], []>} : vector<256x5xbf16>, vector<5x256xbf16>, vector<256x256xf32> -> vector<256x256xf32>
    %11 = vector.extract_strided_slice %3 {offsets = [0, 1, 0], sizes = [16, 16, 5], strides = [1, 1, 1]} : vector<18x18x5xbf16> to vector<16x16x5xbf16>
    %12 = vector.shape_cast %11 : vector<16x16x5xbf16> to vector<256x5xbf16>
    %c5 = arith.constant 5 : index
    %c0_7 = arith.constant 0 : index
    %13 = vector.load %arg4[%c5, %c0_7] : memref<45x256xbf16, #tpu.memory_space<vmem>>, vector<5x256xbf16>
    %cst_8 = arith.constant dense<0.000000e+00> : vector<256x256xf32>
    %14 = tpu.matmul %12, %13, %cst_8 {dimension_numbers = #tpu.dot_dimension_numbers<[1], [0], [0], [1], [0, 0, 1, 1], [], []>} : vector<256x5xbf16>, vector<5x256xbf16>, vector<256x256xf32> -> vector<256x256xf32>
    %15 = arith.addf %10, %14 : vector<256x256xf32>
    %16 = vector.extract_strided_slice %3 {offsets = [0, 2, 0], sizes = [16, 16, 5], strides = [1, 1, 1]} : vector<18x18x5xbf16> to vector<16x16x5xbf16>
    %17 = vector.shape_cast %16 : vector<16x16x5xbf16> to vector<256x5xbf16>
    %c10 = arith.constant 10 : index
    %c0_9 = arith.constant 0 : index
    %18 = vector.load %arg4[%c10, %c0_9] : memref<45x256xbf16, #tpu.memory_space<vmem>>, vector<5x256xbf16>
    %cst_10 = arith.constant dense<0.000000e+00> : vector<256x256xf32>
    %19 = tpu.matmul %17, %18, %cst_10 {dimension_numbers = #tpu.dot_dimension_numbers<[1], [0], [0], [1], [0, 0, 1, 1], [], []>} : vector<256x5xbf16>, vector<5x256xbf16>, vector<256x256xf32> -> vector<256x256xf32>
    %20 = arith.addf %15, %19 : vector<256x256xf32>
    %21 = vector.extract_strided_slice %3 {offsets = [1, 0, 0], sizes = [16, 16, 5], strides = [1, 1, 1]} : vector<18x18x5xbf16> to vector<16x16x5xbf16>
    %22 = vector.shape_cast %21 : vector<16x16x5xbf16> to vector<256x5xbf16>
    %c15 = arith.constant 15 : index
    %c0_11 = arith.constant 0 : index
    %23 = vector.load %arg4[%c15, %c0_11] : memref<45x256xbf16, #tpu.memory_space<vmem>>, vector<5x256xbf16>
    %cst_12 = arith.constant dense<0.000000e+00> : vector<256x256xf32>
    %24 = tpu.matmul %22, %23, %cst_12 {dimension_numbers = #tpu.dot_dimension_numbers<[1], [0], [0], [1], [0, 0, 1, 1], [], []>} : vector<256x5xbf16>, vector<5x256xbf16>, vector<256x256xf32> -> vector<256x256xf32>
    %25 = arith.addf %20, %24 : vector<256x256xf32>
    %26 = vector.extract_strided_slice %3 {offsets = [1, 1, 0], sizes = [16, 16, 5], strides = [1, 1, 1]} : vector<18x18x5xbf16> to vector<16x16x5xbf16>
    %27 = vector.shape_cast %26 : vector<16x16x5xbf16> to vector<256x5xbf16>
    %c20 = arith.constant 20 : index
    %c0_13 = arith.constant 0 : index
    %28 = vector.load %arg4[%c20, %c0_13] : memref<45x256xbf16, #tpu.memory_space<vmem>>, vector<5x256xbf16>
    %cst_14 = arith.constant dense<0.000000e+00> : vector<256x256xf32>
    %29 = tpu.matmul %27, %28, %cst_14 {dimension_numbers = #tpu.dot_dimension_numbers<[1], [0], [0], [1], [0, 0, 1, 1], [], []>} : vector<256x5xbf16>, vector<5x256xbf16>, vector<256x256xf32> -> vector<256x256xf32>
    %30 = arith.addf %25, %29 : vector<256x256xf32>
    %31 = vector.extract_strided_slice %3 {offsets = [1, 2, 0], sizes = [16, 16, 5], strides = [1, 1, 1]} : vector<18x18x5xbf16> to vector<16x16x5xbf16>
    %32 = vector.shape_cast %31 : vector<16x16x5xbf16> to vector<256x5xbf16>
    %c25 = arith.constant 25 : index
    %c0_15 = arith.constant 0 : index
    %33 = vector.load %arg4[%c25, %c0_15] : memref<45x256xbf16, #tpu.memory_space<vmem>>, vector<5x256xbf16>
    %cst_16 = arith.constant dense<0.000000e+00> : vector<256x256xf32>
    %34 = tpu.matmul %32, %33, %cst_16 {dimension_numbers = #tpu.dot_dimension_numbers<[1], [0], [0], [1], [0, 0, 1, 1], [], []>} : vector<256x5xbf16>, vector<5x256xbf16>, vector<256x256xf32> -> vector<256x256xf32>
    %35 = arith.addf %30, %34 : vector<256x256xf32>
    %36 = vector.extract_strided_slice %3 {offsets = [2, 0, 0], sizes = [16, 16, 5], strides = [1, 1, 1]} : vector<18x18x5xbf16> to vector<16x16x5xbf16>
    %37 = vector.shape_cast %36 : vector<16x16x5xbf16> to vector<256x5xbf16>
    %c30 = arith.constant 30 : index
    %c0_17 = arith.constant 0 : index
    %38 = vector.load %arg4[%c30, %c0_17] : memref<45x256xbf16, #tpu.memory_space<vmem>>, vector<5x256xbf16>
    %cst_18 = arith.constant dense<0.000000e+00> : vector<256x256xf32>
    %39 = tpu.matmul %37, %38, %cst_18 {dimension_numbers = #tpu.dot_dimension_numbers<[1], [0], [0], [1], [0, 0, 1, 1], [], []>} : vector<256x5xbf16>, vector<5x256xbf16>, vector<256x256xf32> -> vector<256x256xf32>
    %40 = arith.addf %35, %39 : vector<256x256xf32>
    %41 = vector.extract_strided_slice %3 {offsets = [2, 1, 0], sizes = [16, 16, 5], strides = [1, 1, 1]} : vector<18x18x5xbf16> to vector<16x16x5xbf16>
    %42 = vector.shape_cast %41 : vector<16x16x5xbf16> to vector<256x5xbf16>
    %c35 = arith.constant 35 : index
    %c0_19 = arith.constant 0 : index
    %43 = vector.load %arg4[%c35, %c0_19] : memref<45x256xbf16, #tpu.memory_space<vmem>>, vector<5x256xbf16>
    %cst_20 = arith.constant dense<0.000000e+00> : vector<256x256xf32>
    %44 = tpu.matmul %42, %43, %cst_20 {dimension_numbers = #tpu.dot_dimension_numbers<[1], [0], [0], [1], [0, 0, 1, 1], [], []>} : vector<256x5xbf16>, vector<5x256xbf16>, vector<256x256xf32> -> vector<256x256xf32>
    %45 = arith.addf %40, %44 : vector<256x256xf32>
    %46 = vector.extract_strided_slice %3 {offsets = [2, 2, 0], sizes = [16, 16, 5], strides = [1, 1, 1]} : vector<18x18x5xbf16> to vector<16x16x5xbf16>
    %47 = vector.shape_cast %46 : vector<16x16x5xbf16> to vector<256x5xbf16>
    %c40 = arith.constant 40 : index
    %c0_21 = arith.constant 0 : index
    %48 = vector.load %arg4[%c40, %c0_21] : memref<45x256xbf16, #tpu.memory_space<vmem>>, vector<5x256xbf16>
    %cst_22 = arith.constant dense<0.000000e+00> : vector<256x256xf32>
    %49 = tpu.matmul %47, %48, %cst_22 {dimension_numbers = #tpu.dot_dimension_numbers<[1], [0], [0], [1], [0, 0, 1, 1], [], []>} : vector<256x5xbf16>, vector<5x256xbf16>, vector<256x256xf32> -> vector<256x256xf32>
    %50 = arith.addf %45, %49 : vector<256x256xf32>
    %51 = vector.extract_strided_slice %6 {offsets = [0, 0, 0], sizes = [16, 16, 4], strides = [1, 1, 1]} : vector<18x18x4xbf16> to vector<16x16x4xbf16>
    %52 = vector.shape_cast %51 : vector<16x16x4xbf16> to vector<256x4xbf16>
    %c0_23 = arith.constant 0 : index
    %c0_24 = arith.constant 0 : index
    %53 = vector.load %arg5[%c0_23, %c0_24] : memref<36x256xbf16, #tpu.memory_space<vmem>>, vector<4x256xbf16>
    %cst_25 = arith.constant dense<0.000000e+00> : vector<256x256xf32>
    %54 = tpu.matmul %52, %53, %cst_25 {dimension_numbers = #tpu.dot_dimension_numbers<[1], [0], [0], [1], [0, 0, 1, 1], [], []>} : vector<256x4xbf16>, vector<4x256xbf16>, vector<256x256xf32> -> vector<256x256xf32>
    %55 = vector.extract_strided_slice %6 {offsets = [0, 1, 0], sizes = [16, 16, 4], strides = [1, 1, 1]} : vector<18x18x4xbf16> to vector<16x16x4xbf16>
    %56 = vector.shape_cast %55 : vector<16x16x4xbf16> to vector<256x4xbf16>
    %c4 = arith.constant 4 : index
    %c0_26 = arith.constant 0 : index
    %57 = vector.load %arg5[%c4, %c0_26] : memref<36x256xbf16, #tpu.memory_space<vmem>>, vector<4x256xbf16>
    %cst_27 = arith.constant dense<0.000000e+00> : vector<256x256xf32>
    %58 = tpu.matmul %56, %57, %cst_27 {dimension_numbers = #tpu.dot_dimension_numbers<[1], [0], [0], [1], [0, 0, 1, 1], [], []>} : vector<256x4xbf16>, vector<4x256xbf16>, vector<256x256xf32> -> vector<256x256xf32>
    %59 = arith.addf %54, %58 : vector<256x256xf32>
    %60 = vector.extract_strided_slice %6 {offsets = [0, 2, 0], sizes = [16, 16, 4], strides = [1, 1, 1]} : vector<18x18x4xbf16> to vector<16x16x4xbf16>
    %61 = vector.shape_cast %60 : vector<16x16x4xbf16> to vector<256x4xbf16>
    %c8 = arith.constant 8 : index
    %c0_28 = arith.constant 0 : index
    %62 = vector.load %arg5[%c8, %c0_28] : memref<36x256xbf16, #tpu.memory_space<vmem>>, vector<4x256xbf16>
    %cst_29 = arith.constant dense<0.000000e+00> : vector<256x256xf32>
    %63 = tpu.matmul %61, %62, %cst_29 {dimension_numbers = #tpu.dot_dimension_numbers<[1], [0], [0], [1], [0, 0, 1, 1], [], []>} : vector<256x4xbf16>, vector<4x256xbf16>, vector<256x256xf32> -> vector<256x256xf32>
    %64 = arith.addf %59, %63 : vector<256x256xf32>
    %65 = vector.extract_strided_slice %6 {offsets = [1, 0, 0], sizes = [16, 16, 4], strides = [1, 1, 1]} : vector<18x18x4xbf16> to vector<16x16x4xbf16>
    %66 = vector.shape_cast %65 : vector<16x16x4xbf16> to vector<256x4xbf16>
    %c12 = arith.constant 12 : index
    %c0_30 = arith.constant 0 : index
    %67 = vector.load %arg5[%c12, %c0_30] : memref<36x256xbf16, #tpu.memory_space<vmem>>, vector<4x256xbf16>
    %cst_31 = arith.constant dense<0.000000e+00> : vector<256x256xf32>
    %68 = tpu.matmul %66, %67, %cst_31 {dimension_numbers = #tpu.dot_dimension_numbers<[1], [0], [0], [1], [0, 0, 1, 1], [], []>} : vector<256x4xbf16>, vector<4x256xbf16>, vector<256x256xf32> -> vector<256x256xf32>
    %69 = arith.addf %64, %68 : vector<256x256xf32>
    %70 = vector.extract_strided_slice %6 {offsets = [1, 1, 0], sizes = [16, 16, 4], strides = [1, 1, 1]} : vector<18x18x4xbf16> to vector<16x16x4xbf16>
    %71 = vector.shape_cast %70 : vector<16x16x4xbf16> to vector<256x4xbf16>
    %c16 = arith.constant 16 : index
    %c0_32 = arith.constant 0 : index
    %72 = vector.load %arg5[%c16, %c0_32] : memref<36x256xbf16, #tpu.memory_space<vmem>>, vector<4x256xbf16>
    %cst_33 = arith.constant dense<0.000000e+00> : vector<256x256xf32>
    %73 = tpu.matmul %71, %72, %cst_33 {dimension_numbers = #tpu.dot_dimension_numbers<[1], [0], [0], [1], [0, 0, 1, 1], [], []>} : vector<256x4xbf16>, vector<4x256xbf16>, vector<256x256xf32> -> vector<256x256xf32>
    %74 = arith.addf %69, %73 : vector<256x256xf32>
    %75 = vector.extract_strided_slice %6 {offsets = [1, 2, 0], sizes = [16, 16, 4], strides = [1, 1, 1]} : vector<18x18x4xbf16> to vector<16x16x4xbf16>
    %76 = vector.shape_cast %75 : vector<16x16x4xbf16> to vector<256x4xbf16>
    %c20_34 = arith.constant 20 : index
    %c0_35 = arith.constant 0 : index
    %77 = vector.load %arg5[%c20_34, %c0_35] : memref<36x256xbf16, #tpu.memory_space<vmem>>, vector<4x256xbf16>
    %cst_36 = arith.constant dense<0.000000e+00> : vector<256x256xf32>
    %78 = tpu.matmul %76, %77, %cst_36 {dimension_numbers = #tpu.dot_dimension_numbers<[1], [0], [0], [1], [0, 0, 1, 1], [], []>} : vector<256x4xbf16>, vector<4x256xbf16>, vector<256x256xf32> -> vector<256x256xf32>
    %79 = arith.addf %74, %78 : vector<256x256xf32>
    %80 = vector.extract_strided_slice %6 {offsets = [2, 0, 0], sizes = [16, 16, 4], strides = [1, 1, 1]} : vector<18x18x4xbf16> to vector<16x16x4xbf16>
    %81 = vector.shape_cast %80 : vector<16x16x4xbf16> to vector<256x4xbf16>
    %c24 = arith.constant 24 : index
    %c0_37 = arith.constant 0 : index
    %82 = vector.load %arg5[%c24, %c0_37] : memref<36x256xbf16, #tpu.memory_space<vmem>>, vector<4x256xbf16>
    %cst_38 = arith.constant dense<0.000000e+00> : vector<256x256xf32>
    %83 = tpu.matmul %81, %82, %cst_38 {dimension_numbers = #tpu.dot_dimension_numbers<[1], [0], [0], [1], [0, 0, 1, 1], [], []>} : vector<256x4xbf16>, vector<4x256xbf16>, vector<256x256xf32> -> vector<256x256xf32>
    %84 = arith.addf %79, %83 : vector<256x256xf32>
    %85 = vector.extract_strided_slice %6 {offsets = [2, 1, 0], sizes = [16, 16, 4], strides = [1, 1, 1]} : vector<18x18x4xbf16> to vector<16x16x4xbf16>
    %86 = vector.shape_cast %85 : vector<16x16x4xbf16> to vector<256x4xbf16>
    %c28 = arith.constant 28 : index
    %c0_39 = arith.constant 0 : index
    %87 = vector.load %arg5[%c28, %c0_39] : memref<36x256xbf16, #tpu.memory_space<vmem>>, vector<4x256xbf16>
    %cst_40 = arith.constant dense<0.000000e+00> : vector<256x256xf32>
    %88 = tpu.matmul %86, %87, %cst_40 {dimension_numbers = #tpu.dot_dimension_numbers<[1], [0], [0], [1], [0, 0, 1, 1], [], []>} : vector<256x4xbf16>, vector<4x256xbf16>, vector<256x256xf32> -> vector<256x256xf32>
    %89 = arith.addf %84, %88 : vector<256x256xf32>
    %90 = vector.extract_strided_slice %6 {offsets = [2, 2, 0], sizes = [16, 16, 4], strides = [1, 1, 1]} : vector<18x18x4xbf16> to vector<16x16x4xbf16>
    %91 = vector.shape_cast %90 : vector<16x16x4xbf16> to vector<256x4xbf16>
    %c32 = arith.constant 32 : index
    %c0_41 = arith.constant 0 : index
    %92 = vector.load %arg5[%c32, %c0_41] : memref<36x256xbf16, #tpu.memory_space<vmem>>, vector<4x256xbf16>
    %cst_42 = arith.constant dense<0.000000e+00> : vector<256x256xf32>
    %93 = tpu.matmul %91, %92, %cst_42 {dimension_numbers = #tpu.dot_dimension_numbers<[1], [0], [0], [1], [0, 0, 1, 1], [], []>} : vector<256x4xbf16>, vector<4x256xbf16>, vector<256x256xf32> -> vector<256x256xf32>
    %94 = arith.addf %89, %93 : vector<256x256xf32>
    %95 = arith.addf %50, %94 : vector<256x256xf32>
    %c0_43 = arith.constant 0 : index
    %c0_44 = arith.constant 0 : index
    %96 = vector.load %arg6[%c0_43, %c0_44] : memref<1x256xf32, #tpu.memory_space<vmem>>, vector<1x256xf32>
    %97 = vector.broadcast %96 : vector<1x256xf32> to vector<256x256xf32>
    %98 = arith.addf %95, %97 : vector<256x256xf32>
    %99 = arith.truncf %98 : vector<256x256xf32> to vector<256x256xbf16>
    %c0_45 = arith.constant 0 : index
    %c0_46 = arith.constant 0 : index
    %100 = vector.load %arg7[%c0_45, %c0_46] : memref<256x128xbf16, #tpu.memory_space<vmem>>, vector<256x128xbf16>
    %cst_47 = arith.constant dense<0.000000e+00> : vector<256x128xf32>
    %101 = tpu.matmul %99, %100, %cst_47 {dimension_numbers = #tpu.dot_dimension_numbers<[1], [0], [0], [1], [0, 0, 1, 1], [], []>} : vector<256x256xbf16>, vector<256x128xbf16>, vector<256x128xf32> -> vector<256x128xf32>
    %c0_48 = arith.constant 0 : index
    %c0_49 = arith.constant 0 : index
    %102 = vector.load %arg8[%c0_48, %c0_49] : memref<1x128xf32, #tpu.memory_space<vmem>>, vector<1x128xf32>
    %103 = vector.broadcast %102 : vector<1x128xf32> to vector<256x128xf32>
    %104 = arith.addf %101, %103 : vector<256x128xf32>
    %105 = vector.shape_cast %104 : vector<256x128xf32> to vector<16x16x128xf32>
    %c0_50 = arith.constant 0 : index
    %c0_51 = arith.constant 0 : index
    %c0_52 = arith.constant 0 : index
    %c0_53 = arith.constant 0 : index
    %106 = vector.load %arg9[%c0_50, %c0_51, %c0_52, %c0_53] : memref<1x16x16x128xf32, #tpu.memory_space<vmem>>, vector<1x16x16x128xf32>
    %107 = vector.shape_cast %106 : vector<1x16x16x128xf32> to vector<16x16x128xf32>
    %108 = vector.shape_cast %105 : vector<16x16x128xf32> to vector<1x16x16x128xf32>
    tpu.vector_store %arg9[%c0_50, %c0_51, %c0_52, %c0_53], %108 {strides = array<i32>} : memref<1x16x16x128xf32, #tpu.memory_space<vmem>>, vector<1x16x16x128xf32>,
    return
  }
  func.func @transform_0(%arg0: i32, %arg1: i32) -> (i32, i32, i32, i32) {
    %c0_i32 = arith.constant 0 : i32
    %c0_i32_0 = arith.constant 0 : i32
    %c0_i32_1 = arith.constant 0 : i32
    %c0_i32_2 = arith.constant 0 : i32
    return %arg0, %c0_i32, %c0_i32_0, %c0_i32_1 : i32, i32, i32, i32
  }
  func.func @transform_1(%arg0: i32, %arg1: i32) -> (i32, i32, i32, i32) {
    %c0_i32 = arith.constant 0 : i32
    %c0_i32_0 = arith.constant 0 : i32
    %c0_i32_1 = arith.constant 0 : i32
    %c0_i32_2 = arith.constant 0 : i32
    return %arg0, %c0_i32, %c0_i32_0, %c0_i32_1 : i32, i32, i32, i32
  }
  func.func @transform_2(%arg0: i32, %arg1: i32) -> (i32, i32) {
    %c0_i32 = arith.constant 0 : i32
    %c0_i32_0 = arith.constant 0 : i32
    %c0_i32_1 = arith.constant 0 : i32
    return %c0_i32, %c0_i32_0 : i32, i32
  }
  func.func @transform_3(%arg0: i32, %arg1: i32) -> (i32, i32) {
    %c0_i32 = arith.constant 0 : i32
    %c0_i32_0 = arith.constant 0 : i32
    %c0_i32_1 = arith.constant 0 : i32
    return %c0_i32, %c0_i32_0 : i32, i32
  }
  func.func @transform_4(%arg0: i32, %arg1: i32) -> (i32, i32) {
    %c0_i32 = arith.constant 0 : i32
    %c0_i32_0 = arith.constant 0 : i32
    %c0_i32_1 = arith.constant 0 : i32
    return %c0_i32, %c0_i32_0 : i32, i32
  }
  func.func @transform_5(%arg0: i32, %arg1: i32) -> (i32, i32) {
    %c0_i32 = arith.constant 0 : i32
    %c0_i32_0 = arith.constant 0 : i32
    %c0_i32_1 = arith.constant 0 : i32
    return %c0_i32, %c0_i32_0 : i32, i32
  }
  func.func @transform_6(%arg0: i32, %arg1: i32) -> (i32, i32) {
    %c0_i32 = arith.constant 0 : i32
    %c0_i32_0 = arith.constant 0 : i32
    %c0_i32_1 = arith.constant 0 : i32
    return %c0_i32, %c0_i32_0 : i32, i32
  }
  func.func @transform_7(%arg0: i32, %arg1: i32) -> (i32, i32, i32, i32) {
    %c0_i32 = arith.constant 0 : i32
    %c0_i32_0 = arith.constant 0 : i32
    %c0_i32_1 = arith.constant 0 : i32
    return %arg0, %arg1, %c0_i32, %c0_i32_0 : i32, i32, i32, i32
  }
}

</mosaic_0001>

<llo_original>
// kernel: decoder_forward.1
$region0: #{decoder_forward.1}
  #allocation0 [shape = 'u32[]', space=smem, size = 0x4, offset = 0x4, fixed_abs, tag = 'smem constant byte address 0x4 - core index']
  #allocation1 [shape = 'u32[144,128]{1,0:T(1,128)}', space=vmem, size = 0x12000, scoped, tag = 'internal scratch']
  %s0 = inlined_call_operand.vmem [shape: bf16[2,18,18,5], index: 0, kind: input, shape index: {}]
  %s1 = inlined_call_operand.vmem [shape: bf16[2,18,18,4], index: 1, kind: input, shape index: {}]
  %s2 = inlined_call_operand.vmem [shape: bf16[45,256], index: 2, kind: input, shape index: {}]
  %s3 = inlined_call_operand.vmem [shape: bf16[36,256], index: 3, kind: input, shape index: {}]
  %s4 = inlined_call_operand.vmem [shape: f32[1,256], index: 4, kind: input, shape index: {}]
  %s5 = inlined_call_operand.vmem [shape: bf16[256,128], index: 5, kind: input, shape index: {}]
  %s6 = inlined_call_operand.vmem [shape: f32[1,128], index: 6, kind: input, shape index: {}]
  %s7 = inlined_call_operand.vmem [shape: f32[2,16,16,128], index: 7, kind: output, shape index: {}]
  %s8 = sld [smem:[#allocation0]]
  $region61: #{decoder_forward.1} parent=0
    _
  %s10 = ssub.s32 1, %s8
  %s11 = scalar_select 0, %s10, %s8
  loop: start=0, step=1, limit=4
  $region2: #{decoder_forward.1} parent=0 // loop_pre_header
    _
  $region3: #{decoder_forward.1} parent=0 // loop_header
    %s13 = sphi 0, %s17
    %p14 = scmp.ge.s32.totalorder %s13, 4
    %s20 = sphi 0, %s32
    %s21 = sphi 0, %s28
    %s22 = sphi 0, %s20
    %s23 = sphi 0, %s21
    %s24 = sphi 0, %s22
    %s25 = sphi 0, %s23
    %s35 = sphi 0, %s37
    %s38 = sphi 0, %s35
    %s39 = sphi 0, %s38
    %s55 = sphi 0, %s39
    %s61 = sphi 0, %s63
    %s64 = sphi 0, %s61
    %s65 = sphi 0, %s64
    %s81 = sphi 0, %s65
    %s85 = sphi 0, %s85
    %s87 = sphi 0, %s85
    %s88 = sphi 0, %s87
    %s102 = sphi 0, %s88
    %s106 = sphi 0, %s106
    %s108 = sphi 0, %s106
    %s109 = sphi 0, %s108
    %s123 = sphi 0, %s109
    %s127 = sphi 0, %s127
    %s129 = sphi 0, %s127
    %s130 = sphi 0, %s129
    %s144 = sphi 0, %s130
    %s148 = sphi 0, %s148
    %s150 = sphi 0, %s148
    %s151 = sphi 0, %s150
    %s165 = sphi 0, %s151
    %s169 = sphi 0, %s169
    %s171 = sphi 0, %s169
    %s172 = sphi 0, %s171
    %s186 = sphi 0, %s172
    %s194 = sphi 0, %s196
    %s197 = sphi 0, %s194
    %s198 = sphi 0, %s197
    %s214 = sphi 0, %s198
  $region4: #{decoder_forward.1} parent=0 // loop_header_branch
    %16 = sbr.rel (%p14) target = $region8
  $region5: #{decoder_forward.1} parent=0 // loop_body
    %s18 = ssub.s32 %s13, 1
    %s19 = ssub.s32 %s13, 2
    %s26 = sadd.s32 1, %s21
    %p27 = scmp.ge.s32.totalorder %s26, 1
    %s28 = scalar_select %p27, 0, %s26
    %s29 = sadd.s32 1, %s20
    %s30 = scalar_select %p27, %s29, %s20
    %p31 = scmp.ge.s32.totalorder %s30, 2
    %s32 = scalar_select %p31, 0, %s30
    %s33 = ssub.s32 %s20, %s32
    %p34 = scmp.eq.s32.totalorder %s33, 0
    %s36 = sadd.s32 %s35, 1
    %s37 = scalar_select %p34, %s35, %s36
    %p40 = pneg %p34
    %p41 = scmp.eq.s32.totalorder %s13, 1
    %p42 = por %p40, %p41
    %p43 = scmp.ne.s32.totalorder %s35, %s38
    %p44 = scmp.eq.s32.totalorder %s13, 0
    %p45 = por %p43, %p44
    %p46 = scmp.ne.s32.totalorder %s35, %s38
    %p47 = scmp.eq.s32.totalorder %s18, 1
    %p48 = por %p46, %p47
    %p49 = scmp.ne.s32.totalorder %s38, %s39
    %p50 = scmp.eq.s32.totalorder %s18, 0
    %p51 = por %p49, %p50
    %p52 = scmp.ne.s32.totalorder %s38, %s39
    %p53 = scmp.eq.s32.totalorder %s19, 1
    %p54 = por %p52, %p53
    %p56 = scmp.ne.s32.totalorder %s39, %s55
    %p57 = scmp.eq.s32.totalorder %s19, 0
    %p58 = por %p56, %p57
    %s59 = ssub.s32 %s20, %s32
    %p60 = scmp.eq.s32.totalorder %s59, 0
    %s62 = sadd.s32 %s61, 1
    %s63 = scalar_select %p60, %s61, %s62
    %p66 = pneg %p60
    %p67 = scmp.eq.s32.totalorder %s13, 1
    %p68 = por %p66, %p67
    %p69 = scmp.ne.s32.totalorder %s61, %s64
    %p70 = scmp.eq.s32.totalorder %s13, 0
    %p71 = por %p69, %p70
    %p72 = scmp.ne.s32.totalorder %s61, %s64
    %p73 = scmp.eq.s32.totalorder %s18, 1
    %p74 = por %p72, %p73
    %p75 = scmp.ne.s32.totalorder %s64, %s65
    %p76 = scmp.eq.s32.totalorder %s18, 0
    %p77 = por %p75, %p76
    %p78 = scmp.ne.s32.totalorder %s64, %s65
    %p79 = scmp.eq.s32.totalorder %s19, 1
    %p80 = por %p78, %p79
    %p82 = scmp.ne.s32.totalorder %s65, %s81
    %p83 = scmp.eq.s32.totalorder %s19, 0
    %p84 = por %p82, %p83
    %s86 = sadd.s32 %s85, 1
    %p89 = scmp.eq.s32.totalorder %s13, 1
    %p90 = scmp.ne.s32.totalorder %s85, %s87
    %p91 = scmp.eq.s32.totalorder %s13, 0
    %p92 = por %p90, %p91
    %p93 = scmp.ne.s32.totalorder %s85, %s87
    %p94 = scmp.eq.s32.totalorder %s18, 1
    %p95 = por %p93, %p94
    %p96 = scmp.ne.s32.totalorder %s87, %s88
    %p97 = scmp.eq.s32.totalorder %s18, 0
    %p98 = por %p96, %p97
    %p99 = scmp.ne.s32.totalorder %s87, %s88
    %p100 = scmp.eq.s32.totalorder %s19, 1
    %p101 = por %p99, %p100
    %p103 = scmp.ne.s32.totalorder %s88, %s102
    %p104 = scmp.eq.s32.totalorder %s19, 0
    %p105 = por %p103, %p104
    %s107 = sadd.s32 %s106, 1
    %p110 = scmp.eq.s32.totalorder %s13, 1
    %p111 = scmp.ne.s32.totalorder %s106, %s108
    %p112 = scmp.eq.s32.totalorder %s13, 0
    %p113 = por %p111, %p112
    %p114 = scmp.ne.s32.totalorder %s106, %s108
    %p115 = scmp.eq.s32.totalorder %s18, 1
    %p116 = por %p114, %p115
    %p117 = scmp.ne.s32.totalorder %s108, %s109
    %p118 = scmp.eq.s32.totalorder %s18, 0
    %p119 = por %p117, %p118
    %p120 = scmp.ne.s32.totalorder %s108, %s109
    %p121 = scmp.eq.s32.totalorder %s19, 1
    %p122 = por %p120, %p121
    %p124 = scmp.ne.s32.totalorder %s109, %s123
    %p125 = scmp.eq.s32.totalorder %s19, 0
    %p126 = por %p124, %p125
    %s128 = sadd.s32 %s127, 1
    %p131 = scmp.eq.s32.totalorder %s13, 1
    %p132 = scmp.ne.s32.totalorder %s127, %s129
    %p133 = scmp.eq.s32.totalorder %s13, 0
    %p134 = por %p132, %p133
    %p135 = scmp.ne.s32.totalorder %s127, %s129
    %p136 = scmp.eq.s32.totalorder %s18, 1
    %p137 = por %p135, %p136
    %p138 = scmp.ne.s32.totalorder %s129, %s130
    %p139 = scmp.eq.s32.totalorder %s18, 0
    %p140 = por %p138, %p139
    %p141 = scmp.ne.s32.totalorder %s129, %s130
    %p142 = scmp.eq.s32.totalorder %s19, 1
    %p143 = por %p141, %p142
    %p145 = scmp.ne.s32.totalorder %s130, %s144
    %p146 = scmp.eq.s32.totalorder %s19, 0
    %p147 = por %p145, %p146
    %s149 = sadd.s32 %s148, 1
    %p152 = scmp.eq.s32.totalorder %s13, 1
    %p153 = scmp.ne.s32.totalorder %s148, %s150
    %p154 = scmp.eq.s32.totalorder %s13, 0
    %p155 = por %p153, %p154
    %p156 = scmp.ne.s32.totalorder %s148, %s150
    %p157 = scmp.eq.s32.totalorder %s18, 1
    %p158 = por %p156, %p157
    %p159 = scmp.ne.s32.totalorder %s150, %s151
    %p160 = scmp.eq.s32.totalorder %s18, 0
    %p161 = por %p159, %p160
    %p162 = scmp.ne.s32.totalorder %s150, %s151
    %p163 = scmp.eq.s32.totalorder %s19, 1
    %p164 = por %p162, %p163
    %p166 = scmp.ne.s32.totalorder %s151, %s165
    %p167 = scmp.eq.s32.totalorder %s19, 0
    %p168 = por %p166, %p167
    %s170 = sadd.s32 %s169, 1
    %p173 = scmp.eq.s32.totalorder %s13, 1
    %p174 = scmp.ne.s32.totalorder %s169, %s171
    %p175 = scmp.eq.s32.totalorder %s13, 0
    %p176 = por %p174, %p175
    %p177 = scmp.ne.s32.totalorder %s169, %s171
    %p178 = scmp.eq.s32.totalorder %s18, 1
    %p179 = por %p177, %p178
    %p180 = scmp.ne.s32.totalorder %s171, %s172
    %p181 = scmp.eq.s32.totalorder %s18, 0
    %p182 = por %p180, %p181
    %p183 = scmp.ne.s32.totalorder %s171, %s172
    %p184 = scmp.eq.s32.totalorder %s19, 1
    %p185 = por %p183, %p184
    %p187 = scmp.ne.s32.totalorder %s172, %s186
    %p188 = scmp.eq.s32.totalorder %s19, 0
    %p189 = por %p187, %p188
    %s190 = ssub.s32 %s20, %s32
    %s191 = ssub.s32 %s21, %s28
    %s192 = sor.u32 %s190, %s191
    %p193 = scmp.eq.s32.totalorder %s192, 0
    %s195 = sadd.s32 %s194, 1
    %s196 = scalar_select %p193, %s194, %s195
    %p199 = pneg %p193
    %p200 = scmp.eq.s32.totalorder %s13, 1
    %p201 = por %p199, %p200
    %p202 = scmp.ne.s32.totalorder %s194, %s197
    %p203 = scmp.eq.s32.totalorder %s13, 0
    %p204 = por %p202, %p203
    %p205 = scmp.ne.s32.totalorder %s194, %s197
    %p206 = scmp.eq.s32.totalorder %s18, 1
    %p207 = por %p205, %p206
    %p208 = scmp.ne.s32.totalorder %s197, %s198
    %p209 = scmp.eq.s32.totalorder %s18, 0
    %p210 = por %p208, %p209
    %p211 = scmp.ne.s32.totalorder %s197, %s198
    %p212 = scmp.eq.s32.totalorder %s19, 1
    %p213 = por %p211, %p212
    %p215 = scmp.ne.s32.totalorder %s198, %s214
    %p216 = scmp.eq.s32.totalorder %s19, 0
    %p217 = por %p215, %p216
    %p218 = scmp.le.s32.totalorder 1, %s13
    %p219 = scmp.lt.s32.totalorder %s13, 3
    %p220 = pnand %p218, %p219
    %p221 = pneg %p220
    // Predicated region
    $region9: #{decoder_forward.1} parent=5 // pred_check
      _
    $region10: #{decoder_forward.1} parent=5 // pred_check_branch
      %223 = sbr.rel (%p220) target = $region12
    $region11: #{decoder_forward.1} parent=5 // pred_region
      %s224 = ssub.s32 %s13, 1
      // Predicated region
      $region13: #{decoder_forward.1} parent=11 // pred_check
        %p225 = pneg %p98
      $region14: #{decoder_forward.1} parent=11 // pred_check_branch
        %227 = sbr.rel (%p225) target = $region16
      $region15: #{decoder_forward.1} parent=11 // pred_region
        _
      $region16: #{decoder_forward.1} parent=11 // pred_fallthru
        _
      // Predicated region
      $region17: #{decoder_forward.1} parent=11 // pred_check
        %p228 = pneg %p119
      $region18: #{decoder_forward.1} parent=11 // pred_check_branch
        %230 = sbr.rel (%p228) target = $region20
      $region19: #{decoder_forward.1} parent=11 // pred_region
        _
      $region20: #{decoder_forward.1} parent=11 // pred_fallthru
        _
      // Predicated region
      $region21: #{decoder_forward.1} parent=11 // pred_check
        %p231 = pneg %p140
      $region22: #{decoder_forward.1} parent=11 // pred_check_branch
        %233 = sbr.rel (%p231) target = $region24
      $region23: #{decoder_forward.1} parent=11 // pred_region
        _
      $region24: #{decoder_forward.1} parent=11 // pred_fallthru
        _
      // Predicated region
      $region25: #{decoder_forward.1} parent=11 // pred_check
        %p234 = pneg %p161
      $region26: #{decoder_forward.1} parent=11 // pred_check_branch
        %236 = sbr.rel (%p234) target = $region28
      $region27: #{decoder_forward.1} parent=11 // pred_region
        _
      $region28: #{decoder_forward.1} parent=11 // pred_fallthru
        _
      // Predicated region
      $region29: #{decoder_forward.1} parent=11 // pred_check
        %p237 = pneg %p182
      $region30: #{decoder_forward.1} parent=11 // pred_check_branch
        %239 = sbr.rel (%p237) target = $region32
      $region31: #{decoder_forward.1} parent=11 // pred_region
        _
      $region32: #{decoder_forward.1} parent=11 // pred_fallthru
        _
    $region12: #{decoder_forward.1} parent=5 // pred_fallthru
      _
    %p240 = scmp.lt.s32.totalorder %s13, 2
    // Predicated region
    $region33: #{decoder_forward.1} parent=5 // pred_check
      %p241 = pneg %p240
    $region34: #{decoder_forward.1} parent=5 // pred_check_branch
      %243 = sbr.rel (%p241) target = $region36
    $region35: #{decoder_forward.1} parent=5 // pred_region
      // Predicated region
      $region37: #{decoder_forward.1} parent=35 // pred_check
        %p244 = pneg %p45
      $region38: #{decoder_forward.1} parent=35 // pred_check_branch
        %246 = sbr.rel (%p244) target = $region40
      $region39: #{decoder_forward.1} parent=35 // pred_region
        %p247 = scmp.lt.s32.totalorder %s20, 1
        %s248 = scalar_select %p247, %s20, 1
        %s249 = smul.addr %s248, 54
        %s250 = smul.addr %s249, 4
        %s251 = scalar_lea.vmem %s0, %s250
      $region40: #{decoder_forward.1} parent=35 // pred_fallthru
        _
      // Predicated region
      $region41: #{decoder_forward.1} parent=35 // pred_check
        %p252 = pneg %p71
      $region42: #{decoder_forward.1} parent=35 // pred_check_branch
        %254 = sbr.rel (%p252) target = $region44
      $region43: #{decoder_forward.1} parent=35 // pred_region
        %p255 = scmp.lt.s32.totalorder %s20, 1
        %s256 = scalar_select %p255, %s20, 1
        %s257 = smul.addr %s256, 54
        %s258 = smul.addr %s257, 4
        %s259 = scalar_lea.vmem %s1, %s258
      $region44: #{decoder_forward.1} parent=35 // pred_fallthru
        _
    $region36: #{decoder_forward.1} parent=5 // pred_fallthru
      _
    %p260 = scmp.le.s32.totalorder 1, %s13
    %p261 = scmp.lt.s32.totalorder %s13, 3
    %p262 = pnand %p260, %p261
    %p263 = pneg %p262
    // Predicated region
    $region45: #{decoder_forward.1} parent=5 // pred_check
      _
    $region46: #{decoder_forward.1} parent=5 // pred_check_branch
      %265 = sbr.rel (%p262) target = $region48
    $region47: #{decoder_forward.1} parent=5 // pred_region
      %s266 = ssub.s32 %s13, 1
      %p267 = scmp.lt.s32.totalorder %s22, 1
      %s268 = scalar_select %p267, %s22, 1
      %s269 = smul.addr %s268, 54
      %s270 = smul.addr %s269, 4
      %s271 = scalar_lea.vmem %s0, %s270
      %p272 = pneg %p51
      %p273 = pneg %p48
      %p274 = scmp.lt.s32.totalorder %s22, 1
      %s275 = scalar_select %p274, %s22, 1
      %s276 = smul.addr %s275, 54
      %s277 = smul.addr %s276, 4
      %s278 = scalar_lea.vmem %s1, %s277
      %p279 = pneg %p77
      %p280 = pneg %p74
      %p281 = pneg %p98
      %p282 = pneg %p95
      %p283 = pneg %p119
      %p284 = pneg %p116
      %p285 = pneg %p140
      %p286 = pneg %p137
      %p287 = pneg %p161
      %p288 = pneg %p158
      %p289 = pneg %p182
      %p290 = pneg %p179
      %p291 = pneg %p210
      %p292 = pneg %p207
      %s293 = smul.u32 16, %s23
      %p294 = scmp.lt.s32.totalorder %s22, 1
      %s295 = scalar_select %p294, %s22, 1
      %p296 = scmp.lt.s32.totalorder %s293, 15
      %s297 = scalar_select %p296, %s293, 15
      %s298 = smul.addr %s297, 2
      %s299 = smul.addr %s295, 32
      %s300 = sadd.s32 %s298, %s299
      %s301 = smul.addr %s300, 8
      %s302 = scalar_lea.vmem %s7, %s301
      %p303 = scmp.lt.s32.totalorder %s22, 1
      %s304 = scalar_select %p303, %s22, 1
      %s305 = smul.addr %s304, 54
      %s306 = smul.addr %s305, 4
      %s307 = scalar_lea.vmem %s0, %s306
      %p308 = scmp.lt.s32.totalorder %s22, 1
      %s309 = scalar_select %p308, %s22, 1
      %s310 = smul.addr %s309, 54
      %s311 = smul.addr %s310, 4
      %s312 = scalar_lea.vmem %s1, %s311
      %s313 = smul.u32 16, %s23
      %p314 = scmp.lt.s32.totalorder %s22, 1
      %s315 = scalar_select %p314, %s22, 1
      %p316 = scmp.lt.s32.totalorder %s313, 15
      %s317 = scalar_select %p316, %s313, 15
      %s318 = smul.addr %s317, 2
      %s319 = smul.addr %s315, 32
      %s320 = sadd.s32 %s318, %s319
      %s321 = smul.addr %s320, 8
      %s322 = scalar_lea.vmem %s7, %s321
      %s323 = smul.u32 16, %s23
      %s325 = smul.u32 %s23, 16
      %s326 = smul.u32 %s325, 3
      %s327 = smul.addr %s326, 4
      %s328 = scalar_lea.vmem %s307, %s327
      %v329 = vld [vmem:[%s328] sm:$0xf]
      %v330 = vld [vmem:[%s328 + $0x4] sm:$0xf]
      %v331 = vld [vmem:[%s328 + $0x8] sm:$0x1]
      %v332 = vld [vmem:[%s328 + $0xc] sm:$0xf]
      %v333 = vld [vmem:[%s328 + $0x10] sm:$0xf]
      %v334 = vld [vmem:[%s328 + $0x14] sm:$0x1]
      %v335 = vld [vmem:[%s328 + $0x18] sm:$0xf]
      %v336 = vld [vmem:[%s328 + $0x1c] sm:$0xf]
      %v337 = vld [vmem:[%s328 + $0x20] sm:$0x1]
      %v338 = vld [vmem:[%s328 + $0x24] sm:$0xf]
      %v339 = vld [vmem:[%s328 + $0x28] sm:$0xf]
      %v340 = vld [vmem:[%s328 + $0x2c] sm:$0x1]
      %v341 = vld [vmem:[%s328 + $0x30] sm:$0xf]
      %v342 = vld [vmem:[%s328 + $0x34] sm:$0xf]
      %v343 = vld [vmem:[%s328 + $0x38] sm:$0x1]
      %v344 = vld [vmem:[%s328 + $0x3c] sm:$0xf]
      %v345 = vld [vmem:[%s328 + $0x40] sm:$0xf]
      %v346 = vld [vmem:[%s328 + $0x44] sm:$0x1]
      %v347 = vld [vmem:[%s328 + $0x48] sm:$0xf]
      %v348 = vld [vmem:[%s328 + $0x4c] sm:$0xf]
      %v349 = vld [vmem:[%s328 + $0x50] sm:$0x1]
      %v350 = vld [vmem:[%s328 + $0x54] sm:$0xf]
      %v351 = vld [vmem:[%s328 + $0x58] sm:$0xf]
      %v352 = vld [vmem:[%s328 + $0x5c] sm:$0x1]
      %v353 = vld [vmem:[%s328 + $0x60] sm:$0xf]
      %v354 = vld [vmem:[%s328 + $0x64] sm:$0xf]
      %v355 = vld [vmem:[%s328 + $0x68] sm:$0x1]
      %v356 = vld [vmem:[%s328 + $0x6c] sm:$0xf]
      %v357 = vld [vmem:[%s328 + $0x70] sm:$0xf]
      %v358 = vld [vmem:[%s328 + $0x74] sm:$0x1]
      %v359 = vld [vmem:[%s328 + $0x78] sm:$0xf]
      %v360 = vld [vmem:[%s328 + $0x7c] sm:$0xf]
      %v361 = vld [vmem:[%s328 + $0x80] sm:$0x1]
      %v362 = vld [vmem:[%s328 + $0x84] sm:$0xf]
      %v363 = vld [vmem:[%s328 + $0x88] sm:$0xf]
      %v364 = vld [vmem:[%s328 + $0x8c] sm:$0x1]
      %v365 = vld [vmem:[%s328 + $0x90] sm:$0xf]
      %v366 = vld [vmem:[%s328 + $0x94] sm:$0xf]
      %v367 = vld [vmem:[%s328 + $0x98] sm:$0x1]
      %v368 = vld [vmem:[%s328 + $0x9c] sm:$0xf]
      %v369 = vld [vmem:[%s328 + $0xa0] sm:$0xf]
      %v370 = vld [vmem:[%s328 + $0xa4] sm:$0x1]
      %v371 = vld [vmem:[%s328 + $0xa8] sm:$0xf]
      %v372 = vld [vmem:[%s328 + $0xac] sm:$0xf]
      %v373 = vld [vmem:[%s328 + $0xb0] sm:$0x1]
      %v374 = vld [vmem:[%s328 + $0xb4] sm:$0xf]
      %v375 = vld [vmem:[%s328 + $0xb8] sm:$0xf]
      %v376 = vld [vmem:[%s328 + $0xbc] sm:$0x1]
      %v377 = vld [vmem:[%s328 + $0xc0] sm:$0xf]
      %v378 = vld [vmem:[%s328 + $0xc4] sm:$0xf]
      %v379 = vld [vmem:[%s328 + $0xc8] sm:$0x1]
      %v380 = vld [vmem:[%s328 + $0xcc] sm:$0xf]
      %v381 = vld [vmem:[%s328 + $0xd0] sm:$0xf]
      %v382 = vld [vmem:[%s328 + $0xd4] sm:$0x1]
      %s383 = smul.addr %s326, 4
      %s384 = scalar_lea.vmem %s312, %s383
      %v385 = vld [vmem:[%s384] sm:$0xf]
      %v386 = vld [vmem:[%s384 + $0x4] sm:$0xf]
      %v387 = vld [vmem:[%s384 + $0x8] sm:$0x1]
      %v388 = vld [vmem:[%s384 + $0xc] sm:$0xf]
      %v389 = vld [vmem:[%s384 + $0x10] sm:$0xf]
      %v390 = vld [vmem:[%s384 + $0x14] sm:$0x1]
      %v391 = vld [vmem:[%s384 + $0x18] sm:$0xf]
      %v392 = vld [vmem:[%s384 + $0x1c] sm:$0xf]
      %v393 = vld [vmem:[%s384 + $0x20] sm:$0x1]
      %v394 = vld [vmem:[%s384 + $0x24] sm:$0xf]
      %v395 = vld [vmem:[%s384 + $0x28] sm:$0xf]
      %v396 = vld [vmem:[%s384 + $0x2c] sm:$0x1]
      %v397 = vld [vmem:[%s384 + $0x30] sm:$0xf]
      %v398 = vld [vmem:[%s384 + $0x34] sm:$0xf]
      %v399 = vld [vmem:[%s384 + $0x38] sm:$0x1]
      %v400 = vld [vmem:[%s384 + $0x3c] sm:$0xf]
      %v401 = vld [vmem:[%s384 + $0x40] sm:$0xf]
      %v402 = vld [vmem:[%s384 + $0x44] sm:$0x1]
      %v403 = vld [vmem:[%s384 + $0x48] sm:$0xf]
      %v404 = vld [vmem:[%s384 + $0x4c] sm:$0xf]
      %v405 = vld [vmem:[%s384 + $0x50] sm:$0x1]
      %v406 = vld [vmem:[%s384 + $0x54] sm:$0xf]
      %v407 = vld [vmem:[%s384 + $0x58] sm:$0xf]
      %v408 = vld [vmem:[%s384 + $0x5c] sm:$0x1]
      %v409 = vld [vmem:[%s384 + $0x60] sm:$0xf]
      %v410 = vld [vmem:[%s384 + $0x64] sm:$0xf]
      %v411 = vld [vmem:[%s384 + $0x68] sm:$0x1]
      %v412 = vld [vmem:[%s384 + $0x6c] sm:$0xf]
      %v413 = vld [vmem:[%s384 + $0x70] sm:$0xf]
      %v414 = vld [vmem:[%s384 + $0x74] sm:$0x1]
      %v415 = vld [vmem:[%s384 + $0x78] sm:$0xf]
      %v416 = vld [vmem:[%s384 + $0x7c] sm:$0xf]
      %v417 = vld [vmem:[%s384 + $0x80] sm:$0x1]
      %v418 = vld [vmem:[%s384 + $0x84] sm:$0xf]
      %v419 = vld [vmem:[%s384 + $0x88] sm:$0xf]
      %v420 = vld [vmem:[%s384 + $0x8c] sm:$0x1]
      %v421 = vld [vmem:[%s384 + $0x90] sm:$0xf]
      %v422 = vld [vmem:[%s384 + $0x94] sm:$0xf]
      %v423 = vld [vmem:[%s384 + $0x98] sm:$0x1]
      %v424 = vld [vmem:[%s384 + $0x9c] sm:$0xf]
      %v425 = vld [vmem:[%s384 + $0xa0] sm:$0xf]
      %v426 = vld [vmem:[%s384 + $0xa4] sm:$0x1]
      %v427 = vld [vmem:[%s384 + $0xa8] sm:$0xf]
      %v428 = vld [vmem:[%s384 + $0xac] sm:$0xf]
      %v429 = vld [vmem:[%s384 + $0xb0] sm:$0x1]
      %v430 = vld [vmem:[%s384 + $0xb4] sm:$0xf]
      %v431 = vld [vmem:[%s384 + $0xb8] sm:$0xf]
      %v432 = vld [vmem:[%s384 + $0xbc] sm:$0x1]
      %v433 = vld [vmem:[%s384 + $0xc0] sm:$0xf]
      %v434 = vld [vmem:[%s384 + $0xc4] sm:$0xf]
      %v435 = vld [vmem:[%s384 + $0xc8] sm:$0x1]
      %v436 = vld [vmem:[%s384 + $0xcc] sm:$0xf]
      %v437 = vld [vmem:[%s384 + $0xd0] sm:$0xf]
      %v438 = vld [vmem:[%s384 + $0xd4] sm:$0x1]
      %v471 = vunpack.c.l.b16 %v329
      %v472 = vunpack.c.l.b16 %v330
      %v473 = vunpack.c.l.b16 %v332
      %v474 = vunpack.c.l.b16 %v333
      %v475 = vunpack.c.l.b16 %v335
      %v476 = vunpack.c.l.b16 %v336
      %v477 = vunpack.c.l.b16 %v338
      %v478 = vunpack.c.l.b16 %v339
      %v479 = vunpack.c.l.b16 %v341
      %v480 = vunpack.c.l.b16 %v342
      %v481 = vunpack.c.l.b16 %v344
      %v482 = vunpack.c.l.b16 %v345
      %v483 = vunpack.c.l.b16 %v347
      %v484 = vunpack.c.l.b16 %v348
      %v485 = vunpack.c.l.b16 %v350
      %v486 = vunpack.c.l.b16 %v351
      %v487 = vunpack.c.l.b16 %v353
      %v488 = vunpack.c.l.b16 %v354
      %v489 = vunpack.c.l.b16 %v356
      %v490 = vunpack.c.l.b16 %v357
      %v491 = vunpack.c.l.b16 %v359
      %v492 = vunpack.c.l.b16 %v360
      %v493 = vunpack.c.l.b16 %v362
      %v494 = vunpack.c.l.b16 %v363
      %v495 = vunpack.c.l.b16 %v365
      %v496 = vunpack.c.l.b16 %v366
      %v497 = vunpack.c.l.b16 %v368
      %v498 = vunpack.c.l.b16 %v369
      %v499 = vunpack.c.l.b16 %v371
      %v500 = vunpack.c.l.b16 %v372
      %v501 = vunpack.c.l.b16 %v374
      %v502 = vunpack.c.l.b16 %v375
      %v503 = vpack.c.b16 %v472, %v471
      %v504 = vpack.c.b16 %v474, %v473
      %v505 = vpack.c.b16 %v476, %v475
      %v506 = vpack.c.b16 %v478, %v477
      %v507 = vpack.c.b16 %v480, %v479
      %v508 = vpack.c.b16 %v482, %v481
      %v509 = vpack.c.b16 %v484, %v483
      %v510 = vpack.c.b16 %v486, %v485
      %v511 = vpack.c.b16 %v488, %v487
      %v512 = vpack.c.b16 %v490, %v489
      %v513 = vpack.c.b16 %v492, %v491
      %v514 = vpack.c.b16 %v494, %v493
      %v515 = vpack.c.b16 %v496, %v495
      %v516 = vpack.c.b16 %v498, %v497
      %v517 = vpack.c.b16 %v500, %v499
      %v518 = vpack.c.b16 %v502, %v501
      %v535 = vunpack.c.l.b16 %v331
      %v536 = vunpack.c.l.b16 %v334
      %v537 = vunpack.c.l.b16 %v337
      %v538 = vunpack.c.l.b16 %v340
      %v539 = vunpack.c.l.b16 %v343
      %v540 = vunpack.c.l.b16 %v346
      %v541 = vunpack.c.l.b16 %v349
      %v542 = vunpack.c.l.b16 %v352
      %v543 = vunpack.c.l.b16 %v355
      %v544 = vunpack.c.l.b16 %v358
      %v545 = vunpack.c.l.b16 %v361
      %v546 = vunpack.c.l.b16 %v364
      %v547 = vunpack.c.l.b16 %v367
      %v548 = vunpack.c.l.b16 %v370
      %v549 = vunpack.c.l.b16 %v373
      %v550 = vunpack.c.l.b16 %v376
      %v551 = vpack.c.b16 %v535, %v535
      %v552 = vpack.c.b16 %v536, %v536
      %v553 = vpack.c.b16 %v537, %v537
      %v554 = vpack.c.b16 %v538, %v538
      %v555 = vpack.c.b16 %v539, %v539
      %v556 = vpack.c.b16 %v540, %v540
      %v557 = vpack.c.b16 %v541, %v541
      %v558 = vpack.c.b16 %v542, %v542
      %v559 = vpack.c.b16 %v543, %v543
      %v560 = vpack.c.b16 %v544, %v544
      %v561 = vpack.c.b16 %v545, %v545
      %v562 = vpack.c.b16 %v546, %v546
      %v563 = vpack.c.b16 %v547, %v547
      %v564 = vpack.c.b16 %v548, %v548
      %v565 = vpack.c.b16 %v549, %v549
      %v566 = vpack.c.b16 %v550, %v550
      %vm567 = vsmask.f32 7424
      %v569 = vshrl.u32 %v503, 16
      %v571 = vshll.u32 %v503, 16
      %v573 = vrot.slane %v571, 1
      %v574 = vor.u32 %v569, %v573
      %v576 = vshll.u32 %v551, 16
      %v578 = vrot.slane %v576, 1
      %v579 = vsel %vm567, %v574, %v578
      %v581 = vshrl.u32 %v504, 16
      %v583 = vshll.u32 %v504, 16
      %v585 = vrot.slane %v583, 1
      %v586 = vor.u32 %v581, %v585
      %v588 = vshll.u32 %v552, 16
      %v590 = vrot.slane %v588, 1
      %v591 = vsel %vm567, %v586, %v590
      %v593 = vshrl.u32 %v505, 16
      %v595 = vshll.u32 %v505, 16
      %v597 = vrot.slane %v595, 1
      %v598 = vor.u32 %v593, %v597
      %v600 = vshll.u32 %v553, 16
      %v602 = vrot.slane %v600, 1
      %v603 = vsel %vm567, %v598, %v602
      %v605 = vshrl.u32 %v506, 16
      %v607 = vshll.u32 %v506, 16
      %v609 = vrot.slane %v607, 1
      %v610 = vor.u32 %v605, %v609
      %v612 = vshll.u32 %v554, 16
      %v614 = vrot.slane %v612, 1
      %v615 = vsel %vm567, %v610, %v614
      %v617 = vshrl.u32 %v507, 16
      %v619 = vshll.u32 %v507, 16
      %v621 = vrot.slane %v619, 1
      %v622 = vor.u32 %v617, %v621
      %v624 = vshll.u32 %v555, 16
      %v626 = vrot.slane %v624, 1
      %v627 = vsel %vm567, %v622, %v626
      %v629 = vshrl.u32 %v508, 16
      %v631 = vshll.u32 %v508, 16
      %v633 = vrot.slane %v631, 1
      %v634 = vor.u32 %v629, %v633
      %v636 = vshll.u32 %v556, 16
      %v638 = vrot.slane %v636, 1
      %v639 = vsel %vm567, %v634, %v638
      %v641 = vshrl.u32 %v509, 16
      %v643 = vshll.u32 %v509, 16
      %v645 = vrot.slane %v643, 1
      %v646 = vor.u32 %v641, %v645
      %v648 = vshll.u32 %v557, 16
      %v650 = vrot.slane %v648, 1
      %v651 = vsel %vm567, %v646, %v650
      %v653 = vshrl.u32 %v510, 16
      %v655 = vshll.u32 %v510, 16
      %v657 = vrot.slane %v655, 1
      %v658 = vor.u32 %v653, %v657
      %v660 = vshll.u32 %v558, 16
      %v662 = vrot.slane %v660, 1
      %v663 = vsel %vm567, %v658, %v662
      %v665 = vshrl.u32 %v511, 16
      %v667 = vshll.u32 %v511, 16
      %v669 = vrot.slane %v667, 1
      %v670 = vor.u32 %v665, %v669
      %v672 = vshll.u32 %v559, 16
      %v674 = vrot.slane %v672, 1
      %v675 = vsel %vm567, %v670, %v674
      %v677 = vshrl.u32 %v512, 16
      %v679 = vshll.u32 %v512, 16
      %v681 = vrot.slane %v679, 1
      %v682 = vor.u32 %v677, %v681
      %v684 = vshll.u32 %v560, 16
      %v686 = vrot.slane %v684, 1
      %v687 = vsel %vm567, %v682, %v686
      %v689 = vshrl.u32 %v513, 16
      %v691 = vshll.u32 %v513, 16
      %v693 = vrot.slane %v691, 1
      %v694 = vor.u32 %v689, %v693
      %v696 = vshll.u32 %v561, 16
      %v698 = vrot.slane %v696, 1
      %v699 = vsel %vm567, %v694, %v698
      %v701 = vshrl.u32 %v514, 16
      %v703 = vshll.u32 %v514, 16
      %v705 = vrot.slane %v703, 1
      %v706 = vor.u32 %v701, %v705
      %v708 = vshll.u32 %v562, 16
      %v710 = vrot.slane %v708, 1
      %v711 = vsel %vm567, %v706, %v710
      %v713 = vshrl.u32 %v515, 16
      %v715 = vshll.u32 %v515, 16
      %v717 = vrot.slane %v715, 1
      %v718 = vor.u32 %v713, %v717
      %v720 = vshll.u32 %v563, 16
      %v722 = vrot.slane %v720, 1
      %v723 = vsel %vm567, %v718, %v722
      %v725 = vshrl.u32 %v516, 16
      %v727 = vshll.u32 %v516, 16
      %v729 = vrot.slane %v727, 1
      %v730 = vor.u32 %v725, %v729
      %v732 = vshll.u32 %v564, 16
      %v734 = vrot.slane %v732, 1
      %v735 = vsel %vm567, %v730, %v734
      %v737 = vshrl.u32 %v517, 16
      %v739 = vshll.u32 %v517, 16
      %v741 = vrot.slane %v739, 1
      %v742 = vor.u32 %v737, %v741
      %v744 = vshll.u32 %v565, 16
      %v746 = vrot.slane %v744, 1
      %v747 = vsel %vm567, %v742, %v746
      %v749 = vshrl.u32 %v518, 16
      %v751 = vshll.u32 %v518, 16
      %v753 = vrot.slane %v751, 1
      %v754 = vor.u32 %v749, %v753
      %v756 = vshll.u32 %v566, 16
      %v758 = vrot.slane %v756, 1
      %v759 = vsel %vm567, %v754, %v758
      %760 = vrot.lane.b32.xlu0 %v579, 5
      %v761 = vpop.permute.xlu0 %760
      %762 = vrot.lane.b32.xlu0 %v591, 5
      %v763 = vpop.permute.xlu0 %762
      %764 = vrot.lane.b32.xlu0 %v603, 5
      %v765 = vpop.permute.xlu0 %764
      %766 = vrot.lane.b32.xlu0 %v615, 5
      %v767 = vpop.permute.xlu0 %766
      %768 = vrot.lane.b32.xlu0 %v627, 5
      %v769 = vpop.permute.xlu0 %768
      %770 = vrot.lane.b32.xlu0 %v639, 5
      %v771 = vpop.permute.xlu0 %770
      %772 = vrot.lane.b32.xlu0 %v651, 5
      %v773 = vpop.permute.xlu0 %772
      %774 = vrot.lane.b32.xlu0 %v663, 5
      %v775 = vpop.permute.xlu0 %774
      %776 = vrot.lane.b32.xlu0 %v675, 5
      %v777 = vpop.permute.xlu0 %776
      %778 = vrot.lane.b32.xlu0 %v687, 5
      %v779 = vpop.permute.xlu0 %778
      %780 = vrot.lane.b32.xlu0 %v699, 5
      %v781 = vpop.permute.xlu0 %780
      %782 = vrot.lane.b32.xlu0 %v711, 5
      %v783 = vpop.permute.xlu0 %782
      %784 = vrot.lane.b32.xlu0 %v723, 5
      %v785 = vpop.permute.xlu0 %784
      %786 = vrot.lane.b32.xlu0 %v735, 5
      %v787 = vpop.permute.xlu0 %786
      %788 = vrot.lane.b32.xlu0 %v747, 5
      %v789 = vpop.permute.xlu0 %788
      %790 = vrot.lane.b32.xlu0 %v759, 5
      %v791 = vpop.permute.xlu0 %790
      %vm792 = vcmask 1046528
      %v793 = vrot.slane %v503, 1
      %v794 = vrot.slane %v551, 1
      %v795 = vsel %vm792, %v793, %v794
      %v796 = vrot.slane %v504, 1
      %v797 = vrot.slane %v552, 1
      %v798 = vsel %vm792, %v796, %v797
      %v799 = vrot.slane %v505, 1
      %v800 = vrot.slane %v553, 1
      %v801 = vsel %vm792, %v799, %v800
      %v802 = vrot.slane %v506, 1
      %v803 = vrot.slane %v554, 1
      %v804 = vsel %vm792, %v802, %v803
      %v805 = vrot.slane %v507, 1
      %v806 = vrot.slane %v555, 1
      %v807 = vsel %vm792, %v805, %v806
      %v808 = vrot.slane %v508, 1
      %v809 = vrot.slane %v556, 1
      %v810 = vsel %vm792, %v808, %v809
      %v811 = vrot.slane %v509, 1
      %v812 = vrot.slane %v557, 1
      %v813 = vsel %vm792, %v811, %v812
      %v814 = vrot.slane %v510, 1
      %v815 = vrot.slane %v558, 1
      %v816 = vsel %vm792, %v814, %v815
      %v817 = vrot.slane %v511, 1
      %v818 = vrot.slane %v559, 1
      %v819 = vsel %vm792, %v817, %v818
      %v820 = vrot.slane %v512, 1
      %v821 = vrot.slane %v560, 1
      %v822 = vsel %vm792, %v820, %v821
      %v823 = vrot.slane %v513, 1
      %v824 = vrot.slane %v561, 1
      %v825 = vsel %vm792, %v823, %v824
      %v826 = vrot.slane %v514, 1
      %v827 = vrot.slane %v562, 1
      %v828 = vsel %vm792, %v826, %v827
      %v829 = vrot.slane %v515, 1
      %v830 = vrot.slane %v563, 1
      %v831 = vsel %vm792, %v829, %v830
      %v832 = vrot.slane %v516, 1
      %v833 = vrot.slane %v564, 1
      %v834 = vsel %vm792, %v832, %v833
      %v835 = vrot.slane %v517, 1
      %v836 = vrot.slane %v565, 1
      %v837 = vsel %vm792, %v835, %v836
      %v838 = vrot.slane %v518, 1
      %v839 = vrot.slane %v566, 1
      %v840 = vsel %vm792, %v838, %v839
      %841 = vrot.lane.b32.xlu0 %v795, 10
      %v842 = vpop.permute.xlu0 %841
      %843 = vrot.lane.b32.xlu0 %v798, 10
      %v844 = vpop.permute.xlu0 %843
      %845 = vrot.lane.b32.xlu0 %v801, 10
      %v846 = vpop.permute.xlu0 %845
      %847 = vrot.lane.b32.xlu0 %v804, 10
      %v848 = vpop.permute.xlu0 %847
      %849 = vrot.lane.b32.xlu0 %v807, 10
      %v850 = vpop.permute.xlu0 %849
      %851 = vrot.lane.b32.xlu0 %v810, 10
      %v852 = vpop.permute.xlu0 %851
      %853 = vrot.lane.b32.xlu0 %v813, 10
      %v854 = vpop.permute.xlu0 %853
      %855 = vrot.lane.b32.xlu0 %v816, 10
      %v856 = vpop.permute.xlu0 %855
      %857 = vrot.lane.b32.xlu0 %v819, 10
      %v858 = vpop.permute.xlu0 %857
      %859 = vrot.lane.b32.xlu0 %v822, 10
      %v860 = vpop.permute.xlu0 %859
      %861 = vrot.lane.b32.xlu0 %v825, 10
      %v862 = vpop.permute.xlu0 %861
      %863 = vrot.lane.b32.xlu0 %v828, 10
      %v864 = vpop.permute.xlu0 %863
      %865 = vrot.lane.b32.xlu0 %v831, 10
      %v866 = vpop.permute.xlu0 %865
      %867 = vrot.lane.b32.xlu0 %v834, 10
      %v868 = vpop.permute.xlu0 %867
      %869 = vrot.lane.b32.xlu0 %v837, 10
      %v870 = vpop.permute.xlu0 %869
      %871 = vrot.lane.b32.xlu0 %v840, 10
      %v872 = vpop.permute.xlu0 %871
      %v875 = vunpack.c.l.b16 %v377
      %v876 = vunpack.c.l.b16 %v378
      %v877 = vpack.c.b16 %v876, %v875
      %878 = vrot.lane.b32.xlu0 %v504, 15
      %v879 = vpop.permute.xlu0 %878
      %880 = vrot.lane.b32.xlu0 %v505, 15
      %v881 = vpop.permute.xlu0 %880
      %882 = vrot.lane.b32.xlu0 %v506, 15
      %v883 = vpop.permute.xlu0 %882
      %884 = vrot.lane.b32.xlu0 %v507, 15
      %v885 = vpop.permute.xlu0 %884
      %886 = vrot.lane.b32.xlu0 %v508, 15
      %v887 = vpop.permute.xlu0 %886
      %888 = vrot.lane.b32.xlu0 %v509, 15
      %v889 = vpop.permute.xlu0 %888
      %890 = vrot.lane.b32.xlu0 %v510, 15
      %v891 = vpop.permute.xlu0 %890
      %892 = vrot.lane.b32.xlu0 %v511, 15
      %v893 = vpop.permute.xlu0 %892
      %894 = vrot.lane.b32.xlu0 %v512, 15
      %v895 = vpop.permute.xlu0 %894
      %896 = vrot.lane.b32.xlu0 %v513, 15
      %v897 = vpop.permute.xlu0 %896
      %898 = vrot.lane.b32.xlu0 %v514, 15
      %v899 = vpop.permute.xlu0 %898
      %900 = vrot.lane.b32.xlu0 %v515, 15
      %v901 = vpop.permute.xlu0 %900
      %902 = vrot.lane.b32.xlu0 %v516, 15
      %v903 = vpop.permute.xlu0 %902
      %904 = vrot.lane.b32.xlu0 %v517, 15
      %v905 = vpop.permute.xlu0 %904
      %906 = vrot.lane.b32.xlu0 %v518, 15
      %v907 = vpop.permute.xlu0 %906
      %908 = vrot.lane.b32.xlu0 %v877, 15
      %v909 = vpop.permute.xlu0 %908
      %v911 = vunpack.c.l.b16 %v379
      %v912 = vpack.c.b16 %v911, %v911
      %v914 = vshrl.u32 %v877, 16
      %v916 = vshll.u32 %v877, 16
      %v918 = vrot.slane %v916, 1
      %v919 = vor.u32 %v914, %v918
      %v921 = vshll.u32 %v912, 16
      %v923 = vrot.slane %v921, 1
      %v924 = vsel %vm567, %v919, %v923
      %925 = vrot.lane.b32.xlu0 %v591, 20
      %v926 = vpop.permute.xlu0 %925
      %927 = vrot.lane.b32.xlu0 %v603, 20
      %v928 = vpop.permute.xlu0 %927
      %929 = vrot.lane.b32.xlu0 %v615, 20
      %v930 = vpop.permute.xlu0 %929
      %931 = vrot.lane.b32.xlu0 %v627, 20
      %v932 = vpop.permute.xlu0 %931
      %933 = vrot.lane.b32.xlu0 %v639, 20
      %v934 = vpop.permute.xlu0 %933
      %935 = vrot.lane.b32.xlu0 %v651, 20
      %v936 = vpop.permute.xlu0 %935
      %937 = vrot.lane.b32.xlu0 %v663, 20
      %v938 = vpop.permute.xlu0 %937
      %939 = vrot.lane.b32.xlu0 %v675, 20
      %v940 = vpop.permute.xlu0 %939
      %941 = vrot.lane.b32.xlu0 %v687, 20
      %v942 = vpop.permute.xlu0 %941
      %943 = vrot.lane.b32.xlu0 %v699, 20
      %v944 = vpop.permute.xlu0 %943
      %945 = vrot.lane.b32.xlu0 %v711, 20
      %v946 = vpop.permute.xlu0 %945
      %947 = vrot.lane.b32.xlu0 %v723, 20
      %v948 = vpop.permute.xlu0 %947
      %949 = vrot.lane.b32.xlu0 %v735, 20
      %v950 = vpop.permute.xlu0 %949
      %951 = vrot.lane.b32.xlu0 %v747, 20
      %v952 = vpop.permute.xlu0 %951
      %953 = vrot.lane.b32.xlu0 %v759, 20
      %v954 = vpop.permute.xlu0 %953
      %955 = vrot.lane.b32.xlu0 %v924, 20
      %v956 = vpop.permute.xlu0 %955
      %v957 = vrot.slane %v877, 1
      %v958 = vrot.slane %v912, 1
      %v959 = vsel %vm792, %v957, %v958
      %960 = vrot.lane.b32.xlu0 %v798, 25
      %v961 = vpop.permute.xlu0 %960
      %962 = vrot.lane.b32.xlu0 %v801, 25
      %v963 = vpop.permute.xlu0 %962
      %964 = vrot.lane.b32.xlu0 %v804, 25
      %v965 = vpop.permute.xlu0 %964
      %966 = vrot.lane.b32.xlu0 %v807, 25
      %v967 = vpop.permute.xlu0 %966
      %968 = vrot.lane.b32.xlu0 %v810, 25
      %v969 = vpop.permute.xlu0 %968
      %970 = vrot.lane.b32.xlu0 %v813, 25
      %v971 = vpop.permute.xlu0 %970
      %972 = vrot.lane.b32.xlu0 %v816, 25
      %v973 = vpop.permute.xlu0 %972
      %974 = vrot.lane.b32.xlu0 %v819, 25
      %v975 = vpop.permute.xlu0 %974
      %976 = vrot.lane.b32.xlu0 %v822, 25
      %v977 = vpop.permute.xlu0 %976
      %978 = vrot.lane.b32.xlu0 %v825, 25
      %v979 = vpop.permute.xlu0 %978
      %980 = vrot.lane.b32.xlu0 %v828, 25
      %v981 = vpop.permute.xlu0 %980
      %982 = vrot.lane.b32.xlu0 %v831, 25
      %v983 = vpop.permute.xlu0 %982
      %984 = vrot.lane.b32.xlu0 %v834, 25
      %v985 = vpop.permute.xlu0 %984
      %986 = vrot.lane.b32.xlu0 %v837, 25
      %v987 = vpop.permute.xlu0 %986
      %988 = vrot.lane.b32.xlu0 %v840, 25
      %v989 = vpop.permute.xlu0 %988
      %990 = vrot.lane.b32.xlu0 %v959, 25
      %v991 = vpop.permute.xlu0 %990
      %v994 = vunpack.c.l.b16 %v380
      %v995 = vunpack.c.l.b16 %v381
      %v996 = vpack.c.b16 %v995, %v994
      %997 = vrot.lane.b32.xlu0 %v505, 30
      %v998 = vpop.permute.xlu0 %997
      %999 = vrot.lane.b32.xlu0 %v506, 30
      %v1000 = vpop.permute.xlu0 %999
      %1001 = vrot.lane.b32.xlu0 %v507, 30
      %v1002 = vpop.permute.xlu0 %1001
      %1003 = vrot.lane.b32.xlu0 %v508, 30
      %v1004 = vpop.permute.xlu0 %1003
      %1005 = vrot.lane.b32.xlu0 %v509, 30
      %v1006 = vpop.permute.xlu0 %1005
      %1007 = vrot.lane.b32.xlu0 %v510, 30
      %v1008 = vpop.permute.xlu0 %1007
      %1009 = vrot.lane.b32.xlu0 %v511, 30
      %v1010 = vpop.permute.xlu0 %1009
      %1011 = vrot.lane.b32.xlu0 %v512, 30
      %v1012 = vpop.permute.xlu0 %1011
      %1013 = vrot.lane.b32.xlu0 %v513, 30
      %v1014 = vpop.permute.xlu0 %1013
      %1015 = vrot.lane.b32.xlu0 %v514, 30
      %v1016 = vpop.permute.xlu0 %1015
      %1017 = vrot.lane.b32.xlu0 %v515, 30
      %v1018 = vpop.permute.xlu0 %1017
      %1019 = vrot.lane.b32.xlu0 %v516, 30
      %v1020 = vpop.permute.xlu0 %1019
      %1021 = vrot.lane.b32.xlu0 %v517, 30
      %v1022 = vpop.permute.xlu0 %1021
      %1023 = vrot.lane.b32.xlu0 %v518, 30
      %v1024 = vpop.permute.xlu0 %1023
      %1025 = vrot.lane.b32.xlu0 %v877, 30
      %v1026 = vpop.permute.xlu0 %1025
      %1027 = vrot.lane.b32.xlu0 %v996, 30
      %v1028 = vpop.permute.xlu0 %1027
      %v1030 = vunpack.c.l.b16 %v382
      %v1031 = vpack.c.b16 %v1030, %v1030
      %v1033 = vshrl.u32 %v996, 16
      %v1035 = vshll.u32 %v996, 16
      %v1037 = vrot.slane %v1035, 1
      %v1038 = vor.u32 %v1033, %v1037
      %v1040 = vshll.u32 %v1031, 16
      %v1042 = vrot.slane %v1040, 1
      %v1043 = vsel %vm567, %v1038, %v1042
      %1044 = vrot.lane.b32.xlu0 %v603, 35
      %v1045 = vpop.permute.xlu0 %1044
      %1046 = vrot.lane.b32.xlu0 %v615, 35
      %v1047 = vpop.permute.xlu0 %1046
      %1048 = vrot.lane.b32.xlu0 %v627, 35
      %v1049 = vpop.permute.xlu0 %1048
      %1050 = vrot.lane.b32.xlu0 %v639, 35
      %v1051 = vpop.permute.xlu0 %1050
      %1052 = vrot.lane.b32.xlu0 %v651, 35
      %v1053 = vpop.permute.xlu0 %1052
      %1054 = vrot.lane.b32.xlu0 %v663, 35
      %v1055 = vpop.permute.xlu0 %1054
      %1056 = vrot.lane.b32.xlu0 %v675, 35
      %v1057 = vpop.permute.xlu0 %1056
      %1058 = vrot.lane.b32.xlu0 %v687, 35
      %v1059 = vpop.permute.xlu0 %1058
      %1060 = vrot.lane.b32.xlu0 %v699, 35
      %v1061 = vpop.permute.xlu0 %1060
      %1062 = vrot.lane.b32.xlu0 %v711, 35
      %v1063 = vpop.permute.xlu0 %1062
      %1064 = vrot.lane.b32.xlu0 %v723, 35
      %v1065 = vpop.permute.xlu0 %1064
      %1066 = vrot.lane.b32.xlu0 %v735, 35
      %v1067 = vpop.permute.xlu0 %1066
      %1068 = vrot.lane.b32.xlu0 %v747, 35
      %v1069 = vpop.permute.xlu0 %1068
      %1070 = vrot.lane.b32.xlu0 %v759, 35
      %v1071 = vpop.permute.xlu0 %1070
      %1072 = vrot.lane.b32.xlu0 %v924, 35
      %v1073 = vpop.permute.xlu0 %1072
      %1074 = vrot.lane.b32.xlu0 %v1043, 35
      %v1075 = vpop.permute.xlu0 %1074
      %v1076 = vrot.slane %v996, 1
      %v1077 = vrot.slane %v1031, 1
      %v1078 = vsel %vm792, %v1076, %v1077
      %1079 = vrot.lane.b32.xlu0 %v801, 40
      %v1080 = vpop.permute.xlu0 %1079
      %1081 = vrot.lane.b32.xlu0 %v804, 40
      %v1082 = vpop.permute.xlu0 %1081
      %1083 = vrot.lane.b32.xlu0 %v807, 40
      %v1084 = vpop.permute.xlu0 %1083
      %1085 = vrot.lane.b32.xlu0 %v810, 40
      %v1086 = vpop.permute.xlu0 %1085
      %1087 = vrot.lane.b32.xlu0 %v813, 40
      %v1088 = vpop.permute.xlu0 %1087
      %1089 = vrot.lane.b32.xlu0 %v816, 40
      %v1090 = vpop.permute.xlu0 %1089
      %1091 = vrot.lane.b32.xlu0 %v819, 40
      %v1092 = vpop.permute.xlu0 %1091
      %1093 = vrot.lane.b32.xlu0 %v822, 40
      %v1094 = vpop.permute.xlu0 %1093
      %1095 = vrot.lane.b32.xlu0 %v825, 40
      %v1096 = vpop.permute.xlu0 %1095
      %1097 = vrot.lane.b32.xlu0 %v828, 40
      %v1098 = vpop.permute.xlu0 %1097
      %1099 = vrot.lane.b32.xlu0 %v831, 40
      %v1100 = vpop.permute.xlu0 %1099
      %1101 = vrot.lane.b32.xlu0 %v834, 40
      %v1102 = vpop.permute.xlu0 %1101
      %1103 = vrot.lane.b32.xlu0 %v837, 40
      %v1104 = vpop.permute.xlu0 %1103
      %1105 = vrot.lane.b32.xlu0 %v840, 40
      %v1106 = vpop.permute.xlu0 %1105
      %1107 = vrot.lane.b32.xlu0 %v959, 40
      %v1108 = vpop.permute.xlu0 %1107
      %1109 = vrot.lane.b32.xlu0 %v1078, 40
      %v1110 = vpop.permute.xlu0 %1109
      %vm1111 = vcmask 39936
      %v1113 = vsel %vm1111, %v503, %v761
      %v1115 = vsel %vm1111, %v504, %v763
      %v1117 = vsel %vm1111, %v505, %v765
      %v1119 = vsel %vm1111, %v506, %v767
      %v1121 = vsel %vm1111, %v507, %v769
      %v1123 = vsel %vm1111, %v508, %v771
      %v1125 = vsel %vm1111, %v509, %v773
      %v1127 = vsel %vm1111, %v510, %v775
      %v1129 = vsel %vm1111, %v511, %v777
      %v1131 = vsel %vm1111, %v512, %v779
      %v1133 = vsel %vm1111, %v513, %v781
      %v1135 = vsel %vm1111, %v514, %v783
      %v1137 = vsel %vm1111, %v515, %v785
      %v1139 = vsel %vm1111, %v516, %v787
      %v1141 = vsel %vm1111, %v517, %v789
      %v1143 = vsel %vm1111, %v518, %v791
      %vm1144 = vcmask 80896
      %v1146 = vsel %vm1144, %v1113, %v842
      %v1148 = vsel %vm1144, %v1115, %v844
      %v1150 = vsel %vm1144, %v1117, %v846
      %v1152 = vsel %vm1144, %v1119, %v848
      %v1154 = vsel %vm1144, %v1121, %v850
      %v1156 = vsel %vm1144, %v1123, %v852
      %v1158 = vsel %vm1144, %v1125, %v854
      %v1160 = vsel %vm1144, %v1127, %v856
      %v1162 = vsel %vm1144, %v1129, %v858
      %v1164 = vsel %vm1144, %v1131, %v860
      %v1166 = vsel %vm1144, %v1133, %v862
      %v1168 = vsel %vm1144, %v1135, %v864
      %v1170 = vsel %vm1144, %v1137, %v866
      %v1172 = vsel %vm1144, %v1139, %v868
      %v1174 = vsel %vm1144, %v1141, %v870
      %v1176 = vsel %vm1144, %v1143, %v872
      %vm1177 = vcmask 121856
      %v1179 = vsel %vm1177, %v1146, %v879
      %v1181 = vsel %vm1177, %v1148, %v881
      %v1183 = vsel %vm1177, %v1150, %v883
      %v1185 = vsel %vm1177, %v1152, %v885
      %v1187 = vsel %vm1177, %v1154, %v887
      %v1189 = vsel %vm1177, %v1156, %v889
      %v1191 = vsel %vm1177, %v1158, %v891
      %v1193 = vsel %vm1177, %v1160, %v893
      %v1195 = vsel %vm1177, %v1162, %v895
      %v1197 = vsel %vm1177, %v1164, %v897
      %v1199 = vsel %vm1177, %v1166, %v899
      %v1201 = vsel %vm1177, %v1168, %v901
      %v1203 = vsel %vm1177, %v1170, %v903
      %v1205 = vsel %vm1177, %v1172, %v905
      %v1207 = vsel %vm1177, %v1174, %v907
      %v1209 = vsel %vm1177, %v1176, %v909
      %vm1210 = vcmask 162816
      %v1212 = vsel %vm1210, %v1179, %v926
      %v1214 = vsel %vm1210, %v1181, %v928
      %v1216 = vsel %vm1210, %v1183, %v930
      %v1218 = vsel %vm1210, %v1185, %v932
      %v1220 = vsel %vm1210, %v1187, %v934
      %v1222 = vsel %vm1210, %v1189, %v936
      %v1224 = vsel %vm1210, %v1191, %v938
      %v1226 = vsel %vm1210, %v1193, %v940
      %v1228 = vsel %vm1210, %v1195, %v942
      %v1230 = vsel %vm1210, %v1197, %v944
      %v1232 = vsel %vm1210, %v1199, %v946
      %v1234 = vsel %vm1210, %v1201, %v948
      %v1236 = vsel %vm1210, %v1203, %v950
      %v1238 = vsel %vm1210, %v1205, %v952
      %v1240 = vsel %vm1210, %v1207, %v954
      %v1242 = vsel %vm1210, %v1209, %v956
      %vm1243 = vcmask 203776
      %v1245 = vsel %vm1243, %v1212, %v961
      %v1247 = vsel %vm1243, %v1214, %v963
      %v1249 = vsel %vm1243, %v1216, %v965
      %v1251 = vsel %vm1243, %v1218, %v967
      %v1253 = vsel %vm1243, %v1220, %v969
      %v1255 = vsel %vm1243, %v1222, %v971
      %v1257 = vsel %vm1243, %v1224, %v973
      %v1259 = vsel %vm1243, %v1226, %v975
      %v1261 = vsel %vm1243, %v1228, %v977
      %v1263 = vsel %vm1243, %v1230, %v979
      %v1265 = vsel %vm1243, %v1232, %v981
      %v1267 = vsel %vm1243, %v1234, %v983
      %v1269 = vsel %vm1243, %v1236, %v985
      %v1271 = vsel %vm1243, %v1238, %v987
      %v1273 = vsel %vm1243, %v1240, %v989
      %v1275 = vsel %vm1243, %v1242, %v991
      %vm1276 = vcmask 244736
      %v1278 = vsel %vm1276, %v1245, %v998
      %v1280 = vsel %vm1276, %v1247, %v1000
      %v1282 = vsel %vm1276, %v1249, %v1002
      %v1284 = vsel %vm1276, %v1251, %v1004
      %v1286 = vsel %vm1276, %v1253, %v1006
      %v1288 = vsel %vm1276, %v1255, %v1008
      %v1290 = vsel %vm1276, %v1257, %v1010
      %v1292 = vsel %vm1276, %v1259, %v1012
      %v1294 = vsel %vm1276, %v1261, %v1014
      %v1296 = vsel %vm1276, %v1263, %v1016
      %v1298 = vsel %vm1276, %v1265, %v1018
      %v1300 = vsel %vm1276, %v1267, %v1020
      %v1302 = vsel %vm1276, %v1269, %v1022
      %v1304 = vsel %vm1276, %v1271, %v1024
      %v1306 = vsel %vm1276, %v1273, %v1026
      %v1308 = vsel %vm1276, %v1275, %v1028
      %vm1309 = vcmask 285696
      %v1311 = vsel %vm1309, %v1278, %v1045
      %v1313 = vsel %vm1309, %v1280, %v1047
      %v1315 = vsel %vm1309, %v1282, %v1049
      %v1317 = vsel %vm1309, %v1284, %v1051
      %v1319 = vsel %vm1309, %v1286, %v1053
      %v1321 = vsel %vm1309, %v1288, %v1055
      %v1323 = vsel %vm1309, %v1290, %v1057
      %v1325 = vsel %vm1309, %v1292, %v1059
      %v1327 = vsel %vm1309, %v1294, %v1061
      %v1329 = vsel %vm1309, %v1296, %v1063
      %v1331 = vsel %vm1309, %v1298, %v1065
      %v1333 = vsel %vm1309, %v1300, %v1067
      %v1335 = vsel %vm1309, %v1302, %v1069
      %v1337 = vsel %vm1309, %v1304, %v1071
      %v1339 = vsel %vm1309, %v1306, %v1073
      %v1341 = vsel %vm1309, %v1308, %v1075
      %vm1342 = vcmask 326656
      %v1344 = vsel %vm1342, %v1311, %v1080
      %v1346 = vsel %vm1342, %v1313, %v1082
      %v1348 = vsel %vm1342, %v1315, %v1084
      %v1350 = vsel %vm1342, %v1317, %v1086
      %v1352 = vsel %vm1342, %v1319, %v1088
      %v1354 = vsel %vm1342, %v1321, %v1090
      %v1356 = vsel %vm1342, %v1323, %v1092
      %v1358 = vsel %vm1342, %v1325, %v1094
      %v1360 = vsel %vm1342, %v1327, %v1096
      %v1362 = vsel %vm1342, %v1329, %v1098
      %v1364 = vsel %vm1342, %v1331, %v1100
      %v1366 = vsel %vm1342, %v1333, %v1102
      %v1368 = vsel %vm1342, %v1335, %v1104
      %v1370 = vsel %vm1342, %v1337, %v1106
      %v1372 = vsel %vm1342, %v1339, %v1108
      %v1374 = vsel %vm1342, %v1341, %v1110
      %v1375 = vld [vmem:[%s2] sm:$0xff]
      %v1376 = vld [vmem:[%s2 + $0x8] sm:$0xff]
      %v1377 = vld [vmem:[%s2 + $0x10] sm:$0xff]
      %v1378 = vld [vmem:[%s2 + $0x18] sm:$0xff]
      %v1379 = vld [vmem:[%s2 + $0x20] sm:$0xff]
      %v1380 = vld [vmem:[%s2 + $0x28] sm:$0x77]
      %v1413 = vunpack.c.l.b16 %v385
      %v1414 = vunpack.c.l.b16 %v386
      %v1415 = vunpack.c.l.b16 %v388
      %v1416 = vunpack.c.l.b16 %v389
      %v1417 = vunpack.c.l.b16 %v391
      %v1418 = vunpack.c.l.b16 %v392
      %v1419 = vunpack.c.l.b16 %v394
      %v1420 = vunpack.c.l.b16 %v395
      %v1421 = vunpack.c.l.b16 %v397
      %v1422 = vunpack.c.l.b16 %v398
      %v1423 = vunpack.c.l.b16 %v400
      %v1424 = vunpack.c.l.b16 %v401
      %v1425 = vunpack.c.l.b16 %v403
      %v1426 = vunpack.c.l.b16 %v404
      %v1427 = vunpack.c.l.b16 %v406
      %v1428 = vunpack.c.l.b16 %v407
      %v1429 = vunpack.c.l.b16 %v409
      %v1430 = vunpack.c.l.b16 %v410
      %v1431 = vunpack.c.l.b16 %v412
      %v1432 = vunpack.c.l.b16 %v413
      %v1433 = vunpack.c.l.b16 %v415
      %v1434 = vunpack.c.l.b16 %v416
      %v1435 = vunpack.c.l.b16 %v418
      %v1436 = vunpack.c.l.b16 %v419
      %v1437 = vunpack.c.l.b16 %v421
      %v1438 = vunpack.c.l.b16 %v422
      %v1439 = vunpack.c.l.b16 %v424
      %v1440 = vunpack.c.l.b16 %v425
      %v1441 = vunpack.c.l.b16 %v427
      %v1442 = vunpack.c.l.b16 %v428
      %v1443 = vunpack.c.l.b16 %v430
      %v1444 = vunpack.c.l.b16 %v431
      %v1445 = vpack.c.b16 %v1414, %v1413
      %v1446 = vpack.c.b16 %v1416, %v1415
      %v1447 = vpack.c.b16 %v1418, %v1417
      %v1448 = vpack.c.b16 %v1420, %v1419
      %v1449 = vpack.c.b16 %v1422, %v1421
      %v1450 = vpack.c.b16 %v1424, %v1423
      %v1451 = vpack.c.b16 %v1426, %v1425
      %v1452 = vpack.c.b16 %v1428, %v1427
      %v1453 = vpack.c.b16 %v1430, %v1429
      %v1454 = vpack.c.b16 %v1432, %v1431
      %v1455 = vpack.c.b16 %v1434, %v1433
      %v1456 = vpack.c.b16 %v1436, %v1435
      %v1457 = vpack.c.b16 %v1438, %v1437
      %v1458 = vpack.c.b16 %v1440, %v1439
      %v1459 = vpack.c.b16 %v1442, %v1441
      %v1460 = vpack.c.b16 %v1444, %v1443
      %v1477 = vunpack.c.l.b16 %v387
      %v1478 = vunpack.c.l.b16 %v390
      %v1479 = vunpack.c.l.b16 %v393
      %v1480 = vunpack.c.l.b16 %v396
      %v1481 = vunpack.c.l.b16 %v399
      %v1482 = vunpack.c.l.b16 %v402
      %v1483 = vunpack.c.l.b16 %v405
      %v1484 = vunpack.c.l.b16 %v408
      %v1485 = vunpack.c.l.b16 %v411
      %v1486 = vunpack.c.l.b16 %v414
      %v1487 = vunpack.c.l.b16 %v417
      %v1488 = vunpack.c.l.b16 %v420
      %v1489 = vunpack.c.l.b16 %v423
      %v1490 = vunpack.c.l.b16 %v426
      %v1491 = vunpack.c.l.b16 %v429
      %v1492 = vunpack.c.l.b16 %v432
      %v1493 = vpack.c.b16 %v1477, %v1477
      %v1494 = vpack.c.b16 %v1478, %v1478
      %v1495 = vpack.c.b16 %v1479, %v1479
      %v1496 = vpack.c.b16 %v1480, %v1480
      %v1497 = vpack.c.b16 %v1481, %v1481
      %v1498 = vpack.c.b16 %v1482, %v1482
      %v1499 = vpack.c.b16 %v1483, %v1483
      %v1500 = vpack.c.b16 %v1484, %v1484
      %v1501 = vpack.c.b16 %v1485, %v1485
      %v1502 = vpack.c.b16 %v1486, %v1486
      %v1503 = vpack.c.b16 %v1487, %v1487
      %v1504 = vpack.c.b16 %v1488, %v1488
      %v1505 = vpack.c.b16 %v1489, %v1489
      %v1506 = vpack.c.b16 %v1490, %v1490
      %v1507 = vpack.c.b16 %v1491, %v1491
      %v1508 = vpack.c.b16 %v1492, %v1492
      %v1510 = vshrl.u32 %v1445, 16
      %v1512 = vshll.u32 %v1445, 16
      %v1514 = vrot.slane %v1512, 1
      %v1515 = vor.u32 %v1510, %v1514
      %v1517 = vshll.u32 %v1493, 16
      %v1519 = vrot.slane %v1517, 1
      %v1520 = vsel %vm567, %v1515, %v1519
      %v1522 = vshrl.u32 %v1446, 16
      %v1524 = vshll.u32 %v1446, 16
      %v1526 = vrot.slane %v1524, 1
      %v1527 = vor.u32 %v1522, %v1526
      %v1529 = vshll.u32 %v1494, 16
      %v1531 = vrot.slane %v1529, 1
      %v1532 = vsel %vm567, %v1527, %v1531
      %v1534 = vshrl.u32 %v1447, 16
      %v1536 = vshll.u32 %v1447, 16
      %v1538 = vrot.slane %v1536, 1
      %v1539 = vor.u32 %v1534, %v1538
      %v1541 = vshll.u32 %v1495, 16
      %v1543 = vrot.slane %v1541, 1
      %v1544 = vsel %vm567, %v1539, %v1543
      %v1546 = vshrl.u32 %v1448, 16
      %v1548 = vshll.u32 %v1448, 16
      %v1550 = vrot.slane %v1548, 1
      %v1551 = vor.u32 %v1546, %v1550
      %v1553 = vshll.u32 %v1496, 16
      %v1555 = vrot.slane %v1553, 1
      %v1556 = vsel %vm567, %v1551, %v1555
      %v1558 = vshrl.u32 %v1449, 16
      %v1560 = vshll.u32 %v1449, 16
      %v1562 = vrot.slane %v1560, 1
      %v1563 = vor.u32 %v1558, %v1562
      %v1565 = vshll.u32 %v1497, 16
      %v1567 = vrot.slane %v1565, 1
      %v1568 = vsel %vm567, %v1563, %v1567
      %v1570 = vshrl.u32 %v1450, 16
      %v1572 = vshll.u32 %v1450, 16
      %v1574 = vrot.slane %v1572, 1
      %v1575 = vor.u32 %v1570, %v1574
      %v1577 = vshll.u32 %v1498, 16
      %v1579 = vrot.slane %v1577, 1
      %v1580 = vsel %vm567, %v1575, %v1579
      %v1582 = vshrl.u32 %v1451, 16
      %v1584 = vshll.u32 %v1451, 16
      %v1586 = vrot.slane %v1584, 1
      %v1587 = vor.u32 %v1582, %v1586
      %v1589 = vshll.u32 %v1499, 16
      %v1591 = vrot.slane %v1589, 1
      %v1592 = vsel %vm567, %v1587, %v1591
      %v1594 = vshrl.u32 %v1452, 16
      %v1596 = vshll.u32 %v1452, 16
      %v1598 = vrot.slane %v1596, 1
      %v1599 = vor.u32 %v1594, %v1598
      %v1601 = vshll.u32 %v1500, 16
      %v1603 = vrot.slane %v1601, 1
      %v1604 = vsel %vm567, %v1599, %v1603
      %v1606 = vshrl.u32 %v1453, 16
      %v1608 = vshll.u32 %v1453, 16
      %v1610 = vrot.slane %v1608, 1
      %v1611 = vor.u32 %v1606, %v1610
      %v1613 = vshll.u32 %v1501, 16
      %v1615 = vrot.slane %v1613, 1
      %v1616 = vsel %vm567, %v1611, %v1615
      %v1618 = vshrl.u32 %v1454, 16
      %v1620 = vshll.u32 %v1454, 16
      %v1622 = vrot.slane %v1620, 1
      %v1623 = vor.u32 %v1618, %v1622
      %v1625 = vshll.u32 %v1502, 16
      %v1627 = vrot.slane %v1625, 1
      %v1628 = vsel %vm567, %v1623, %v1627
      %v1630 = vshrl.u32 %v1455, 16
      %v1632 = vshll.u32 %v1455, 16
      %v1634 = vrot.slane %v1632, 1
      %v1635 = vor.u32 %v1630, %v1634
      %v1637 = vshll.u32 %v1503, 16
      %v1639 = vrot.slane %v1637, 1
      %v1640 = vsel %vm567, %v1635, %v1639
      %v1642 = vshrl.u32 %v1456, 16
      %v1644 = vshll.u32 %v1456, 16
      %v1646 = vrot.slane %v1644, 1
      %v1647 = vor.u32 %v1642, %v1646
      %v1649 = vshll.u32 %v1504, 16
      %v1651 = vrot.slane %v1649, 1
      %v1652 = vsel %vm567, %v1647, %v1651
      %v1654 = vshrl.u32 %v1457, 16
      %v1656 = vshll.u32 %v1457, 16
      %v1658 = vrot.slane %v1656, 1
      %v1659 = vor.u32 %v1654, %v1658
      %v1661 = vshll.u32 %v1505, 16
      %v1663 = vrot.slane %v1661, 1
      %v1664 = vsel %vm567, %v1659, %v1663
      %v1666 = vshrl.u32 %v1458, 16
      %v1668 = vshll.u32 %v1458, 16
      %v1670 = vrot.slane %v1668, 1
      %v1671 = vor.u32 %v1666, %v1670
      %v1673 = vshll.u32 %v1506, 16
      %v1675 = vrot.slane %v1673, 1
      %v1676 = vsel %vm567, %v1671, %v1675
      %v1678 = vshrl.u32 %v1459, 16
      %v1680 = vshll.u32 %v1459, 16
      %v1682 = vrot.slane %v1680, 1
      %v1683 = vor.u32 %v1678, %v1682
      %v1685 = vshll.u32 %v1507, 16
      %v1687 = vrot.slane %v1685, 1
      %v1688 = vsel %vm567, %v1683, %v1687
      %v1690 = vshrl.u32 %v1460, 16
      %v1692 = vshll.u32 %v1460, 16
      %v1694 = vrot.slane %v1692, 1
      %v1695 = vor.u32 %v1690, %v1694
      %v1697 = vshll.u32 %v1508, 16
      %v1699 = vrot.slane %v1697, 1
      %v1700 = vsel %vm567, %v1695, %v1699
      %1701 = vrot.lane.b32.xlu0 %v1520, 4
      %v1702 = vpop.permute.xlu0 %1701
      %1703 = vrot.lane.b32.xlu0 %v1532, 4
      %v1704 = vpop.permute.xlu0 %1703
      %1705 = vrot.lane.b32.xlu0 %v1544, 4
      %v1706 = vpop.permute.xlu0 %1705
      %1707 = vrot.lane.b32.xlu0 %v1556, 4
      %v1708 = vpop.permute.xlu0 %1707
      %1709 = vrot.lane.b32.xlu0 %v1568, 4
      %v1710 = vpop.permute.xlu0 %1709
      %1711 = vrot.lane.b32.xlu0 %v1580, 4
      %v1712 = vpop.permute.xlu0 %1711
      %1713 = vrot.lane.b32.xlu0 %v1592, 4
      %v1714 = vpop.permute.xlu0 %1713
      %1715 = vrot.lane.b32.xlu0 %v1604, 4
      %v1716 = vpop.permute.xlu0 %1715
      %1717 = vrot.lane.b32.xlu0 %v1616, 4
      %v1718 = vpop.permute.xlu0 %1717
      %1719 = vrot.lane.b32.xlu0 %v1628, 4
      %v1720 = vpop.permute.xlu0 %1719
      %1721 = vrot.lane.b32.xlu0 %v1640, 4
      %v1722 = vpop.permute.xlu0 %1721
      %1723 = vrot.lane.b32.xlu0 %v1652, 4
      %v1724 = vpop.permute.xlu0 %1723
      %1725 = vrot.lane.b32.xlu0 %v1664, 4
      %v1726 = vpop.permute.xlu0 %1725
      %1727 = vrot.lane.b32.xlu0 %v1676, 4
      %v1728 = vpop.permute.xlu0 %1727
      %1729 = vrot.lane.b32.xlu0 %v1688, 4
      %v1730 = vpop.permute.xlu0 %1729
      %1731 = vrot.lane.b32.xlu0 %v1700, 4
      %v1732 = vpop.permute.xlu0 %1731
      %v1733 = vrot.slane %v1445, 1
      %v1734 = vrot.slane %v1493, 1
      %v1735 = vsel %vm792, %v1733, %v1734
      %v1736 = vrot.slane %v1446, 1
      %v1737 = vrot.slane %v1494, 1
      %v1738 = vsel %vm792, %v1736, %v1737
      %v1739 = vrot.slane %v1447, 1
      %v1740 = vrot.slane %v1495, 1
      %v1741 = vsel %vm792, %v1739, %v1740
      %v1742 = vrot.slane %v1448, 1
      %v1743 = vrot.slane %v1496, 1
      %v1744 = vsel %vm792, %v1742, %v1743
      %v1745 = vrot.slane %v1449, 1
      %v1746 = vrot.slane %v1497, 1
      %v1747 = vsel %vm792, %v1745, %v1746
      %v1748 = vrot.slane %v1450, 1
      %v1749 = vrot.slane %v1498, 1
      %v1750 = vsel %vm792, %v1748, %v1749
      %v1751 = vrot.slane %v1451, 1
      %v1752 = vrot.slane %v1499, 1
      %v1753 = vsel %vm792, %v1751, %v1752
      %v1754 = vrot.slane %v1452, 1
      %v1755 = vrot.slane %v1500, 1
      %v1756 = vsel %vm792, %v1754, %v1755
      %v1757 = vrot.slane %v1453, 1
      %v1758 = vrot.slane %v1501, 1
      %v1759 = vsel %vm792, %v1757, %v1758
      %v1760 = vrot.slane %v1454, 1
      %v1761 = vrot.slane %v1502, 1
      %v1762 = vsel %vm792, %v1760, %v1761
      %v1763 = vrot.slane %v1455, 1
      %v1764 = vrot.slane %v1503, 1
      %v1765 = vsel %vm792, %v1763, %v1764
      %v1766 = vrot.slane %v1456, 1
      %v1767 = vrot.slane %v1504, 1
      %v1768 = vsel %vm792, %v1766, %v1767
      %v1769 = vrot.slane %v1457, 1
      %v1770 = vrot.slane %v1505, 1
      %v1771 = vsel %vm792, %v1769, %v1770
      %v1772 = vrot.slane %v1458, 1
      %v1773 = vrot.slane %v1506, 1
      %v1774 = vsel %vm792, %v1772, %v1773
      %v1775 = vrot.slane %v1459, 1
      %v1776 = vrot.slane %v1507, 1
      %v1777 = vsel %vm792, %v1775, %v1776
      %v1778 = vrot.slane %v1460, 1
      %v1779 = vrot.slane %v1508, 1
      %v1780 = vsel %vm792, %v1778, %v1779
      %1781 = vrot.lane.b32.xlu0 %v1735, 8
      %v1782 = vpop.permute.xlu0 %1781
      %1783 = vrot.lane.b32.xlu0 %v1738, 8
      %v1784 = vpop.permute.xlu0 %1783
      %1785 = vrot.lane.b32.xlu0 %v1741, 8
      %v1786 = vpop.permute.xlu0 %1785
      %1787 = vrot.lane.b32.xlu0 %v1744, 8
      %v1788 = vpop.permute.xlu0 %1787
      %1789 = vrot.lane.b32.xlu0 %v1747, 8
      %v1790 = vpop.permute.xlu0 %1789
      %1791 = vrot.lane.b32.xlu0 %v1750, 8
      %v1792 = vpop.permute.xlu0 %1791
      %1793 = vrot.lane.b32.xlu0 %v1753, 8
      %v1794 = vpop.permute.xlu0 %1793
      %1795 = vrot.lane.b32.xlu0 %v1756, 8
      %v1796 = vpop.permute.xlu0 %1795
      %1797 = vrot.lane.b32.xlu0 %v1759, 8
      %v1798 = vpop.permute.xlu0 %1797
      %1799 = vrot.lane.b32.xlu0 %v1762, 8
      %v1800 = vpop.permute.xlu0 %1799
      %1801 = vrot.lane.b32.xlu0 %v1765, 8
      %v1802 = vpop.permute.xlu0 %1801
      %1803 = vrot.lane.b32.xlu0 %v1768, 8
      %v1804 = vpop.permute.xlu0 %1803
      %1805 = vrot.lane.b32.xlu0 %v1771, 8
      %v1806 = vpop.permute.xlu0 %1805
      %1807 = vrot.lane.b32.xlu0 %v1774, 8
      %v1808 = vpop.permute.xlu0 %1807
      %1809 = vrot.lane.b32.xlu0 %v1777, 8
      %v1810 = vpop.permute.xlu0 %1809
      %1811 = vrot.lane.b32.xlu0 %v1780, 8
      %v1812 = vpop.permute.xlu0 %1811
      %v1815 = vunpack.c.l.b16 %v433
      %v1816 = vunpack.c.l.b16 %v434
      %v1817 = vpack.c.b16 %v1816, %v1815
      %1818 = vrot.lane.b32.xlu0 %v1446, 12
      %v1819 = vpop.permute.xlu0 %1818
      %1820 = vrot.lane.b32.xlu0 %v1447, 12
      %v1821 = vpop.permute.xlu0 %1820
      %1822 = vrot.lane.b32.xlu0 %v1448, 12
      %v1823 = vpop.permute.xlu0 %1822
      %1824 = vrot.lane.b32.xlu0 %v1449, 12
      %v1825 = vpop.permute.xlu0 %1824
      %1826 = vrot.lane.b32.xlu0 %v1450, 12
      %v1827 = vpop.permute.xlu0 %1826
      %1828 = vrot.lane.b32.xlu0 %v1451, 12
      %v1829 = vpop.permute.xlu0 %1828
      %1830 = vrot.lane.b32.xlu0 %v1452, 12
      %v1831 = vpop.permute.xlu0 %1830
      %1832 = vrot.lane.b32.xlu0 %v1453, 12
      %v1833 = vpop.permute.xlu0 %1832
      %1834 = vrot.lane.b32.xlu0 %v1454, 12
      %v1835 = vpop.permute.xlu0 %1834
      %1836 = vrot.lane.b32.xlu0 %v1455, 12
      %v1837 = vpop.permute.xlu0 %1836
      %1838 = vrot.lane.b32.xlu0 %v1456, 12
      %v1839 = vpop.permute.xlu0 %1838
      %1840 = vrot.lane.b32.xlu0 %v1457, 12
      %v1841 = vpop.permute.xlu0 %1840
      %1842 = vrot.lane.b32.xlu0 %v1458, 12
      %v1843 = vpop.permute.xlu0 %1842
      %1844 = vrot.lane.b32.xlu0 %v1459, 12
      %v1845 = vpop.permute.xlu0 %1844
      %1846 = vrot.lane.b32.xlu0 %v1460, 12
      %v1847 = vpop.permute.xlu0 %1846
      %1848 = vrot.lane.b32.xlu0 %v1817, 12
      %v1849 = vpop.permute.xlu0 %1848
      %v1851 = vunpack.c.l.b16 %v435
      %v1852 = vpack.c.b16 %v1851, %v1851
      %v1854 = vshrl.u32 %v1817, 16
      %v1856 = vshll.u32 %v1817, 16
      %v1858 = vrot.slane %v1856, 1
      %v1859 = vor.u32 %v1854, %v1858
      %v1861 = vshll.u32 %v1852, 16
      %v1863 = vrot.slane %v1861, 1
      %v1864 = vsel %vm567, %v1859, %v1863
      %1865 = vrot.lane.b32.xlu0 %v1532, 16
      %v1866 = vpop.permute.xlu0 %1865
      %1867 = vrot.lane.b32.xlu0 %v1544, 16
      %v1868 = vpop.permute.xlu0 %1867
      %1869 = vrot.lane.b32.xlu0 %v1556, 16
      %v1870 = vpop.permute.xlu0 %1869
      %1871 = vrot.lane.b32.xlu0 %v1568, 16
      %v1872 = vpop.permute.xlu0 %1871
      %1873 = vrot.lane.b32.xlu0 %v1580, 16
      %v1874 = vpop.permute.xlu0 %1873
      %1875 = vrot.lane.b32.xlu0 %v1592, 16
      %v1876 = vpop.permute.xlu0 %1875
      %1877 = vrot.lane.b32.xlu0 %v1604, 16
      %v1878 = vpop.permute.xlu0 %1877
      %1879 = vrot.lane.b32.xlu0 %v1616, 16
      %v1880 = vpop.permute.xlu0 %1879
      %1881 = vrot.lane.b32.xlu0 %v1628, 16
      %v1882 = vpop.permute.xlu0 %1881
      %1883 = vrot.lane.b32.xlu0 %v1640, 16
      %v1884 = vpop.permute.xlu0 %1883
      %1885 = vrot.lane.b32.xlu0 %v1652, 16
      %v1886 = vpop.permute.xlu0 %1885
      %1887 = vrot.lane.b32.xlu0 %v1664, 16
      %v1888 = vpop.permute.xlu0 %1887
      %1889 = vrot.lane.b32.xlu0 %v1676, 16
      %v1890 = vpop.permute.xlu0 %1889
      %1891 = vrot.lane.b32.xlu0 %v1688, 16
      %v1892 = vpop.permute.xlu0 %1891
      %1893 = vrot.lane.b32.xlu0 %v1700, 16
      %v1894 = vpop.permute.xlu0 %1893
      %1895 = vrot.lane.b32.xlu0 %v1864, 16
      %v1896 = vpop.permute.xlu0 %1895
      %v1897 = vrot.slane %v1817, 1
      %v1898 = vrot.slane %v1852, 1
      %v1899 = vsel %vm792, %v1897, %v1898
      %1900 = vrot.lane.b32.xlu0 %v1738, 20
      %v1901 = vpop.permute.xlu0 %1900
      %1902 = vrot.lane.b32.xlu0 %v1741, 20
      %v1903 = vpop.permute.xlu0 %1902
      %1904 = vrot.lane.b32.xlu0 %v1744, 20
      %v1905 = vpop.permute.xlu0 %1904
      %1906 = vrot.lane.b32.xlu0 %v1747, 20
      %v1907 = vpop.permute.xlu0 %1906
      %1908 = vrot.lane.b32.xlu0 %v1750, 20
      %v1909 = vpop.permute.xlu0 %1908
      %1910 = vrot.lane.b32.xlu0 %v1753, 20
      %v1911 = vpop.permute.xlu0 %1910
      %1912 = vrot.lane.b32.xlu0 %v1756, 20
      %v1913 = vpop.permute.xlu0 %1912
      %1914 = vrot.lane.b32.xlu0 %v1759, 20
      %v1915 = vpop.permute.xlu0 %1914
      %1916 = vrot.lane.b32.xlu0 %v1762, 20
      %v1917 = vpop.permute.xlu0 %1916
      %1918 = vrot.lane.b32.xlu0 %v1765, 20
      %v1919 = vpop.permute.xlu0 %1918
      %1920 = vrot.lane.b32.xlu0 %v1768, 20
      %v1921 = vpop.permute.xlu0 %1920
      %1922 = vrot.lane.b32.xlu0 %v1771, 20
      %v1923 = vpop.permute.xlu0 %1922
      %1924 = vrot.lane.b32.xlu0 %v1774, 20
      %v1925 = vpop.permute.xlu0 %1924
      %1926 = vrot.lane.b32.xlu0 %v1777, 20
      %v1927 = vpop.permute.xlu0 %1926
      %1928 = vrot.lane.b32.xlu0 %v1780, 20
      %v1929 = vpop.permute.xlu0 %1928
      %1930 = vrot.lane.b32.xlu0 %v1899, 20
      %v1931 = vpop.permute.xlu0 %1930
      %v1934 = vunpack.c.l.b16 %v436
      %v1935 = vunpack.c.l.b16 %v437
      %v1936 = vpack.c.b16 %v1935, %v1934
      %1937 = vrot.lane.b32.xlu0 %v1447, 24
      %v1938 = vpop.permute.xlu0 %1937
      %1939 = vrot.lane.b32.xlu0 %v1448, 24
      %v1940 = vpop.permute.xlu0 %1939
      %1941 = vrot.lane.b32.xlu0 %v1449, 24
      %v1942 = vpop.permute.xlu0 %1941
      %1943 = vrot.lane.b32.xlu0 %v1450, 24
      %v1944 = vpop.permute.xlu0 %1943
      %1945 = vrot.lane.b32.xlu0 %v1451, 24
      %v1946 = vpop.permute.xlu0 %1945
      %1947 = vrot.lane.b32.xlu0 %v1452, 24
      %v1948 = vpop.permute.xlu0 %1947
      %1949 = vrot.lane.b32.xlu0 %v1453, 24
      %v1950 = vpop.permute.xlu0 %1949
      %1951 = vrot.lane.b32.xlu0 %v1454, 24
      %v1952 = vpop.permute.xlu0 %1951
      %1953 = vrot.lane.b32.xlu0 %v1455, 24
      %v1954 = vpop.permute.xlu0 %1953
      %1955 = vrot.lane.b32.xlu0 %v1456, 24
      %v1956 = vpop.permute.xlu0 %1955
      %1957 = vrot.lane.b32.xlu0 %v1457, 24
      %v1958 = vpop.permute.xlu0 %1957
      %1959 = vrot.lane.b32.xlu0 %v1458, 24
      %v1960 = vpop.permute.xlu0 %1959
      %1961 = vrot.lane.b32.xlu0 %v1459, 24
      %v1962 = vpop.permute.xlu0 %1961
      %1963 = vrot.lane.b32.xlu0 %v1460, 24
      %v1964 = vpop.permute.xlu0 %1963
      %1965 = vrot.lane.b32.xlu0 %v1817, 24
      %v1966 = vpop.permute.xlu0 %1965
      %1967 = vrot.lane.b32.xlu0 %v1936, 24
      %v1968 = vpop.permute.xlu0 %1967
      %v1970 = vunpack.c.l.b16 %v438
      %v1971 = vpack.c.b16 %v1970, %v1970
      %v1973 = vshrl.u32 %v1936, 16
      %v1975 = vshll.u32 %v1936, 16
      %v1977 = vrot.slane %v1975, 1
      %v1978 = vor.u32 %v1973, %v1977
      %v1980 = vshll.u32 %v1971, 16
      %v1982 = vrot.slane %v1980, 1
      %v1983 = vsel %vm567, %v1978, %v1982
      %1984 = vrot.lane.b32.xlu0 %v1544, 28
      %v1985 = vpop.permute.xlu0 %1984
      %1986 = vrot.lane.b32.xlu0 %v1556, 28
      %v1987 = vpop.permute.xlu0 %1986
      %1988 = vrot.lane.b32.xlu0 %v1568, 28
      %v1989 = vpop.permute.xlu0 %1988
      %1990 = vrot.lane.b32.xlu0 %v1580, 28
      %v1991 = vpop.permute.xlu0 %1990
      %1992 = vrot.lane.b32.xlu0 %v1592, 28
      %v1993 = vpop.permute.xlu0 %1992
      %1994 = vrot.lane.b32.xlu0 %v1604, 28
      %v1995 = vpop.permute.xlu0 %1994
      %1996 = vrot.lane.b32.xlu0 %v1616, 28
      %v1997 = vpop.permute.xlu0 %1996
      %1998 = vrot.lane.b32.xlu0 %v1628, 28
      %v1999 = vpop.permute.xlu0 %1998
      %2000 = vrot.lane.b32.xlu0 %v1640, 28
      %v2001 = vpop.permute.xlu0 %2000
      %2002 = vrot.lane.b32.xlu0 %v1652, 28
      %v2003 = vpop.permute.xlu0 %2002
      %2004 = vrot.lane.b32.xlu0 %v1664, 28
      %v2005 = vpop.permute.xlu0 %2004
      %2006 = vrot.lane.b32.xlu0 %v1676, 28
      %v2007 = vpop.permute.xlu0 %2006
      %2008 = vrot.lane.b32.xlu0 %v1688, 28
      %v2009 = vpop.permute.xlu0 %2008
      %2010 = vrot.lane.b32.xlu0 %v1700, 28
      %v2011 = vpop.permute.xlu0 %2010
      %2012 = vrot.lane.b32.xlu0 %v1864, 28
      %v2013 = vpop.permute.xlu0 %2012
      %2014 = vrot.lane.b32.xlu0 %v1983, 28
      %v2015 = vpop.permute.xlu0 %2014
      %v2016 = vrot.slane %v1936, 1
      %v2017 = vrot.slane %v1971, 1
      %v2018 = vsel %vm792, %v2016, %v2017
      %2019 = vrot.lane.b32.xlu0 %v1741, 32
      %v2020 = vpop.permute.xlu0 %2019
      %2021 = vrot.lane.b32.xlu0 %v1744, 32
      %v2022 = vpop.permute.xlu0 %2021
      %2023 = vrot.lane.b32.xlu0 %v1747, 32
      %v2024 = vpop.permute.xlu0 %2023
      %2025 = vrot.lane.b32.xlu0 %v1750, 32
      %v2026 = vpop.permute.xlu0 %2025
      %2027 = vrot.lane.b32.xlu0 %v1753, 32
      %v2028 = vpop.permute.xlu0 %2027
      %2029 = vrot.lane.b32.xlu0 %v1756, 32
      %v2030 = vpop.permute.xlu0 %2029
      %2031 = vrot.lane.b32.xlu0 %v1759, 32
      %v2032 = vpop.permute.xlu0 %2031
      %2033 = vrot.lane.b32.xlu0 %v1762, 32
      %v2034 = vpop.permute.xlu0 %2033
      %2035 = vrot.lane.b32.xlu0 %v1765, 32
      %v2036 = vpop.permute.xlu0 %2035
      %2037 = vrot.lane.b32.xlu0 %v1768, 32
      %v2038 = vpop.permute.xlu0 %2037
      %2039 = vrot.lane.b32.xlu0 %v1771, 32
      %v2040 = vpop.permute.xlu0 %2039
      %2041 = vrot.lane.b32.xlu0 %v1774, 32
      %v2042 = vpop.permute.xlu0 %2041
      %2043 = vrot.lane.b32.xlu0 %v1777, 32
      %v2044 = vpop.permute.xlu0 %2043
      %2045 = vrot.lane.b32.xlu0 %v1780, 32
      %v2046 = vpop.permute.xlu0 %2045
      %2047 = vrot.lane.b32.xlu0 %v1899, 32
      %v2048 = vpop.permute.xlu0 %2047
      %2049 = vrot.lane.b32.xlu0 %v2018, 32
      %v2050 = vpop.permute.xlu0 %2049
      %vm2051 = vcmask 31744
      %v2053 = vsel %vm2051, %v1445, %v1702
      %v2055 = vsel %vm2051, %v1446, %v1704
      %v2057 = vsel %vm2051, %v1447, %v1706
      %v2059 = vsel %vm2051, %v1448, %v1708
      %v2061 = vsel %vm2051, %v1449, %v1710
      %v2063 = vsel %vm2051, %v1450, %v1712
      %v2065 = vsel %vm2051, %v1451, %v1714
      %v2067 = vsel %vm2051, %v1452, %v1716
      %v2069 = vsel %vm2051, %v1453, %v1718
      %v2071 = vsel %vm2051, %v1454, %v1720
      %v2073 = vsel %vm2051, %v1455, %v1722
      %v2075 = vsel %vm2051, %v1456, %v1724
      %v2077 = vsel %vm2051, %v1457, %v1726
      %v2079 = vsel %vm2051, %v1458, %v1728
      %v2081 = vsel %vm2051, %v1459, %v1730
      %v2083 = vsel %vm2051, %v1460, %v1732
      %vm2084 = vcmask 64512
      %v2086 = vsel %vm2084, %v2053, %v1782
      %v2088 = vsel %vm2084, %v2055, %v1784
      %v2090 = vsel %vm2084, %v2057, %v1786
      %v2092 = vsel %vm2084, %v2059, %v1788
      %v2094 = vsel %vm2084, %v2061, %v1790
      %v2096 = vsel %vm2084, %v2063, %v1792
      %v2098 = vsel %vm2084, %v2065, %v1794
      %v2100 = vsel %vm2084, %v2067, %v1796
      %v2102 = vsel %vm2084, %v2069, %v1798
      %v2104 = vsel %vm2084, %v2071, %v1800
      %v2106 = vsel %vm2084, %v2073, %v1802
      %v2108 = vsel %vm2084, %v2075, %v1804
      %v2110 = vsel %vm2084, %v2077, %v1806
      %v2112 = vsel %vm2084, %v2079, %v1808
      %v2114 = vsel %vm2084, %v2081, %v1810
      %v2116 = vsel %vm2084, %v2083, %v1812
      %vm2117 = vcmask 97280
      %v2119 = vsel %vm2117, %v2086, %v1819
      %v2121 = vsel %vm2117, %v2088, %v1821
      %v2123 = vsel %vm2117, %v2090, %v1823
      %v2125 = vsel %vm2117, %v2092, %v1825
      %v2127 = vsel %vm2117, %v2094, %v1827
      %v2129 = vsel %vm2117, %v2096, %v1829
      %v2131 = vsel %vm2117, %v2098, %v1831
      %v2133 = vsel %vm2117, %v2100, %v1833
      %v2135 = vsel %vm2117, %v2102, %v1835
      %v2137 = vsel %vm2117, %v2104, %v1837
      %v2139 = vsel %vm2117, %v2106, %v1839
      %v2141 = vsel %vm2117, %v2108, %v1841
      %v2143 = vsel %vm2117, %v2110, %v1843
      %v2145 = vsel %vm2117, %v2112, %v1845
      %v2147 = vsel %vm2117, %v2114, %v1847
      %v2149 = vsel %vm2117, %v2116, %v1849
      %vm2150 = vcmask 130048
      %v2152 = vsel %vm2150, %v2119, %v1866
      %v2154 = vsel %vm2150, %v2121, %v1868
      %v2156 = vsel %vm2150, %v2123, %v1870
      %v2158 = vsel %vm2150, %v2125, %v1872
      %v2160 = vsel %vm2150, %v2127, %v1874
      %v2162 = vsel %vm2150, %v2129, %v1876
      %v2164 = vsel %vm2150, %v2131, %v1878
      %v2166 = vsel %vm2150, %v2133, %v1880
      %v2168 = vsel %vm2150, %v2135, %v1882
      %v2170 = vsel %vm2150, %v2137, %v1884
      %v2172 = vsel %vm2150, %v2139, %v1886
      %v2174 = vsel %vm2150, %v2141, %v1888
      %v2176 = vsel %vm2150, %v2143, %v1890
      %v2178 = vsel %vm2150, %v2145, %v1892
      %v2180 = vsel %vm2150, %v2147, %v1894
      %v2182 = vsel %vm2150, %v2149, %v1896
      %v2184 = vsel %vm1210, %v2152, %v1901
      %v2186 = vsel %vm1210, %v2154, %v1903
      %v2188 = vsel %vm1210, %v2156, %v1905
      %v2190 = vsel %vm1210, %v2158, %v1907
      %v2192 = vsel %vm1210, %v2160, %v1909
      %v2194 = vsel %vm1210, %v2162, %v1911
      %v2196 = vsel %vm1210, %v2164, %v1913
      %v2198 = vsel %vm1210, %v2166, %v1915
      %v2200 = vsel %vm1210, %v2168, %v1917
      %v2202 = vsel %vm1210, %v2170, %v1919
      %v2204 = vsel %vm1210, %v2172, %v1921
      %v2206 = vsel %vm1210, %v2174, %v1923
      %v2208 = vsel %vm1210, %v2176, %v1925
      %v2210 = vsel %vm1210, %v2178, %v1927
      %v2212 = vsel %vm1210, %v2180, %v1929
      %v2214 = vsel %vm1210, %v2182, %v1931
      %vm2215 = vcmask 195584
      %v2217 = vsel %vm2215, %v2184, %v1938
      %v2219 = vsel %vm2215, %v2186, %v1940
      %v2221 = vsel %vm2215, %v2188, %v1942
      %v2223 = vsel %vm2215, %v2190, %v1944
      %v2225 = vsel %vm2215, %v2192, %v1946
      %v2227 = vsel %vm2215, %v2194, %v1948
      %v2229 = vsel %vm2215, %v2196, %v1950
      %v2231 = vsel %vm2215, %v2198, %v1952
      %v2233 = vsel %vm2215, %v2200, %v1954
      %v2235 = vsel %vm2215, %v2202, %v1956
      %v2237 = vsel %vm2215, %v2204, %v1958
      %v2239 = vsel %vm2215, %v2206, %v1960
      %v2241 = vsel %vm2215, %v2208, %v1962
      %v2243 = vsel %vm2215, %v2210, %v1964
      %v2245 = vsel %vm2215, %v2212, %v1966
      %v2247 = vsel %vm2215, %v2214, %v1968
      %vm2248 = vcmask 228352
      %v2250 = vsel %vm2248, %v2217, %v1985
      %v2252 = vsel %vm2248, %v2219, %v1987
      %v2254 = vsel %vm2248, %v2221, %v1989
      %v2256 = vsel %vm2248, %v2223, %v1991
      %v2258 = vsel %vm2248, %v2225, %v1993
      %v2260 = vsel %vm2248, %v2227, %v1995
      %v2262 = vsel %vm2248, %v2229, %v1997
      %v2264 = vsel %vm2248, %v2231, %v1999
      %v2266 = vsel %vm2248, %v2233, %v2001
      %v2268 = vsel %vm2248, %v2235, %v2003
      %v2270 = vsel %vm2248, %v2237, %v2005
      %v2272 = vsel %vm2248, %v2239, %v2007
      %v2274 = vsel %vm2248, %v2241, %v2009
      %v2276 = vsel %vm2248, %v2243, %v2011
      %v2278 = vsel %vm2248, %v2245, %v2013
      %v2280 = vsel %vm2248, %v2247, %v2015
      %vm2281 = vcmask 261120
      %v2283 = vsel %vm2281, %v2250, %v2020
      %v2285 = vsel %vm2281, %v2252, %v2022
      %v2287 = vsel %vm2281, %v2254, %v2024
      %v2289 = vsel %vm2281, %v2256, %v2026
      %v2291 = vsel %vm2281, %v2258, %v2028
      %v2293 = vsel %vm2281, %v2260, %v2030
      %v2295 = vsel %vm2281, %v2262, %v2032
      %v2297 = vsel %vm2281, %v2264, %v2034
      %v2299 = vsel %vm2281, %v2266, %v2036
      %v2301 = vsel %vm2281, %v2268, %v2038
      %v2303 = vsel %vm2281, %v2270, %v2040
      %v2305 = vsel %vm2281, %v2272, %v2042
      %v2307 = vsel %vm2281, %v2274, %v2044
      %v2309 = vsel %vm2281, %v2276, %v2046
      %v2311 = vsel %vm2281, %v2278, %v2048
      %v2313 = vsel %vm2281, %v2280, %v2050
      %v2314 = vld [vmem:[%s3] sm:$0xff]
      %v2315 = vld [vmem:[%s3 + $0x8] sm:$0xff]
      %v2316 = vld [vmem:[%s3 + $0x10] sm:$0xff]
      %v2317 = vld [vmem:[%s3 + $0x18] sm:$0xff]
      %v2318 = vld [vmem:[%s3 + $0x20] sm:$0x33]
      %v2324 = vunpack.c.l.b16 %v2314
      %v2325 = vunpack.c.h.b16 %v2314
      %v2326 = vunpack.c.l.b16 %v2315
      %v2327 = vunpack.c.h.b16 %v2315
      %v2328 = vunpack.c.l.b16 %v2316
      %v2329 = vunpack.c.h.b16 %v2316
      %v2330 = vunpack.c.l.b16 %v2317
      %v2331 = vunpack.c.h.b16 %v2317
      %v2332 = vunpack.c.l.b16 %v2318
      %v2333 = vunpack.c.h.b16 %v2318
      %v2334 = vpack.c.b16 %v2326, %v2324
      %v2335 = vpack.c.b16 %v2327, %v2325
      %v2336 = vpack.c.b16 %v2330, %v2328
      %v2337 = vpack.c.b16 %v2331, %v2329
      %v2338 = vpack.c.b16 %v2332, %v2332
      %v2339 = vpack.c.b16 %v2333, %v2333
      %vm2344 = vcmask 293888
      %v2345 = vsel %vm2344, %v2283, 0
      %v2347 = vsel %vm2344, %v2285, 0
      %v2349 = vsel %vm2344, %v2287, 0
      %v2351 = vsel %vm2344, %v2289, 0
      %v2353 = vsel %vm2344, %v2291, 0
      %v2355 = vsel %vm2344, %v2293, 0
      %v2357 = vsel %vm2344, %v2295, 0
      %v2359 = vsel %vm2344, %v2297, 0
      %v2361 = vsel %vm2344, %v2299, 0
      %v2363 = vsel %vm2344, %v2301, 0
      %v2365 = vsel %vm2344, %v2303, 0
      %v2367 = vsel %vm2344, %v2305, 0
      %v2369 = vsel %vm2344, %v2307, 0
      %v2371 = vsel %vm2344, %v2309, 0
      %v2373 = vsel %vm2344, %v2311, 0
      %v2375 = vsel %vm2344, %v2313, 0
      %vm2377 = vcmask 1041408
      %v2379 = vsel %vm2377, %v2338, 0
      %v2382 = vsel %vm2377, %v2339, 0
      %2384 = vmatprep.subr.bf16.mxu0 0
      %2385 = vmatpush1.bf16.msra.mxu0 0
      %2386 = vmatprep.subr.bf16.mxu0 0
      %2387 = vmatpush1.bf16.msra.mxu0 0
      %2388 = vmatprep.subr.bf16.mxu0 0
      %2389 = vmatpush1.bf16.msra.mxu0 0
      %2390 = vmatprep.subr.bf16.mxu0 0
      %2391 = vmatpush1.bf16.msra.mxu0 0
      %2392 = vmatprep.subr.bf16.mxu0 0
      %2393 = vmatpush1.bf16.msra.mxu0 0
      %2394 = vmatprep.subr.bf16.mxu0 %v2382
      %2395 = vmatpush1.bf16.msra.mxu0 %v2379
      %2396 = vmatprep.subr.bf16.mxu0 %v2337
      %2397 = vmatpush1.bf16.msra.mxu0 %v2336
      %2398 = vmatprep.subr.bf16.mxu0 %v2335
      %2399 = vmatpush1.bf16.msra.mxu0 %v2334
      %2400 = vmatprep.subr.bf16.mxu0 0
      %2401 = vmatpush2.bf16.msra.mxu0 0
      %2402 = vmatprep.subr.bf16.mxu0 0
      %2403 = vmatpush2.bf16.msra.mxu0 0
      %2404 = vmatprep.subr.bf16.mxu0 0
      %2405 = vmatpush2.bf16.msra.mxu0 0
      %2406 = vmatprep.subr.bf16.mxu0 0
      %2407 = vmatpush2.bf16.msra.mxu0 0
      %2408 = vmatprep.subr.bf16.mxu0 0
      %2409 = vmatpush2.bf16.msra.mxu0 0
      %2410 = vmatprep.subr.bf16.mxu0 0
      %2411 = vmatpush2.bf16.msra.mxu0 0
      %2412 = vmatprep.subr.bf16.mxu0 0
      %2413 = vmatpush2.bf16.msra.mxu0 0
      %2414 = vmatprep.subr.bf16.mxu0 0
      %2415 = vmatpush2.bf16.msra.mxu0 0
      %2416 = vmatprep.mubr.bf16.mxu0 0
      %2417 = vmatmul.mubr.bf16.gmra.mxu0 %v2345
      %v2418 = vpop.f32.mrf.mxu0
      %v2419 = vadd.f32 0.0, %v2418
      %v2420 = vpop.f32.mrf.mxu0
      %v2421 = vadd.f32 0.0, %v2420
      %v2422 = vpop.f32.mrf.mxu0
      %v2423 = vadd.f32 0.0, %v2422
      %v2424 = vpop.f32.mrf.mxu0
      %v2425 = vadd.f32 0.0, %v2424
      %2426 = vmatprep.mubr.bf16.mxu0 0
      %2427 = vmatmul.mubr.bf16.gmra.mxu0 %v2347
      %v2428 = vpop.f32.mrf.mxu0
      %v2429 = vadd.f32 0.0, %v2428
      %v2430 = vpop.f32.mrf.mxu0
      %v2431 = vadd.f32 0.0, %v2430
      %v2432 = vpop.f32.mrf.mxu0
      %v2433 = vadd.f32 0.0, %v2432
      %v2434 = vpop.f32.mrf.mxu0
      %v2435 = vadd.f32 0.0, %v2434
      %2436 = vmatprep.mubr.bf16.mxu0 0
      %2437 = vmatmul.mubr.bf16.gmra.mxu0 %v2349
      %v2438 = vpop.f32.mrf.mxu0
      %v2439 = vadd.f32 0.0, %v2438
      %v2440 = vpop.f32.mrf.mxu0
      %v2441 = vadd.f32 0.0, %v2440
      %v2442 = vpop.f32.mrf.mxu0
      %v2443 = vadd.f32 0.0, %v2442
      %v2444 = vpop.f32.mrf.mxu0
      %v2445 = vadd.f32 0.0, %v2444
      %2446 = vmatprep.mubr.bf16.mxu0 0
      %2447 = vmatmul.mubr.bf16.gmra.mxu0 %v2351
      %v2448 = vpop.f32.mrf.mxu0
      %v2449 = vadd.f32 0.0, %v2448
      %v2450 = vpop.f32.mrf.mxu0
      %v2451 = vadd.f32 0.0, %v2450
      %v2452 = vpop.f32.mrf.mxu0
      %v2453 = vadd.f32 0.0, %v2452
      %v2454 = vpop.f32.mrf.mxu0
      %v2455 = vadd.f32 0.0, %v2454
      %2456 = vmatprep.mubr.bf16.mxu0 0
      %2457 = vmatmul.mubr.bf16.gmra.mxu0 %v2353
      %v2458 = vpop.f32.mrf.mxu0
      %v2459 = vadd.f32 0.0, %v2458
      %v2460 = vpop.f32.mrf.mxu0
      %v2461 = vadd.f32 0.0, %v2460
      %v2462 = vpop.f32.mrf.mxu0
      %v2463 = vadd.f32 0.0, %v2462
      %v2464 = vpop.f32.mrf.mxu0
      %v2465 = vadd.f32 0.0, %v2464
      %2466 = vmatprep.mubr.bf16.mxu0 0
      %2467 = vmatmul.mubr.bf16.gmra.mxu0 %v2355
      %v2468 = vpop.f32.mrf.mxu0
      %v2469 = vadd.f32 0.0, %v2468
      %v2470 = vpop.f32.mrf.mxu0
      %v2471 = vadd.f32 0.0, %v2470
      %v2472 = vpop.f32.mrf.mxu0
      %v2473 = vadd.f32 0.0, %v2472
      %v2474 = vpop.f32.mrf.mxu0
      %v2475 = vadd.f32 0.0, %v2474
      %2476 = vmatprep.mubr.bf16.mxu0 0
      %2477 = vmatmul.mubr.bf16.gmra.mxu0 %v2357
      %v2478 = vpop.f32.mrf.mxu0
      %v2479 = vadd.f32 0.0, %v2478
      %v2480 = vpop.f32.mrf.mxu0
      %v2481 = vadd.f32 0.0, %v2480
      %v2482 = vpop.f32.mrf.mxu0
      %v2483 = vadd.f32 0.0, %v2482
      %v2484 = vpop.f32.mrf.mxu0
      %v2485 = vadd.f32 0.0, %v2484
      %2486 = vmatprep.mubr.bf16.mxu0 0
      %2487 = vmatmul.mubr.bf16.gmra.mxu0 %v2359
      %v2488 = vpop.f32.mrf.mxu0
      %v2489 = vadd.f32 0.0, %v2488
      %v2490 = vpop.f32.mrf.mxu0
      %v2491 = vadd.f32 0.0, %v2490
      %v2492 = vpop.f32.mrf.mxu0
      %v2493 = vadd.f32 0.0, %v2492
      %v2494 = vpop.f32.mrf.mxu0
      %v2495 = vadd.f32 0.0, %v2494
      %2496 = vmatprep.mubr.bf16.mxu0 0
      %2497 = vmatmul.mubr.bf16.gmra.mxu0 %v2361
      %v2498 = vpop.f32.mrf.mxu0
      %v2499 = vadd.f32 0.0, %v2498
      %v2500 = vpop.f32.mrf.mxu0
      %v2501 = vadd.f32 0.0, %v2500
      %v2502 = vpop.f32.mrf.mxu0
      %v2503 = vadd.f32 0.0, %v2502
      %v2504 = vpop.f32.mrf.mxu0
      %v2505 = vadd.f32 0.0, %v2504
      %2506 = vmatprep.mubr.bf16.mxu0 0
      %2507 = vmatmul.mubr.bf16.gmra.mxu0 %v2363
      %v2508 = vpop.f32.mrf.mxu0
      %v2509 = vadd.f32 0.0, %v2508
      %v2510 = vpop.f32.mrf.mxu0
      %v2511 = vadd.f32 0.0, %v2510
      %v2512 = vpop.f32.mrf.mxu0
      %v2513 = vadd.f32 0.0, %v2512
      %v2514 = vpop.f32.mrf.mxu0
      %v2515 = vadd.f32 0.0, %v2514
      %2516 = vmatprep.mubr.bf16.mxu0 0
      %2517 = vmatmul.mubr.bf16.gmra.mxu0 %v2365
      %v2518 = vpop.f32.mrf.mxu0
      %v2519 = vadd.f32 0.0, %v2518
      %v2520 = vpop.f32.mrf.mxu0
      %v2521 = vadd.f32 0.0, %v2520
      %v2522 = vpop.f32.mrf.mxu0
      %v2523 = vadd.f32 0.0, %v2522
      %v2524 = vpop.f32.mrf.mxu0
      %v2525 = vadd.f32 0.0, %v2524
      %2526 = vmatprep.mubr.bf16.mxu0 0
      %2527 = vmatmul.mubr.bf16.gmra.mxu0 %v2367
      %v2528 = vpop.f32.mrf.mxu0
      %v2529 = vadd.f32 0.0, %v2528
      %v2530 = vpop.f32.mrf.mxu0
      %v2531 = vadd.f32 0.0, %v2530
      %v2532 = vpop.f32.mrf.mxu0
      %v2533 = vadd.f32 0.0, %v2532
      %v2534 = vpop.f32.mrf.mxu0
      %v2535 = vadd.f32 0.0, %v2534
      %2536 = vmatprep.mubr.bf16.mxu0 0
      %2537 = vmatmul.mubr.bf16.gmra.mxu0 %v2369
      %v2538 = vpop.f32.mrf.mxu0
      %v2539 = vadd.f32 0.0, %v2538
      %v2540 = vpop.f32.mrf.mxu0
      %v2541 = vadd.f32 0.0, %v2540
      %v2542 = vpop.f32.mrf.mxu0
      %v2543 = vadd.f32 0.0, %v2542
      %v2544 = vpop.f32.mrf.mxu0
      %v2545 = vadd.f32 0.0, %v2544
      %2546 = vmatprep.mubr.bf16.mxu0 0
      %2547 = vmatmul.mubr.bf16.gmra.mxu0 %v2371
      %v2548 = vpop.f32.mrf.mxu0
      %v2549 = vadd.f32 0.0, %v2548
      %v2550 = vpop.f32.mrf.mxu0
      %v2551 = vadd.f32 0.0, %v2550
      %v2552 = vpop.f32.mrf.mxu0
      %v2553 = vadd.f32 0.0, %v2552
      %v2554 = vpop.f32.mrf.mxu0
      %v2555 = vadd.f32 0.0, %v2554
      %2556 = vmatprep.mubr.bf16.mxu0 0
      %2557 = vmatmul.mubr.bf16.gmra.mxu0 %v2373
      %v2558 = vpop.f32.mrf.mxu0
      %v2559 = vadd.f32 0.0, %v2558
      %v2560 = vpop.f32.mrf.mxu0
      %v2561 = vadd.f32 0.0, %v2560
      %v2562 = vpop.f32.mrf.mxu0
      %v2563 = vadd.f32 0.0, %v2562
      %v2564 = vpop.f32.mrf.mxu0
      %v2565 = vadd.f32 0.0, %v2564
      %2566 = vmatprep.mubr.bf16.mxu0 0
      %2567 = vmatmul.mubr.bf16.gmra.mxu0 %v2375
      %v2568 = vpop.f32.mrf.mxu0
      %v2569 = vadd.f32 0.0, %v2568
      %v2570 = vpop.f32.mrf.mxu0
      %v2571 = vadd.f32 0.0, %v2570
      %v2572 = vpop.f32.mrf.mxu0
      %v2573 = vadd.f32 0.0, %v2572
      %v2574 = vpop.f32.mrf.mxu0
      %v2575 = vadd.f32 0.0, %v2574
      %2576 = vdwg.mxu0
      %v2583 = vunpack.c.l.b16 %v1375
      %v2584 = vunpack.c.h.b16 %v1375
      %v2585 = vunpack.c.l.b16 %v1376
      %v2586 = vunpack.c.h.b16 %v1376
      %v2587 = vunpack.c.l.b16 %v1377
      %v2588 = vunpack.c.h.b16 %v1377
      %v2589 = vunpack.c.l.b16 %v1378
      %v2590 = vunpack.c.h.b16 %v1378
      %v2591 = vunpack.c.l.b16 %v1379
      %v2592 = vunpack.c.h.b16 %v1379
      %v2593 = vunpack.c.l.b16 %v1380
      %v2594 = vunpack.c.h.b16 %v1380
      %v2595 = vpack.c.b16 %v2585, %v2583
      %v2596 = vpack.c.b16 %v2586, %v2584
      %v2597 = vpack.c.b16 %v2589, %v2587
      %v2598 = vpack.c.b16 %v2590, %v2588
      %v2599 = vpack.c.b16 %v2593, %v2591
      %v2600 = vpack.c.b16 %v2594, %v2592
      %vm2605 = vcmask 367616
      %v2606 = vsel %vm2605, %v1344, 0
      %v2608 = vsel %vm2605, %v1346, 0
      %v2610 = vsel %vm2605, %v1348, 0
      %v2612 = vsel %vm2605, %v1350, 0
      %v2614 = vsel %vm2605, %v1352, 0
      %v2616 = vsel %vm2605, %v1354, 0
      %v2618 = vsel %vm2605, %v1356, 0
      %v2620 = vsel %vm2605, %v1358, 0
      %v2622 = vsel %vm2605, %v1360, 0
      %v2624 = vsel %vm2605, %v1362, 0
      %v2626 = vsel %vm2605, %v1364, 0
      %v2628 = vsel %vm2605, %v1366, 0
      %v2630 = vsel %vm2605, %v1368, 0
      %v2632 = vsel %vm2605, %v1370, 0
      %v2634 = vsel %vm2605, %v1372, 0
      %v2636 = vsel %vm2605, %v1374, 0
      %vm2638 = vcmask 1045504
      %vm2639 = vcmask 1046528
      %v2640 = vsel %vm2638, 4294967295, 65535
      %v2641 = vsel %vm2639, %v2640, 0
      %v2643 = vand.u32 %v2599, %v2641
      %v2646 = vand.u32 %v2600, %v2641
      %2648 = vmatprep.subr.bf16.mxu0 0
      %2649 = vmatpush1.bf16.msra.mxu0 0
      %2650 = vmatprep.subr.bf16.mxu0 0
      %2651 = vmatpush1.bf16.msra.mxu0 0
      %2652 = vmatprep.subr.bf16.mxu0 0
      %2653 = vmatpush1.bf16.msra.mxu0 0
      %2654 = vmatprep.subr.bf16.mxu0 0
      %2655 = vmatpush1.bf16.msra.mxu0 0
      %2656 = vmatprep.subr.bf16.mxu0 0
      %2657 = vmatpush1.bf16.msra.mxu0 0
      %2658 = vmatprep.subr.bf16.mxu0 %v2646
      %2659 = vmatpush1.bf16.msra.mxu0 %v2643
      %2660 = vmatprep.subr.bf16.mxu0 %v2598
      %2661 = vmatpush1.bf16.msra.mxu0 %v2597
      %2662 = vmatprep.subr.bf16.mxu0 %v2596
      %2663 = vmatpush1.bf16.msra.mxu0 %v2595
      %2664 = vmatprep.subr.bf16.mxu0 0
      %2665 = vmatpush2.bf16.msra.mxu0 0
      %2666 = vmatprep.subr.bf16.mxu0 0
      %2667 = vmatpush2.bf16.msra.mxu0 0
      %2668 = vmatprep.subr.bf16.mxu0 0
      %2669 = vmatpush2.bf16.msra.mxu0 0
      %2670 = vmatprep.subr.bf16.mxu0 0
      %2671 = vmatpush2.bf16.msra.mxu0 0
      %2672 = vmatprep.subr.bf16.mxu0 0
      %2673 = vmatpush2.bf16.msra.mxu0 0
      %2674 = vmatprep.subr.bf16.mxu0 0
      %2675 = vmatpush2.bf16.msra.mxu0 0
      %2676 = vmatprep.subr.bf16.mxu0 0
      %2677 = vmatpush2.bf16.msra.mxu0 0
      %2678 = vmatprep.subr.bf16.mxu0 0
      %2679 = vmatpush2.bf16.msra.mxu0 0
      %2680 = vmatprep.mubr.bf16.mxu0 0
      %2681 = vmatmul.mubr.bf16.gmra.mxu0 %v2606
      %v2682 = vpop.f32.mrf.mxu0
      %v2683 = vadd.f32 %v2419, %v2682
      %v2684 = vpop.f32.mrf.mxu0
      %v2685 = vadd.f32 %v2421, %v2684
      %v2686 = vpop.f32.mrf.mxu0
      %v2687 = vadd.f32 %v2423, %v2686
      %v2688 = vpop.f32.mrf.mxu0
      %v2689 = vadd.f32 %v2425, %v2688
      %2690 = vmatprep.mubr.bf16.mxu0 0
      %2691 = vmatmul.mubr.bf16.gmra.mxu0 %v2608
      %v2692 = vpop.f32.mrf.mxu0
      %v2693 = vadd.f32 %v2429, %v2692
      %v2694 = vpop.f32.mrf.mxu0
      %v2695 = vadd.f32 %v2431, %v2694
      %v2696 = vpop.f32.mrf.mxu0
      %v2697 = vadd.f32 %v2433, %v2696
      %v2698 = vpop.f32.mrf.mxu0
      %v2699 = vadd.f32 %v2435, %v2698
      %2700 = vmatprep.mubr.bf16.mxu0 0
      %2701 = vmatmul.mubr.bf16.gmra.mxu0 %v2610
      %v2702 = vpop.f32.mrf.mxu0
      %v2703 = vadd.f32 %v2439, %v2702
      %v2704 = vpop.f32.mrf.mxu0
      %v2705 = vadd.f32 %v2441, %v2704
      %v2706 = vpop.f32.mrf.mxu0
      %v2707 = vadd.f32 %v2443, %v2706
      %v2708 = vpop.f32.mrf.mxu0
      %v2709 = vadd.f32 %v2445, %v2708
      %2710 = vmatprep.mubr.bf16.mxu0 0
      %2711 = vmatmul.mubr.bf16.gmra.mxu0 %v2612
      %v2712 = vpop.f32.mrf.mxu0
      %v2713 = vadd.f32 %v2449, %v2712
      %v2714 = vpop.f32.mrf.mxu0
      %v2715 = vadd.f32 %v2451, %v2714
      %v2716 = vpop.f32.mrf.mxu0
      %v2717 = vadd.f32 %v2453, %v2716
      %v2718 = vpop.f32.mrf.mxu0
      %v2719 = vadd.f32 %v2455, %v2718
      %2720 = vmatprep.mubr.bf16.mxu0 0
      %2721 = vmatmul.mubr.bf16.gmra.mxu0 %v2614
      %v2722 = vpop.f32.mrf.mxu0
      %v2723 = vadd.f32 %v2459, %v2722
      %v2724 = vpop.f32.mrf.mxu0
      %v2725 = vadd.f32 %v2461, %v2724
      %v2726 = vpop.f32.mrf.mxu0
      %v2727 = vadd.f32 %v2463, %v2726
      %v2728 = vpop.f32.mrf.mxu0
      %v2729 = vadd.f32 %v2465, %v2728
      %2730 = vmatprep.mubr.bf16.mxu0 0
      %2731 = vmatmul.mubr.bf16.gmra.mxu0 %v2616
      %v2732 = vpop.f32.mrf.mxu0
      %v2733 = vadd.f32 %v2469, %v2732
      %v2734 = vpop.f32.mrf.mxu0
      %v2735 = vadd.f32 %v2471, %v2734
      %v2736 = vpop.f32.mrf.mxu0
      %v2737 = vadd.f32 %v2473, %v2736
      %v2738 = vpop.f32.mrf.mxu0
      %v2739 = vadd.f32 %v2475, %v2738
      %2740 = vmatprep.mubr.bf16.mxu0 0
      %2741 = vmatmul.mubr.bf16.gmra.mxu0 %v2618
      %v2742 = vpop.f32.mrf.mxu0
      %v2743 = vadd.f32 %v2479, %v2742
      %v2744 = vpop.f32.mrf.mxu0
      %v2745 = vadd.f32 %v2481, %v2744
      %v2746 = vpop.f32.mrf.mxu0
      %v2747 = vadd.f32 %v2483, %v2746
      %v2748 = vpop.f32.mrf.mxu0
      %v2749 = vadd.f32 %v2485, %v2748
      %2750 = vmatprep.mubr.bf16.mxu0 0
      %2751 = vmatmul.mubr.bf16.gmra.mxu0 %v2620
      %v2752 = vpop.f32.mrf.mxu0
      %v2753 = vadd.f32 %v2489, %v2752
      %v2754 = vpop.f32.mrf.mxu0
      %v2755 = vadd.f32 %v2491, %v2754
      %v2756 = vpop.f32.mrf.mxu0
      %v2757 = vadd.f32 %v2493, %v2756
      %v2758 = vpop.f32.mrf.mxu0
      %v2759 = vadd.f32 %v2495, %v2758
      %2760 = vmatprep.mubr.bf16.mxu0 0
      %2761 = vmatmul.mubr.bf16.gmra.mxu0 %v2622
      %v2762 = vpop.f32.mrf.mxu0
      %v2763 = vadd.f32 %v2499, %v2762
      %v2764 = vpop.f32.mrf.mxu0
      %v2765 = vadd.f32 %v2501, %v2764
      %v2766 = vpop.f32.mrf.mxu0
      %v2767 = vadd.f32 %v2503, %v2766
      %v2768 = vpop.f32.mrf.mxu0
      %v2769 = vadd.f32 %v2505, %v2768
      %2770 = vmatprep.mubr.bf16.mxu0 0
      %2771 = vmatmul.mubr.bf16.gmra.mxu0 %v2624
      %v2772 = vpop.f32.mrf.mxu0
      %v2773 = vadd.f32 %v2509, %v2772
      %v2774 = vpop.f32.mrf.mxu0
      %v2775 = vadd.f32 %v2511, %v2774
      %v2776 = vpop.f32.mrf.mxu0
      %v2777 = vadd.f32 %v2513, %v2776
      %v2778 = vpop.f32.mrf.mxu0
      %v2779 = vadd.f32 %v2515, %v2778
      %2780 = vmatprep.mubr.bf16.mxu0 0
      %2781 = vmatmul.mubr.bf16.gmra.mxu0 %v2626
      %v2782 = vpop.f32.mrf.mxu0
      %v2783 = vadd.f32 %v2519, %v2782
      %v2784 = vpop.f32.mrf.mxu0
      %v2785 = vadd.f32 %v2521, %v2784
      %v2786 = vpop.f32.mrf.mxu0
      %v2787 = vadd.f32 %v2523, %v2786
      %v2788 = vpop.f32.mrf.mxu0
      %v2789 = vadd.f32 %v2525, %v2788
      %2790 = vmatprep.mubr.bf16.mxu0 0
      %2791 = vmatmul.mubr.bf16.gmra.mxu0 %v2628
      %v2792 = vpop.f32.mrf.mxu0
      %v2793 = vadd.f32 %v2529, %v2792
      %v2794 = vpop.f32.mrf.mxu0
      %v2795 = vadd.f32 %v2531, %v2794
      %v2796 = vpop.f32.mrf.mxu0
      %v2797 = vadd.f32 %v2533, %v2796
      %v2798 = vpop.f32.mrf.mxu0
      %v2799 = vadd.f32 %v2535, %v2798
      %2800 = vmatprep.mubr.bf16.mxu0 0
      %2801 = vmatmul.mubr.bf16.gmra.mxu0 %v2630
      %v2802 = vpop.f32.mrf.mxu0
      %v2803 = vadd.f32 %v2539, %v2802
      %v2804 = vpop.f32.mrf.mxu0
      %v2805 = vadd.f32 %v2541, %v2804
      %v2806 = vpop.f32.mrf.mxu0
      %v2807 = vadd.f32 %v2543, %v2806
      %v2808 = vpop.f32.mrf.mxu0
      %v2809 = vadd.f32 %v2545, %v2808
      %2810 = vmatprep.mubr.bf16.mxu0 0
      %2811 = vmatmul.mubr.bf16.gmra.mxu0 %v2632
      %v2812 = vpop.f32.mrf.mxu0
      %v2813 = vadd.f32 %v2549, %v2812
      %v2814 = vpop.f32.mrf.mxu0
      %v2815 = vadd.f32 %v2551, %v2814
      %v2816 = vpop.f32.mrf.mxu0
      %v2817 = vadd.f32 %v2553, %v2816
      %v2818 = vpop.f32.mrf.mxu0
      %v2819 = vadd.f32 %v2555, %v2818
      %2820 = vmatprep.mubr.bf16.mxu0 0
      %2821 = vmatmul.mubr.bf16.gmra.mxu0 %v2634
      %v2822 = vpop.f32.mrf.mxu0
      %v2823 = vadd.f32 %v2559, %v2822
      %v2824 = vpop.f32.mrf.mxu0
      %v2825 = vadd.f32 %v2561, %v2824
      %v2826 = vpop.f32.mrf.mxu0
      %v2827 = vadd.f32 %v2563, %v2826
      %v2828 = vpop.f32.mrf.mxu0
      %v2829 = vadd.f32 %v2565, %v2828
      %2830 = vmatprep.mubr.bf16.mxu0 0
      %2831 = vmatmul.mubr.bf16.gmra.mxu0 %v2636
      %v2832 = vpop.f32.mrf.mxu0
      %v2833 = vadd.f32 %v2569, %v2832
      %v2834 = vpop.f32.mrf.mxu0
      %v2835 = vadd.f32 %v2571, %v2834
      %v2836 = vpop.f32.mrf.mxu0
      %v2837 = vadd.f32 %v2573, %v2836
      %v2838 = vpop.f32.mrf.mxu0
      %v2839 = vadd.f32 %v2575, %v2838
      %2840 = vdwg.mxu0
      %v2841 = vld [vmem:[%s4] sm:$0x3]
      %v2843 = vlaneseq
      %v2844 = vshrl.u32 %v2843, 7
      %v2845 = vsub.s32 0, %v2844
      %v2846 = vrot.slane %v2841, %v2845
      %v2847 = vlaneseq
      %v2848 = vshrl.u32 %v2847, 7
      %v2849 = vsub.s32 1, %v2848
      %v2850 = vrot.slane %v2841, %v2849
      %v2853 = vadd.f32 %v2683, %v2846
      %v2854 = vadd.f32 %v2685, %v2850
      %v2855 = vadd.f32 %v2687, %v2846
      %v2856 = vadd.f32 %v2689, %v2850
      %v2857 = vadd.f32 %v2693, %v2846
      %v2858 = vadd.f32 %v2695, %v2850
      %v2859 = vadd.f32 %v2697, %v2846
      %v2860 = vadd.f32 %v2699, %v2850
      %v2861 = vadd.f32 %v2703, %v2846
      %v2862 = vadd.f32 %v2705, %v2850
      %v2863 = vadd.f32 %v2707, %v2846
      %v2864 = vadd.f32 %v2709, %v2850
      %v2865 = vadd.f32 %v2713, %v2846
      %v2866 = vadd.f32 %v2715, %v2850
      %v2867 = vadd.f32 %v2717, %v2846
      %v2868 = vadd.f32 %v2719, %v2850
      %v2869 = vadd.f32 %v2723, %v2846
      %v2870 = vadd.f32 %v2725, %v2850
      %v2871 = vadd.f32 %v2727, %v2846
      %v2872 = vadd.f32 %v2729, %v2850
      %v2873 = vadd.f32 %v2733, %v2846
      %v2874 = vadd.f32 %v2735, %v2850
      %v2875 = vadd.f32 %v2737, %v2846
      %v2876 = vadd.f32 %v2739, %v2850
      %v2877 = vadd.f32 %v2743, %v2846
      %v2878 = vadd.f32 %v2745, %v2850
      %v2879 = vadd.f32 %v2747, %v2846
      %v2880 = vadd.f32 %v2749, %v2850
      %v2881 = vadd.f32 %v2753, %v2846
      %v2882 = vadd.f32 %v2755, %v2850
      %v2883 = vadd.f32 %v2757, %v2846
      %v2884 = vadd.f32 %v2759, %v2850
      %v2885 = vadd.f32 %v2763, %v2846
      %v2886 = vadd.f32 %v2765, %v2850
      %v2887 = vadd.f32 %v2767, %v2846
      %v2888 = vadd.f32 %v2769, %v2850
      %v2889 = vadd.f32 %v2773, %v2846
      %v2890 = vadd.f32 %v2775, %v2850
      %v2891 = vadd.f32 %v2777, %v2846
      %v2892 = vadd.f32 %v2779, %v2850
      %v2893 = vadd.f32 %v2783, %v2846
      %v2894 = vadd.f32 %v2785, %v2850
      %v2895 = vadd.f32 %v2787, %v2846
      %v2896 = vadd.f32 %v2789, %v2850
      %v2897 = vadd.f32 %v2793, %v2846
      %v2898 = vadd.f32 %v2795, %v2850
      %v2899 = vadd.f32 %v2797, %v2846
      %v2900 = vadd.f32 %v2799, %v2850
      %v2901 = vadd.f32 %v2803, %v2846
      %v2902 = vadd.f32 %v2805, %v2850
      %v2903 = vadd.f32 %v2807, %v2846
      %v2904 = vadd.f32 %v2809, %v2850
      %v2905 = vadd.f32 %v2813, %v2846
      %v2906 = vadd.f32 %v2815, %v2850
      %v2907 = vadd.f32 %v2817, %v2846
      %v2908 = vadd.f32 %v2819, %v2850
      %v2909 = vadd.f32 %v2823, %v2846
      %v2910 = vadd.f32 %v2825, %v2850
      %v2911 = vadd.f32 %v2827, %v2846
      %v2912 = vadd.f32 %v2829, %v2850
      %v2913 = vadd.f32 %v2833, %v2846
      %v2914 = vadd.f32 %v2835, %v2850
      %v2915 = vadd.f32 %v2837, %v2846
      %v2916 = vadd.f32 %v2839, %v2850
      %v2917 = vpack.c.bf16 %v2855, %v2853
      %v2918 = vpack.c.bf16 %v2856, %v2854
      %v2919 = vpack.c.bf16 %v2859, %v2857
      %v2920 = vpack.c.bf16 %v2860, %v2858
      %v2921 = vpack.c.bf16 %v2863, %v2861
      %v2922 = vpack.c.bf16 %v2864, %v2862
      %v2923 = vpack.c.bf16 %v2867, %v2865
      %v2924 = vpack.c.bf16 %v2868, %v2866
      %v2925 = vpack.c.bf16 %v2871, %v2869
      %v2926 = vpack.c.bf16 %v2872, %v2870
      %v2927 = vpack.c.bf16 %v2875, %v2873
      %v2928 = vpack.c.bf16 %v2876, %v2874
      %v2929 = vpack.c.bf16 %v2879, %v2877
      %v2930 = vpack.c.bf16 %v2880, %v2878
      %v2931 = vpack.c.bf16 %v2883, %v2881
      %v2932 = vpack.c.bf16 %v2884, %v2882
      %v2933 = vpack.c.bf16 %v2887, %v2885
      %v2934 = vpack.c.bf16 %v2888, %v2886
      %v2935 = vpack.c.bf16 %v2891, %v2889
      %v2936 = vpack.c.bf16 %v2892, %v2890
      %v2937 = vpack.c.bf16 %v2895, %v2893
      %v2938 = vpack.c.bf16 %v2896, %v2894
      %v2939 = vpack.c.bf16 %v2899, %v2897
      %v2940 = vpack.c.bf16 %v2900, %v2898
      %v2941 = vpack.c.bf16 %v2903, %v2901
      %v2942 = vpack.c.bf16 %v2904, %v2902
      %v2943 = vpack.c.bf16 %v2907, %v2905
      %v2944 = vpack.c.bf16 %v2908, %v2906
      %v2945 = vpack.c.bf16 %v2911, %v2909
      %v2946 = vpack.c.bf16 %v2912, %v2910
      %v2947 = vpack.c.bf16 %v2915, %v2913
      %v2948 = vpack.c.bf16 %v2916, %v2914
      %v2949 = vld [vmem:[%s5] sm:$0xf]
      %v2950 = vld [vmem:[%s5 + $0x4] sm:$0xf]
      %v2951 = vld [vmem:[%s5 + $0x8] sm:$0xf]
      %v2952 = vld [vmem:[%s5 + $0xc] sm:$0xf]
      %v2953 = vld [vmem:[%s5 + $0x10] sm:$0xf]
      %v2954 = vld [vmem:[%s5 + $0x14] sm:$0xf]
      %v2955 = vld [vmem:[%s5 + $0x18] sm:$0xf]
      %v2956 = vld [vmem:[%s5 + $0x1c] sm:$0xf]
      %v2957 = vld [vmem:[%s5 + $0x20] sm:$0xf]
      %v2958 = vld [vmem:[%s5 + $0x24] sm:$0xf]
      %v2959 = vld [vmem:[%s5 + $0x28] sm:$0xf]
      %v2960 = vld [vmem:[%s5 + $0x2c] sm:$0xf]
      %v2961 = vld [vmem:[%s5 + $0x30] sm:$0xf]
      %v2962 = vld [vmem:[%s5 + $0x34] sm:$0xf]
      %v2963 = vld [vmem:[%s5 + $0x38] sm:$0xf]
      %v2964 = vld [vmem:[%s5 + $0x3c] sm:$0xf]
      %v2965 = vld [vmem:[%s5 + $0x40] sm:$0xf]
      %v2966 = vld [vmem:[%s5 + $0x44] sm:$0xf]
      %v2967 = vld [vmem:[%s5 + $0x48] sm:$0xf]
      %v2968 = vld [vmem:[%s5 + $0x4c] sm:$0xf]
      %v2969 = vld [vmem:[%s5 + $0x50] sm:$0xf]
      %v2970 = vld [vmem:[%s5 + $0x54] sm:$0xf]
      %v2971 = vld [vmem:[%s5 + $0x58] sm:$0xf]
      %v2972 = vld [vmem:[%s5 + $0x5c] sm:$0xf]
      %v2973 = vld [vmem:[%s5 + $0x60] sm:$0xf]
      %v2974 = vld [vmem:[%s5 + $0x64] sm:$0xf]
      %v2975 = vld [vmem:[%s5 + $0x68] sm:$0xf]
      %v2976 = vld [vmem:[%s5 + $0x6c] sm:$0xf]
      %v2977 = vld [vmem:[%s5 + $0x70] sm:$0xf]
      %v2978 = vld [vmem:[%s5 + $0x74] sm:$0xf]
      %v2979 = vld [vmem:[%s5 + $0x78] sm:$0xf]
      %v2980 = vld [vmem:[%s5 + $0x7c] sm:$0xf]
      %v2981 = vld [vmem:[%s6] sm:$0x1]
      %v2983 = vlaneseq
      %v2984 = vshrl.u32 %v2983, 7
      %v2985 = vsub.s32 0, %v2984
      %v2986 = vrot.slane %v2981, %v2985
      %v3020 = vunpack.c.l.b16 %v2949
      %v3021 = vunpack.c.l.b16 %v2950
      %v3022 = vunpack.c.l.b16 %v2951
      %v3023 = vunpack.c.l.b16 %v2952
      %v3024 = vunpack.c.l.b16 %v2953
      %v3025 = vunpack.c.l.b16 %v2954
      %v3026 = vunpack.c.l.b16 %v2955
      %v3027 = vunpack.c.l.b16 %v2956
      %v3028 = vunpack.c.l.b16 %v2957
      %v3029 = vunpack.c.l.b16 %v2958
      %v3030 = vunpack.c.l.b16 %v2959
      %v3031 = vunpack.c.l.b16 %v2960
      %v3032 = vunpack.c.l.b16 %v2961
      %v3033 = vunpack.c.l.b16 %v2962
      %v3034 = vunpack.c.l.b16 %v2963
      %v3035 = vunpack.c.l.b16 %v2964
      %v3036 = vunpack.c.l.b16 %v2965
      %v3037 = vunpack.c.l.b16 %v2966
      %v3038 = vunpack.c.l.b16 %v2967
      %v3039 = vunpack.c.l.b16 %v2968
      %v3040 = vunpack.c.l.b16 %v2969
      %v3041 = vunpack.c.l.b16 %v2970
      %v3042 = vunpack.c.l.b16 %v2971
      %v3043 = vunpack.c.l.b16 %v2972
      %v3044 = vunpack.c.l.b16 %v2973
      %v3045 = vunpack.c.l.b16 %v2974
      %v3046 = vunpack.c.l.b16 %v2975
      %v3047 = vunpack.c.l.b16 %v2976
      %v3048 = vunpack.c.l.b16 %v2977
      %v3049 = vunpack.c.l.b16 %v2978
      %v3050 = vunpack.c.l.b16 %v2979
      %v3051 = vunpack.c.l.b16 %v2980
      %v3052 = vpack.c.b16 %v3021, %v3020
      %v3053 = vpack.c.b16 %v3023, %v3022
      %v3054 = vpack.c.b16 %v3025, %v3024
      %v3055 = vpack.c.b16 %v3027, %v3026
      %v3056 = vpack.c.b16 %v3029, %v3028
      %v3057 = vpack.c.b16 %v3031, %v3030
      %v3058 = vpack.c.b16 %v3033, %v3032
      %v3059 = vpack.c.b16 %v3035, %v3034
      %v3060 = vpack.c.b16 %v3037, %v3036
      %v3061 = vpack.c.b16 %v3039, %v3038
      %v3062 = vpack.c.b16 %v3041, %v3040
      %v3063 = vpack.c.b16 %v3043, %v3042
      %v3064 = vpack.c.b16 %v3045, %v3044
      %v3065 = vpack.c.b16 %v3047, %v3046
      %v3066 = vpack.c.b16 %v3049, %v3048
      %v3067 = vpack.c.b16 %v3051, %v3050
      %3084 = vmatprep.subr.bf16.mxu0 0
      %3085 = vmatpush1.bf16.msra.mxu0 %v3059
      %3086 = vmatprep.subr.bf16.mxu0 0
      %3087 = vmatpush1.bf16.msra.mxu0 %v3058
      %3088 = vmatprep.subr.bf16.mxu0 0
      %3089 = vmatpush1.bf16.msra.mxu0 %v3057
      %3090 = vmatprep.subr.bf16.mxu0 0
      %3091 = vmatpush1.bf16.msra.mxu0 %v3056
      %3092 = vmatprep.subr.bf16.mxu0 0
      %3093 = vmatpush1.bf16.msra.mxu0 %v3055
      %3094 = vmatprep.subr.bf16.mxu0 0
      %3095 = vmatpush1.bf16.msra.mxu0 %v3054
      %3096 = vmatprep.subr.bf16.mxu0 0
      %3097 = vmatpush1.bf16.msra.mxu0 %v3053
      %3098 = vmatprep.subr.bf16.mxu0 0
      %3099 = vmatpush1.bf16.msra.mxu0 %v3052
      %3100 = vmatprep.subr.bf16.mxu0 0
      %3101 = vmatpush2.bf16.msra.mxu0 %v3067
      %3102 = vmatprep.subr.bf16.mxu0 0
      %3103 = vmatpush2.bf16.msra.mxu0 %v3066
      %3104 = vmatprep.subr.bf16.mxu0 0
      %3105 = vmatpush2.bf16.msra.mxu0 %v3065
      %3106 = vmatprep.subr.bf16.mxu0 0
      %3107 = vmatpush2.bf16.msra.mxu0 %v3064
      %3108 = vmatprep.subr.bf16.mxu0 0
      %3109 = vmatpush2.bf16.msra.mxu0 %v3063
      %3110 = vmatprep.subr.bf16.mxu0 0
      %3111 = vmatpush2.bf16.msra.mxu0 %v3062
      %3112 = vmatprep.subr.bf16.mxu0 0
      %3113 = vmatpush2.bf16.msra.mxu0 %v3061
      %3114 = vmatprep.subr.bf16.mxu0 0
      %3115 = vmatpush2.bf16.msra.mxu0 %v3060
      %3116 = vmatprep.mubr.bf16.mxu0 %v2918
      %3117 = vmatmul.mubr.bf16.gmra.mxu0 %v2917
      %v3118 = vpop.f32.mrf.mxu0
      %v3119 = vadd.f32 %v2986, %v3118
      %v3120 = vpop.f32.mrf.mxu0
      %v3121 = vpop.f32.mrf.mxu0
      %v3122 = vadd.f32 %v2986, %v3121
      %v3123 = vpop.f32.mrf.mxu0
      %3124 = vmatprep.mubr.bf16.mxu0 %v2920
      %3125 = vmatmul.mubr.bf16.gmra.mxu0 %v2919
      %v3126 = vpop.f32.mrf.mxu0
      %v3127 = vadd.f32 %v2986, %v3126
      %v3128 = vpop.f32.mrf.mxu0
      %v3129 = vpop.f32.mrf.mxu0
      %v3130 = vadd.f32 %v2986, %v3129
      %v3131 = vpop.f32.mrf.mxu0
      %3132 = vmatprep.mubr.bf16.mxu0 %v2922
      %3133 = vmatmul.mubr.bf16.gmra.mxu0 %v2921
      %v3134 = vpop.f32.mrf.mxu0
      %v3135 = vadd.f32 %v2986, %v3134
      %v3136 = vpop.f32.mrf.mxu0
      %v3137 = vpop.f32.mrf.mxu0
      %v3138 = vadd.f32 %v2986, %v3137
      %v3139 = vpop.f32.mrf.mxu0
      %3140 = vmatprep.mubr.bf16.mxu0 %v2924
      %3141 = vmatmul.mubr.bf16.gmra.mxu0 %v2923
      %v3142 = vpop.f32.mrf.mxu0
      %v3143 = vadd.f32 %v2986, %v3142
      %v3144 = vpop.f32.mrf.mxu0
      %v3145 = vpop.f32.mrf.mxu0
      %v3146 = vadd.f32 %v2986, %v3145
      %v3147 = vpop.f32.mrf.mxu0
      %3148 = vmatprep.mubr.bf16.mxu0 %v2926
      %3149 = vmatmul.mubr.bf16.gmra.mxu0 %v2925
      %v3150 = vpop.f32.mrf.mxu0
      %v3151 = vadd.f32 %v2986, %v3150
      %v3152 = vpop.f32.mrf.mxu0
      %v3153 = vpop.f32.mrf.mxu0
      %v3154 = vadd.f32 %v2986, %v3153
      %v3155 = vpop.f32.mrf.mxu0
      %3156 = vmatprep.mubr.bf16.mxu0 %v2928
      %3157 = vmatmul.mubr.bf16.gmra.mxu0 %v2927
      %v3158 = vpop.f32.mrf.mxu0
      %v3159 = vadd.f32 %v2986, %v3158
      %v3160 = vpop.f32.mrf.mxu0
      %v3161 = vpop.f32.mrf.mxu0
      %v3162 = vadd.f32 %v2986, %v3161
      %v3163 = vpop.f32.mrf.mxu0
      %3164 = vmatprep.mubr.bf16.mxu0 %v2930
      %3165 = vmatmul.mubr.bf16.gmra.mxu0 %v2929
      %v3166 = vpop.f32.mrf.mxu0
      %v3167 = vadd.f32 %v2986, %v3166
      %v3168 = vpop.f32.mrf.mxu0
      %v3169 = vpop.f32.mrf.mxu0
      %v3170 = vadd.f32 %v2986, %v3169
      %v3171 = vpop.f32.mrf.mxu0
      %3172 = vmatprep.mubr.bf16.mxu0 %v2932
      %3173 = vmatmul.mubr.bf16.gmra.mxu0 %v2931
      %v3174 = vpop.f32.mrf.mxu0
      %v3175 = vadd.f32 %v2986, %v3174
      %v3176 = vpop.f32.mrf.mxu0
      %v3177 = vpop.f32.mrf.mxu0
      %v3178 = vadd.f32 %v2986, %v3177
      %v3179 = vpop.f32.mrf.mxu0
      %3180 = vmatprep.mubr.bf16.mxu0 %v2934
      %3181 = vmatmul.mubr.bf16.gmra.mxu0 %v2933
      %v3182 = vpop.f32.mrf.mxu0
      %v3183 = vadd.f32 %v2986, %v3182
      %v3184 = vpop.f32.mrf.mxu0
      %v3185 = vpop.f32.mrf.mxu0
      %v3186 = vadd.f32 %v2986, %v3185
      %v3187 = vpop.f32.mrf.mxu0
      %3188 = vmatprep.mubr.bf16.mxu0 %v2936
      %3189 = vmatmul.mubr.bf16.gmra.mxu0 %v2935
      %v3190 = vpop.f32.mrf.mxu0
      %v3191 = vadd.f32 %v2986, %v3190
      %v3192 = vpop.f32.mrf.mxu0
      %v3193 = vpop.f32.mrf.mxu0
      %v3194 = vadd.f32 %v2986, %v3193
      %v3195 = vpop.f32.mrf.mxu0
      %3196 = vmatprep.mubr.bf16.mxu0 %v2938
      %3197 = vmatmul.mubr.bf16.gmra.mxu0 %v2937
      %v3198 = vpop.f32.mrf.mxu0
      %v3199 = vadd.f32 %v2986, %v3198
      %v3200 = vpop.f32.mrf.mxu0
      %v3201 = vpop.f32.mrf.mxu0
      %v3202 = vadd.f32 %v2986, %v3201
      %v3203 = vpop.f32.mrf.mxu0
      %3204 = vmatprep.mubr.bf16.mxu0 %v2940
      %3205 = vmatmul.mubr.bf16.gmra.mxu0 %v2939
      %v3206 = vpop.f32.mrf.mxu0
      %v3207 = vadd.f32 %v2986, %v3206
      %v3208 = vpop.f32.mrf.mxu0
      %v3209 = vpop.f32.mrf.mxu0
      %v3210 = vadd.f32 %v2986, %v3209
      %v3211 = vpop.f32.mrf.mxu0
      %3212 = vmatprep.mubr.bf16.mxu0 %v2942
      %3213 = vmatmul.mubr.bf16.gmra.mxu0 %v2941
      %v3214 = vpop.f32.mrf.mxu0
      %v3215 = vadd.f32 %v2986, %v3214
      %v3216 = vpop.f32.mrf.mxu0
      %v3217 = vpop.f32.mrf.mxu0
      %v3218 = vadd.f32 %v2986, %v3217
      %v3219 = vpop.f32.mrf.mxu0
      %3220 = vmatprep.mubr.bf16.mxu0 %v2944
      %3221 = vmatmul.mubr.bf16.gmra.mxu0 %v2943
      %v3222 = vpop.f32.mrf.mxu0
      %v3223 = vadd.f32 %v2986, %v3222
      %v3224 = vpop.f32.mrf.mxu0
      %v3225 = vpop.f32.mrf.mxu0
      %v3226 = vadd.f32 %v2986, %v3225
      %v3227 = vpop.f32.mrf.mxu0
      %3228 = vmatprep.mubr.bf16.mxu0 %v2946
      %3229 = vmatmul.mubr.bf16.gmra.mxu0 %v2945
      %v3230 = vpop.f32.mrf.mxu0
      %v3231 = vadd.f32 %v2986, %v3230
      %v3232 = vpop.f32.mrf.mxu0
      %v3233 = vpop.f32.mrf.mxu0
      %v3234 = vadd.f32 %v2986, %v3233
      %v3235 = vpop.f32.mrf.mxu0
      %3236 = vmatprep.mubr.bf16.mxu0 %v2948
      %3237 = vmatmul.mubr.bf16.gmra.mxu0 %v2947
      %v3238 = vpop.f32.mrf.mxu0
      %v3239 = vadd.f32 %v2986, %v3238
      %v3240 = vpop.f32.mrf.mxu0
      %v3241 = vpop.f32.mrf.mxu0
      %v3242 = vadd.f32 %v2986, %v3241
      %v3243 = vpop.f32.mrf.mxu0
      %3244 = vdwg.mxu0
      %3245 = vst [vmem:[%s322] sm:$0xff] %v3119
      %3246 = vst [vmem:[%s322 + $0x8] sm:$0xff] %v3122
      %3247 = vst [vmem:[%s322 + $0x10] sm:$0xff] %v3127
      %3248 = vst [vmem:[%s322 + $0x18] sm:$0xff] %v3130
      %3249 = vst [vmem:[%s322 + $0x20] sm:$0xff] %v3135
      %3250 = vst [vmem:[%s322 + $0x28] sm:$0xff] %v3138
      %3251 = vst [vmem:[%s322 + $0x30] sm:$0xff] %v3143
      %3252 = vst [vmem:[%s322 + $0x38] sm:$0xff] %v3146
      %3253 = vst [vmem:[%s322 + $0x40] sm:$0xff] %v3151
      %3254 = vst [vmem:[%s322 + $0x48] sm:$0xff] %v3154
      %3255 = vst [vmem:[%s322 + $0x50] sm:$0xff] %v3159
      %3256 = vst [vmem:[%s322 + $0x58] sm:$0xff] %v3162
      %3257 = vst [vmem:[%s322 + $0x60] sm:$0xff] %v3167
      %3258 = vst [vmem:[%s322 + $0x68] sm:$0xff] %v3170
      %3259 = vst [vmem:[%s322 + $0x70] sm:$0xff] %v3175
      %3260 = vst [vmem:[%s322 + $0x78] sm:$0xff] %v3178
      %3261 = vst [vmem:[%s322 + $0x80] sm:$0xff] %v3183
      %3262 = vst [vmem:[%s322 + $0x88] sm:$0xff] %v3186
      %3263 = vst [vmem:[%s322 + $0x90] sm:$0xff] %v3191
      %3264 = vst [vmem:[%s322 + $0x98] sm:$0xff] %v3194
      %3265 = vst [vmem:[%s322 + $0xa0] sm:$0xff] %v3199
      %3266 = vst [vmem:[%s322 + $0xa8] sm:$0xff] %v3202
      %3267 = vst [vmem:[%s322 + $0xb0] sm:$0xff] %v3207
      %3268 = vst [vmem:[%s322 + $0xb8] sm:$0xff] %v3210
      %3269 = vst [vmem:[%s322 + $0xc0] sm:$0xff] %v3215
      %3270 = vst [vmem:[%s322 + $0xc8] sm:$0xff] %v3218
      %3271 = vst [vmem:[%s322 + $0xd0] sm:$0xff] %v3223
      %3272 = vst [vmem:[%s322 + $0xd8] sm:$0xff] %v3226
      %3273 = vst [vmem:[%s322 + $0xe0] sm:$0xff] %v3231
      %3274 = vst [vmem:[%s322 + $0xe8] sm:$0xff] %v3234
      %3275 = vst [vmem:[%s322 + $0xf0] sm:$0xff] %v3239
      %3276 = vst [vmem:[%s322 + $0xf8] sm:$0xff] %v3242
      %s3277 = smul.u32 16, %s23
      %p3278 = scmp.lt.s32.totalorder %s22, 1
      %s3279 = scalar_select %p3278, %s22, 1
      %p3280 = scmp.lt.s32.totalorder %s3277, 15
      %s3281 = scalar_select %p3280, %s3277, 15
      %s3282 = smul.addr %s3281, 2
      %s3283 = smul.addr %s3279, 32
      %s3284 = sadd.s32 %s3282, %s3283
      %s3285 = smul.addr %s3284, 8
      %s3286 = scalar_lea.vmem %s7, %s3285
      // Predicated region
      $region49: #{decoder_forward.1} parent=47 // pred_check
        %p3287 = pneg %p207
      $region50: #{decoder_forward.1} parent=47 // pred_check_branch
        %3289 = sbr.rel (%p3287) target = $region52
      $region51: #{decoder_forward.1} parent=47 // pred_region
        %s3290 = smul.u32 16, %s23
      $region52: #{decoder_forward.1} parent=47 // pred_fallthru
        _
    $region48: #{decoder_forward.1} parent=5 // pred_fallthru
      _
    %p3291 = scmp.le.s32.totalorder 2, %s13
    // Predicated region
    $region53: #{decoder_forward.1} parent=5 // pred_check
      %p3292 = pneg %p3291
    $region54: #{decoder_forward.1} parent=5 // pred_check_branch
      %3294 = sbr.rel (%p3292) target = $region56
    $region55: #{decoder_forward.1} parent=5 // pred_region
      %s3295 = ssub.s32 %s13, 2
      // Predicated region
      $region57: #{decoder_forward.1} parent=55 // pred_check
        %p3296 = pneg %p213
      $region58: #{decoder_forward.1} parent=55 // pred_check_branch
        %3298 = sbr.rel (%p3296) target = $region60
      $region59: #{decoder_forward.1} parent=55 // pred_region
        %s3299 = smul.u32 16, %s25
        %p3300 = scmp.lt.s32.totalorder %s24, 1
        %s3301 = scalar_select %p3300, %s24, 1
        %p3302 = scmp.lt.s32.totalorder %s3299, 15
        %s3303 = scalar_select %p3302, %s3299, 15
        %s3304 = smul.addr %s3303, 2
        %s3305 = smul.addr %s3301, 32
        %s3306 = sadd.s32 %s3304, %s3305
        %s3307 = smul.addr %s3306, 8
        %s3308 = scalar_lea.vmem %s7, %s3307
      $region60: #{decoder_forward.1} parent=55 // pred_fallthru
        _
    $region56: #{decoder_forward.1} parent=5 // pred_fallthru
      _
  $region6: #{decoder_forward.1} parent=0 // loop_footer
    %s17 = sadd.s32 1, %s13
  $region7: #{decoder_forward.1} parent=0 // loop_footer_branch
    %12 = sbr.rel target = $region3
  $region8: #{decoder_forward.1} parent=0 // loop_exit
    _

// kernel: decoder_forward.1
$region0: #{decoder_forward.1}
  #allocation0 [shape = 'u32[]', space=smem, size = 0x4, offset = 0x4, fixed_abs, tag = 'smem constant byte address 0x4 - core index']
  #allocation1 [shape = 'u32[144,128]{1,0:T(1,128)}', space=vmem, size = 0x12000, scoped, tag = 'internal scratch']
  %s0 = inlined_call_operand.vmem [shape: bf16[2,18,18,5], index: 0, kind: input, shape index: {}]
  %s1 = inlined_call_operand.vmem [shape: bf16[2,18,18,4], index: 1, kind: input, shape index: {}]
  %s2 = inlined_call_operand.vmem [shape: bf16[45,256], index: 2, kind: input, shape index: {}]
  %s3 = inlined_call_operand.vmem [shape: bf16[36,256], index: 3, kind: input, shape index: {}]
  %s4 = inlined_call_operand.vmem [shape: f32[1,256], index: 4, kind: input, shape index: {}]
  %s5 = inlined_call_operand.vmem [shape: bf16[256,128], index: 5, kind: input, shape index: {}]
  %s6 = inlined_call_operand.vmem [shape: f32[1,128], index: 6, kind: input, shape index: {}]
  %s7 = inlined_call_operand.vmem [shape: f32[2,16,16,128], index: 7, kind: output, shape index: {}]
  %s8 = sld [smem:[#allocation0]]
  $region61: #{decoder_forward.1} parent=0
    _
  %s10 = ssub.s32 1, %s8
  %s11 = scalar_select 0, %s10, %s8
  loop: start=0, step=1, limit=4
  $region2: #{decoder_forward.1} parent=0 // loop_pre_header
    _
  $region3: #{decoder_forward.1} parent=0 // loop_header
    %s13 = sphi 0, %s17
    %p14 = scmp.ge.s32.totalorder %s13, 4
    %s20 = sphi 0, %s32
    %s21 = sphi 0, %s28
    %s22 = sphi 0, %s20
    %s23 = sphi 0, %s21
    %s24 = sphi 0, %s22
    %s25 = sphi 0, %s23
    %s35 = sphi 0, %s37
    %s38 = sphi 0, %s35
    %s39 = sphi 0, %s38
    %s55 = sphi 0, %s39
    %s61 = sphi 0, %s63
    %s64 = sphi 0, %s61
    %s65 = sphi 0, %s64
    %s81 = sphi 0, %s65
    %s85 = sphi 0, %s85
    %s87 = sphi 0, %s85
    %s88 = sphi 0, %s87
    %s102 = sphi 0, %s88
    %s106 = sphi 0, %s106
    %s108 = sphi 0, %s106
    %s109 = sphi 0, %s108
    %s123 = sphi 0, %s109
    %s127 = sphi 0, %s127
    %s129 = sphi 0, %s127
    %s130 = sphi 0, %s129
    %s144 = sphi 0, %s130
    %s148 = sphi 0, %s148
    %s150 = sphi 0, %s148
    %s151 = sphi 0, %s150
    %s165 = sphi 0, %s151
    %s169 = sphi 0, %s169
    %s171 = sphi 0, %s169
    %s172 = sphi 0, %s171
    %s186 = sphi 0, %s172
    %s194 = sphi 0, %s196
    %s197 = sphi 0, %s194
    %s198 = sphi 0, %s197
    %s214 = sphi 0, %s198
  $region4: #{decoder_forward.1} parent=0 // loop_header_branch
    %16 = sbr.rel (%p14) target = $region8
  $region5: #{decoder_forward.1} parent=0 // loop_body
    %s18 = ssub.s32 %s13, 1
    %s19 = ssub.s32 %s13, 2
    %s26 = sadd.s32 1, %s21
    %p27 = scmp.ge.s32.totalorder %s26, 1
    %s28 = scalar_select %p27, 0, %s26
    %s29 = sadd.s32 1, %s20
    %s30 = scalar_select %p27, %s29, %s20
    %p31 = scmp.ge.s32.totalorder %s30, 2
    %s32 = scalar_select %p31, 0, %s30
    %s33 = ssub.s32 %s20, %s32
    %p34 = scmp.eq.s32.totalorder %s33, 0
    %s36 = sadd.s32 %s35, 1
    %s37 = scalar_select %p34, %s35, %s36
    %p40 = pneg %p34
    %p41 = scmp.eq.s32.totalorder %s13, 1
    %p42 = por %p40, %p41
    %p43 = scmp.ne.s32.totalorder %s35, %s38
    %p44 = scmp.eq.s32.totalorder %s13, 0
    %p45 = por %p43, %p44
    %p46 = scmp.ne.s32.totalorder %s35, %s38
    %p47 = scmp.eq.s32.totalorder %s18, 1
    %p48 = por %p46, %p47
    %p49 = scmp.ne.s32.totalorder %s38, %s39
    %p50 = scmp.eq.s32.totalorder %s18, 0
    %p51 = por %p49, %p50
    %p52 = scmp.ne.s32.totalorder %s38, %s39
    %p53 = scmp.eq.s32.totalorder %s19, 1
    %p54 = por %p52, %p53
    %p56 = scmp.ne.s32.totalorder %s39, %s55
    %p57 = scmp.eq.s32.totalorder %s19, 0
    %p58 = por %p56, %p57
    %s59 = ssub.s32 %s20, %s32
    %p60 = scmp.eq.s32.totalorder %s59, 0
    %s62 = sadd.s32 %s61, 1
    %s63 = scalar_select %p60, %s61, %s62
    %p66 = pneg %p60
    %p67 = scmp.eq.s32.totalorder %s13, 1
    %p68 = por %p66, %p67
    %p69 = scmp.ne.s32.totalorder %s61, %s64
    %p70 = scmp.eq.s32.totalorder %s13, 0
    %p71 = por %p69, %p70
    %p72 = scmp.ne.s32.totalorder %s61, %s64
    %p73 = scmp.eq.s32.totalorder %s18, 1
    %p74 = por %p72, %p73
    %p75 = scmp.ne.s32.totalorder %s64, %s65
    %p76 = scmp.eq.s32.totalorder %s18, 0
    %p77 = por %p75, %p76
    %p78 = scmp.ne.s32.totalorder %s64, %s65
    %p79 = scmp.eq.s32.totalorder %s19, 1
    %p80 = por %p78, %p79
    %p82 = scmp.ne.s32.totalorder %s65, %s81
    %p83 = scmp.eq.s32.totalorder %s19, 0
    %p84 = por %p82, %p83
    %s86 = sadd.s32 %s85, 1
    %p89 = scmp.eq.s32.totalorder %s13, 1
    %p90 = scmp.ne.s32.totalorder %s85, %s87
    %p91 = scmp.eq.s32.totalorder %s13, 0
    %p92 = por %p90, %p91
    %p93 = scmp.ne.s32.totalorder %s85, %s87
    %p94 = scmp.eq.s32.totalorder %s18, 1
    %p95 = por %p93, %p94
    %p96 = scmp.ne.s32.totalorder %s87, %s88
    %p97 = scmp.eq.s32.totalorder %s18, 0
    %p98 = por %p96, %p97
    %p99 = scmp.ne.s32.totalorder %s87, %s88
    %p100 = scmp.eq.s32.totalorder %s19, 1
    %p101 = por %p99, %p100
    %p103 = scmp.ne.s32.totalorder %s88, %s102
    %p104 = scmp.eq.s32.totalorder %s19, 0
    %p105 = por %p103, %p104
    %s107 = sadd.s32 %s106, 1
    %p110 = scmp.eq.s32.totalorder %s13, 1
    %p111 = scmp.ne.s32.totalorder %s106, %s108
    %p112 = scmp.eq.s32.totalorder %s13, 0
    %p113 = por %p111, %p112
    %p114 = scmp.ne.s32.totalorder %s106, %s108
    %p115 = scmp.eq.s32.totalorder %s18, 1
    %p116 = por %p114, %p115
    %p117 = scmp.ne.s32.totalorder %s108, %s109
    %p118 = scmp.eq.s32.totalorder %s18, 0
    %p119 = por %p117, %p118
    %p120 = scmp.ne.s32.totalorder %s108, %s109
    %p121 = scmp.eq.s32.totalorder %s19, 1
    %p122 = por %p120, %p121
    %p124 = scmp.ne.s32.totalorder %s109, %s123
    %p125 = scmp.eq.s32.totalorder %s19, 0
    %p126 = por %p124, %p125
    %s128 = sadd.s32 %s127, 1
    %p131 = scmp.eq.s32.totalorder %s13, 1
    %p132 = scmp.ne.s32.totalorder %s127, %s129
    %p133 = scmp.eq.s32.totalorder %s13, 0
    %p134 = por %p132, %p133
    %p135 = scmp.ne.s32.totalorder %s127, %s129
    %p136 = scmp.eq.s32.totalorder %s18, 1
    %p137 = por %p135, %p136
    %p138 = scmp.ne.s32.totalorder %s129, %s130
    %p139 = scmp.eq.s32.totalorder %s18, 0
    %p140 = por %p138, %p139
    %p141 = scmp.ne.s32.totalorder %s129, %s130
    %p142 = scmp.eq.s32.totalorder %s19, 1
    %p143 = por %p141, %p142
    %p145 = scmp.ne.s32.totalorder %s130, %s144
    %p146 = scmp.eq.s32.totalorder %s19, 0
    %p147 = por %p145, %p146
    %s149 = sadd.s32 %s148, 1
    %p152 = scmp.eq.s32.totalorder %s13, 1
    %p153 = scmp.ne.s32.totalorder %s148, %s150
    %p154 = scmp.eq.s32.totalorder %s13, 0
    %p155 = por %p153, %p154
    %p156 = scmp.ne.s32.totalorder %s148, %s150
    %p157 = scmp.eq.s32.totalorder %s18, 1
    %p158 = por %p156, %p157
    %p159 = scmp.ne.s32.totalorder %s150, %s151
    %p160 = scmp.eq.s32.totalorder %s18, 0
    %p161 = por %p159, %p160
    %p162 = scmp.ne.s32.totalorder %s150, %s151
    %p163 = scmp.eq.s32.totalorder %s19, 1
    %p164 = por %p162, %p163
    %p166 = scmp.ne.s32.totalorder %s151, %s165
    %p167 = scmp.eq.s32.totalorder %s19, 0
    %p168 = por %p166, %p167
    %s170 = sadd.s32 %s169, 1
    %p173 = scmp.eq.s32.totalorder %s13, 1
    %p174 = scmp.ne.s32.totalorder %s169, %s171
    %p175 = scmp.eq.s32.totalorder %s13, 0
    %p176 = por %p174, %p175
    %p177 = scmp.ne.s32.totalorder %s169, %s171
    %p178 = scmp.eq.s32.totalorder %s18, 1
    %p179 = por %p177, %p178
    %p180 = scmp.ne.s32.totalorder %s171, %s172
    %p181 = scmp.eq.s32.totalorder %s18, 0
    %p182 = por %p180, %p181
    %p183 = scmp.ne.s32.totalorder %s171, %s172
    %p184 = scmp.eq.s32.totalorder %s19, 1
    %p185 = por %p183, %p184
    %p187 = scmp.ne.s32.totalorder %s172, %s186
    %p188 = scmp.eq.s32.totalorder %s19, 0
    %p189 = por %p187, %p188
    %s190 = ssub.s32 %s20, %s32
    %s191 = ssub.s32 %s21, %s28
    %s192 = sor.u32 %s190, %s191
    %p193 = scmp.eq.s32.totalorder %s192, 0
    %s195 = sadd.s32 %s194, 1
    %s196 = scalar_select %p193, %s194, %s195
    %p199 = pneg %p193
    %p200 = scmp.eq.s32.totalorder %s13, 1
    %p201 = por %p199, %p200
    %p202 = scmp.ne.s32.totalorder %s194, %s197
    %p203 = scmp.eq.s32.totalorder %s13, 0
    %p204 = por %p202, %p203
    %p205 = scmp.ne.s32.totalorder %s194, %s197
    %p206 = scmp.eq.s32.totalorder %s18, 1
    %p207 = por %p205, %p206
    %p208 = scmp.ne.s32.totalorder %s197, %s198
    %p209 = scmp.eq.s32.totalorder %s18, 0
    %p210 = por %p208, %p209
    %p211 = scmp.ne.s32.totalorder %s197, %s198
    %p212 = scmp.eq.s32.totalorder %s19, 1
    %p213 = por %p211, %p212
    %p215 = scmp.ne.s32.totalorder %s198, %s214
    %p216 = scmp.eq.s32.totalorder %s19, 0
    %p217 = por %p215, %p216
    %p218 = scmp.le.s32.totalorder 1, %s13
    %p219 = scmp.lt.s32.totalorder %s13, 3
    %p220 = pnand %p218, %p219
    %p221 = pneg %p220
    // Predicated region
    $region9: #{decoder_forward.1} parent=5 // pred_check
      _
    $region10: #{decoder_forward.1} parent=5 // pred_check_branch
      %223 = sbr.rel (%p220) target = $region12
    $region11: #{decoder_forward.1} parent=5 // pred_region
      %s224 = ssub.s32 %s13, 1
      // Predicated region
      $region13: #{decoder_forward.1} parent=11 // pred_check
        %p225 = pneg %p98
      $region14: #{decoder_forward.1} parent=11 // pred_check_branch
        %227 = sbr.rel (%p225) target = $region16
      $region15: #{decoder_forward.1} parent=11 // pred_region
        _
      $region16: #{decoder_forward.1} parent=11 // pred_fallthru
        _
      // Predicated region
      $region17: #{decoder_forward.1} parent=11 // pred_check
        %p228 = pneg %p119
      $region18: #{decoder_forward.1} parent=11 // pred_check_branch
        %230 = sbr.rel (%p228) target = $region20
      $region19: #{decoder_forward.1} parent=11 // pred_region
        _
      $region20: #{decoder_forward.1} parent=11 // pred_fallthru
        _
      // Predicated region
      $region21: #{decoder_forward.1} parent=11 // pred_check
        %p231 = pneg %p140
      $region22: #{decoder_forward.1} parent=11 // pred_check_branch
        %233 = sbr.rel (%p231) target = $region24
      $region23: #{decoder_forward.1} parent=11 // pred_region
        _
      $region24: #{decoder_forward.1} parent=11 // pred_fallthru
        _
      // Predicated region
      $region25: #{decoder_forward.1} parent=11 // pred_check
        %p234 = pneg %p161
      $region26: #{decoder_forward.1} parent=11 // pred_check_branch
        %236 = sbr.rel (%p234) target = $region28
      $region27: #{decoder_forward.1} parent=11 // pred_region
        _
      $region28: #{decoder_forward.1} parent=11 // pred_fallthru
        _
      // Predicated region
      $region29: #{decoder_forward.1} parent=11 // pred_check
        %p237 = pneg %p182
      $region30: #{decoder_forward.1} parent=11 // pred_check_branch
        %239 = sbr.rel (%p237) target = $region32
      $region31: #{decoder_forward.1} parent=11 // pred_region
        _
      $region32: #{decoder_forward.1} parent=11 // pred_fallthru
        _
    $region12: #{decoder_forward.1} parent=5 // pred_fallthru
      _
    %p240 = scmp.lt.s32.totalorder %s13, 2
    // Predicated region
    $region33: #{decoder_forward.1} parent=5 // pred_check
      %p241 = pneg %p240
    $region34: #{decoder_forward.1} parent=5 // pred_check_branch
      %243 = sbr.rel (%p241) target = $region36
    $region35: #{decoder_forward.1} parent=5 // pred_region
      // Predicated region
      $region37: #{decoder_forward.1} parent=35 // pred_check
        %p244 = pneg %p45
      $region38: #{decoder_forward.1} parent=35 // pred_check_branch
        %246 = sbr.rel (%p244) target = $region40
      $region39: #{decoder_forward.1} parent=35 // pred_region
        %p247 = scmp.lt.s32.totalorder %s20, 1
        %s248 = scalar_select %p247, %s20, 1
        %s249 = smul.addr %s248, 54
        %s250 = smul.addr %s249, 4
        %s251 = scalar_lea.vmem %s0, %s250
      $region40: #{decoder_forward.1} parent=35 // pred_fallthru
        _
      // Predicated region
      $region41: #{decoder_forward.1} parent=35 // pred_check
        %p252 = pneg %p71
      $region42: #{decoder_forward.1} parent=35 // pred_check_branch
        %254 = sbr.rel (%p252) target = $region44
      $region43: #{decoder_forward.1} parent=35 // pred_region
        %p255 = scmp.lt.s32.totalorder %s20, 1
        %s256 = scalar_select %p255, %s20, 1
        %s257 = smul.addr %s256, 54
        %s258 = smul.addr %s257, 4
        %s259 = scalar_lea.vmem %s1, %s258
      $region44: #{decoder_forward.1} parent=35 // pred_fallthru
        _
    $region36: #{decoder_forward.1} parent=5 // pred_fallthru
      _
    %p260 = scmp.le.s32.totalorder 1, %s13
    %p261 = scmp.lt.s32.totalorder %s13, 3
    %p262 = pnand %p260, %p261
    %p263 = pneg %p262
    // Predicated region
    $region45: #{decoder_forward.1} parent=5 // pred_check
      _
    $region46: #{decoder_forward.1} parent=5 // pred_check_branch
      %265 = sbr.rel (%p262) target = $region48
    $region47: #{decoder_forward.1} parent=5 // pred_region
      %s266 = ssub.s32 %s13, 1
      %p267 = scmp.lt.s32.totalorder %s22, 1
      %s268 = scalar_select %p267, %s22, 1
      %s269 = smul.addr %s268, 54
      %s270 = smul.addr %s269, 4
      %s271 = scalar_lea.vmem %s0, %s270
      %p272 = pneg %p51
      %p273 = pneg %p48
      %p274 = scmp.lt.s32.totalorder %s22, 1
      %s275 = scalar_select %p274, %s22, 1
      %s276 = smul.addr %s275, 54
      %s277 = smul.addr %s276, 4
      %s278 = scalar_lea.vmem %s1, %s277
      %p279 = pneg %p77
      %p280 = pneg %p74
      %p281 = pneg %p98
      %p282 = pneg %p95
      %p283 = pneg %p119
      %p284 = pneg %p116
      %p285 = pneg %p140
      %p286 = pneg %p137
      %p287 = pneg %p161
      %p288 = pneg %p158
      %p289 = pneg %p182
      %p290 = pneg %p179
      %p291 = pneg %p210
      %p292 = pneg %p207
      %s293 = smul.u32 16, %s23
      %p294 = scmp.lt.s32.totalorder %s22, 1
      %s295 = scalar_select %p294, %s22, 1
      %p296 = scmp.lt.s32.totalorder %s293, 15
      %s297 = scalar_select %p296, %s293, 15
      %s298 = smul.addr %s297, 2
      %s299 = smul.addr %s295, 32
      %s300 = sadd.s32 %s298, %s299
      %s301 = smul.addr %s300, 8
      %s302 = scalar_lea.vmem %s7, %s301
      %p303 = scmp.lt.s32.totalorder %s22, 1
      %s304 = scalar_select %p303, %s22, 1
      %s305 = smul.addr %s304, 54
      %s306 = smul.addr %s305, 4
      %s307 = scalar_lea.vmem %s0, %s306
      %p308 = scmp.lt.s32.totalorder %s22, 1
      %s309 = scalar_select %p308, %s22, 1
      %s310 = smul.addr %s309, 54
      %s311 = smul.addr %s310, 4
      %s312 = scalar_lea.vmem %s1, %s311
      %s313 = smul.u32 16, %s23
      %p314 = scmp.lt.s32.totalorder %s22, 1
      %s315 = scalar_select %p314, %s22, 1
      %p316 = scmp.lt.s32.totalorder %s313, 15
      %s317 = scalar_select %p316, %s313, 15
      %s318 = smul.addr %s317, 2
      %s319 = smul.addr %s315, 32
      %s320 = sadd.s32 %s318, %s319
      %s321 = smul.addr %s320, 8
      %s322 = scalar_lea.vmem %s7, %s321
      %s323 = smul.u32 16, %s23
      %s325 = smul.u32 %s23, 16
      %s326 = smul.u32 %s325, 3
      %s327 = smul.addr %s326, 4
      %s328 = scalar_lea.vmem %s307, %s327
      %v329 = vld [vmem:[%s328] sm:$0xf]
      %v330 = vld [vmem:[%s328 + $0x4] sm:$0xf]
      %v331 = vld [vmem:[%s328 + $0x8] sm:$0x1]
      %v332 = vld [vmem:[%s328 + $0xc] sm:$0xf]
      %v333 = vld [vmem:[%s328 + $0x10] sm:$0xf]
      %v334 = vld [vmem:[%s328 + $0x14] sm:$0x1]
      %v335 = vld [vmem:[%s328 + $0x18] sm:$0xf]
      %v336 = vld [vmem:[%s328 + $0x1c] sm:$0xf]
      %v337 = vld [vmem:[%s328 + $0x20] sm:$0x1]
      %v338 = vld [vmem:[%s328 + $0x24] sm:$0xf]
      %v339 = vld [vmem:[%s328 + $0x28] sm:$0xf]
      %v340 = vld [vmem:[%s328 + $0x2c] sm:$0x1]
      %v341 = vld [vmem:[%s328 + $0x30] sm:$0xf]
      %v342 = vld [vmem:[%s328 + $0x34] sm:$0xf]
      %v343 = vld [vmem:[%s328 + $0x38] sm:$0x1]
      %v344 = vld [vmem:[%s328 + $0x3c] sm:$0xf]
      %v345 = vld [vmem:[%s328 + $0x40] sm:$0xf]
      %v346 = vld [vmem:[%s328 + $0x44] sm:$0x1]
      %v347 = vld [vmem:[%s328 + $0x48] sm:$0xf]
      %v348 = vld [vmem:[%s328 + $0x4c] sm:$0xf]
      %v349 = vld [vmem:[%s328 + $0x50] sm:$0x1]
      %v350 = vld [vmem:[%s328 + $0x54] sm:$0xf]
      %v351 = vld [vmem:[%s328 + $0x58] sm:$0xf]
      %v352 = vld [vmem:[%s328 + $0x5c] sm:$0x1]
      %v353 = vld [vmem:[%s328 + $0x60] sm:$0xf]
      %v354 = vld [vmem:[%s328 + $0x64] sm:$0xf]
      %v355 = vld [vmem:[%s328 + $0x68] sm:$0x1]
      %v356 = vld [vmem:[%s328 + $0x6c] sm:$0xf]
      %v357 = vld [vmem:[%s328 + $0x70] sm:$0xf]
      %v358 = vld [vmem:[%s328 + $0x74] sm:$0x1]
      %v359 = vld [vmem:[%s328 + $0x78] sm:$0xf]
      %v360 = vld [vmem:[%s328 + $0x7c] sm:$0xf]
      %v361 = vld [vmem:[%s328 + $0x80] sm:$0x1]
      %v362 = vld [vmem:[%s328 + $0x84] sm:$0xf]
      %v363 = vld [vmem:[%s328 + $0x88] sm:$0xf]
      %v364 = vld [vmem:[%s328 + $0x8c] sm:$0x1]
      %v365 = vld [vmem:[%s328 + $0x90] sm:$0xf]
      %v366 = vld [vmem:[%s328 + $0x94] sm:$0xf]
      %v367 = vld [vmem:[%s328 + $0x98] sm:$0x1]
      %v368 = vld [vmem:[%s328 + $0x9c] sm:$0xf]
      %v369 = vld [vmem:[%s328 + $0xa0] sm:$0xf]
      %v370 = vld [vmem:[%s328 + $0xa4] sm:$0x1]
      %v371 = vld [vmem:[%s328 + $0xa8] sm:$0xf]
      %v372 = vld [vmem:[%s328 + $0xac] sm:$0xf]
      %v373 = vld [vmem:[%s328 + $0xb0] sm:$0x1]
      %v374 = vld [vmem:[%s328 + $0xb4] sm:$0xf]
      %v375 = vld [vmem:[%s328 + $0xb8] sm:$0xf]
      %v376 = vld [vmem:[%s328 + $0xbc] sm:$0x1]
      %v377 = vld [vmem:[%s328 + $0xc0] sm:$0xf]
      %v378 = vld [vmem:[%s328 + $0xc4] sm:$0xf]
      %v379 = vld [vmem:[%s328 + $0xc8] sm:$0x1]
      %v380 = vld [vmem:[%s328 + $0xcc] sm:$0xf]
      %v381 = vld [vmem:[%s328 + $0xd0] sm:$0xf]
      %v382 = vld [vmem:[%s328 + $0xd4] sm:$0x1]
      %s383 = smul.addr %s326, 4
      %s384 = scalar_lea.vmem %s312, %s383
      %v385 = vld [vmem:[%s384] sm:$0xf]
      %v386 = vld [vmem:[%s384 + $0x4] sm:$0xf]
      %v387 = vld [vmem:[%s384 + $0x8] sm:$0x1]
      %v388 = vld [vmem:[%s384 + $0xc] sm:$0xf]
      %v389 = vld [vmem:[%s384 + $0x10] sm:$0xf]
      %v390 = vld [vmem:[%s384 + $0x14] sm:$0x1]
      %v391 = vld [vmem:[%s384 + $0x18] sm:$0xf]
      %v392 = vld [vmem:[%s384 + $0x1c] sm:$0xf]
      %v393 = vld [vmem:[%s384 + $0x20] sm:$0x1]
      %v394 = vld [vmem:[%s384 + $0x24] sm:$0xf]
      %v395 = vld [vmem:[%s384 + $0x28] sm:$0xf]
      %v396 = vld [vmem:[%s384 + $0x2c] sm:$0x1]
      %v397 = vld [vmem:[%s384 + $0x30] sm:$0xf]
      %v398 = vld [vmem:[%s384 + $0x34] sm:$0xf]
      %v399 = vld [vmem:[%s384 + $0x38] sm:$0x1]
      %v400 = vld [vmem:[%s384 + $0x3c] sm:$0xf]
      %v401 = vld [vmem:[%s384 + $0x40] sm:$0xf]
      %v402 = vld [vmem:[%s384 + $0x44] sm:$0x1]
      %v403 = vld [vmem:[%s384 + $0x48] sm:$0xf]
      %v404 = vld [vmem:[%s384 + $0x4c] sm:$0xf]
      %v405 = vld [vmem:[%s384 + $0x50] sm:$0x1]
      %v406 = vld [vmem:[%s384 + $0x54] sm:$0xf]
      %v407 = vld [vmem:[%s384 + $0x58] sm:$0xf]
      %v408 = vld [vmem:[%s384 + $0x5c] sm:$0x1]
      %v409 = vld [vmem:[%s384 + $0x60] sm:$0xf]
      %v410 = vld [vmem:[%s384 + $0x64] sm:$0xf]
      %v411 = vld [vmem:[%s384 + $0x68] sm:$0x1]
      %v412 = vld [vmem:[%s384 + $0x6c] sm:$0xf]
      %v413 = vld [vmem:[%s384 + $0x70] sm:$0xf]
      %v414 = vld [vmem:[%s384 + $0x74] sm:$0x1]
      %v415 = vld [vmem:[%s384 + $0x78] sm:$0xf]
      %v416 = vld [vmem:[%s384 + $0x7c] sm:$0xf]
      %v417 = vld [vmem:[%s384 + $0x80] sm:$0x1]
      %v418 = vld [vmem:[%s384 + $0x84] sm:$0xf]
      %v419 = vld [vmem:[%s384 + $0x88] sm:$0xf]
      %v420 = vld [vmem:[%s384 + $0x8c] sm:$0x1]
      %v421 = vld [vmem:[%s384 + $0x90] sm:$0xf]
      %v422 = vld [vmem:[%s384 + $0x94] sm:$0xf]
      %v423 = vld [vmem:[%s384 + $0x98] sm:$0x1]
      %v424 = vld [vmem:[%s384 + $0x9c] sm:$0xf]
      %v425 = vld [vmem:[%s384 + $0xa0] sm:$0xf]
      %v426 = vld [vmem:[%s384 + $0xa4] sm:$0x1]
      %v427 = vld [vmem:[%s384 + $0xa8] sm:$0xf]
      %v428 = vld [vmem:[%s384 + $0xac] sm:$0xf]
      %v429 = vld [vmem:[%s384 + $0xb0] sm:$0x1]
      %v430 = vld [vmem:[%s384 + $0xb4] sm:$0xf]
      %v431 = vld [vmem:[%s384 + $0xb8] sm:$0xf]
      %v432 = vld [vmem:[%s384 + $0xbc] sm:$0x1]
      %v433 = vld [vmem:[%s384 + $0xc0] sm:$0xf]
      %v434 = vld [vmem:[%s384 + $0xc4] sm:$0xf]
      %v435 = vld [vmem:[%s384 + $0xc8] sm:$0x1]
      %v436 = vld [vmem:[%s384 + $0xcc] sm:$0xf]
      %v437 = vld [vmem:[%s384 + $0xd0] sm:$0xf]
      %v438 = vld [vmem:[%s384 + $0xd4] sm:$0x1]
      %v439 = vld [vmem:[%s2] sm:$0x77]
      %vm440 = vsmask.f32 3328
      %vm441 = vsmask.f32 7440
      %vm442 = vmor %vm440, %vm441
      %v444 = vshrl.u32 %v329, 16
      %v446 = vrot.slane %v444, 4
      %v447 = vshll.u32 %v329, 16
      %v449 = vrot.slane %v447, 5
      %v450 = vor.u32 %v446, %v449
      %v451 = vrot.slane %v450, 4
      %v453 = vshll.u32 %v330, 16
      %v455 = vrot.slane %v453, 5
      %v456 = vsel %vm442, %v451, %v455
      %v457 = vshrl.u32 %v330, 16
      %v459 = vrot.slane %v457, 4
      %v460 = vor.u32 %v459, %v455
      %v461 = vrot.slane %v460, 4
      %v463 = vshll.u32 %v331, 16
      %v465 = vrot.slane %v463, 5
      %v466 = vsel %vm442, %v461, %v465
      %v468 = vshrl.u32 %v332, 16
      %v470 = vrot.slane %v468, 4
      %v471 = vshll.u32 %v332, 16
      %v473 = vrot.slane %v471, 5
      %v474 = vor.u32 %v470, %v473
      %v475 = vrot.slane %v474, 4
      %v477 = vshll.u32 %v333, 16
      %v479 = vrot.slane %v477, 5
      %v480 = vsel %vm442, %v475, %v479
      %v481 = vshrl.u32 %v333, 16
      %v483 = vrot.slane %v481, 4
      %v484 = vor.u32 %v483, %v479
      %v485 = vrot.slane %v484, 4
      %v487 = vshll.u32 %v334, 16
      %v489 = vrot.slane %v487, 5
      %v490 = vsel %vm442, %v485, %v489
      %v492 = vshrl.u32 %v335, 16
      %v494 = vrot.slane %v492, 4
      %v495 = vshll.u32 %v335, 16
      %v497 = vrot.slane %v495, 5
      %v498 = vor.u32 %v494, %v497
      %v499 = vrot.slane %v498, 4
      %v501 = vshll.u32 %v336, 16
      %v503 = vrot.slane %v501, 5
      %v504 = vsel %vm442, %v499, %v503
      %v505 = vshrl.u32 %v336, 16
      %v507 = vrot.slane %v505, 4
      %v508 = vor.u32 %v507, %v503
      %v509 = vrot.slane %v508, 4
      %v511 = vshll.u32 %v337, 16
      %v513 = vrot.slane %v511, 5
      %v514 = vsel %vm442, %v509, %v513
      %v516 = vshrl.u32 %v338, 16
      %v518 = vrot.slane %v516, 4
      %v519 = vshll.u32 %v338, 16
      %v521 = vrot.slane %v519, 5
      %v522 = vor.u32 %v518, %v521
      %v523 = vrot.slane %v522, 4
      %v525 = vshll.u32 %v339, 16
      %v527 = vrot.slane %v525, 5
      %v528 = vsel %vm442, %v523, %v527
      %v529 = vshrl.u32 %v339, 16
      %v531 = vrot.slane %v529, 4
      %v532 = vor.u32 %v531, %v527
      %v533 = vrot.slane %v532, 4
      %v535 = vshll.u32 %v340, 16
      %v537 = vrot.slane %v535, 5
      %v538 = vsel %vm442, %v533, %v537
      %v540 = vshrl.u32 %v341, 16
      %v542 = vrot.slane %v540, 4
      %v543 = vshll.u32 %v341, 16
      %v545 = vrot.slane %v543, 5
      %v546 = vor.u32 %v542, %v545
      %v547 = vrot.slane %v546, 4
      %v549 = vshll.u32 %v342, 16
      %v551 = vrot.slane %v549, 5
      %v552 = vsel %vm442, %v547, %v551
      %v553 = vshrl.u32 %v342, 16
      %v555 = vrot.slane %v553, 4
      %v556 = vor.u32 %v555, %v551
      %v557 = vrot.slane %v556, 4
      %v559 = vshll.u32 %v343, 16
      %v561 = vrot.slane %v559, 5
      %v562 = vsel %vm442, %v557, %v561
      %v564 = vshrl.u32 %v344, 16
      %v566 = vrot.slane %v564, 4
      %v567 = vshll.u32 %v344, 16
      %v569 = vrot.slane %v567, 5
      %v570 = vor.u32 %v566, %v569
      %v571 = vrot.slane %v570, 4
      %v573 = vshll.u32 %v345, 16
      %v575 = vrot.slane %v573, 5
      %v576 = vsel %vm442, %v571, %v575
      %v577 = vshrl.u32 %v345, 16
      %v579 = vrot.slane %v577, 4
      %v580 = vor.u32 %v579, %v575
      %v581 = vrot.slane %v580, 4
      %v583 = vshll.u32 %v346, 16
      %v585 = vrot.slane %v583, 5
      %v586 = vsel %vm442, %v581, %v585
      %v588 = vshrl.u32 %v347, 16
      %v590 = vrot.slane %v588, 4
      %v591 = vshll.u32 %v347, 16
      %v593 = vrot.slane %v591, 5
      %v594 = vor.u32 %v590, %v593
      %v595 = vrot.slane %v594, 4
      %v597 = vshll.u32 %v348, 16
      %v599 = vrot.slane %v597, 5
      %v600 = vsel %vm442, %v595, %v599
      %v601 = vshrl.u32 %v348, 16
      %v603 = vrot.slane %v601, 4
      %v604 = vor.u32 %v603, %v599
      %v605 = vrot.slane %v604, 4
      %v607 = vshll.u32 %v349, 16
      %v609 = vrot.slane %v607, 5
      %v610 = vsel %vm442, %v605, %v609
      %v612 = vshrl.u32 %v350, 16
      %v614 = vrot.slane %v612, 4
      %v615 = vshll.u32 %v350, 16
      %v617 = vrot.slane %v615, 5
      %v618 = vor.u32 %v614, %v617
      %v619 = vrot.slane %v618, 4
      %v621 = vshll.u32 %v351, 16
      %v623 = vrot.slane %v621, 5
      %v624 = vsel %vm442, %v619, %v623
      %v625 = vshrl.u32 %v351, 16
      %v627 = vrot.slane %v625, 4
      %v628 = vor.u32 %v627, %v623
      %v629 = vrot.slane %v628, 4
      %v631 = vshll.u32 %v352, 16
      %v633 = vrot.slane %v631, 5
      %v634 = vsel %vm442, %v629, %v633
      %v636 = vshrl.u32 %v353, 16
      %v638 = vrot.slane %v636, 4
      %v639 = vshll.u32 %v353, 16
      %v641 = vrot.slane %v639, 5
      %v642 = vor.u32 %v638, %v641
      %v643 = vrot.slane %v642, 4
      %v645 = vshll.u32 %v354, 16
      %v647 = vrot.slane %v645, 5
      %v648 = vsel %vm442, %v643, %v647
      %v649 = vshrl.u32 %v354, 16
      %v651 = vrot.slane %v649, 4
      %v652 = vor.u32 %v651, %v647
      %v653 = vrot.slane %v652, 4
      %v655 = vshll.u32 %v355, 16
      %v657 = vrot.slane %v655, 5
      %v658 = vsel %vm442, %v653, %v657
      %v660 = vshrl.u32 %v356, 16
      %v662 = vrot.slane %v660, 4
      %v663 = vshll.u32 %v356, 16
      %v665 = vrot.slane %v663, 5
      %v666 = vor.u32 %v662, %v665
      %v667 = vrot.slane %v666, 4
      %v669 = vshll.u32 %v357, 16
      %v671 = vrot.slane %v669, 5
      %v672 = vsel %vm442, %v667, %v671
      %v673 = vshrl.u32 %v357, 16
      %v675 = vrot.slane %v673, 4
      %v676 = vor.u32 %v675, %v671
      %v677 = vrot.slane %v676, 4
      %v679 = vshll.u32 %v358, 16
      %v681 = vrot.slane %v679, 5
      %v682 = vsel %vm442, %v677, %v681
      %v684 = vshrl.u32 %v359, 16
      %v686 = vrot.slane %v684, 4
      %v687 = vshll.u32 %v359, 16
      %v689 = vrot.slane %v687, 5
      %v690 = vor.u32 %v686, %v689
      %v691 = vrot.slane %v690, 4
      %v693 = vshll.u32 %v360, 16
      %v695 = vrot.slane %v693, 5
      %v696 = vsel %vm442, %v691, %v695
      %v697 = vshrl.u32 %v360, 16
      %v699 = vrot.slane %v697, 4
      %v700 = vor.u32 %v699, %v695
      %v701 = vrot.slane %v700, 4
      %v703 = vshll.u32 %v361, 16
      %v705 = vrot.slane %v703, 5
      %v706 = vsel %vm442, %v701, %v705
      %v708 = vshrl.u32 %v362, 16
      %v710 = vrot.slane %v708, 4
      %v711 = vshll.u32 %v362, 16
      %v713 = vrot.slane %v711, 5
      %v714 = vor.u32 %v710, %v713
      %v715 = vrot.slane %v714, 4
      %v717 = vshll.u32 %v363, 16
      %v719 = vrot.slane %v717, 5
      %v720 = vsel %vm442, %v715, %v719
      %v721 = vshrl.u32 %v363, 16
      %v723 = vrot.slane %v721, 4
      %v724 = vor.u32 %v723, %v719
      %v725 = vrot.slane %v724, 4
      %v727 = vshll.u32 %v364, 16
      %v729 = vrot.slane %v727, 5
      %v730 = vsel %vm442, %v725, %v729
      %v732 = vshrl.u32 %v365, 16
      %v734 = vrot.slane %v732, 4
      %v735 = vshll.u32 %v365, 16
      %v737 = vrot.slane %v735, 5
      %v738 = vor.u32 %v734, %v737
      %v739 = vrot.slane %v738, 4
      %v741 = vshll.u32 %v366, 16
      %v743 = vrot.slane %v741, 5
      %v744 = vsel %vm442, %v739, %v743
      %v745 = vshrl.u32 %v366, 16
      %v747 = vrot.slane %v745, 4
      %v748 = vor.u32 %v747, %v743
      %v749 = vrot.slane %v748, 4
      %v751 = vshll.u32 %v367, 16
      %v753 = vrot.slane %v751, 5
      %v754 = vsel %vm442, %v749, %v753
      %v756 = vshrl.u32 %v368, 16
      %v758 = vrot.slane %v756, 4
      %v759 = vshll.u32 %v368, 16
      %v761 = vrot.slane %v759, 5
      %v762 = vor.u32 %v758, %v761
      %v763 = vrot.slane %v762, 4
      %v765 = vshll.u32 %v369, 16
      %v767 = vrot.slane %v765, 5
      %v768 = vsel %vm442, %v763, %v767
      %v769 = vshrl.u32 %v369, 16
      %v771 = vrot.slane %v769, 4
      %v772 = vor.u32 %v771, %v767
      %v773 = vrot.slane %v772, 4
      %v775 = vshll.u32 %v370, 16
      %v777 = vrot.slane %v775, 5
      %v778 = vsel %vm442, %v773, %v777
      %v780 = vshrl.u32 %v371, 16
      %v782 = vrot.slane %v780, 4
      %v783 = vshll.u32 %v371, 16
      %v785 = vrot.slane %v783, 5
      %v786 = vor.u32 %v782, %v785
      %v787 = vrot.slane %v786, 4
      %v789 = vshll.u32 %v372, 16
      %v791 = vrot.slane %v789, 5
      %v792 = vsel %vm442, %v787, %v791
      %v793 = vshrl.u32 %v372, 16
      %v795 = vrot.slane %v793, 4
      %v796 = vor.u32 %v795, %v791
      %v797 = vrot.slane %v796, 4
      %v799 = vshll.u32 %v373, 16
      %v801 = vrot.slane %v799, 5
      %v802 = vsel %vm442, %v797, %v801
      %v804 = vshrl.u32 %v374, 16
      %v806 = vrot.slane %v804, 4
      %v807 = vshll.u32 %v374, 16
      %v809 = vrot.slane %v807, 5
      %v810 = vor.u32 %v806, %v809
      %v811 = vrot.slane %v810, 4
      %v813 = vshll.u32 %v375, 16
      %v815 = vrot.slane %v813, 5
      %v816 = vsel %vm442, %v811, %v815
      %v817 = vshrl.u32 %v375, 16
      %v819 = vrot.slane %v817, 4
      %v820 = vor.u32 %v819, %v815
      %v821 = vrot.slane %v820, 4
      %v823 = vshll.u32 %v376, 16
      %v825 = vrot.slane %v823, 5
      %v826 = vsel %vm442, %v821, %v825
      %v827 = vld [vmem:[%s2] sm:$0xcc]
      %v828 = vld [vmem:[%s2 + $0x8] sm:$0x11]
      %v829 = vunpack.c.l.b16 %v456
      %v830 = vunpack.c.l.b16 %v466
      %v831 = vunpack.c.l.b16 %v480
      %v832 = vunpack.c.l.b16 %v490
      %v833 = vunpack.c.l.b16 %v504
      %v834 = vunpack.c.l.b16 %v514
      %v835 = vunpack.c.l.b16 %v528
      %v836 = vunpack.c.l.b16 %v538
      %v837 = vunpack.c.l.b16 %v552
      %v838 = vunpack.c.l.b16 %v562
      %v839 = vunpack.c.l.b16 %v576
      %v840 = vunpack.c.l.b16 %v586
      %v841 = vunpack.c.l.b16 %v600
      %v842 = vunpack.c.l.b16 %v610
      %v843 = vunpack.c.l.b16 %v624
      %v844 = vunpack.c.l.b16 %v634
      %v845 = vunpack.c.l.b16 %v648
      %v846 = vunpack.c.l.b16 %v658
      %v847 = vunpack.c.l.b16 %v672
      %v848 = vunpack.c.l.b16 %v682
      %v849 = vunpack.c.l.b16 %v696
      %v850 = vunpack.c.l.b16 %v706
      %v851 = vunpack.c.l.b16 %v720
      %v852 = vunpack.c.l.b16 %v730
      %v853 = vunpack.c.l.b16 %v744
      %v854 = vunpack.c.l.b16 %v754
      %v855 = vunpack.c.l.b16 %v768
      %v856 = vunpack.c.l.b16 %v778
      %v857 = vunpack.c.l.b16 %v792
      %v858 = vunpack.c.l.b16 %v802
      %v859 = vunpack.c.l.b16 %v816
      %v860 = vunpack.c.l.b16 %v826
      %v861 = vpack.c.b16 %v830, %v829
      %v862 = vpack.c.b16 %v832, %v831
      %v863 = vpack.c.b16 %v834, %v833
      %v864 = vpack.c.b16 %v836, %v835
      %v865 = vpack.c.b16 %v838, %v837
      %v866 = vpack.c.b16 %v840, %v839
      %v867 = vpack.c.b16 %v842, %v841
      %v868 = vpack.c.b16 %v844, %v843
      %v869 = vpack.c.b16 %v846, %v845
      %v870 = vpack.c.b16 %v848, %v847
      %v871 = vpack.c.b16 %v850, %v849
      %v872 = vpack.c.b16 %v852, %v851
      %v873 = vpack.c.b16 %v854, %v853
      %v874 = vpack.c.b16 %v856, %v855
      %v875 = vpack.c.b16 %v858, %v857
      %v876 = vpack.c.b16 %v860, %v859
      %v879 = vunpack.c.l.b16 %v827
      %v880 = vunpack.c.h.b16 %v827
      %v881 = vunpack.c.l.b16 %v828
      %v882 = vunpack.c.h.b16 %v828
      %v883 = vpack.c.b16 %v881, %v879
      %v884 = vpack.c.b16 %v882, %v880
      %v886 = vshrl.u32 %v883, 16
      %v888 = vrot.slane %v886, 2
      %v889 = vshll.u32 %v883, 16
      %v891 = vrot.slane %v889, 3
      %v892 = vor.u32 %v888, %v891
      %v894 = vshrl.u32 %v884, 16
      %v896 = vrot.slane %v894, 2
      %v897 = vshll.u32 %v884, 16
      %v899 = vrot.slane %v897, 3
      %v900 = vor.u32 %v896, %v899
      %vm901 = vcmask 39936
      %v903 = vsel %vm901, %v861, 0
      %v906 = vsel %vm901, %v862, 0
      %v909 = vsel %vm901, %v863, 0
      %v912 = vsel %vm901, %v864, 0
      %v915 = vsel %vm901, %v865, 0
      %v918 = vsel %vm901, %v866, 0
      %v921 = vsel %vm901, %v867, 0
      %v924 = vsel %vm901, %v868, 0
      %v927 = vsel %vm901, %v869, 0
      %v930 = vsel %vm901, %v870, 0
      %v933 = vsel %vm901, %v871, 0
      %v936 = vsel %vm901, %v872, 0
      %v939 = vsel %vm901, %v873, 0
      %v942 = vsel %vm901, %v874, 0
      %v945 = vsel %vm901, %v875, 0
      %v948 = vsel %vm901, %v876, 0
      %vm950 = vcmask 1041408
      %vm951 = vcmask 1042432
      %v952 = vsel %vm950, 4294967295, 65535
      %v953 = vsel %vm951, %v952, 0
      %v955 = vand.u32 %v892, %v953
      %v958 = vand.u32 %v900, %v953
      %960 = vmatprep.subr.bf16.mxu0 0
      %961 = vmatpush1.bf16.msra.mxu0 0
      %962 = vmatprep.subr.bf16.mxu0 0
      %963 = vmatpush1.bf16.msra.mxu0 0
      %964 = vmatprep.subr.bf16.mxu0 0
      %965 = vmatpush1.bf16.msra.mxu0 0
      %966 = vmatprep.subr.bf16.mxu0 0
      %967 = vmatpush1.bf16.msra.mxu0 0
      %968 = vmatprep.subr.bf16.mxu0 0
      %969 = vmatpush1.bf16.msra.mxu0 0
      %970 = vmatprep.subr.bf16.mxu0 0
      %971 = vmatpush1.bf16.msra.mxu0 0
      %972 = vmatprep.subr.bf16.mxu0 0
      %973 = vmatpush1.bf16.msra.mxu0 0
      %974 = vmatprep.subr.bf16.mxu0 %v958
      %975 = vmatpush1.bf16.msra.mxu0 %v955
      %976 = vmatprep.subr.bf16.mxu0 0
      %977 = vmatpush2.bf16.msra.mxu0 0
      %978 = vmatprep.subr.bf16.mxu0 0
      %979 = vmatpush2.bf16.msra.mxu0 0
      %980 = vmatprep.subr.bf16.mxu0 0
      %981 = vmatpush2.bf16.msra.mxu0 0
      %982 = vmatprep.subr.bf16.mxu0 0
      %983 = vmatpush2.bf16.msra.mxu0 0
      %984 = vmatprep.subr.bf16.mxu0 0
      %985 = vmatpush2.bf16.msra.mxu0 0
      %986 = vmatprep.subr.bf16.mxu0 0
      %987 = vmatpush2.bf16.msra.mxu0 0
      %988 = vmatprep.subr.bf16.mxu0 0
      %989 = vmatpush2.bf16.msra.mxu0 0
      %990 = vmatprep.subr.bf16.mxu0 0
      %991 = vmatpush2.bf16.msra.mxu0 0
      %992 = vmatprep.mubr.bf16.mxu0 0
      %993 = vmatmul.mubr.bf16.gmra.mxu0 %v903
      %v994 = vpop.f32.mrf.mxu0
      %v995 = vadd.f32 0.0, %v994
      %v996 = vpop.f32.mrf.mxu0
      %v997 = vadd.f32 0.0, %v996
      %v998 = vpop.f32.mrf.mxu0
      %v999 = vadd.f32 0.0, %v998
      %v1000 = vpop.f32.mrf.mxu0
      %v1001 = vadd.f32 0.0, %v1000
      %1002 = vmatprep.mubr.bf16.mxu0 0
      %1003 = vmatmul.mubr.bf16.gmra.mxu0 %v906
      %v1004 = vpop.f32.mrf.mxu0
      %v1005 = vadd.f32 0.0, %v1004
      %v1006 = vpop.f32.mrf.mxu0
      %v1007 = vadd.f32 0.0, %v1006
      %v1008 = vpop.f32.mrf.mxu0
      %v1009 = vadd.f32 0.0, %v1008
      %v1010 = vpop.f32.mrf.mxu0
      %v1011 = vadd.f32 0.0, %v1010
      %1012 = vmatprep.mubr.bf16.mxu0 0
      %1013 = vmatmul.mubr.bf16.gmra.mxu0 %v909
      %v1014 = vpop.f32.mrf.mxu0
      %v1015 = vadd.f32 0.0, %v1014
      %v1016 = vpop.f32.mrf.mxu0
      %v1017 = vadd.f32 0.0, %v1016
      %v1018 = vpop.f32.mrf.mxu0
      %v1019 = vadd.f32 0.0, %v1018
      %v1020 = vpop.f32.mrf.mxu0
      %v1021 = vadd.f32 0.0, %v1020
      %1022 = vmatprep.mubr.bf16.mxu0 0
      %1023 = vmatmul.mubr.bf16.gmra.mxu0 %v912
      %v1024 = vpop.f32.mrf.mxu0
      %v1025 = vadd.f32 0.0, %v1024
      %v1026 = vpop.f32.mrf.mxu0
      %v1027 = vadd.f32 0.0, %v1026
      %v1028 = vpop.f32.mrf.mxu0
      %v1029 = vadd.f32 0.0, %v1028
      %v1030 = vpop.f32.mrf.mxu0
      %v1031 = vadd.f32 0.0, %v1030
      %1032 = vmatprep.mubr.bf16.mxu0 0
      %1033 = vmatmul.mubr.bf16.gmra.mxu0 %v915
      %v1034 = vpop.f32.mrf.mxu0
      %v1035 = vadd.f32 0.0, %v1034
      %v1036 = vpop.f32.mrf.mxu0
      %v1037 = vadd.f32 0.0, %v1036
      %v1038 = vpop.f32.mrf.mxu0
      %v1039 = vadd.f32 0.0, %v1038
      %v1040 = vpop.f32.mrf.mxu0
      %v1041 = vadd.f32 0.0, %v1040
      %1042 = vmatprep.mubr.bf16.mxu0 0
      %1043 = vmatmul.mubr.bf16.gmra.mxu0 %v918
      %v1044 = vpop.f32.mrf.mxu0
      %v1045 = vadd.f32 0.0, %v1044
      %v1046 = vpop.f32.mrf.mxu0
      %v1047 = vadd.f32 0.0, %v1046
      %v1048 = vpop.f32.mrf.mxu0
      %v1049 = vadd.f32 0.0, %v1048
      %v1050 = vpop.f32.mrf.mxu0
      %v1051 = vadd.f32 0.0, %v1050
      %1052 = vmatprep.mubr.bf16.mxu0 0
      %1053 = vmatmul.mubr.bf16.gmra.mxu0 %v921
      %v1054 = vpop.f32.mrf.mxu0
      %v1055 = vadd.f32 0.0, %v1054
      %v1056 = vpop.f32.mrf.mxu0
      %v1057 = vadd.f32 0.0, %v1056
      %v1058 = vpop.f32.mrf.mxu0
      %v1059 = vadd.f32 0.0, %v1058
      %v1060 = vpop.f32.mrf.mxu0
      %v1061 = vadd.f32 0.0, %v1060
      %1062 = vmatprep.mubr.bf16.mxu0 0
      %1063 = vmatmul.mubr.bf16.gmra.mxu0 %v924
      %v1064 = vpop.f32.mrf.mxu0
      %v1065 = vadd.f32 0.0, %v1064
      %v1066 = vpop.f32.mrf.mxu0
      %v1067 = vadd.f32 0.0, %v1066
      %v1068 = vpop.f32.mrf.mxu0
      %v1069 = vadd.f32 0.0, %v1068
      %v1070 = vpop.f32.mrf.mxu0
      %v1071 = vadd.f32 0.0, %v1070
      %1072 = vmatprep.mubr.bf16.mxu0 0
      %1073 = vmatmul.mubr.bf16.gmra.mxu0 %v927
      %v1074 = vpop.f32.mrf.mxu0
      %v1075 = vadd.f32 0.0, %v1074
      %v1076 = vpop.f32.mrf.mxu0
      %v1077 = vadd.f32 0.0, %v1076
      %v1078 = vpop.f32.mrf.mxu0
      %v1079 = vadd.f32 0.0, %v1078
      %v1080 = vpop.f32.mrf.mxu0
      %v1081 = vadd.f32 0.0, %v1080
      %1082 = vmatprep.mubr.bf16.mxu0 0
      %1083 = vmatmul.mubr.bf16.gmra.mxu0 %v930
      %v1084 = vpop.f32.mrf.mxu0
      %v1085 = vadd.f32 0.0, %v1084
      %v1086 = vpop.f32.mrf.mxu0
      %v1087 = vadd.f32 0.0, %v1086
      %v1088 = vpop.f32.mrf.mxu0
      %v1089 = vadd.f32 0.0, %v1088
      %v1090 = vpop.f32.mrf.mxu0
      %v1091 = vadd.f32 0.0, %v1090
      %1092 = vmatprep.mubr.bf16.mxu0 0
      %1093 = vmatmul.mubr.bf16.gmra.mxu0 %v933
      %v1094 = vpop.f32.mrf.mxu0
      %v1095 = vadd.f32 0.0, %v1094
      %v1096 = vpop.f32.mrf.mxu0
      %v1097 = vadd.f32 0.0, %v1096
      %v1098 = vpop.f32.mrf.mxu0
      %v1099 = vadd.f32 0.0, %v1098
      %v1100 = vpop.f32.mrf.mxu0
      %v1101 = vadd.f32 0.0, %v1100
      %1102 = vmatprep.mubr.bf16.mxu0 0
      %1103 = vmatmul.mubr.bf16.gmra.mxu0 %v936
      %v1104 = vpop.f32.mrf.mxu0
      %v1105 = vadd.f32 0.0, %v1104
      %v1106 = vpop.f32.mrf.mxu0
      %v1107 = vadd.f32 0.0, %v1106
      %v1108 = vpop.f32.mrf.mxu0
      %v1109 = vadd.f32 0.0, %v1108
      %v1110 = vpop.f32.mrf.mxu0
      %v1111 = vadd.f32 0.0, %v1110
      %1112 = vmatprep.mubr.bf16.mxu0 0
      %1113 = vmatmul.mubr.bf16.gmra.mxu0 %v939
      %v1114 = vpop.f32.mrf.mxu0
      %v1115 = vadd.f32 0.0, %v1114
      %v1116 = vpop.f32.mrf.mxu0
      %v1117 = vadd.f32 0.0, %v1116
      %v1118 = vpop.f32.mrf.mxu0
      %v1119 = vadd.f32 0.0, %v1118
      %v1120 = vpop.f32.mrf.mxu0
      %v1121 = vadd.f32 0.0, %v1120
      %1122 = vmatprep.mubr.bf16.mxu0 0
      %1123 = vmatmul.mubr.bf16.gmra.mxu0 %v942
      %v1124 = vpop.f32.mrf.mxu0
      %v1125 = vadd.f32 0.0, %v1124
      %v1126 = vpop.f32.mrf.mxu0
      %v1127 = vadd.f32 0.0, %v1126
      %v1128 = vpop.f32.mrf.mxu0
      %v1129 = vadd.f32 0.0, %v1128
      %v1130 = vpop.f32.mrf.mxu0
      %v1131 = vadd.f32 0.0, %v1130
      %1132 = vmatprep.mubr.bf16.mxu0 0
      %1133 = vmatmul.mubr.bf16.gmra.mxu0 %v945
      %v1134 = vpop.f32.mrf.mxu0
      %v1135 = vadd.f32 0.0, %v1134
      %v1136 = vpop.f32.mrf.mxu0
      %v1137 = vadd.f32 0.0, %v1136
      %v1138 = vpop.f32.mrf.mxu0
      %v1139 = vadd.f32 0.0, %v1138
      %v1140 = vpop.f32.mrf.mxu0
      %v1141 = vadd.f32 0.0, %v1140
      %1142 = vmatprep.mubr.bf16.mxu0 0
      %1143 = vmatmul.mubr.bf16.gmra.mxu0 %v948
      %v1144 = vpop.f32.mrf.mxu0
      %v1145 = vadd.f32 0.0, %v1144
      %v1146 = vpop.f32.mrf.mxu0
      %v1147 = vadd.f32 0.0, %v1146
      %v1148 = vpop.f32.mrf.mxu0
      %v1149 = vadd.f32 0.0, %v1148
      %v1150 = vpop.f32.mrf.mxu0
      %v1151 = vadd.f32 0.0, %v1150
      %1152 = vdwg.mxu0
      %v1185 = vunpack.c.l.b16 %v329
      %v1186 = vunpack.c.l.b16 %v330
      %v1187 = vunpack.c.l.b16 %v332
      %v1188 = vunpack.c.l.b16 %v333
      %v1189 = vunpack.c.l.b16 %v335
      %v1190 = vunpack.c.l.b16 %v336
      %v1191 = vunpack.c.l.b16 %v338
      %v1192 = vunpack.c.l.b16 %v339
      %v1193 = vunpack.c.l.b16 %v341
      %v1194 = vunpack.c.l.b16 %v342
      %v1195 = vunpack.c.l.b16 %v344
      %v1196 = vunpack.c.l.b16 %v345
      %v1197 = vunpack.c.l.b16 %v347
      %v1198 = vunpack.c.l.b16 %v348
      %v1199 = vunpack.c.l.b16 %v350
      %v1200 = vunpack.c.l.b16 %v351
      %v1201 = vunpack.c.l.b16 %v353
      %v1202 = vunpack.c.l.b16 %v354
      %v1203 = vunpack.c.l.b16 %v356
      %v1204 = vunpack.c.l.b16 %v357
      %v1205 = vunpack.c.l.b16 %v359
      %v1206 = vunpack.c.l.b16 %v360
      %v1207 = vunpack.c.l.b16 %v362
      %v1208 = vunpack.c.l.b16 %v363
      %v1209 = vunpack.c.l.b16 %v365
      %v1210 = vunpack.c.l.b16 %v366
      %v1211 = vunpack.c.l.b16 %v368
      %v1212 = vunpack.c.l.b16 %v369
      %v1213 = vunpack.c.l.b16 %v371
      %v1214 = vunpack.c.l.b16 %v372
      %v1215 = vunpack.c.l.b16 %v374
      %v1216 = vunpack.c.l.b16 %v375
      %v1217 = vpack.c.b16 %v1186, %v1185
      %v1218 = vpack.c.b16 %v1188, %v1187
      %v1219 = vpack.c.b16 %v1190, %v1189
      %v1220 = vpack.c.b16 %v1192, %v1191
      %v1221 = vpack.c.b16 %v1194, %v1193
      %v1222 = vpack.c.b16 %v1196, %v1195
      %v1223 = vpack.c.b16 %v1198, %v1197
      %v1224 = vpack.c.b16 %v1200, %v1199
      %v1225 = vpack.c.b16 %v1202, %v1201
      %v1226 = vpack.c.b16 %v1204, %v1203
      %v1227 = vpack.c.b16 %v1206, %v1205
      %v1228 = vpack.c.b16 %v1208, %v1207
      %v1229 = vpack.c.b16 %v1210, %v1209
      %v1230 = vpack.c.b16 %v1212, %v1211
      %v1231 = vpack.c.b16 %v1214, %v1213
      %v1232 = vpack.c.b16 %v1216, %v1215
      %v1234 = vunpack.c.l.b16 %v439
      %v1235 = vunpack.c.h.b16 %v439
      %v1236 = vpack.c.b16 %v1234, %v1234
      %v1237 = vpack.c.b16 %v1235, %v1235
      %v1239 = vsel %vm901, %v1217, 0
      %v1242 = vsel %vm901, %v1218, 0
      %v1245 = vsel %vm901, %v1219, 0
      %v1248 = vsel %vm901, %v1220, 0
      %v1251 = vsel %vm901, %v1221, 0
      %v1254 = vsel %vm901, %v1222, 0
      %v1257 = vsel %vm901, %v1223, 0
      %v1260 = vsel %vm901, %v1224, 0
      %v1263 = vsel %vm901, %v1225, 0
      %v1266 = vsel %vm901, %v1226, 0
      %v1269 = vsel %vm901, %v1227, 0
      %v1272 = vsel %vm901, %v1228, 0
      %v1275 = vsel %vm901, %v1229, 0
      %v1278 = vsel %vm901, %v1230, 0
      %v1281 = vsel %vm901, %v1231, 0
      %v1284 = vsel %vm901, %v1232, 0
      %v1287 = vand.u32 %v1236, %v953
      %v1290 = vand.u32 %v1237, %v953
      %1292 = vmatprep.subr.bf16.mxu0 0
      %1293 = vmatpush1.bf16.msra.mxu0 0
      %1294 = vmatprep.subr.bf16.mxu0 0
      %1295 = vmatpush1.bf16.msra.mxu0 0
      %1296 = vmatprep.subr.bf16.mxu0 0
      %1297 = vmatpush1.bf16.msra.mxu0 0
      %1298 = vmatprep.subr.bf16.mxu0 0
      %1299 = vmatpush1.bf16.msra.mxu0 0
      %1300 = vmatprep.subr.bf16.mxu0 0
      %1301 = vmatpush1.bf16.msra.mxu0 0
      %1302 = vmatprep.subr.bf16.mxu0 0
      %1303 = vmatpush1.bf16.msra.mxu0 0
      %1304 = vmatprep.subr.bf16.mxu0 0
      %1305 = vmatpush1.bf16.msra.mxu0 0
      %1306 = vmatprep.subr.bf16.mxu0 %v1290
      %1307 = vmatpush1.bf16.msra.mxu0 %v1287
      %1308 = vmatprep.subr.bf16.mxu0 0
      %1309 = vmatpush2.bf16.msra.mxu0 0
      %1310 = vmatprep.subr.bf16.mxu0 0
      %1311 = vmatpush2.bf16.msra.mxu0 0
      %1312 = vmatprep.subr.bf16.mxu0 0
      %1313 = vmatpush2.bf16.msra.mxu0 0
      %1314 = vmatprep.subr.bf16.mxu0 0
      %1315 = vmatpush2.bf16.msra.mxu0 0
      %1316 = vmatprep.subr.bf16.mxu0 0
      %1317 = vmatpush2.bf16.msra.mxu0 0
      %1318 = vmatprep.subr.bf16.mxu0 0
      %1319 = vmatpush2.bf16.msra.mxu0 0
      %1320 = vmatprep.subr.bf16.mxu0 0
      %1321 = vmatpush2.bf16.msra.mxu0 0
      %1322 = vmatprep.subr.bf16.mxu0 0
      %1323 = vmatpush2.bf16.msra.mxu0 0
      %1324 = vmatprep.mubr.bf16.mxu0 0
      %1325 = vmatmul.mubr.bf16.gmra.mxu0 %v1239
      %v1326 = vpop.f32.mrf.mxu0
      %v1327 = vadd.f32 %v995, %v1326
      %v1328 = vpop.f32.mrf.mxu0
      %v1329 = vadd.f32 %v997, %v1328
      %v1330 = vpop.f32.mrf.mxu0
      %v1331 = vadd.f32 %v999, %v1330
      %v1332 = vpop.f32.mrf.mxu0
      %v1333 = vadd.f32 %v1001, %v1332
      %1334 = vmatprep.mubr.bf16.mxu0 0
      %1335 = vmatmul.mubr.bf16.gmra.mxu0 %v1242
      %v1336 = vpop.f32.mrf.mxu0
      %v1337 = vadd.f32 %v1005, %v1336
      %v1338 = vpop.f32.mrf.mxu0
      %v1339 = vadd.f32 %v1007, %v1338
      %v1340 = vpop.f32.mrf.mxu0
      %v1341 = vadd.f32 %v1009, %v1340
      %v1342 = vpop.f32.mrf.mxu0
      %v1343 = vadd.f32 %v1011, %v1342
      %1344 = vmatprep.mubr.bf16.mxu0 0
      %1345 = vmatmul.mubr.bf16.gmra.mxu0 %v1245
      %v1346 = vpop.f32.mrf.mxu0
      %v1347 = vadd.f32 %v1015, %v1346
      %v1348 = vpop.f32.mrf.mxu0
      %v1349 = vadd.f32 %v1017, %v1348
      %v1350 = vpop.f32.mrf.mxu0
      %v1351 = vadd.f32 %v1019, %v1350
      %v1352 = vpop.f32.mrf.mxu0
      %v1353 = vadd.f32 %v1021, %v1352
      %1354 = vmatprep.mubr.bf16.mxu0 0
      %1355 = vmatmul.mubr.bf16.gmra.mxu0 %v1248
      %v1356 = vpop.f32.mrf.mxu0
      %v1357 = vadd.f32 %v1025, %v1356
      %v1358 = vpop.f32.mrf.mxu0
      %v1359 = vadd.f32 %v1027, %v1358
      %v1360 = vpop.f32.mrf.mxu0
      %v1361 = vadd.f32 %v1029, %v1360
      %v1362 = vpop.f32.mrf.mxu0
      %v1363 = vadd.f32 %v1031, %v1362
      %1364 = vmatprep.mubr.bf16.mxu0 0
      %1365 = vmatmul.mubr.bf16.gmra.mxu0 %v1251
      %v1366 = vpop.f32.mrf.mxu0
      %v1367 = vadd.f32 %v1035, %v1366
      %v1368 = vpop.f32.mrf.mxu0
      %v1369 = vadd.f32 %v1037, %v1368
      %v1370 = vpop.f32.mrf.mxu0
      %v1371 = vadd.f32 %v1039, %v1370
      %v1372 = vpop.f32.mrf.mxu0
      %v1373 = vadd.f32 %v1041, %v1372
      %1374 = vmatprep.mubr.bf16.mxu0 0
      %1375 = vmatmul.mubr.bf16.gmra.mxu0 %v1254
      %v1376 = vpop.f32.mrf.mxu0
      %v1377 = vadd.f32 %v1045, %v1376
      %v1378 = vpop.f32.mrf.mxu0
      %v1379 = vadd.f32 %v1047, %v1378
      %v1380 = vpop.f32.mrf.mxu0
      %v1381 = vadd.f32 %v1049, %v1380
      %v1382 = vpop.f32.mrf.mxu0
      %v1383 = vadd.f32 %v1051, %v1382
      %1384 = vmatprep.mubr.bf16.mxu0 0
      %1385 = vmatmul.mubr.bf16.gmra.mxu0 %v1257
      %v1386 = vpop.f32.mrf.mxu0
      %v1387 = vadd.f32 %v1055, %v1386
      %v1388 = vpop.f32.mrf.mxu0
      %v1389 = vadd.f32 %v1057, %v1388
      %v1390 = vpop.f32.mrf.mxu0
      %v1391 = vadd.f32 %v1059, %v1390
      %v1392 = vpop.f32.mrf.mxu0
      %v1393 = vadd.f32 %v1061, %v1392
      %1394 = vmatprep.mubr.bf16.mxu0 0
      %1395 = vmatmul.mubr.bf16.gmra.mxu0 %v1260
      %v1396 = vpop.f32.mrf.mxu0
      %v1397 = vadd.f32 %v1065, %v1396
      %v1398 = vpop.f32.mrf.mxu0
      %v1399 = vadd.f32 %v1067, %v1398
      %v1400 = vpop.f32.mrf.mxu0
      %v1401 = vadd.f32 %v1069, %v1400
      %v1402 = vpop.f32.mrf.mxu0
      %v1403 = vadd.f32 %v1071, %v1402
      %1404 = vmatprep.mubr.bf16.mxu0 0
      %1405 = vmatmul.mubr.bf16.gmra.mxu0 %v1263
      %v1406 = vpop.f32.mrf.mxu0
      %v1407 = vadd.f32 %v1075, %v1406
      %v1408 = vpop.f32.mrf.mxu0
      %v1409 = vadd.f32 %v1077, %v1408
      %v1410 = vpop.f32.mrf.mxu0
      %v1411 = vadd.f32 %v1079, %v1410
      %v1412 = vpop.f32.mrf.mxu0
      %v1413 = vadd.f32 %v1081, %v1412
      %1414 = vmatprep.mubr.bf16.mxu0 0
      %1415 = vmatmul.mubr.bf16.gmra.mxu0 %v1266
      %v1416 = vpop.f32.mrf.mxu0
      %v1417 = vadd.f32 %v1085, %v1416
      %v1418 = vpop.f32.mrf.mxu0
      %v1419 = vadd.f32 %v1087, %v1418
      %v1420 = vpop.f32.mrf.mxu0
      %v1421 = vadd.f32 %v1089, %v1420
      %v1422 = vpop.f32.mrf.mxu0
      %v1423 = vadd.f32 %v1091, %v1422
      %1424 = vmatprep.mubr.bf16.mxu0 0
      %1425 = vmatmul.mubr.bf16.gmra.mxu0 %v1269
      %v1426 = vpop.f32.mrf.mxu0
      %v1427 = vadd.f32 %v1095, %v1426
      %v1428 = vpop.f32.mrf.mxu0
      %v1429 = vadd.f32 %v1097, %v1428
      %v1430 = vpop.f32.mrf.mxu0
      %v1431 = vadd.f32 %v1099, %v1430
      %v1432 = vpop.f32.mrf.mxu0
      %v1433 = vadd.f32 %v1101, %v1432
      %1434 = vmatprep.mubr.bf16.mxu0 0
      %1435 = vmatmul.mubr.bf16.gmra.mxu0 %v1272
      %v1436 = vpop.f32.mrf.mxu0
      %v1437 = vadd.f32 %v1105, %v1436
      %v1438 = vpop.f32.mrf.mxu0
      %v1439 = vadd.f32 %v1107, %v1438
      %v1440 = vpop.f32.mrf.mxu0
      %v1441 = vadd.f32 %v1109, %v1440
      %v1442 = vpop.f32.mrf.mxu0
      %v1443 = vadd.f32 %v1111, %v1442
      %1444 = vmatprep.mubr.bf16.mxu0 0
      %1445 = vmatmul.mubr.bf16.gmra.mxu0 %v1275
      %v1446 = vpop.f32.mrf.mxu0
      %v1447 = vadd.f32 %v1115, %v1446
      %v1448 = vpop.f32.mrf.mxu0
      %v1449 = vadd.f32 %v1117, %v1448
      %v1450 = vpop.f32.mrf.mxu0
      %v1451 = vadd.f32 %v1119, %v1450
      %v1452 = vpop.f32.mrf.mxu0
      %v1453 = vadd.f32 %v1121, %v1452
      %1454 = vmatprep.mubr.bf16.mxu0 0
      %1455 = vmatmul.mubr.bf16.gmra.mxu0 %v1278
      %v1456 = vpop.f32.mrf.mxu0
      %v1457 = vadd.f32 %v1125, %v1456
      %v1458 = vpop.f32.mrf.mxu0
      %v1459 = vadd.f32 %v1127, %v1458
      %v1460 = vpop.f32.mrf.mxu0
      %v1461 = vadd.f32 %v1129, %v1460
      %v1462 = vpop.f32.mrf.mxu0
      %v1463 = vadd.f32 %v1131, %v1462
      %1464 = vmatprep.mubr.bf16.mxu0 0
      %1465 = vmatmul.mubr.bf16.gmra.mxu0 %v1281
      %v1466 = vpop.f32.mrf.mxu0
      %v1467 = vadd.f32 %v1135, %v1466
      %v1468 = vpop.f32.mrf.mxu0
      %v1469 = vadd.f32 %v1137, %v1468
      %v1470 = vpop.f32.mrf.mxu0
      %v1471 = vadd.f32 %v1139, %v1470
      %v1472 = vpop.f32.mrf.mxu0
      %v1473 = vadd.f32 %v1141, %v1472
      %1474 = vmatprep.mubr.bf16.mxu0 0
      %1475 = vmatmul.mubr.bf16.gmra.mxu0 %v1284
      %v1476 = vpop.f32.mrf.mxu0
      %v1477 = vadd.f32 %v1145, %v1476
      %v1478 = vpop.f32.mrf.mxu0
      %v1479 = vadd.f32 %v1147, %v1478
      %v1480 = vpop.f32.mrf.mxu0
      %v1481 = vadd.f32 %v1149, %v1480
      %v1482 = vpop.f32.mrf.mxu0
      %v1483 = vadd.f32 %v1151, %v1482
      %1484 = vdwg.mxu0
      %vm1501 = vcmask 1042432
      %vm1502 = vcmask 1046532
      %vm1503 = vmor %vm1501, %vm1502
      %v1504 = vrot.slane %v329, 5
      %v1505 = vrot.slane %v1504, 4
      %v1506 = vrot.slane %v330, 5
      %v1507 = vsel %vm1503, %v1505, %v1506
      %v1508 = vrot.slane %v1506, 4
      %v1509 = vrot.slane %v331, 5
      %v1510 = vsel %vm1503, %v1508, %v1509
      %v1511 = vrot.slane %v332, 5
      %v1512 = vrot.slane %v1511, 4
      %v1513 = vrot.slane %v333, 5
      %v1514 = vsel %vm1503, %v1512, %v1513
      %v1515 = vrot.slane %v1513, 4
      %v1516 = vrot.slane %v334, 5
      %v1517 = vsel %vm1503, %v1515, %v1516
      %v1518 = vrot.slane %v335, 5
      %v1519 = vrot.slane %v1518, 4
      %v1520 = vrot.slane %v336, 5
      %v1521 = vsel %vm1503, %v1519, %v1520
      %v1522 = vrot.slane %v1520, 4
      %v1523 = vrot.slane %v337, 5
      %v1524 = vsel %vm1503, %v1522, %v1523
      %v1525 = vrot.slane %v338, 5
      %v1526 = vrot.slane %v1525, 4
      %v1527 = vrot.slane %v339, 5
      %v1528 = vsel %vm1503, %v1526, %v1527
      %v1529 = vrot.slane %v1527, 4
      %v1530 = vrot.slane %v340, 5
      %v1531 = vsel %vm1503, %v1529, %v1530
      %v1532 = vrot.slane %v341, 5
      %v1533 = vrot.slane %v1532, 4
      %v1534 = vrot.slane %v342, 5
      %v1535 = vsel %vm1503, %v1533, %v1534
      %v1536 = vrot.slane %v1534, 4
      %v1537 = vrot.slane %v343, 5
      %v1538 = vsel %vm1503, %v1536, %v1537
      %v1539 = vrot.slane %v344, 5
      %v1540 = vrot.slane %v1539, 4
      %v1541 = vrot.slane %v345, 5
      %v1542 = vsel %vm1503, %v1540, %v1541
      %v1543 = vrot.slane %v1541, 4
      %v1544 = vrot.slane %v346, 5
      %v1545 = vsel %vm1503, %v1543, %v1544
      %v1546 = vrot.slane %v347, 5
      %v1547 = vrot.slane %v1546, 4
      %v1548 = vrot.slane %v348, 5
      %v1549 = vsel %vm1503, %v1547, %v1548
      %v1550 = vrot.slane %v1548, 4
      %v1551 = vrot.slane %v349, 5
      %v1552 = vsel %vm1503, %v1550, %v1551
      %v1553 = vrot.slane %v350, 5
      %v1554 = vrot.slane %v1553, 4
      %v1555 = vrot.slane %v351, 5
      %v1556 = vsel %vm1503, %v1554, %v1555
      %v1557 = vrot.slane %v1555, 4
      %v1558 = vrot.slane %v352, 5
      %v1559 = vsel %vm1503, %v1557, %v1558
      %v1560 = vrot.slane %v353, 5
      %v1561 = vrot.slane %v1560, 4
      %v1562 = vrot.slane %v354, 5
      %v1563 = vsel %vm1503, %v1561, %v1562
      %v1564 = vrot.slane %v1562, 4
      %v1565 = vrot.slane %v355, 5
      %v1566 = vsel %vm1503, %v1564, %v1565
      %v1567 = vrot.slane %v356, 5
      %v1568 = vrot.slane %v1567, 4
      %v1569 = vrot.slane %v357, 5
      %v1570 = vsel %vm1503, %v1568, %v1569
      %v1571 = vrot.slane %v1569, 4
      %v1572 = vrot.slane %v358, 5
      %v1573 = vsel %vm1503, %v1571, %v1572
      %v1574 = vrot.slane %v359, 5
      %v1575 = vrot.slane %v1574, 4
      %v1576 = vrot.slane %v360, 5
      %v1577 = vsel %vm1503, %v1575, %v1576
      %v1578 = vrot.slane %v1576, 4
      %v1579 = vrot.slane %v361, 5
      %v1580 = vsel %vm1503, %v1578, %v1579
      %v1581 = vrot.slane %v362, 5
      %v1582 = vrot.slane %v1581, 4
      %v1583 = vrot.slane %v363, 5
      %v1584 = vsel %vm1503, %v1582, %v1583
      %v1585 = vrot.slane %v1583, 4
      %v1586 = vrot.slane %v364, 5
      %v1587 = vsel %vm1503, %v1585, %v1586
      %v1588 = vrot.slane %v365, 5
      %v1589 = vrot.slane %v1588, 4
      %v1590 = vrot.slane %v366, 5
      %v1591 = vsel %vm1503, %v1589, %v1590
      %v1592 = vrot.slane %v1590, 4
      %v1593 = vrot.slane %v367, 5
      %v1594 = vsel %vm1503, %v1592, %v1593
      %v1595 = vrot.slane %v368, 5
      %v1596 = vrot.slane %v1595, 4
      %v1597 = vrot.slane %v369, 5
      %v1598 = vsel %vm1503, %v1596, %v1597
      %v1599 = vrot.slane %v1597, 4
      %v1600 = vrot.slane %v370, 5
      %v1601 = vsel %vm1503, %v1599, %v1600
      %v1602 = vrot.slane %v371, 5
      %v1603 = vrot.slane %v1602, 4
      %v1604 = vrot.slane %v372, 5
      %v1605 = vsel %vm1503, %v1603, %v1604
      %v1606 = vrot.slane %v1604, 4
      %v1607 = vrot.slane %v373, 5
      %v1608 = vsel %vm1503, %v1606, %v1607
      %v1609 = vrot.slane %v374, 5
      %v1610 = vrot.slane %v1609, 4
      %v1611 = vrot.slane %v375, 5
      %v1612 = vsel %vm1503, %v1610, %v1611
      %v1613 = vrot.slane %v1611, 4
      %v1614 = vrot.slane %v376, 5
      %v1615 = vsel %vm1503, %v1613, %v1614
      %v1616 = vld [vmem:[%s2 + $0x8] sm:$0xee]
      %v1617 = vunpack.c.l.b16 %v1507
      %v1618 = vunpack.c.l.b16 %v1510
      %v1619 = vunpack.c.l.b16 %v1514
      %v1620 = vunpack.c.l.b16 %v1517
      %v1621 = vunpack.c.l.b16 %v1521
      %v1622 = vunpack.c.l.b16 %v1524
      %v1623 = vunpack.c.l.b16 %v1528
      %v1624 = vunpack.c.l.b16 %v1531
      %v1625 = vunpack.c.l.b16 %v1535
      %v1626 = vunpack.c.l.b16 %v1538
      %v1627 = vunpack.c.l.b16 %v1542
      %v1628 = vunpack.c.l.b16 %v1545
      %v1629 = vunpack.c.l.b16 %v1549
      %v1630 = vunpack.c.l.b16 %v1552
      %v1631 = vunpack.c.l.b16 %v1556
      %v1632 = vunpack.c.l.b16 %v1559
      %v1633 = vunpack.c.l.b16 %v1563
      %v1634 = vunpack.c.l.b16 %v1566
      %v1635 = vunpack.c.l.b16 %v1570
      %v1636 = vunpack.c.l.b16 %v1573
      %v1637 = vunpack.c.l.b16 %v1577
      %v1638 = vunpack.c.l.b16 %v1580
      %v1639 = vunpack.c.l.b16 %v1584
      %v1640 = vunpack.c.l.b16 %v1587
      %v1641 = vunpack.c.l.b16 %v1591
      %v1642 = vunpack.c.l.b16 %v1594
      %v1643 = vunpack.c.l.b16 %v1598
      %v1644 = vunpack.c.l.b16 %v1601
      %v1645 = vunpack.c.l.b16 %v1605
      %v1646 = vunpack.c.l.b16 %v1608
      %v1647 = vunpack.c.l.b16 %v1612
      %v1648 = vunpack.c.l.b16 %v1615
      %v1649 = vpack.c.b16 %v1618, %v1617
      %v1650 = vpack.c.b16 %v1620, %v1619
      %v1651 = vpack.c.b16 %v1622, %v1621
      %v1652 = vpack.c.b16 %v1624, %v1623
      %v1653 = vpack.c.b16 %v1626, %v1625
      %v1654 = vpack.c.b16 %v1628, %v1627
      %v1655 = vpack.c.b16 %v1630, %v1629
      %v1656 = vpack.c.b16 %v1632, %v1631
      %v1657 = vpack.c.b16 %v1634, %v1633
      %v1658 = vpack.c.b16 %v1636, %v1635
      %v1659 = vpack.c.b16 %v1638, %v1637
      %v1660 = vpack.c.b16 %v1640, %v1639
      %v1661 = vpack.c.b16 %v1642, %v1641
      %v1662 = vpack.c.b16 %v1644, %v1643
      %v1663 = vpack.c.b16 %v1646, %v1645
      %v1664 = vpack.c.b16 %v1648, %v1647
      %v1666 = vunpack.c.l.b16 %v1616
      %v1667 = vunpack.c.h.b16 %v1616
      %v1668 = vpack.c.b16 %v1666, %v1666
      %v1669 = vpack.c.b16 %v1667, %v1667
      %v1670 = vrot.slane %v1668, 1
      %v1671 = vrot.slane %v1669, 1
      %v1673 = vsel %vm901, %v1649, 0
      %v1676 = vsel %vm901, %v1650, 0
      %v1679 = vsel %vm901, %v1651, 0
      %v1682 = vsel %vm901, %v1652, 0
      %v1685 = vsel %vm901, %v1653, 0
      %v1688 = vsel %vm901, %v1654, 0
      %v1691 = vsel %vm901, %v1655, 0
      %v1694 = vsel %vm901, %v1656, 0
      %v1697 = vsel %vm901, %v1657, 0
      %v1700 = vsel %vm901, %v1658, 0
      %v1703 = vsel %vm901, %v1659, 0
      %v1706 = vsel %vm901, %v1660, 0
      %v1709 = vsel %vm901, %v1661, 0
      %v1712 = vsel %vm901, %v1662, 0
      %v1715 = vsel %vm901, %v1663, 0
      %v1718 = vsel %vm901, %v1664, 0
      %v1721 = vand.u32 %v1670, %v953
      %v1724 = vand.u32 %v1671, %v953
      %1726 = vmatprep.subr.bf16.mxu0 0
      %1727 = vmatpush1.bf16.msra.mxu0 0
      %1728 = vmatprep.subr.bf16.mxu0 0
      %1729 = vmatpush1.bf16.msra.mxu0 0
      %1730 = vmatprep.subr.bf16.mxu0 0
      %1731 = vmatpush1.bf16.msra.mxu0 0
      %1732 = vmatprep.subr.bf16.mxu0 0
      %1733 = vmatpush1.bf16.msra.mxu0 0
      %1734 = vmatprep.subr.bf16.mxu0 0
      %1735 = vmatpush1.bf16.msra.mxu0 0
      %1736 = vmatprep.subr.bf16.mxu0 0
      %1737 = vmatpush1.bf16.msra.mxu0 0
      %1738 = vmatprep.subr.bf16.mxu0 0
      %1739 = vmatpush1.bf16.msra.mxu0 0
      %1740 = vmatprep.subr.bf16.mxu0 %v1724
      %1741 = vmatpush1.bf16.msra.mxu0 %v1721
      %1742 = vmatprep.subr.bf16.mxu0 0
      %1743 = vmatpush2.bf16.msra.mxu0 0
      %1744 = vmatprep.subr.bf16.mxu0 0
      %1745 = vmatpush2.bf16.msra.mxu0 0
      %1746 = vmatprep.subr.bf16.mxu0 0
      %1747 = vmatpush2.bf16.msra.mxu0 0
      %1748 = vmatprep.subr.bf16.mxu0 0
      %1749 = vmatpush2.bf16.msra.mxu0 0
      %1750 = vmatprep.subr.bf16.mxu0 0
      %1751 = vmatpush2.bf16.msra.mxu0 0
      %1752 = vmatprep.subr.bf16.mxu0 0
      %1753 = vmatpush2.bf16.msra.mxu0 0
      %1754 = vmatprep.subr.bf16.mxu0 0
      %1755 = vmatpush2.bf16.msra.mxu0 0
      %1756 = vmatprep.subr.bf16.mxu0 0
      %1757 = vmatpush2.bf16.msra.mxu0 0
      %1758 = vmatprep.mubr.bf16.mxu0 0
      %1759 = vmatmul.mubr.bf16.gmra.mxu0 %v1673
      %v1760 = vpop.f32.mrf.mxu0
      %v1761 = vadd.f32 0.0, %v1760
      %v1762 = vpop.f32.mrf.mxu0
      %v1763 = vadd.f32 0.0, %v1762
      %v1764 = vpop.f32.mrf.mxu0
      %v1765 = vadd.f32 0.0, %v1764
      %v1766 = vpop.f32.mrf.mxu0
      %v1767 = vadd.f32 0.0, %v1766
      %1768 = vmatprep.mubr.bf16.mxu0 0
      %1769 = vmatmul.mubr.bf16.gmra.mxu0 %v1676
      %v1770 = vpop.f32.mrf.mxu0
      %v1771 = vadd.f32 0.0, %v1770
      %v1772 = vpop.f32.mrf.mxu0
      %v1773 = vadd.f32 0.0, %v1772
      %v1774 = vpop.f32.mrf.mxu0
      %v1775 = vadd.f32 0.0, %v1774
      %v1776 = vpop.f32.mrf.mxu0
      %v1777 = vadd.f32 0.0, %v1776
      %1778 = vmatprep.mubr.bf16.mxu0 0
      %1779 = vmatmul.mubr.bf16.gmra.mxu0 %v1679
      %v1780 = vpop.f32.mrf.mxu0
      %v1781 = vadd.f32 0.0, %v1780
      %v1782 = vpop.f32.mrf.mxu0
      %v1783 = vadd.f32 0.0, %v1782
      %v1784 = vpop.f32.mrf.mxu0
      %v1785 = vadd.f32 0.0, %v1784
      %v1786 = vpop.f32.mrf.mxu0
      %v1787 = vadd.f32 0.0, %v1786
      %1788 = vmatprep.mubr.bf16.mxu0 0
      %1789 = vmatmul.mubr.bf16.gmra.mxu0 %v1682
      %v1790 = vpop.f32.mrf.mxu0
      %v1791 = vadd.f32 0.0, %v1790
      %v1792 = vpop.f32.mrf.mxu0
      %v1793 = vadd.f32 0.0, %v1792
      %v1794 = vpop.f32.mrf.mxu0
      %v1795 = vadd.f32 0.0, %v1794
      %v1796 = vpop.f32.mrf.mxu0
      %v1797 = vadd.f32 0.0, %v1796
      %1798 = vmatprep.mubr.bf16.mxu0 0
      %1799 = vmatmul.mubr.bf16.gmra.mxu0 %v1685
      %v1800 = vpop.f32.mrf.mxu0
      %v1801 = vadd.f32 0.0, %v1800
      %v1802 = vpop.f32.mrf.mxu0
      %v1803 = vadd.f32 0.0, %v1802
      %v1804 = vpop.f32.mrf.mxu0
      %v1805 = vadd.f32 0.0, %v1804
      %v1806 = vpop.f32.mrf.mxu0
      %v1807 = vadd.f32 0.0, %v1806
      %1808 = vmatprep.mubr.bf16.mxu0 0
      %1809 = vmatmul.mubr.bf16.gmra.mxu0 %v1688
      %v1810 = vpop.f32.mrf.mxu0
      %v1811 = vadd.f32 0.0, %v1810
      %v1812 = vpop.f32.mrf.mxu0
      %v1813 = vadd.f32 0.0, %v1812
      %v1814 = vpop.f32.mrf.mxu0
      %v1815 = vadd.f32 0.0, %v1814
      %v1816 = vpop.f32.mrf.mxu0
      %v1817 = vadd.f32 0.0, %v1816
      %1818 = vmatprep.mubr.bf16.mxu0 0
      %1819 = vmatmul.mubr.bf16.gmra.mxu0 %v1691
      %v1820 = vpop.f32.mrf.mxu0
      %v1821 = vadd.f32 0.0, %v1820
      %v1822 = vpop.f32.mrf.mxu0
      %v1823 = vadd.f32 0.0, %v1822
      %v1824 = vpop.f32.mrf.mxu0
      %v1825 = vadd.f32 0.0, %v1824
      %v1826 = vpop.f32.mrf.mxu0
      %v1827 = vadd.f32 0.0, %v1826
      %1828 = vmatprep.mubr.bf16.mxu0 0
      %1829 = vmatmul.mubr.bf16.gmra.mxu0 %v1694
      %v1830 = vpop.f32.mrf.mxu0
      %v1831 = vadd.f32 0.0, %v1830
      %v1832 = vpop.f32.mrf.mxu0
      %v1833 = vadd.f32 0.0, %v1832
      %v1834 = vpop.f32.mrf.mxu0
      %v1835 = vadd.f32 0.0, %v1834
      %v1836 = vpop.f32.mrf.mxu0
      %v1837 = vadd.f32 0.0, %v1836
      %1838 = vmatprep.mubr.bf16.mxu0 0
      %1839 = vmatmul.mubr.bf16.gmra.mxu0 %v1697
      %v1840 = vpop.f32.mrf.mxu0
      %v1841 = vadd.f32 0.0, %v1840
      %v1842 = vpop.f32.mrf.mxu0
      %v1843 = vadd.f32 0.0, %v1842
      %v1844 = vpop.f32.mrf.mxu0
      %v1845 = vadd.f32 0.0, %v1844
      %v1846 = vpop.f32.mrf.mxu0
      %v1847 = vadd.f32 0.0, %v1846
      %1848 = vmatprep.mubr.bf16.mxu0 0
      %1849 = vmatmul.mubr.bf16.gmra.mxu0 %v1700
      %v1850 = vpop.f32.mrf.mxu0
      %v1851 = vadd.f32 0.0, %v1850
      %v1852 = vpop.f32.mrf.mxu0
      %v1853 = vadd.f32 0.0, %v1852
      %v1854 = vpop.f32.mrf.mxu0
      %v1855 = vadd.f32 0.0, %v1854
      %v1856 = vpop.f32.mrf.mxu0
      %v1857 = vadd.f32 0.0, %v1856
      %1858 = vmatprep.mubr.bf16.mxu0 0
      %1859 = vmatmul.mubr.bf16.gmra.mxu0 %v1703
      %v1860 = vpop.f32.mrf.mxu0
      %v1861 = vadd.f32 0.0, %v1860
      %v1862 = vpop.f32.mrf.mxu0
      %v1863 = vadd.f32 0.0, %v1862
      %v1864 = vpop.f32.mrf.mxu0
      %v1865 = vadd.f32 0.0, %v1864
      %v1866 = vpop.f32.mrf.mxu0
      %v1867 = vadd.f32 0.0, %v1866
      %1868 = vmatprep.mubr.bf16.mxu0 0
      %1869 = vmatmul.mubr.bf16.gmra.mxu0 %v1706
      %v1870 = vpop.f32.mrf.mxu0
      %v1871 = vadd.f32 0.0, %v1870
      %v1872 = vpop.f32.mrf.mxu0
      %v1873 = vadd.f32 0.0, %v1872
      %v1874 = vpop.f32.mrf.mxu0
      %v1875 = vadd.f32 0.0, %v1874
      %v1876 = vpop.f32.mrf.mxu0
      %v1877 = vadd.f32 0.0, %v1876
      %1878 = vmatprep.mubr.bf16.mxu0 0
      %1879 = vmatmul.mubr.bf16.gmra.mxu0 %v1709
      %v1880 = vpop.f32.mrf.mxu0
      %v1881 = vadd.f32 0.0, %v1880
      %v1882 = vpop.f32.mrf.mxu0
      %v1883 = vadd.f32 0.0, %v1882
      %v1884 = vpop.f32.mrf.mxu0
      %v1885 = vadd.f32 0.0, %v1884
      %v1886 = vpop.f32.mrf.mxu0
      %v1887 = vadd.f32 0.0, %v1886
      %1888 = vmatprep.mubr.bf16.mxu0 0
      %1889 = vmatmul.mubr.bf16.gmra.mxu0 %v1712
      %v1890 = vpop.f32.mrf.mxu0
      %v1891 = vadd.f32 0.0, %v1890
      %v1892 = vpop.f32.mrf.mxu0
      %v1893 = vadd.f32 0.0, %v1892
      %v1894 = vpop.f32.mrf.mxu0
      %v1895 = vadd.f32 0.0, %v1894
      %v1896 = vpop.f32.mrf.mxu0
      %v1897 = vadd.f32 0.0, %v1896
      %1898 = vmatprep.mubr.bf16.mxu0 0
      %1899 = vmatmul.mubr.bf16.gmra.mxu0 %v1715
      %v1900 = vpop.f32.mrf.mxu0
      %v1901 = vadd.f32 0.0, %v1900
      %v1902 = vpop.f32.mrf.mxu0
      %v1903 = vadd.f32 0.0, %v1902
      %v1904 = vpop.f32.mrf.mxu0
      %v1905 = vadd.f32 0.0, %v1904
      %v1906 = vpop.f32.mrf.mxu0
      %v1907 = vadd.f32 0.0, %v1906
      %1908 = vmatprep.mubr.bf16.mxu0 0
      %1909 = vmatmul.mubr.bf16.gmra.mxu0 %v1718
      %v1910 = vpop.f32.mrf.mxu0
      %v1911 = vadd.f32 0.0, %v1910
      %v1912 = vpop.f32.mrf.mxu0
      %v1913 = vadd.f32 0.0, %v1912
      %v1914 = vpop.f32.mrf.mxu0
      %v1915 = vadd.f32 0.0, %v1914
      %v1916 = vpop.f32.mrf.mxu0
      %v1917 = vadd.f32 0.0, %v1916
      %1918 = vdwg.mxu0
      %v1919 = vadd.f32 %v1327, %v1761
      %v1920 = vadd.f32 %v1329, %v1763
      %v1921 = vadd.f32 %v1331, %v1765
      %v1922 = vadd.f32 %v1333, %v1767
      %v1923 = vadd.f32 %v1337, %v1771
      %v1924 = vadd.f32 %v1339, %v1773
      %v1925 = vadd.f32 %v1341, %v1775
      %v1926 = vadd.f32 %v1343, %v1777
      %v1927 = vadd.f32 %v1347, %v1781
      %v1928 = vadd.f32 %v1349, %v1783
      %v1929 = vadd.f32 %v1351, %v1785
      %v1930 = vadd.f32 %v1353, %v1787
      %v1931 = vadd.f32 %v1357, %v1791
      %v1932 = vadd.f32 %v1359, %v1793
      %v1933 = vadd.f32 %v1361, %v1795
      %v1934 = vadd.f32 %v1363, %v1797
      %v1935 = vadd.f32 %v1367, %v1801
      %v1936 = vadd.f32 %v1369, %v1803
      %v1937 = vadd.f32 %v1371, %v1805
      %v1938 = vadd.f32 %v1373, %v1807
      %v1939 = vadd.f32 %v1377, %v1811
      %v1940 = vadd.f32 %v1379, %v1813
      %v1941 = vadd.f32 %v1381, %v1815
      %v1942 = vadd.f32 %v1383, %v1817
      %v1943 = vadd.f32 %v1387, %v1821
      %v1944 = vadd.f32 %v1389, %v1823
      %v1945 = vadd.f32 %v1391, %v1825
      %v1946 = vadd.f32 %v1393, %v1827
      %v1947 = vadd.f32 %v1397, %v1831
      %v1948 = vadd.f32 %v1399, %v1833
      %v1949 = vadd.f32 %v1401, %v1835
      %v1950 = vadd.f32 %v1403, %v1837
      %v1951 = vadd.f32 %v1407, %v1841
      %v1952 = vadd.f32 %v1409, %v1843
      %v1953 = vadd.f32 %v1411, %v1845
      %v1954 = vadd.f32 %v1413, %v1847
      %v1955 = vadd.f32 %v1417, %v1851
      %v1956 = vadd.f32 %v1419, %v1853
      %v1957 = vadd.f32 %v1421, %v1855
      %v1958 = vadd.f32 %v1423, %v1857
      %v1959 = vadd.f32 %v1427, %v1861
      %v1960 = vadd.f32 %v1429, %v1863
      %v1961 = vadd.f32 %v1431, %v1865
      %v1962 = vadd.f32 %v1433, %v1867
      %v1963 = vadd.f32 %v1437, %v1871
      %v1964 = vadd.f32 %v1439, %v1873
      %v1965 = vadd.f32 %v1441, %v1875
      %v1966 = vadd.f32 %v1443, %v1877
      %v1967 = vadd.f32 %v1447, %v1881
      %v1968 = vadd.f32 %v1449, %v1883
      %v1969 = vadd.f32 %v1451, %v1885
      %v1970 = vadd.f32 %v1453, %v1887
      %v1971 = vadd.f32 %v1457, %v1891
      %v1972 = vadd.f32 %v1459, %v1893
      %v1973 = vadd.f32 %v1461, %v1895
      %v1974 = vadd.f32 %v1463, %v1897
      %v1975 = vadd.f32 %v1467, %v1901
      %v1976 = vadd.f32 %v1469, %v1903
      %v1977 = vadd.f32 %v1471, %v1905
      %v1978 = vadd.f32 %v1473, %v1907
      %v1979 = vadd.f32 %v1477, %v1911
      %v1980 = vadd.f32 %v1479, %v1913
      %v1981 = vadd.f32 %v1481, %v1915
      %v1982 = vadd.f32 %v1483, %v1917
      %v1983 = vld [vmem:[%s2 + $0x8] sm:$0x88]
      %v1984 = vld [vmem:[%s2 + $0x10] sm:$0x33]
      %v1987 = vunpack.c.l.b16 %v377
      %v1988 = vunpack.c.l.b16 %v378
      %v1989 = vpack.c.b16 %v1988, %v1987
      %v1992 = vunpack.c.l.b16 %v1983
      %v1993 = vunpack.c.h.b16 %v1983
      %v1994 = vunpack.c.l.b16 %v1984
      %v1995 = vunpack.c.h.b16 %v1984
      %v1996 = vpack.c.b16 %v1994, %v1992
      %v1997 = vpack.c.b16 %v1995, %v1993
      %v1999 = vshrl.u32 %v1996, 16
      %v2001 = vrot.slane %v1999, 3
      %v2002 = vshll.u32 %v1996, 16
      %v2004 = vrot.slane %v2002, 4
      %v2005 = vor.u32 %v2001, %v2004
      %v2007 = vshrl.u32 %v1997, 16
      %v2009 = vrot.slane %v2007, 3
      %v2010 = vshll.u32 %v1997, 16
      %v2012 = vrot.slane %v2010, 4
      %v2013 = vor.u32 %v2009, %v2012
      %v2015 = vsel %vm901, %v1989, 0
      %v2018 = vand.u32 %v2005, %v953
      %v2021 = vand.u32 %v2013, %v953
      %2023 = vmatprep.subr.bf16.mxu0 0
      %2024 = vmatpush1.bf16.msra.mxu0 0
      %2025 = vmatprep.subr.bf16.mxu0 0
      %2026 = vmatpush1.bf16.msra.mxu0 0
      %2027 = vmatprep.subr.bf16.mxu0 0
      %2028 = vmatpush1.bf16.msra.mxu0 0
      %2029 = vmatprep.subr.bf16.mxu0 0
      %2030 = vmatpush1.bf16.msra.mxu0 0
      %2031 = vmatprep.subr.bf16.mxu0 0
      %2032 = vmatpush1.bf16.msra.mxu0 0
      %2033 = vmatprep.subr.bf16.mxu0 0
      %2034 = vmatpush1.bf16.msra.mxu0 0
      %2035 = vmatprep.subr.bf16.mxu0 0
      %2036 = vmatpush1.bf16.msra.mxu0 0
      %2037 = vmatprep.subr.bf16.mxu0 %v2021
      %2038 = vmatpush1.bf16.msra.mxu0 %v2018
      %2039 = vmatprep.subr.bf16.mxu0 0
      %2040 = vmatpush2.bf16.msra.mxu0 0
      %2041 = vmatprep.subr.bf16.mxu0 0
      %2042 = vmatpush2.bf16.msra.mxu0 0
      %2043 = vmatprep.subr.bf16.mxu0 0
      %2044 = vmatpush2.bf16.msra.mxu0 0
      %2045 = vmatprep.subr.bf16.mxu0 0
      %2046 = vmatpush2.bf16.msra.mxu0 0
      %2047 = vmatprep.subr.bf16.mxu0 0
      %2048 = vmatpush2.bf16.msra.mxu0 0
      %2049 = vmatprep.subr.bf16.mxu0 0
      %2050 = vmatpush2.bf16.msra.mxu0 0
      %2051 = vmatprep.subr.bf16.mxu0 0
      %2052 = vmatpush2.bf16.msra.mxu0 0
      %2053 = vmatprep.subr.bf16.mxu0 0
      %2054 = vmatpush2.bf16.msra.mxu0 0
      %2055 = vmatprep.mubr.bf16.mxu0 0
      %2056 = vmatmul.mubr.bf16.gmra.mxu0 %v1242
      %v2057 = vpop.f32.mrf.mxu0
      %v2058 = vadd.f32 0.0, %v2057
      %v2059 = vpop.f32.mrf.mxu0
      %v2060 = vadd.f32 0.0, %v2059
      %v2061 = vpop.f32.mrf.mxu0
      %v2062 = vadd.f32 0.0, %v2061
      %v2063 = vpop.f32.mrf.mxu0
      %v2064 = vadd.f32 0.0, %v2063
      %2065 = vmatprep.mubr.bf16.mxu0 0
      %2066 = vmatmul.mubr.bf16.gmra.mxu0 %v1245
      %v2067 = vpop.f32.mrf.mxu0
      %v2068 = vadd.f32 0.0, %v2067
      %v2069 = vpop.f32.mrf.mxu0
      %v2070 = vadd.f32 0.0, %v2069
      %v2071 = vpop.f32.mrf.mxu0
      %v2072 = vadd.f32 0.0, %v2071
      %v2073 = vpop.f32.mrf.mxu0
      %v2074 = vadd.f32 0.0, %v2073
      %2075 = vmatprep.mubr.bf16.mxu0 0
      %2076 = vmatmul.mubr.bf16.gmra.mxu0 %v1248
      %v2077 = vpop.f32.mrf.mxu0
      %v2078 = vadd.f32 0.0, %v2077
      %v2079 = vpop.f32.mrf.mxu0
      %v2080 = vadd.f32 0.0, %v2079
      %v2081 = vpop.f32.mrf.mxu0
      %v2082 = vadd.f32 0.0, %v2081
      %v2083 = vpop.f32.mrf.mxu0
      %v2084 = vadd.f32 0.0, %v2083
      %2085 = vmatprep.mubr.bf16.mxu0 0
      %2086 = vmatmul.mubr.bf16.gmra.mxu0 %v1251
      %v2087 = vpop.f32.mrf.mxu0
      %v2088 = vadd.f32 0.0, %v2087
      %v2089 = vpop.f32.mrf.mxu0
      %v2090 = vadd.f32 0.0, %v2089
      %v2091 = vpop.f32.mrf.mxu0
      %v2092 = vadd.f32 0.0, %v2091
      %v2093 = vpop.f32.mrf.mxu0
      %v2094 = vadd.f32 0.0, %v2093
      %2095 = vmatprep.mubr.bf16.mxu0 0
      %2096 = vmatmul.mubr.bf16.gmra.mxu0 %v1254
      %v2097 = vpop.f32.mrf.mxu0
      %v2098 = vadd.f32 0.0, %v2097
      %v2099 = vpop.f32.mrf.mxu0
      %v2100 = vadd.f32 0.0, %v2099
      %v2101 = vpop.f32.mrf.mxu0
      %v2102 = vadd.f32 0.0, %v2101
      %v2103 = vpop.f32.mrf.mxu0
      %v2104 = vadd.f32 0.0, %v2103
      %2105 = vmatprep.mubr.bf16.mxu0 0
      %2106 = vmatmul.mubr.bf16.gmra.mxu0 %v1257
      %v2107 = vpop.f32.mrf.mxu0
      %v2108 = vadd.f32 0.0, %v2107
      %v2109 = vpop.f32.mrf.mxu0
      %v2110 = vadd.f32 0.0, %v2109
      %v2111 = vpop.f32.mrf.mxu0
      %v2112 = vadd.f32 0.0, %v2111
      %v2113 = vpop.f32.mrf.mxu0
      %v2114 = vadd.f32 0.0, %v2113
      %2115 = vmatprep.mubr.bf16.mxu0 0
      %2116 = vmatmul.mubr.bf16.gmra.mxu0 %v1260
      %v2117 = vpop.f32.mrf.mxu0
      %v2118 = vadd.f32 0.0, %v2117
      %v2119 = vpop.f32.mrf.mxu0
      %v2120 = vadd.f32 0.0, %v2119
      %v2121 = vpop.f32.mrf.mxu0
      %v2122 = vadd.f32 0.0, %v2121
      %v2123 = vpop.f32.mrf.mxu0
      %v2124 = vadd.f32 0.0, %v2123
      %2125 = vmatprep.mubr.bf16.mxu0 0
      %2126 = vmatmul.mubr.bf16.gmra.mxu0 %v1263
      %v2127 = vpop.f32.mrf.mxu0
      %v2128 = vadd.f32 0.0, %v2127
      %v2129 = vpop.f32.mrf.mxu0
      %v2130 = vadd.f32 0.0, %v2129
      %v2131 = vpop.f32.mrf.mxu0
      %v2132 = vadd.f32 0.0, %v2131
      %v2133 = vpop.f32.mrf.mxu0
      %v2134 = vadd.f32 0.0, %v2133
      %2135 = vmatprep.mubr.bf16.mxu0 0
      %2136 = vmatmul.mubr.bf16.gmra.mxu0 %v1266
      %v2137 = vpop.f32.mrf.mxu0
      %v2138 = vadd.f32 0.0, %v2137
      %v2139 = vpop.f32.mrf.mxu0
      %v2140 = vadd.f32 0.0, %v2139
      %v2141 = vpop.f32.mrf.mxu0
      %v2142 = vadd.f32 0.0, %v2141
      %v2143 = vpop.f32.mrf.mxu0
      %v2144 = vadd.f32 0.0, %v2143
      %2145 = vmatprep.mubr.bf16.mxu0 0
      %2146 = vmatmul.mubr.bf16.gmra.mxu0 %v1269
      %v2147 = vpop.f32.mrf.mxu0
      %v2148 = vadd.f32 0.0, %v2147
      %v2149 = vpop.f32.mrf.mxu0
      %v2150 = vadd.f32 0.0, %v2149
      %v2151 = vpop.f32.mrf.mxu0
      %v2152 = vadd.f32 0.0, %v2151
      %v2153 = vpop.f32.mrf.mxu0
      %v2154 = vadd.f32 0.0, %v2153
      %2155 = vmatprep.mubr.bf16.mxu0 0
      %2156 = vmatmul.mubr.bf16.gmra.mxu0 %v1272
      %v2157 = vpop.f32.mrf.mxu0
      %v2158 = vadd.f32 0.0, %v2157
      %v2159 = vpop.f32.mrf.mxu0
      %v2160 = vadd.f32 0.0, %v2159
      %v2161 = vpop.f32.mrf.mxu0
      %v2162 = vadd.f32 0.0, %v2161
      %v2163 = vpop.f32.mrf.mxu0
      %v2164 = vadd.f32 0.0, %v2163
      %2165 = vmatprep.mubr.bf16.mxu0 0
      %2166 = vmatmul.mubr.bf16.gmra.mxu0 %v1275
      %v2167 = vpop.f32.mrf.mxu0
      %v2168 = vadd.f32 0.0, %v2167
      %v2169 = vpop.f32.mrf.mxu0
      %v2170 = vadd.f32 0.0, %v2169
      %v2171 = vpop.f32.mrf.mxu0
      %v2172 = vadd.f32 0.0, %v2171
      %v2173 = vpop.f32.mrf.mxu0
      %v2174 = vadd.f32 0.0, %v2173
      %2175 = vmatprep.mubr.bf16.mxu0 0
      %2176 = vmatmul.mubr.bf16.gmra.mxu0 %v1278
      %v2177 = vpop.f32.mrf.mxu0
      %v2178 = vadd.f32 0.0, %v2177
      %v2179 = vpop.f32.mrf.mxu0
      %v2180 = vadd.f32 0.0, %v2179
      %v2181 = vpop.f32.mrf.mxu0
      %v2182 = vadd.f32 0.0, %v2181
      %v2183 = vpop.f32.mrf.mxu0
      %v2184 = vadd.f32 0.0, %v2183
      %2185 = vmatprep.mubr.bf16.mxu0 0
      %2186 = vmatmul.mubr.bf16.gmra.mxu0 %v1281
      %v2187 = vpop.f32.mrf.mxu0
      %v2188 = vadd.f32 0.0, %v2187
      %v2189 = vpop.f32.mrf.mxu0
      %v2190 = vadd.f32 0.0, %v2189
      %v2191 = vpop.f32.mrf.mxu0
      %v2192 = vadd.f32 0.0, %v2191
      %v2193 = vpop.f32.mrf.mxu0
      %v2194 = vadd.f32 0.0, %v2193
      %2195 = vmatprep.mubr.bf16.mxu0 0
      %2196 = vmatmul.mubr.bf16.gmra.mxu0 %v1284
      %v2197 = vpop.f32.mrf.mxu0
      %v2198 = vadd.f32 0.0, %v2197
      %v2199 = vpop.f32.mrf.mxu0
      %v2200 = vadd.f32 0.0, %v2199
      %v2201 = vpop.f32.mrf.mxu0
      %v2202 = vadd.f32 0.0, %v2201
      %v2203 = vpop.f32.mrf.mxu0
      %v2204 = vadd.f32 0.0, %v2203
      %2205 = vmatprep.mubr.bf16.mxu0 0
      %2206 = vmatmul.mubr.bf16.gmra.mxu0 %v2015
      %v2207 = vpop.f32.mrf.mxu0
      %v2208 = vadd.f32 0.0, %v2207
      %v2209 = vpop.f32.mrf.mxu0
      %v2210 = vadd.f32 0.0, %v2209
      %v2211 = vpop.f32.mrf.mxu0
      %v2212 = vadd.f32 0.0, %v2211
      %v2213 = vpop.f32.mrf.mxu0
      %v2214 = vadd.f32 0.0, %v2213
      %2215 = vdwg.mxu0
      %v2216 = vadd.f32 %v1919, %v2058
      %v2217 = vadd.f32 %v1920, %v2060
      %v2218 = vadd.f32 %v1921, %v2062
      %v2219 = vadd.f32 %v1922, %v2064
      %v2220 = vadd.f32 %v1923, %v2068
      %v2221 = vadd.f32 %v1924, %v2070
      %v2222 = vadd.f32 %v1925, %v2072
      %v2223 = vadd.f32 %v1926, %v2074
      %v2224 = vadd.f32 %v1927, %v2078
      %v2225 = vadd.f32 %v1928, %v2080
      %v2226 = vadd.f32 %v1929, %v2082
      %v2227 = vadd.f32 %v1930, %v2084
      %v2228 = vadd.f32 %v1931, %v2088
      %v2229 = vadd.f32 %v1932, %v2090
      %v2230 = vadd.f32 %v1933, %v2092
      %v2231 = vadd.f32 %v1934, %v2094
      %v2232 = vadd.f32 %v1935, %v2098
      %v2233 = vadd.f32 %v1936, %v2100
      %v2234 = vadd.f32 %v1937, %v2102
      %v2235 = vadd.f32 %v1938, %v2104
      %v2236 = vadd.f32 %v1939, %v2108
      %v2237 = vadd.f32 %v1940, %v2110
      %v2238 = vadd.f32 %v1941, %v2112
      %v2239 = vadd.f32 %v1942, %v2114
      %v2240 = vadd.f32 %v1943, %v2118
      %v2241 = vadd.f32 %v1944, %v2120
      %v2242 = vadd.f32 %v1945, %v2122
      %v2243 = vadd.f32 %v1946, %v2124
      %v2244 = vadd.f32 %v1947, %v2128
      %v2245 = vadd.f32 %v1948, %v2130
      %v2246 = vadd.f32 %v1949, %v2132
      %v2247 = vadd.f32 %v1950, %v2134
      %v2248 = vadd.f32 %v1951, %v2138
      %v2249 = vadd.f32 %v1952, %v2140
      %v2250 = vadd.f32 %v1953, %v2142
      %v2251 = vadd.f32 %v1954, %v2144
      %v2252 = vadd.f32 %v1955, %v2148
      %v2253 = vadd.f32 %v1956, %v2150
      %v2254 = vadd.f32 %v1957, %v2152
      %v2255 = vadd.f32 %v1958, %v2154
      %v2256 = vadd.f32 %v1959, %v2158
      %v2257 = vadd.f32 %v1960, %v2160
      %v2258 = vadd.f32 %v1961, %v2162
      %v2259 = vadd.f32 %v1962, %v2164
      %v2260 = vadd.f32 %v1963, %v2168
      %v2261 = vadd.f32 %v1964, %v2170
      %v2262 = vadd.f32 %v1965, %v2172
      %v2263 = vadd.f32 %v1966, %v2174
      %v2264 = vadd.f32 %v1967, %v2178
      %v2265 = vadd.f32 %v1968, %v2180
      %v2266 = vadd.f32 %v1969, %v2182
      %v2267 = vadd.f32 %v1970, %v2184
      %v2268 = vadd.f32 %v1971, %v2188
      %v2269 = vadd.f32 %v1972, %v2190
      %v2270 = vadd.f32 %v1973, %v2192
      %v2271 = vadd.f32 %v1974, %v2194
      %v2272 = vadd.f32 %v1975, %v2198
      %v2273 = vadd.f32 %v1976, %v2200
      %v2274 = vadd.f32 %v1977, %v2202
      %v2275 = vadd.f32 %v1978, %v2204
      %v2276 = vadd.f32 %v1979, %v2208
      %v2277 = vadd.f32 %v1980, %v2210
      %v2278 = vadd.f32 %v1981, %v2212
      %v2279 = vadd.f32 %v1982, %v2214
      %v2281 = vshrl.u32 %v377, 16
      %v2283 = vrot.slane %v2281, 4
      %v2284 = vshll.u32 %v377, 16
      %v2286 = vrot.slane %v2284, 5
      %v2287 = vor.u32 %v2283, %v2286
      %v2288 = vrot.slane %v2287, 4
      %v2290 = vshll.u32 %v378, 16
      %v2292 = vrot.slane %v2290, 5
      %v2293 = vsel %vm442, %v2288, %v2292
      %v2294 = vshrl.u32 %v378, 16
      %v2296 = vrot.slane %v2294, 4
      %v2297 = vor.u32 %v2296, %v2292
      %v2298 = vrot.slane %v2297, 4
      %v2300 = vshll.u32 %v379, 16
      %v2302 = vrot.slane %v2300, 5
      %v2303 = vsel %vm442, %v2298, %v2302
      %v2304 = vld [vmem:[%s2 + $0x10] sm:$0xcc]
      %v2305 = vld [vmem:[%s2 + $0x18] sm:$0x11]
      %v2306 = vunpack.c.l.b16 %v2293
      %v2307 = vunpack.c.l.b16 %v2303
      %v2308 = vpack.c.b16 %v2307, %v2306
      %v2311 = vunpack.c.l.b16 %v2304
      %v2312 = vunpack.c.h.b16 %v2304
      %v2313 = vunpack.c.l.b16 %v2305
      %v2314 = vunpack.c.h.b16 %v2305
      %v2315 = vpack.c.b16 %v2313, %v2311
      %v2316 = vpack.c.b16 %v2314, %v2312
      %v2317 = vrot.slane %v2315, 2
      %v2318 = vrot.slane %v2316, 2
      %v2320 = vsel %vm901, %v2308, 0
      %v2323 = vand.u32 %v2317, %v953
      %v2326 = vand.u32 %v2318, %v953
      %2328 = vmatprep.subr.bf16.mxu0 0
      %2329 = vmatpush1.bf16.msra.mxu0 0
      %2330 = vmatprep.subr.bf16.mxu0 0
      %2331 = vmatpush1.bf16.msra.mxu0 0
      %2332 = vmatprep.subr.bf16.mxu0 0
      %2333 = vmatpush1.bf16.msra.mxu0 0
      %2334 = vmatprep.subr.bf16.mxu0 0
      %2335 = vmatpush1.bf16.msra.mxu0 0
      %2336 = vmatprep.subr.bf16.mxu0 0
      %2337 = vmatpush1.bf16.msra.mxu0 0
      %2338 = vmatprep.subr.bf16.mxu0 0
      %2339 = vmatpush1.bf16.msra.mxu0 0
      %2340 = vmatprep.subr.bf16.mxu0 0
      %2341 = vmatpush1.bf16.msra.mxu0 0
      %2342 = vmatprep.subr.bf16.mxu0 %v2326
      %2343 = vmatpush1.bf16.msra.mxu0 %v2323
      %2344 = vmatprep.subr.bf16.mxu0 0
      %2345 = vmatpush2.bf16.msra.mxu0 0
      %2346 = vmatprep.subr.bf16.mxu0 0
      %2347 = vmatpush2.bf16.msra.mxu0 0
      %2348 = vmatprep.subr.bf16.mxu0 0
      %2349 = vmatpush2.bf16.msra.mxu0 0
      %2350 = vmatprep.subr.bf16.mxu0 0
      %2351 = vmatpush2.bf16.msra.mxu0 0
      %2352 = vmatprep.subr.bf16.mxu0 0
      %2353 = vmatpush2.bf16.msra.mxu0 0
      %2354 = vmatprep.subr.bf16.mxu0 0
      %2355 = vmatpush2.bf16.msra.mxu0 0
      %2356 = vmatprep.subr.bf16.mxu0 0
      %2357 = vmatpush2.bf16.msra.mxu0 0
      %2358 = vmatprep.subr.bf16.mxu0 0
      %2359 = vmatpush2.bf16.msra.mxu0 0
      %2360 = vmatprep.mubr.bf16.mxu0 0
      %2361 = vmatmul.mubr.bf16.gmra.mxu0 %v906
      %v2362 = vpop.f32.mrf.mxu0
      %v2363 = vadd.f32 0.0, %v2362
      %v2364 = vpop.f32.mrf.mxu0
      %v2365 = vadd.f32 0.0, %v2364
      %v2366 = vpop.f32.mrf.mxu0
      %v2367 = vadd.f32 0.0, %v2366
      %v2368 = vpop.f32.mrf.mxu0
      %v2369 = vadd.f32 0.0, %v2368
      %2370 = vmatprep.mubr.bf16.mxu0 0
      %2371 = vmatmul.mubr.bf16.gmra.mxu0 %v909
      %v2372 = vpop.f32.mrf.mxu0
      %v2373 = vadd.f32 0.0, %v2372
      %v2374 = vpop.f32.mrf.mxu0
      %v2375 = vadd.f32 0.0, %v2374
      %v2376 = vpop.f32.mrf.mxu0
      %v2377 = vadd.f32 0.0, %v2376
      %v2378 = vpop.f32.mrf.mxu0
      %v2379 = vadd.f32 0.0, %v2378
      %2380 = vmatprep.mubr.bf16.mxu0 0
      %2381 = vmatmul.mubr.bf16.gmra.mxu0 %v912
      %v2382 = vpop.f32.mrf.mxu0
      %v2383 = vadd.f32 0.0, %v2382
      %v2384 = vpop.f32.mrf.mxu0
      %v2385 = vadd.f32 0.0, %v2384
      %v2386 = vpop.f32.mrf.mxu0
      %v2387 = vadd.f32 0.0, %v2386
      %v2388 = vpop.f32.mrf.mxu0
      %v2389 = vadd.f32 0.0, %v2388
      %2390 = vmatprep.mubr.bf16.mxu0 0
      %2391 = vmatmul.mubr.bf16.gmra.mxu0 %v915
      %v2392 = vpop.f32.mrf.mxu0
      %v2393 = vadd.f32 0.0, %v2392
      %v2394 = vpop.f32.mrf.mxu0
      %v2395 = vadd.f32 0.0, %v2394
      %v2396 = vpop.f32.mrf.mxu0
      %v2397 = vadd.f32 0.0, %v2396
      %v2398 = vpop.f32.mrf.mxu0
      %v2399 = vadd.f32 0.0, %v2398
      %2400 = vmatprep.mubr.bf16.mxu0 0
      %2401 = vmatmul.mubr.bf16.gmra.mxu0 %v918
      %v2402 = vpop.f32.mrf.mxu0
      %v2403 = vadd.f32 0.0, %v2402
      %v2404 = vpop.f32.mrf.mxu0
      %v2405 = vadd.f32 0.0, %v2404
      %v2406 = vpop.f32.mrf.mxu0
      %v2407 = vadd.f32 0.0, %v2406
      %v2408 = vpop.f32.mrf.mxu0
      %v2409 = vadd.f32 0.0, %v2408
      %2410 = vmatprep.mubr.bf16.mxu0 0
      %2411 = vmatmul.mubr.bf16.gmra.mxu0 %v921
      %v2412 = vpop.f32.mrf.mxu0
      %v2413 = vadd.f32 0.0, %v2412
      %v2414 = vpop.f32.mrf.mxu0
      %v2415 = vadd.f32 0.0, %v2414
      %v2416 = vpop.f32.mrf.mxu0
      %v2417 = vadd.f32 0.0, %v2416
      %v2418 = vpop.f32.mrf.mxu0
      %v2419 = vadd.f32 0.0, %v2418
      %2420 = vmatprep.mubr.bf16.mxu0 0
      %2421 = vmatmul.mubr.bf16.gmra.mxu0 %v924
      %v2422 = vpop.f32.mrf.mxu0
      %v2423 = vadd.f32 0.0, %v2422
      %v2424 = vpop.f32.mrf.mxu0
      %v2425 = vadd.f32 0.0, %v2424
      %v2426 = vpop.f32.mrf.mxu0
      %v2427 = vadd.f32 0.0, %v2426
      %v2428 = vpop.f32.mrf.mxu0
      %v2429 = vadd.f32 0.0, %v2428
      %2430 = vmatprep.mubr.bf16.mxu0 0
      %2431 = vmatmul.mubr.bf16.gmra.mxu0 %v927
      %v2432 = vpop.f32.mrf.mxu0
      %v2433 = vadd.f32 0.0, %v2432
      %v2434 = vpop.f32.mrf.mxu0
      %v2435 = vadd.f32 0.0, %v2434
      %v2436 = vpop.f32.mrf.mxu0
      %v2437 = vadd.f32 0.0, %v2436
      %v2438 = vpop.f32.mrf.mxu0
      %v2439 = vadd.f32 0.0, %v2438
      %2440 = vmatprep.mubr.bf16.mxu0 0
      %2441 = vmatmul.mubr.bf16.gmra.mxu0 %v930
      %v2442 = vpop.f32.mrf.mxu0
      %v2443 = vadd.f32 0.0, %v2442
      %v2444 = vpop.f32.mrf.mxu0
      %v2445 = vadd.f32 0.0, %v2444
      %v2446 = vpop.f32.mrf.mxu0
      %v2447 = vadd.f32 0.0, %v2446
      %v2448 = vpop.f32.mrf.mxu0
      %v2449 = vadd.f32 0.0, %v2448
      %2450 = vmatprep.mubr.bf16.mxu0 0
      %2451 = vmatmul.mubr.bf16.gmra.mxu0 %v933
      %v2452 = vpop.f32.mrf.mxu0
      %v2453 = vadd.f32 0.0, %v2452
      %v2454 = vpop.f32.mrf.mxu0
      %v2455 = vadd.f32 0.0, %v2454
      %v2456 = vpop.f32.mrf.mxu0
      %v2457 = vadd.f32 0.0, %v2456
      %v2458 = vpop.f32.mrf.mxu0
      %v2459 = vadd.f32 0.0, %v2458
      %2460 = vmatprep.mubr.bf16.mxu0 0
      %2461 = vmatmul.mubr.bf16.gmra.mxu0 %v936
      %v2462 = vpop.f32.mrf.mxu0
      %v2463 = vadd.f32 0.0, %v2462
      %v2464 = vpop.f32.mrf.mxu0
      %v2465 = vadd.f32 0.0, %v2464
      %v2466 = vpop.f32.mrf.mxu0
      %v2467 = vadd.f32 0.0, %v2466
      %v2468 = vpop.f32.mrf.mxu0
      %v2469 = vadd.f32 0.0, %v2468
      %2470 = vmatprep.mubr.bf16.mxu0 0
      %2471 = vmatmul.mubr.bf16.gmra.mxu0 %v939
      %v2472 = vpop.f32.mrf.mxu0
      %v2473 = vadd.f32 0.0, %v2472
      %v2474 = vpop.f32.mrf.mxu0
      %v2475 = vadd.f32 0.0, %v2474
      %v2476 = vpop.f32.mrf.mxu0
      %v2477 = vadd.f32 0.0, %v2476
      %v2478 = vpop.f32.mrf.mxu0
      %v2479 = vadd.f32 0.0, %v2478
      %2480 = vmatprep.mubr.bf16.mxu0 0
      %2481 = vmatmul.mubr.bf16.gmra.mxu0 %v942
      %v2482 = vpop.f32.mrf.mxu0
      %v2483 = vadd.f32 0.0, %v2482
      %v2484 = vpop.f32.mrf.mxu0
      %v2485 = vadd.f32 0.0, %v2484
      %v2486 = vpop.f32.mrf.mxu0
      %v2487 = vadd.f32 0.0, %v2486
      %v2488 = vpop.f32.mrf.mxu0
      %v2489 = vadd.f32 0.0, %v2488
      %2490 = vmatprep.mubr.bf16.mxu0 0
      %2491 = vmatmul.mubr.bf16.gmra.mxu0 %v945
      %v2492 = vpop.f32.mrf.mxu0
      %v2493 = vadd.f32 0.0, %v2492
      %v2494 = vpop.f32.mrf.mxu0
      %v2495 = vadd.f32 0.0, %v2494
      %v2496 = vpop.f32.mrf.mxu0
      %v2497 = vadd.f32 0.0, %v2496
      %v2498 = vpop.f32.mrf.mxu0
      %v2499 = vadd.f32 0.0, %v2498
      %2500 = vmatprep.mubr.bf16.mxu0 0
      %2501 = vmatmul.mubr.bf16.gmra.mxu0 %v948
      %v2502 = vpop.f32.mrf.mxu0
      %v2503 = vadd.f32 0.0, %v2502
      %v2504 = vpop.f32.mrf.mxu0
      %v2505 = vadd.f32 0.0, %v2504
      %v2506 = vpop.f32.mrf.mxu0
      %v2507 = vadd.f32 0.0, %v2506
      %v2508 = vpop.f32.mrf.mxu0
      %v2509 = vadd.f32 0.0, %v2508
      %2510 = vmatprep.mubr.bf16.mxu0 0
      %2511 = vmatmul.mubr.bf16.gmra.mxu0 %v2320
      %v2512 = vpop.f32.mrf.mxu0
      %v2513 = vadd.f32 0.0, %v2512
      %v2514 = vpop.f32.mrf.mxu0
      %v2515 = vadd.f32 0.0, %v2514
      %v2516 = vpop.f32.mrf.mxu0
      %v2517 = vadd.f32 0.0, %v2516
      %v2518 = vpop.f32.mrf.mxu0
      %v2519 = vadd.f32 0.0, %v2518
      %2520 = vdwg.mxu0
      %v2521 = vadd.f32 %v2216, %v2363
      %v2522 = vadd.f32 %v2217, %v2365
      %v2523 = vadd.f32 %v2218, %v2367
      %v2524 = vadd.f32 %v2219, %v2369
      %v2525 = vadd.f32 %v2220, %v2373
      %v2526 = vadd.f32 %v2221, %v2375
      %v2527 = vadd.f32 %v2222, %v2377
      %v2528 = vadd.f32 %v2223, %v2379
      %v2529 = vadd.f32 %v2224, %v2383
      %v2530 = vadd.f32 %v2225, %v2385
      %v2531 = vadd.f32 %v2226, %v2387
      %v2532 = vadd.f32 %v2227, %v2389
      %v2533 = vadd.f32 %v2228, %v2393
      %v2534 = vadd.f32 %v2229, %v2395
      %v2535 = vadd.f32 %v2230, %v2397
      %v2536 = vadd.f32 %v2231, %v2399
      %v2537 = vadd.f32 %v2232, %v2403
      %v2538 = vadd.f32 %v2233, %v2405
      %v2539 = vadd.f32 %v2234, %v2407
      %v2540 = vadd.f32 %v2235, %v2409
      %v2541 = vadd.f32 %v2236, %v2413
      %v2542 = vadd.f32 %v2237, %v2415
      %v2543 = vadd.f32 %v2238, %v2417
      %v2544 = vadd.f32 %v2239, %v2419
      %v2545 = vadd.f32 %v2240, %v2423
      %v2546 = vadd.f32 %v2241, %v2425
      %v2547 = vadd.f32 %v2242, %v2427
      %v2548 = vadd.f32 %v2243, %v2429
      %v2549 = vadd.f32 %v2244, %v2433
      %v2550 = vadd.f32 %v2245, %v2435
      %v2551 = vadd.f32 %v2246, %v2437
      %v2552 = vadd.f32 %v2247, %v2439
      %v2553 = vadd.f32 %v2248, %v2443
      %v2554 = vadd.f32 %v2249, %v2445
      %v2555 = vadd.f32 %v2250, %v2447
      %v2556 = vadd.f32 %v2251, %v2449
      %v2557 = vadd.f32 %v2252, %v2453
      %v2558 = vadd.f32 %v2253, %v2455
      %v2559 = vadd.f32 %v2254, %v2457
      %v2560 = vadd.f32 %v2255, %v2459
      %v2561 = vadd.f32 %v2256, %v2463
      %v2562 = vadd.f32 %v2257, %v2465
      %v2563 = vadd.f32 %v2258, %v2467
      %v2564 = vadd.f32 %v2259, %v2469
      %v2565 = vadd.f32 %v2260, %v2473
      %v2566 = vadd.f32 %v2261, %v2475
      %v2567 = vadd.f32 %v2262, %v2477
      %v2568 = vadd.f32 %v2263, %v2479
      %v2569 = vadd.f32 %v2264, %v2483
      %v2570 = vadd.f32 %v2265, %v2485
      %v2571 = vadd.f32 %v2266, %v2487
      %v2572 = vadd.f32 %v2267, %v2489
      %v2573 = vadd.f32 %v2268, %v2493
      %v2574 = vadd.f32 %v2269, %v2495
      %v2575 = vadd.f32 %v2270, %v2497
      %v2576 = vadd.f32 %v2271, %v2499
      %v2577 = vadd.f32 %v2272, %v2503
      %v2578 = vadd.f32 %v2273, %v2505
      %v2579 = vadd.f32 %v2274, %v2507
      %v2580 = vadd.f32 %v2275, %v2509
      %v2581 = vadd.f32 %v2276, %v2513
      %v2582 = vadd.f32 %v2277, %v2515
      %v2583 = vadd.f32 %v2278, %v2517
      %v2584 = vadd.f32 %v2279, %v2519
      %v2586 = vrot.slane %v377, 5
      %v2587 = vrot.slane %v2586, 4
      %v2588 = vrot.slane %v378, 5
      %v2589 = vsel %vm1503, %v2587, %v2588
      %v2590 = vrot.slane %v2588, 4
      %v2591 = vrot.slane %v379, 5
      %v2592 = vsel %vm1503, %v2590, %v2591
      %v2593 = vld [vmem:[%s2 + $0x18] sm:$0x77]
      %v2594 = vunpack.c.l.b16 %v2589
      %v2595 = vunpack.c.l.b16 %v2592
      %v2596 = vpack.c.b16 %v2595, %v2594
      %v2598 = vunpack.c.l.b16 %v2593
      %v2599 = vunpack.c.h.b16 %v2593
      %v2600 = vpack.c.b16 %v2598, %v2598
      %v2601 = vpack.c.b16 %v2599, %v2599
      %v2603 = vshrl.u32 %v2600, 16
      %v2605 = vshll.u32 %v2600, 16
      %v2607 = vrot.slane %v2605, 1
      %v2608 = vor.u32 %v2603, %v2607
      %v2610 = vshrl.u32 %v2601, 16
      %v2612 = vshll.u32 %v2601, 16
      %v2614 = vrot.slane %v2612, 1
      %v2615 = vor.u32 %v2610, %v2614
      %v2617 = vsel %vm901, %v2596, 0
      %v2620 = vand.u32 %v2608, %v953
      %v2623 = vand.u32 %v2615, %v953
      %2625 = vmatprep.subr.bf16.mxu0 0
      %2626 = vmatpush1.bf16.msra.mxu0 0
      %2627 = vmatprep.subr.bf16.mxu0 0
      %2628 = vmatpush1.bf16.msra.mxu0 0
      %2629 = vmatprep.subr.bf16.mxu0 0
      %2630 = vmatpush1.bf16.msra.mxu0 0
      %2631 = vmatprep.subr.bf16.mxu0 0
      %2632 = vmatpush1.bf16.msra.mxu0 0
      %2633 = vmatprep.subr.bf16.mxu0 0
      %2634 = vmatpush1.bf16.msra.mxu0 0
      %2635 = vmatprep.subr.bf16.mxu0 0
      %2636 = vmatpush1.bf16.msra.mxu0 0
      %2637 = vmatprep.subr.bf16.mxu0 0
      %2638 = vmatpush1.bf16.msra.mxu0 0
      %2639 = vmatprep.subr.bf16.mxu0 %v2623
      %2640 = vmatpush1.bf16.msra.mxu0 %v2620
      %2641 = vmatprep.subr.bf16.mxu0 0
      %2642 = vmatpush2.bf16.msra.mxu0 0
      %2643 = vmatprep.subr.bf16.mxu0 0
      %2644 = vmatpush2.bf16.msra.mxu0 0
      %2645 = vmatprep.subr.bf16.mxu0 0
      %2646 = vmatpush2.bf16.msra.mxu0 0
      %2647 = vmatprep.subr.bf16.mxu0 0
      %2648 = vmatpush2.bf16.msra.mxu0 0
      %2649 = vmatprep.subr.bf16.mxu0 0
      %2650 = vmatpush2.bf16.msra.mxu0 0
      %2651 = vmatprep.subr.bf16.mxu0 0
      %2652 = vmatpush2.bf16.msra.mxu0 0
      %2653 = vmatprep.subr.bf16.mxu0 0
      %2654 = vmatpush2.bf16.msra.mxu0 0
      %2655 = vmatprep.subr.bf16.mxu0 0
      %2656 = vmatpush2.bf16.msra.mxu0 0
      %2657 = vmatprep.mubr.bf16.mxu0 0
      %2658 = vmatmul.mubr.bf16.gmra.mxu0 %v1676
      %v2659 = vpop.f32.mrf.mxu0
      %v2660 = vadd.f32 0.0, %v2659
      %v2661 = vpop.f32.mrf.mxu0
      %v2662 = vadd.f32 0.0, %v2661
      %v2663 = vpop.f32.mrf.mxu0
      %v2664 = vadd.f32 0.0, %v2663
      %v2665 = vpop.f32.mrf.mxu0
      %v2666 = vadd.f32 0.0, %v2665
      %2667 = vmatprep.mubr.bf16.mxu0 0
      %2668 = vmatmul.mubr.bf16.gmra.mxu0 %v1679
      %v2669 = vpop.f32.mrf.mxu0
      %v2670 = vadd.f32 0.0, %v2669
      %v2671 = vpop.f32.mrf.mxu0
      %v2672 = vadd.f32 0.0, %v2671
      %v2673 = vpop.f32.mrf.mxu0
      %v2674 = vadd.f32 0.0, %v2673
      %v2675 = vpop.f32.mrf.mxu0
      %v2676 = vadd.f32 0.0, %v2675
      %2677 = vmatprep.mubr.bf16.mxu0 0
      %2678 = vmatmul.mubr.bf16.gmra.mxu0 %v1682
      %v2679 = vpop.f32.mrf.mxu0
      %v2680 = vadd.f32 0.0, %v2679
      %v2681 = vpop.f32.mrf.mxu0
      %v2682 = vadd.f32 0.0, %v2681
      %v2683 = vpop.f32.mrf.mxu0
      %v2684 = vadd.f32 0.0, %v2683
      %v2685 = vpop.f32.mrf.mxu0
      %v2686 = vadd.f32 0.0, %v2685
      %2687 = vmatprep.mubr.bf16.mxu0 0
      %2688 = vmatmul.mubr.bf16.gmra.mxu0 %v1685
      %v2689 = vpop.f32.mrf.mxu0
      %v2690 = vadd.f32 0.0, %v2689
      %v2691 = vpop.f32.mrf.mxu0
      %v2692 = vadd.f32 0.0, %v2691
      %v2693 = vpop.f32.mrf.mxu0
      %v2694 = vadd.f32 0.0, %v2693
      %v2695 = vpop.f32.mrf.mxu0
      %v2696 = vadd.f32 0.0, %v2695
      %2697 = vmatprep.mubr.bf16.mxu0 0
      %2698 = vmatmul.mubr.bf16.gmra.mxu0 %v1688
      %v2699 = vpop.f32.mrf.mxu0
      %v2700 = vadd.f32 0.0, %v2699
      %v2701 = vpop.f32.mrf.mxu0
      %v2702 = vadd.f32 0.0, %v2701
      %v2703 = vpop.f32.mrf.mxu0
      %v2704 = vadd.f32 0.0, %v2703
      %v2705 = vpop.f32.mrf.mxu0
      %v2706 = vadd.f32 0.0, %v2705
      %2707 = vmatprep.mubr.bf16.mxu0 0
      %2708 = vmatmul.mubr.bf16.gmra.mxu0 %v1691
      %v2709 = vpop.f32.mrf.mxu0
      %v2710 = vadd.f32 0.0, %v2709
      %v2711 = vpop.f32.mrf.mxu0
      %v2712 = vadd.f32 0.0, %v2711
      %v2713 = vpop.f32.mrf.mxu0
      %v2714 = vadd.f32 0.0, %v2713
      %v2715 = vpop.f32.mrf.mxu0
      %v2716 = vadd.f32 0.0, %v2715
      %2717 = vmatprep.mubr.bf16.mxu0 0
      %2718 = vmatmul.mubr.bf16.gmra.mxu0 %v1694
      %v2719 = vpop.f32.mrf.mxu0
      %v2720 = vadd.f32 0.0, %v2719
      %v2721 = vpop.f32.mrf.mxu0
      %v2722 = vadd.f32 0.0, %v2721
      %v2723 = vpop.f32.mrf.mxu0
      %v2724 = vadd.f32 0.0, %v2723
      %v2725 = vpop.f32.mrf.mxu0
      %v2726 = vadd.f32 0.0, %v2725
      %2727 = vmatprep.mubr.bf16.mxu0 0
      %2728 = vmatmul.mubr.bf16.gmra.mxu0 %v1697
      %v2729 = vpop.f32.mrf.mxu0
      %v2730 = vadd.f32 0.0, %v2729
      %v2731 = vpop.f32.mrf.mxu0
      %v2732 = vadd.f32 0.0, %v2731
      %v2733 = vpop.f32.mrf.mxu0
      %v2734 = vadd.f32 0.0, %v2733
      %v2735 = vpop.f32.mrf.mxu0
      %v2736 = vadd.f32 0.0, %v2735
      %2737 = vmatprep.mubr.bf16.mxu0 0
      %2738 = vmatmul.mubr.bf16.gmra.mxu0 %v1700
      %v2739 = vpop.f32.mrf.mxu0
      %v2740 = vadd.f32 0.0, %v2739
      %v2741 = vpop.f32.mrf.mxu0
      %v2742 = vadd.f32 0.0, %v2741
      %v2743 = vpop.f32.mrf.mxu0
      %v2744 = vadd.f32 0.0, %v2743
      %v2745 = vpop.f32.mrf.mxu0
      %v2746 = vadd.f32 0.0, %v2745
      %2747 = vmatprep.mubr.bf16.mxu0 0
      %2748 = vmatmul.mubr.bf16.gmra.mxu0 %v1703
      %v2749 = vpop.f32.mrf.mxu0
      %v2750 = vadd.f32 0.0, %v2749
      %v2751 = vpop.f32.mrf.mxu0
      %v2752 = vadd.f32 0.0, %v2751
      %v2753 = vpop.f32.mrf.mxu0
      %v2754 = vadd.f32 0.0, %v2753
      %v2755 = vpop.f32.mrf.mxu0
      %v2756 = vadd.f32 0.0, %v2755
      %2757 = vmatprep.mubr.bf16.mxu0 0
      %2758 = vmatmul.mubr.bf16.gmra.mxu0 %v1706
      %v2759 = vpop.f32.mrf.mxu0
      %v2760 = vadd.f32 0.0, %v2759
      %v2761 = vpop.f32.mrf.mxu0
      %v2762 = vadd.f32 0.0, %v2761
      %v2763 = vpop.f32.mrf.mxu0
      %v2764 = vadd.f32 0.0, %v2763
      %v2765 = vpop.f32.mrf.mxu0
      %v2766 = vadd.f32 0.0, %v2765
      %2767 = vmatprep.mubr.bf16.mxu0 0
      %2768 = vmatmul.mubr.bf16.gmra.mxu0 %v1709
      %v2769 = vpop.f32.mrf.mxu0
      %v2770 = vadd.f32 0.0, %v2769
      %v2771 = vpop.f32.mrf.mxu0
      %v2772 = vadd.f32 0.0, %v2771
      %v2773 = vpop.f32.mrf.mxu0
      %v2774 = vadd.f32 0.0, %v2773
      %v2775 = vpop.f32.mrf.mxu0
      %v2776 = vadd.f32 0.0, %v2775
      %2777 = vmatprep.mubr.bf16.mxu0 0
      %2778 = vmatmul.mubr.bf16.gmra.mxu0 %v1712
      %v2779 = vpop.f32.mrf.mxu0
      %v2780 = vadd.f32 0.0, %v2779
      %v2781 = vpop.f32.mrf.mxu0
      %v2782 = vadd.f32 0.0, %v2781
      %v2783 = vpop.f32.mrf.mxu0
      %v2784 = vadd.f32 0.0, %v2783
      %v2785 = vpop.f32.mrf.mxu0
      %v2786 = vadd.f32 0.0, %v2785
      %2787 = vmatprep.mubr.bf16.mxu0 0
      %2788 = vmatmul.mubr.bf16.gmra.mxu0 %v1715
      %v2789 = vpop.f32.mrf.mxu0
      %v2790 = vadd.f32 0.0, %v2789
      %v2791 = vpop.f32.mrf.mxu0
      %v2792 = vadd.f32 0.0, %v2791
      %v2793 = vpop.f32.mrf.mxu0
      %v2794 = vadd.f32 0.0, %v2793
      %v2795 = vpop.f32.mrf.mxu0
      %v2796 = vadd.f32 0.0, %v2795
      %2797 = vmatprep.mubr.bf16.mxu0 0
      %2798 = vmatmul.mubr.bf16.gmra.mxu0 %v1718
      %v2799 = vpop.f32.mrf.mxu0
      %v2800 = vadd.f32 0.0, %v2799
      %v2801 = vpop.f32.mrf.mxu0
      %v2802 = vadd.f32 0.0, %v2801
      %v2803 = vpop.f32.mrf.mxu0
      %v2804 = vadd.f32 0.0, %v2803
      %v2805 = vpop.f32.mrf.mxu0
      %v2806 = vadd.f32 0.0, %v2805
      %2807 = vmatprep.mubr.bf16.mxu0 0
      %2808 = vmatmul.mubr.bf16.gmra.mxu0 %v2617
      %v2809 = vpop.f32.mrf.mxu0
      %v2810 = vadd.f32 0.0, %v2809
      %v2811 = vpop.f32.mrf.mxu0
      %v2812 = vadd.f32 0.0, %v2811
      %v2813 = vpop.f32.mrf.mxu0
      %v2814 = vadd.f32 0.0, %v2813
      %v2815 = vpop.f32.mrf.mxu0
      %v2816 = vadd.f32 0.0, %v2815
      %2817 = vdwg.mxu0
      %v2818 = vadd.f32 %v2521, %v2660
      %v2819 = vadd.f32 %v2522, %v2662
      %v2820 = vadd.f32 %v2523, %v2664
      %v2821 = vadd.f32 %v2524, %v2666
      %v2822 = vadd.f32 %v2525, %v2670
      %v2823 = vadd.f32 %v2526, %v2672
      %v2824 = vadd.f32 %v2527, %v2674
      %v2825 = vadd.f32 %v2528, %v2676
      %v2826 = vadd.f32 %v2529, %v2680
      %v2827 = vadd.f32 %v2530, %v2682
      %v2828 = vadd.f32 %v2531, %v2684
      %v2829 = vadd.f32 %v2532, %v2686
      %v2830 = vadd.f32 %v2533, %v2690
      %v2831 = vadd.f32 %v2534, %v2692
      %v2832 = vadd.f32 %v2535, %v2694
      %v2833 = vadd.f32 %v2536, %v2696
      %v2834 = vadd.f32 %v2537, %v2700
      %v2835 = vadd.f32 %v2538, %v2702
      %v2836 = vadd.f32 %v2539, %v2704
      %v2837 = vadd.f32 %v2540, %v2706
      %v2838 = vadd.f32 %v2541, %v2710
      %v2839 = vadd.f32 %v2542, %v2712
      %v2840 = vadd.f32 %v2543, %v2714
      %v2841 = vadd.f32 %v2544, %v2716
      %v2842 = vadd.f32 %v2545, %v2720
      %v2843 = vadd.f32 %v2546, %v2722
      %v2844 = vadd.f32 %v2547, %v2724
      %v2845 = vadd.f32 %v2548, %v2726
      %v2846 = vadd.f32 %v2549, %v2730
      %v2847 = vadd.f32 %v2550, %v2732
      %v2848 = vadd.f32 %v2551, %v2734
      %v2849 = vadd.f32 %v2552, %v2736
      %v2850 = vadd.f32 %v2553, %v2740
      %v2851 = vadd.f32 %v2554, %v2742
      %v2852 = vadd.f32 %v2555, %v2744
      %v2853 = vadd.f32 %v2556, %v2746
      %v2854 = vadd.f32 %v2557, %v2750
      %v2855 = vadd.f32 %v2558, %v2752
      %v2856 = vadd.f32 %v2559, %v2754
      %v2857 = vadd.f32 %v2560, %v2756
      %v2858 = vadd.f32 %v2561, %v2760
      %v2859 = vadd.f32 %v2562, %v2762
      %v2860 = vadd.f32 %v2563, %v2764
      %v2861 = vadd.f32 %v2564, %v2766
      %v2862 = vadd.f32 %v2565, %v2770
      %v2863 = vadd.f32 %v2566, %v2772
      %v2864 = vadd.f32 %v2567, %v2774
      %v2865 = vadd.f32 %v2568, %v2776
      %v2866 = vadd.f32 %v2569, %v2780
      %v2867 = vadd.f32 %v2570, %v2782
      %v2868 = vadd.f32 %v2571, %v2784
      %v2869 = vadd.f32 %v2572, %v2786
      %v2870 = vadd.f32 %v2573, %v2790
      %v2871 = vadd.f32 %v2574, %v2792
      %v2872 = vadd.f32 %v2575, %v2794
      %v2873 = vadd.f32 %v2576, %v2796
      %v2874 = vadd.f32 %v2577, %v2800
      %v2875 = vadd.f32 %v2578, %v2802
      %v2876 = vadd.f32 %v2579, %v2804
      %v2877 = vadd.f32 %v2580, %v2806
      %v2878 = vadd.f32 %v2581, %v2810
      %v2879 = vadd.f32 %v2582, %v2812
      %v2880 = vadd.f32 %v2583, %v2814
      %v2881 = vadd.f32 %v2584, %v2816
      %v2882 = vld [vmem:[%s2 + $0x18] sm:$0x88]
      %v2883 = vld [vmem:[%s2 + $0x20] sm:$0x33]
      %v2886 = vunpack.c.l.b16 %v380
      %v2887 = vunpack.c.l.b16 %v381
      %v2888 = vpack.c.b16 %v2887, %v2886
      %v2891 = vunpack.c.l.b16 %v2882
      %v2892 = vunpack.c.h.b16 %v2882
      %v2893 = vunpack.c.l.b16 %v2883
      %v2894 = vunpack.c.h.b16 %v2883
      %v2895 = vpack.c.b16 %v2893, %v2891
      %v2896 = vpack.c.b16 %v2894, %v2892
      %v2897 = vrot.slane %v2895, 3
      %v2898 = vrot.slane %v2896, 3
      %v2900 = vsel %vm901, %v2888, 0
      %v2903 = vand.u32 %v2897, %v953
      %v2906 = vand.u32 %v2898, %v953
      %2908 = vmatprep.subr.bf16.mxu0 0
      %2909 = vmatpush1.bf16.msra.mxu0 0
      %2910 = vmatprep.subr.bf16.mxu0 0
      %2911 = vmatpush1.bf16.msra.mxu0 0
      %2912 = vmatprep.subr.bf16.mxu0 0
      %2913 = vmatpush1.bf16.msra.mxu0 0
      %2914 = vmatprep.subr.bf16.mxu0 0
      %2915 = vmatpush1.bf16.msra.mxu0 0
      %2916 = vmatprep.subr.bf16.mxu0 0
      %2917 = vmatpush1.bf16.msra.mxu0 0
      %2918 = vmatprep.subr.bf16.mxu0 0
      %2919 = vmatpush1.bf16.msra.mxu0 0
      %2920 = vmatprep.subr.bf16.mxu0 0
      %2921 = vmatpush1.bf16.msra.mxu0 0
      %2922 = vmatprep.subr.bf16.mxu0 %v2906
      %2923 = vmatpush1.bf16.msra.mxu0 %v2903
      %2924 = vmatprep.subr.bf16.mxu0 0
      %2925 = vmatpush2.bf16.msra.mxu0 0
      %2926 = vmatprep.subr.bf16.mxu0 0
      %2927 = vmatpush2.bf16.msra.mxu0 0
      %2928 = vmatprep.subr.bf16.mxu0 0
      %2929 = vmatpush2.bf16.msra.mxu0 0
      %2930 = vmatprep.subr.bf16.mxu0 0
      %2931 = vmatpush2.bf16.msra.mxu0 0
      %2932 = vmatprep.subr.bf16.mxu0 0
      %2933 = vmatpush2.bf16.msra.mxu0 0
      %2934 = vmatprep.subr.bf16.mxu0 0
      %2935 = vmatpush2.bf16.msra.mxu0 0
      %2936 = vmatprep.subr.bf16.mxu0 0
      %2937 = vmatpush2.bf16.msra.mxu0 0
      %2938 = vmatprep.subr.bf16.mxu0 0
      %2939 = vmatpush2.bf16.msra.mxu0 0
      %2940 = vmatprep.mubr.bf16.mxu0 0
      %2941 = vmatmul.mubr.bf16.gmra.mxu0 %v1245
      %v2942 = vpop.f32.mrf.mxu0
      %v2943 = vadd.f32 0.0, %v2942
      %v2944 = vpop.f32.mrf.mxu0
      %v2945 = vadd.f32 0.0, %v2944
      %v2946 = vpop.f32.mrf.mxu0
      %v2947 = vadd.f32 0.0, %v2946
      %v2948 = vpop.f32.mrf.mxu0
      %v2949 = vadd.f32 0.0, %v2948
      %2950 = vmatprep.mubr.bf16.mxu0 0
      %2951 = vmatmul.mubr.bf16.gmra.mxu0 %v1248
      %v2952 = vpop.f32.mrf.mxu0
      %v2953 = vadd.f32 0.0, %v2952
      %v2954 = vpop.f32.mrf.mxu0
      %v2955 = vadd.f32 0.0, %v2954
      %v2956 = vpop.f32.mrf.mxu0
      %v2957 = vadd.f32 0.0, %v2956
      %v2958 = vpop.f32.mrf.mxu0
      %v2959 = vadd.f32 0.0, %v2958
      %2960 = vmatprep.mubr.bf16.mxu0 0
      %2961 = vmatmul.mubr.bf16.gmra.mxu0 %v1251
      %v2962 = vpop.f32.mrf.mxu0
      %v2963 = vadd.f32 0.0, %v2962
      %v2964 = vpop.f32.mrf.mxu0
      %v2965 = vadd.f32 0.0, %v2964
      %v2966 = vpop.f32.mrf.mxu0
      %v2967 = vadd.f32 0.0, %v2966
      %v2968 = vpop.f32.mrf.mxu0
      %v2969 = vadd.f32 0.0, %v2968
      %2970 = vmatprep.mubr.bf16.mxu0 0
      %2971 = vmatmul.mubr.bf16.gmra.mxu0 %v1254
      %v2972 = vpop.f32.mrf.mxu0
      %v2973 = vadd.f32 0.0, %v2972
      %v2974 = vpop.f32.mrf.mxu0
      %v2975 = vadd.f32 0.0, %v2974
      %v2976 = vpop.f32.mrf.mxu0
      %v2977 = vadd.f32 0.0, %v2976
      %v2978 = vpop.f32.mrf.mxu0
      %v2979 = vadd.f32 0.0, %v2978
      %2980 = vmatprep.mubr.bf16.mxu0 0
      %2981 = vmatmul.mubr.bf16.gmra.mxu0 %v1257
      %v2982 = vpop.f32.mrf.mxu0
      %v2983 = vadd.f32 0.0, %v2982
      %v2984 = vpop.f32.mrf.mxu0
      %v2985 = vadd.f32 0.0, %v2984
      %v2986 = vpop.f32.mrf.mxu0
      %v2987 = vadd.f32 0.0, %v2986
      %v2988 = vpop.f32.mrf.mxu0
      %v2989 = vadd.f32 0.0, %v2988
      %2990 = vmatprep.mubr.bf16.mxu0 0
      %2991 = vmatmul.mubr.bf16.gmra.mxu0 %v1260
      %v2992 = vpop.f32.mrf.mxu0
      %v2993 = vadd.f32 0.0, %v2992
      %v2994 = vpop.f32.mrf.mxu0
      %v2995 = vadd.f32 0.0, %v2994
      %v2996 = vpop.f32.mrf.mxu0
      %v2997 = vadd.f32 0.0, %v2996
      %v2998 = vpop.f32.mrf.mxu0
      %v2999 = vadd.f32 0.0, %v2998
      %3000 = vmatprep.mubr.bf16.mxu0 0
      %3001 = vmatmul.mubr.bf16.gmra.mxu0 %v1263
      %v3002 = vpop.f32.mrf.mxu0
      %v3003 = vadd.f32 0.0, %v3002
      %v3004 = vpop.f32.mrf.mxu0
      %v3005 = vadd.f32 0.0, %v3004
      %v3006 = vpop.f32.mrf.mxu0
      %v3007 = vadd.f32 0.0, %v3006
      %v3008 = vpop.f32.mrf.mxu0
      %v3009 = vadd.f32 0.0, %v3008
      %3010 = vmatprep.mubr.bf16.mxu0 0
      %3011 = vmatmul.mubr.bf16.gmra.mxu0 %v1266
      %v3012 = vpop.f32.mrf.mxu0
      %v3013 = vadd.f32 0.0, %v3012
      %v3014 = vpop.f32.mrf.mxu0
      %v3015 = vadd.f32 0.0, %v3014
      %v3016 = vpop.f32.mrf.mxu0
      %v3017 = vadd.f32 0.0, %v3016
      %v3018 = vpop.f32.mrf.mxu0
      %v3019 = vadd.f32 0.0, %v3018
      %3020 = vmatprep.mubr.bf16.mxu0 0
      %3021 = vmatmul.mubr.bf16.gmra.mxu0 %v1269
      %v3022 = vpop.f32.mrf.mxu0
      %v3023 = vadd.f32 0.0, %v3022
      %v3024 = vpop.f32.mrf.mxu0
      %v3025 = vadd.f32 0.0, %v3024
      %v3026 = vpop.f32.mrf.mxu0
      %v3027 = vadd.f32 0.0, %v3026
      %v3028 = vpop.f32.mrf.mxu0
      %v3029 = vadd.f32 0.0, %v3028
      %3030 = vmatprep.mubr.bf16.mxu0 0
      %3031 = vmatmul.mubr.bf16.gmra.mxu0 %v1272
      %v3032 = vpop.f32.mrf.mxu0
      %v3033 = vadd.f32 0.0, %v3032
      %v3034 = vpop.f32.mrf.mxu0
      %v3035 = vadd.f32 0.0, %v3034
      %v3036 = vpop.f32.mrf.mxu0
      %v3037 = vadd.f32 0.0, %v3036
      %v3038 = vpop.f32.mrf.mxu0
      %v3039 = vadd.f32 0.0, %v3038
      %3040 = vmatprep.mubr.bf16.mxu0 0
      %3041 = vmatmul.mubr.bf16.gmra.mxu0 %v1275
      %v3042 = vpop.f32.mrf.mxu0
      %v3043 = vadd.f32 0.0, %v3042
      %v3044 = vpop.f32.mrf.mxu0
      %v3045 = vadd.f32 0.0, %v3044
      %v3046 = vpop.f32.mrf.mxu0
      %v3047 = vadd.f32 0.0, %v3046
      %v3048 = vpop.f32.mrf.mxu0
      %v3049 = vadd.f32 0.0, %v3048
      %3050 = vmatprep.mubr.bf16.mxu0 0
      %3051 = vmatmul.mubr.bf16.gmra.mxu0 %v1278
      %v3052 = vpop.f32.mrf.mxu0
      %v3053 = vadd.f32 0.0, %v3052
      %v3054 = vpop.f32.mrf.mxu0
      %v3055 = vadd.f32 0.0, %v3054
      %v3056 = vpop.f32.mrf.mxu0
      %v3057 = vadd.f32 0.0, %v3056
      %v3058 = vpop.f32.mrf.mxu0
      %v3059 = vadd.f32 0.0, %v3058
      %3060 = vmatprep.mubr.bf16.mxu0 0
      %3061 = vmatmul.mubr.bf16.gmra.mxu0 %v1281
      %v3062 = vpop.f32.mrf.mxu0
      %v3063 = vadd.f32 0.0, %v3062
      %v3064 = vpop.f32.mrf.mxu0
      %v3065 = vadd.f32 0.0, %v3064
      %v3066 = vpop.f32.mrf.mxu0
      %v3067 = vadd.f32 0.0, %v3066
      %v3068 = vpop.f32.mrf.mxu0
      %v3069 = vadd.f32 0.0, %v3068
      %3070 = vmatprep.mubr.bf16.mxu0 0
      %3071 = vmatmul.mubr.bf16.gmra.mxu0 %v1284
      %v3072 = vpop.f32.mrf.mxu0
      %v3073 = vadd.f32 0.0, %v3072
      %v3074 = vpop.f32.mrf.mxu0
      %v3075 = vadd.f32 0.0, %v3074
      %v3076 = vpop.f32.mrf.mxu0
      %v3077 = vadd.f32 0.0, %v3076
      %v3078 = vpop.f32.mrf.mxu0
      %v3079 = vadd.f32 0.0, %v3078
      %3080 = vmatprep.mubr.bf16.mxu0 0
      %3081 = vmatmul.mubr.bf16.gmra.mxu0 %v2015
      %v3082 = vpop.f32.mrf.mxu0
      %v3083 = vadd.f32 0.0, %v3082
      %v3084 = vpop.f32.mrf.mxu0
      %v3085 = vadd.f32 0.0, %v3084
      %v3086 = vpop.f32.mrf.mxu0
      %v3087 = vadd.f32 0.0, %v3086
      %v3088 = vpop.f32.mrf.mxu0
      %v3089 = vadd.f32 0.0, %v3088
      %3090 = vmatprep.mubr.bf16.mxu0 0
      %3091 = vmatmul.mubr.bf16.gmra.mxu0 %v2900
      %v3092 = vpop.f32.mrf.mxu0
      %v3093 = vadd.f32 0.0, %v3092
      %v3094 = vpop.f32.mrf.mxu0
      %v3095 = vadd.f32 0.0, %v3094
      %v3096 = vpop.f32.mrf.mxu0
      %v3097 = vadd.f32 0.0, %v3096
      %v3098 = vpop.f32.mrf.mxu0
      %v3099 = vadd.f32 0.0, %v3098
      %3100 = vdwg.mxu0
      %v3101 = vadd.f32 %v2818, %v2943
      %v3102 = vadd.f32 %v2819, %v2945
      %v3103 = vadd.f32 %v2820, %v2947
      %v3104 = vadd.f32 %v2821, %v2949
      %v3105 = vadd.f32 %v2822, %v2953
      %v3106 = vadd.f32 %v2823, %v2955
      %v3107 = vadd.f32 %v2824, %v2957
      %v3108 = vadd.f32 %v2825, %v2959
      %v3109 = vadd.f32 %v2826, %v2963
      %v3110 = vadd.f32 %v2827, %v2965
      %v3111 = vadd.f32 %v2828, %v2967
      %v3112 = vadd.f32 %v2829, %v2969
      %v3113 = vadd.f32 %v2830, %v2973
      %v3114 = vadd.f32 %v2831, %v2975
      %v3115 = vadd.f32 %v2832, %v2977
      %v3116 = vadd.f32 %v2833, %v2979
      %v3117 = vadd.f32 %v2834, %v2983
      %v3118 = vadd.f32 %v2835, %v2985
      %v3119 = vadd.f32 %v2836, %v2987
      %v3120 = vadd.f32 %v2837, %v2989
      %v3121 = vadd.f32 %v2838, %v2993
      %v3122 = vadd.f32 %v2839, %v2995
      %v3123 = vadd.f32 %v2840, %v2997
      %v3124 = vadd.f32 %v2841, %v2999
      %v3125 = vadd.f32 %v2842, %v3003
      %v3126 = vadd.f32 %v2843, %v3005
      %v3127 = vadd.f32 %v2844, %v3007
      %v3128 = vadd.f32 %v2845, %v3009
      %v3129 = vadd.f32 %v2846, %v3013
      %v3130 = vadd.f32 %v2847, %v3015
      %v3131 = vadd.f32 %v2848, %v3017
      %v3132 = vadd.f32 %v2849, %v3019
      %v3133 = vadd.f32 %v2850, %v3023
      %v3134 = vadd.f32 %v2851, %v3025
      %v3135 = vadd.f32 %v2852, %v3027
      %v3136 = vadd.f32 %v2853, %v3029
      %v3137 = vadd.f32 %v2854, %v3033
      %v3138 = vadd.f32 %v2855, %v3035
      %v3139 = vadd.f32 %v2856, %v3037
      %v3140 = vadd.f32 %v2857, %v3039
      %v3141 = vadd.f32 %v2858, %v3043
      %v3142 = vadd.f32 %v2859, %v3045
      %v3143 = vadd.f32 %v2860, %v3047
      %v3144 = vadd.f32 %v2861, %v3049
      %v3145 = vadd.f32 %v2862, %v3053
      %v3146 = vadd.f32 %v2863, %v3055
      %v3147 = vadd.f32 %v2864, %v3057
      %v3148 = vadd.f32 %v2865, %v3059
      %v3149 = vadd.f32 %v2866, %v3063
      %v3150 = vadd.f32 %v2867, %v3065
      %v3151 = vadd.f32 %v2868, %v3067
      %v3152 = vadd.f32 %v2869, %v3069
      %v3153 = vadd.f32 %v2870, %v3073
      %v3154 = vadd.f32 %v2871, %v3075
      %v3155 = vadd.f32 %v2872, %v3077
      %v3156 = vadd.f32 %v2873, %v3079
      %v3157 = vadd.f32 %v2874, %v3083
      %v3158 = vadd.f32 %v2875, %v3085
      %v3159 = vadd.f32 %v2876, %v3087
      %v3160 = vadd.f32 %v2877, %v3089
      %v3161 = vadd.f32 %v2878, %v3093
      %v3162 = vadd.f32 %v2879, %v3095
      %v3163 = vadd.f32 %v2880, %v3097
      %v3164 = vadd.f32 %v2881, %v3099
      %v3166 = vshrl.u32 %v380, 16
      %v3168 = vrot.slane %v3166, 4
      %v3169 = vshll.u32 %v380, 16
      %v3171 = vrot.slane %v3169, 5
      %v3172 = vor.u32 %v3168, %v3171
      %v3173 = vrot.slane %v3172, 4
      %v3175 = vshll.u32 %v381, 16
      %v3177 = vrot.slane %v3175, 5
      %v3178 = vsel %vm442, %v3173, %v3177
      %v3179 = vshrl.u32 %v381, 16
      %v3181 = vrot.slane %v3179, 4
      %v3182 = vor.u32 %v3181, %v3177
      %v3183 = vrot.slane %v3182, 4
      %v3185 = vshll.u32 %v382, 16
      %v3187 = vrot.slane %v3185, 5
      %v3188 = vsel %vm442, %v3183, %v3187
      %v3189 = vld [vmem:[%s2 + $0x20] sm:$0xee]
      %v3190 = vunpack.c.l.b16 %v3178
      %v3191 = vunpack.c.l.b16 %v3188
      %v3192 = vpack.c.b16 %v3191, %v3190
      %v3194 = vunpack.c.l.b16 %v3189
      %v3195 = vunpack.c.h.b16 %v3189
      %v3196 = vpack.c.b16 %v3194, %v3194
      %v3197 = vpack.c.b16 %v3195, %v3195
      %v3199 = vshrl.u32 %v3196, 16
      %v3201 = vrot.slane %v3199, 1
      %v3202 = vshll.u32 %v3196, 16
      %v3204 = vrot.slane %v3202, 2
      %v3205 = vor.u32 %v3201, %v3204
      %v3207 = vshrl.u32 %v3197, 16
      %v3209 = vrot.slane %v3207, 1
      %v3210 = vshll.u32 %v3197, 16
      %v3212 = vrot.slane %v3210, 2
      %v3213 = vor.u32 %v3209, %v3212
      %v3215 = vsel %vm901, %v3192, 0
      %v3218 = vand.u32 %v3205, %v953
      %v3221 = vand.u32 %v3213, %v953
      %3223 = vmatprep.subr.bf16.mxu0 0
      %3224 = vmatpush1.bf16.msra.mxu0 0
      %3225 = vmatprep.subr.bf16.mxu0 0
      %3226 = vmatpush1.bf16.msra.mxu0 0
      %3227 = vmatprep.subr.bf16.mxu0 0
      %3228 = vmatpush1.bf16.msra.mxu0 0
      %3229 = vmatprep.subr.bf16.mxu0 0
      %3230 = vmatpush1.bf16.msra.mxu0 0
      %3231 = vmatprep.subr.bf16.mxu0 0
      %3232 = vmatpush1.bf16.msra.mxu0 0
      %3233 = vmatprep.subr.bf16.mxu0 0
      %3234 = vmatpush1.bf16.msra.mxu0 0
      %3235 = vmatprep.subr.bf16.mxu0 0
      %3236 = vmatpush1.bf16.msra.mxu0 0
      %3237 = vmatprep.subr.bf16.mxu0 %v3221
      %3238 = vmatpush1.bf16.msra.mxu0 %v3218
      %3239 = vmatprep.subr.bf16.mxu0 0
      %3240 = vmatpush2.bf16.msra.mxu0 0
      %3241 = vmatprep.subr.bf16.mxu0 0
      %3242 = vmatpush2.bf16.msra.mxu0 0
      %3243 = vmatprep.subr.bf16.mxu0 0
      %3244 = vmatpush2.bf16.msra.mxu0 0
      %3245 = vmatprep.subr.bf16.mxu0 0
      %3246 = vmatpush2.bf16.msra.mxu0 0
      %3247 = vmatprep.subr.bf16.mxu0 0
      %3248 = vmatpush2.bf16.msra.mxu0 0
      %3249 = vmatprep.subr.bf16.mxu0 0
      %3250 = vmatpush2.bf16.msra.mxu0 0
      %3251 = vmatprep.subr.bf16.mxu0 0
      %3252 = vmatpush2.bf16.msra.mxu0 0
      %3253 = vmatprep.subr.bf16.mxu0 0
      %3254 = vmatpush2.bf16.msra.mxu0 0
      %3255 = vmatprep.mubr.bf16.mxu0 0
      %3256 = vmatmul.mubr.bf16.gmra.mxu0 %v909
      %v3257 = vpop.f32.mrf.mxu0
      %v3258 = vadd.f32 0.0, %v3257
      %v3259 = vpop.f32.mrf.mxu0
      %v3260 = vadd.f32 0.0, %v3259
      %v3261 = vpop.f32.mrf.mxu0
      %v3262 = vadd.f32 0.0, %v3261
      %v3263 = vpop.f32.mrf.mxu0
      %v3264 = vadd.f32 0.0, %v3263
      %3265 = vmatprep.mubr.bf16.mxu0 0
      %3266 = vmatmul.mubr.bf16.gmra.mxu0 %v912
      %v3267 = vpop.f32.mrf.mxu0
      %v3268 = vadd.f32 0.0, %v3267
      %v3269 = vpop.f32.mrf.mxu0
      %v3270 = vadd.f32 0.0, %v3269
      %v3271 = vpop.f32.mrf.mxu0
      %v3272 = vadd.f32 0.0, %v3271
      %v3273 = vpop.f32.mrf.mxu0
      %v3274 = vadd.f32 0.0, %v3273
      %3275 = vmatprep.mubr.bf16.mxu0 0
      %3276 = vmatmul.mubr.bf16.gmra.mxu0 %v915
      %v3277 = vpop.f32.mrf.mxu0
      %v3278 = vadd.f32 0.0, %v3277
      %v3279 = vpop.f32.mrf.mxu0
      %v3280 = vadd.f32 0.0, %v3279
      %v3281 = vpop.f32.mrf.mxu0
      %v3282 = vadd.f32 0.0, %v3281
      %v3283 = vpop.f32.mrf.mxu0
      %v3284 = vadd.f32 0.0, %v3283
      %3285 = vmatprep.mubr.bf16.mxu0 0
      %3286 = vmatmul.mubr.bf16.gmra.mxu0 %v918
      %v3287 = vpop.f32.mrf.mxu0
      %v3288 = vadd.f32 0.0, %v3287
      %v3289 = vpop.f32.mrf.mxu0
      %v3290 = vadd.f32 0.0, %v3289
      %v3291 = vpop.f32.mrf.mxu0
      %v3292 = vadd.f32 0.0, %v3291
      %v3293 = vpop.f32.mrf.mxu0
      %v3294 = vadd.f32 0.0, %v3293
      %3295 = vmatprep.mubr.bf16.mxu0 0
      %3296 = vmatmul.mubr.bf16.gmra.mxu0 %v921
      %v3297 = vpop.f32.mrf.mxu0
      %v3298 = vadd.f32 0.0, %v3297
      %v3299 = vpop.f32.mrf.mxu0
      %v3300 = vadd.f32 0.0, %v3299
      %v3301 = vpop.f32.mrf.mxu0
      %v3302 = vadd.f32 0.0, %v3301
      %v3303 = vpop.f32.mrf.mxu0
      %v3304 = vadd.f32 0.0, %v3303
      %3305 = vmatprep.mubr.bf16.mxu0 0
      %3306 = vmatmul.mubr.bf16.gmra.mxu0 %v924
      %v3307 = vpop.f32.mrf.mxu0
      %v3308 = vadd.f32 0.0, %v3307
      %v3309 = vpop.f32.mrf.mxu0
      %v3310 = vadd.f32 0.0, %v3309
      %v3311 = vpop.f32.mrf.mxu0
      %v3312 = vadd.f32 0.0, %v3311
      %v3313 = vpop.f32.mrf.mxu0
      %v3314 = vadd.f32 0.0, %v3313
      %3315 = vmatprep.mubr.bf16.mxu0 0
      %3316 = vmatmul.mubr.bf16.gmra.mxu0 %v927
      %v3317 = vpop.f32.mrf.mxu0
      %v3318 = vadd.f32 0.0, %v3317
      %v3319 = vpop.f32.mrf.mxu0
      %v3320 = vadd.f32 0.0, %v3319
      %v3321 = vpop.f32.mrf.mxu0
      %v3322 = vadd.f32 0.0, %v3321
      %v3323 = vpop.f32.mrf.mxu0
      %v3324 = vadd.f32 0.0, %v3323
      %3325 = vmatprep.mubr.bf16.mxu0 0
      %3326 = vmatmul.mubr.bf16.gmra.mxu0 %v930
      %v3327 = vpop.f32.mrf.mxu0
      %v3328 = vadd.f32 0.0, %v3327
      %v3329 = vpop.f32.mrf.mxu0
      %v3330 = vadd.f32 0.0, %v3329
      %v3331 = vpop.f32.mrf.mxu0
      %v3332 = vadd.f32 0.0, %v3331
      %v3333 = vpop.f32.mrf.mxu0
      %v3334 = vadd.f32 0.0, %v3333
      %3335 = vmatprep.mubr.bf16.mxu0 0
      %3336 = vmatmul.mubr.bf16.gmra.mxu0 %v933
      %v3337 = vpop.f32.mrf.mxu0
      %v3338 = vadd.f32 0.0, %v3337
      %v3339 = vpop.f32.mrf.mxu0
      %v3340 = vadd.f32 0.0, %v3339
      %v3341 = vpop.f32.mrf.mxu0
      %v3342 = vadd.f32 0.0, %v3341
      %v3343 = vpop.f32.mrf.mxu0
      %v3344 = vadd.f32 0.0, %v3343
      %3345 = vmatprep.mubr.bf16.mxu0 0
      %3346 = vmatmul.mubr.bf16.gmra.mxu0 %v936
      %v3347 = vpop.f32.mrf.mxu0
      %v3348 = vadd.f32 0.0, %v3347
      %v3349 = vpop.f32.mrf.mxu0
      %v3350 = vadd.f32 0.0, %v3349
      %v3351 = vpop.f32.mrf.mxu0
      %v3352 = vadd.f32 0.0, %v3351
      %v3353 = vpop.f32.mrf.mxu0
      %v3354 = vadd.f32 0.0, %v3353
      %3355 = vmatprep.mubr.bf16.mxu0 0
      %3356 = vmatmul.mubr.bf16.gmra.mxu0 %v939
      %v3357 = vpop.f32.mrf.mxu0
      %v3358 = vadd.f32 0.0, %v3357
      %v3359 = vpop.f32.mrf.mxu0
      %v3360 = vadd.f32 0.0, %v3359
      %v3361 = vpop.f32.mrf.mxu0
      %v3362 = vadd.f32 0.0, %v3361
      %v3363 = vpop.f32.mrf.mxu0
      %v3364 = vadd.f32 0.0, %v3363
      %3365 = vmatprep.mubr.bf16.mxu0 0
      %3366 = vmatmul.mubr.bf16.gmra.mxu0 %v942
      %v3367 = vpop.f32.mrf.mxu0
      %v3368 = vadd.f32 0.0, %v3367
      %v3369 = vpop.f32.mrf.mxu0
      %v3370 = vadd.f32 0.0, %v3369
      %v3371 = vpop.f32.mrf.mxu0
      %v3372 = vadd.f32 0.0, %v3371
      %v3373 = vpop.f32.mrf.mxu0
      %v3374 = vadd.f32 0.0, %v3373
      %3375 = vmatprep.mubr.bf16.mxu0 0
      %3376 = vmatmul.mubr.bf16.gmra.mxu0 %v945
      %v3377 = vpop.f32.mrf.mxu0
      %v3378 = vadd.f32 0.0, %v3377
      %v3379 = vpop.f32.mrf.mxu0
      %v3380 = vadd.f32 0.0, %v3379
      %v3381 = vpop.f32.mrf.mxu0
      %v3382 = vadd.f32 0.0, %v3381
      %v3383 = vpop.f32.mrf.mxu0
      %v3384 = vadd.f32 0.0, %v3383
      %3385 = vmatprep.mubr.bf16.mxu0 0
      %3386 = vmatmul.mubr.bf16.gmra.mxu0 %v948
      %v3387 = vpop.f32.mrf.mxu0
      %v3388 = vadd.f32 0.0, %v3387
      %v3389 = vpop.f32.mrf.mxu0
      %v3390 = vadd.f32 0.0, %v3389
      %v3391 = vpop.f32.mrf.mxu0
      %v3392 = vadd.f32 0.0, %v3391
      %v3393 = vpop.f32.mrf.mxu0
      %v3394 = vadd.f32 0.0, %v3393
      %3395 = vmatprep.mubr.bf16.mxu0 0
      %3396 = vmatmul.mubr.bf16.gmra.mxu0 %v2320
      %v3397 = vpop.f32.mrf.mxu0
      %v3398 = vadd.f32 0.0, %v3397
      %v3399 = vpop.f32.mrf.mxu0
      %v3400 = vadd.f32 0.0, %v3399
      %v3401 = vpop.f32.mrf.mxu0
      %v3402 = vadd.f32 0.0, %v3401
      %v3403 = vpop.f32.mrf.mxu0
      %v3404 = vadd.f32 0.0, %v3403
      %3405 = vmatprep.mubr.bf16.mxu0 0
      %3406 = vmatmul.mubr.bf16.gmra.mxu0 %v3215
      %v3407 = vpop.f32.mrf.mxu0
      %v3408 = vadd.f32 0.0, %v3407
      %v3409 = vpop.f32.mrf.mxu0
      %v3410 = vadd.f32 0.0, %v3409
      %v3411 = vpop.f32.mrf.mxu0
      %v3412 = vadd.f32 0.0, %v3411
      %v3413 = vpop.f32.mrf.mxu0
      %v3414 = vadd.f32 0.0, %v3413
      %3415 = vdwg.mxu0
      %v3416 = vadd.f32 %v3101, %v3258
      %v3417 = vadd.f32 %v3102, %v3260
      %v3418 = vadd.f32 %v3103, %v3262
      %v3419 = vadd.f32 %v3104, %v3264
      %v3420 = vadd.f32 %v3105, %v3268
      %v3421 = vadd.f32 %v3106, %v3270
      %v3422 = vadd.f32 %v3107, %v3272
      %v3423 = vadd.f32 %v3108, %v3274
      %v3424 = vadd.f32 %v3109, %v3278
      %v3425 = vadd.f32 %v3110, %v3280
      %v3426 = vadd.f32 %v3111, %v3282
      %v3427 = vadd.f32 %v3112, %v3284
      %v3428 = vadd.f32 %v3113, %v3288
      %v3429 = vadd.f32 %v3114, %v3290
      %v3430 = vadd.f32 %v3115, %v3292
      %v3431 = vadd.f32 %v3116, %v3294
      %v3432 = vadd.f32 %v3117, %v3298
      %v3433 = vadd.f32 %v3118, %v3300
      %v3434 = vadd.f32 %v3119, %v3302
      %v3435 = vadd.f32 %v3120, %v3304
      %v3436 = vadd.f32 %v3121, %v3308
      %v3437 = vadd.f32 %v3122, %v3310
      %v3438 = vadd.f32 %v3123, %v3312
      %v3439 = vadd.f32 %v3124, %v3314
      %v3440 = vadd.f32 %v3125, %v3318
      %v3441 = vadd.f32 %v3126, %v3320
      %v3442 = vadd.f32 %v3127, %v3322
      %v3443 = vadd.f32 %v3128, %v3324
      %v3444 = vadd.f32 %v3129, %v3328
      %v3445 = vadd.f32 %v3130, %v3330
      %v3446 = vadd.f32 %v3131, %v3332
      %v3447 = vadd.f32 %v3132, %v3334
      %v3448 = vadd.f32 %v3133, %v3338
      %v3449 = vadd.f32 %v3134, %v3340
      %v3450 = vadd.f32 %v3135, %v3342
      %v3451 = vadd.f32 %v3136, %v3344
      %v3452 = vadd.f32 %v3137, %v3348
      %v3453 = vadd.f32 %v3138, %v3350
      %v3454 = vadd.f32 %v3139, %v3352
      %v3455 = vadd.f32 %v3140, %v3354
      %v3456 = vadd.f32 %v3141, %v3358
      %v3457 = vadd.f32 %v3142, %v3360
      %v3458 = vadd.f32 %v3143, %v3362
      %v3459 = vadd.f32 %v3144, %v3364
      %v3460 = vadd.f32 %v3145, %v3368
      %v3461 = vadd.f32 %v3146, %v3370
      %v3462 = vadd.f32 %v3147, %v3372
      %v3463 = vadd.f32 %v3148, %v3374
      %v3464 = vadd.f32 %v3149, %v3378
      %v3465 = vadd.f32 %v3150, %v3380
      %v3466 = vadd.f32 %v3151, %v3382
      %v3467 = vadd.f32 %v3152, %v3384
      %v3468 = vadd.f32 %v3153, %v3388
      %v3469 = vadd.f32 %v3154, %v3390
      %v3470 = vadd.f32 %v3155, %v3392
      %v3471 = vadd.f32 %v3156, %v3394
      %v3472 = vadd.f32 %v3157, %v3398
      %v3473 = vadd.f32 %v3158, %v3400
      %v3474 = vadd.f32 %v3159, %v3402
      %v3475 = vadd.f32 %v3160, %v3404
      %v3476 = vadd.f32 %v3161, %v3408
      %v3477 = vadd.f32 %v3162, %v3410
      %v3478 = vadd.f32 %v3163, %v3412
      %v3479 = vadd.f32 %v3164, %v3414
      %v3481 = vrot.slane %v380, 5
      %v3482 = vrot.slane %v3481, 4
      %v3483 = vrot.slane %v381, 5
      %v3484 = vsel %vm1503, %v3482, %v3483
      %v3485 = vrot.slane %v3483, 4
      %v3486 = vrot.slane %v382, 5
      %v3487 = vsel %vm1503, %v3485, %v3486
      %v3488 = vld [vmem:[%s2 + $0x28] sm:$0x77]
      %v3489 = vunpack.c.l.b16 %v3484
      %v3490 = vunpack.c.l.b16 %v3487
      %v3491 = vpack.c.b16 %v3490, %v3489
      %v3493 = vunpack.c.l.b16 %v3488
      %v3494 = vunpack.c.h.b16 %v3488
      %v3495 = vpack.c.b16 %v3493, %v3493
      %v3496 = vpack.c.b16 %v3494, %v3494
      %v3498 = vsel %vm901, %v3491, 0
      %v3501 = vand.u32 %v3495, %v953
      %v3504 = vand.u32 %v3496, %v953
      %3506 = vmatprep.subr.bf16.mxu0 0
      %3507 = vmatpush1.bf16.msra.mxu0 0
      %3508 = vmatprep.subr.bf16.mxu0 0
      %3509 = vmatpush1.bf16.msra.mxu0 0
      %3510 = vmatprep.subr.bf16.mxu0 0
      %3511 = vmatpush1.bf16.msra.mxu0 0
      %3512 = vmatprep.subr.bf16.mxu0 0
      %3513 = vmatpush1.bf16.msra.mxu0 0
      %3514 = vmatprep.subr.bf16.mxu0 0
      %3515 = vmatpush1.bf16.msra.mxu0 0
      %3516 = vmatprep.subr.bf16.mxu0 0
      %3517 = vmatpush1.bf16.msra.mxu0 0
      %3518 = vmatprep.subr.bf16.mxu0 0
      %3519 = vmatpush1.bf16.msra.mxu0 0
      %3520 = vmatprep.subr.bf16.mxu0 %v3504
      %3521 = vmatpush1.bf16.msra.mxu0 %v3501
      %3522 = vmatprep.subr.bf16.mxu0 0
      %3523 = vmatpush2.bf16.msra.mxu0 0
      %3524 = vmatprep.subr.bf16.mxu0 0
      %3525 = vmatpush2.bf16.msra.mxu0 0
      %3526 = vmatprep.subr.bf16.mxu0 0
      %3527 = vmatpush2.bf16.msra.mxu0 0
      %3528 = vmatprep.subr.bf16.mxu0 0
      %3529 = vmatpush2.bf16.msra.mxu0 0
      %3530 = vmatprep.subr.bf16.mxu0 0
      %3531 = vmatpush2.bf16.msra.mxu0 0
      %3532 = vmatprep.subr.bf16.mxu0 0
      %3533 = vmatpush2.bf16.msra.mxu0 0
      %3534 = vmatprep.subr.bf16.mxu0 0
      %3535 = vmatpush2.bf16.msra.mxu0 0
      %3536 = vmatprep.subr.bf16.mxu0 0
      %3537 = vmatpush2.bf16.msra.mxu0 0
      %3538 = vmatprep.mubr.bf16.mxu0 0
      %3539 = vmatmul.mubr.bf16.gmra.mxu0 %v1679
      %v3540 = vpop.f32.mrf.mxu0
      %v3541 = vadd.f32 0.0, %v3540
      %v3542 = vpop.f32.mrf.mxu0
      %v3543 = vadd.f32 0.0, %v3542
      %v3544 = vpop.f32.mrf.mxu0
      %v3545 = vadd.f32 0.0, %v3544
      %v3546 = vpop.f32.mrf.mxu0
      %v3547 = vadd.f32 0.0, %v3546
      %3548 = vmatprep.mubr.bf16.mxu0 0
      %3549 = vmatmul.mubr.bf16.gmra.mxu0 %v1682
      %v3550 = vpop.f32.mrf.mxu0
      %v3551 = vadd.f32 0.0, %v3550
      %v3552 = vpop.f32.mrf.mxu0
      %v3553 = vadd.f32 0.0, %v3552
      %v3554 = vpop.f32.mrf.mxu0
      %v3555 = vadd.f32 0.0, %v3554
      %v3556 = vpop.f32.mrf.mxu0
      %v3557 = vadd.f32 0.0, %v3556
      %3558 = vmatprep.mubr.bf16.mxu0 0
      %3559 = vmatmul.mubr.bf16.gmra.mxu0 %v1685
      %v3560 = vpop.f32.mrf.mxu0
      %v3561 = vadd.f32 0.0, %v3560
      %v3562 = vpop.f32.mrf.mxu0
      %v3563 = vadd.f32 0.0, %v3562
      %v3564 = vpop.f32.mrf.mxu0
      %v3565 = vadd.f32 0.0, %v3564
      %v3566 = vpop.f32.mrf.mxu0
      %v3567 = vadd.f32 0.0, %v3566
      %3568 = vmatprep.mubr.bf16.mxu0 0
      %3569 = vmatmul.mubr.bf16.gmra.mxu0 %v1688
      %v3570 = vpop.f32.mrf.mxu0
      %v3571 = vadd.f32 0.0, %v3570
      %v3572 = vpop.f32.mrf.mxu0
      %v3573 = vadd.f32 0.0, %v3572
      %v3574 = vpop.f32.mrf.mxu0
      %v3575 = vadd.f32 0.0, %v3574
      %v3576 = vpop.f32.mrf.mxu0
      %v3577 = vadd.f32 0.0, %v3576
      %3578 = vmatprep.mubr.bf16.mxu0 0
      %3579 = vmatmul.mubr.bf16.gmra.mxu0 %v1691
      %v3580 = vpop.f32.mrf.mxu0
      %v3581 = vadd.f32 0.0, %v3580
      %v3582 = vpop.f32.mrf.mxu0
      %v3583 = vadd.f32 0.0, %v3582
      %v3584 = vpop.f32.mrf.mxu0
      %v3585 = vadd.f32 0.0, %v3584
      %v3586 = vpop.f32.mrf.mxu0
      %v3587 = vadd.f32 0.0, %v3586
      %3588 = vmatprep.mubr.bf16.mxu0 0
      %3589 = vmatmul.mubr.bf16.gmra.mxu0 %v1694
      %v3590 = vpop.f32.mrf.mxu0
      %v3591 = vadd.f32 0.0, %v3590
      %v3592 = vpop.f32.mrf.mxu0
      %v3593 = vadd.f32 0.0, %v3592
      %v3594 = vpop.f32.mrf.mxu0
      %v3595 = vadd.f32 0.0, %v3594
      %v3596 = vpop.f32.mrf.mxu0
      %v3597 = vadd.f32 0.0, %v3596
      %3598 = vmatprep.mubr.bf16.mxu0 0
      %3599 = vmatmul.mubr.bf16.gmra.mxu0 %v1697
      %v3600 = vpop.f32.mrf.mxu0
      %v3601 = vadd.f32 0.0, %v3600
      %v3602 = vpop.f32.mrf.mxu0
      %v3603 = vadd.f32 0.0, %v3602
      %v3604 = vpop.f32.mrf.mxu0
      %v3605 = vadd.f32 0.0, %v3604
      %v3606 = vpop.f32.mrf.mxu0
      %v3607 = vadd.f32 0.0, %v3606
      %3608 = vmatprep.mubr.bf16.mxu0 0
      %3609 = vmatmul.mubr.bf16.gmra.mxu0 %v1700
      %v3610 = vpop.f32.mrf.mxu0
      %v3611 = vadd.f32 0.0, %v3610
      %v3612 = vpop.f32.mrf.mxu0
      %v3613 = vadd.f32 0.0, %v3612
      %v3614 = vpop.f32.mrf.mxu0
      %v3615 = vadd.f32 0.0, %v3614
      %v3616 = vpop.f32.mrf.mxu0
      %v3617 = vadd.f32 0.0, %v3616
      %3618 = vmatprep.mubr.bf16.mxu0 0
      %3619 = vmatmul.mubr.bf16.gmra.mxu0 %v1703
      %v3620 = vpop.f32.mrf.mxu0
      %v3621 = vadd.f32 0.0, %v3620
      %v3622 = vpop.f32.mrf.mxu0
      %v3623 = vadd.f32 0.0, %v3622
      %v3624 = vpop.f32.mrf.mxu0
      %v3625 = vadd.f32 0.0, %v3624
      %v3626 = vpop.f32.mrf.mxu0
      %v3627 = vadd.f32 0.0, %v3626
      %3628 = vmatprep.mubr.bf16.mxu0 0
      %3629 = vmatmul.mubr.bf16.gmra.mxu0 %v1706
      %v3630 = vpop.f32.mrf.mxu0
      %v3631 = vadd.f32 0.0, %v3630
      %v3632 = vpop.f32.mrf.mxu0
      %v3633 = vadd.f32 0.0, %v3632
      %v3634 = vpop.f32.mrf.mxu0
      %v3635 = vadd.f32 0.0, %v3634
      %v3636 = vpop.f32.mrf.mxu0
      %v3637 = vadd.f32 0.0, %v3636
      %3638 = vmatprep.mubr.bf16.mxu0 0
      %3639 = vmatmul.mubr.bf16.gmra.mxu0 %v1709
      %v3640 = vpop.f32.mrf.mxu0
      %v3641 = vadd.f32 0.0, %v3640
      %v3642 = vpop.f32.mrf.mxu0
      %v3643 = vadd.f32 0.0, %v3642
      %v3644 = vpop.f32.mrf.mxu0
      %v3645 = vadd.f32 0.0, %v3644
      %v3646 = vpop.f32.mrf.mxu0
      %v3647 = vadd.f32 0.0, %v3646
      %3648 = vmatprep.mubr.bf16.mxu0 0
      %3649 = vmatmul.mubr.bf16.gmra.mxu0 %v1712
      %v3650 = vpop.f32.mrf.mxu0
      %v3651 = vadd.f32 0.0, %v3650
      %v3652 = vpop.f32.mrf.mxu0
      %v3653 = vadd.f32 0.0, %v3652
      %v3654 = vpop.f32.mrf.mxu0
      %v3655 = vadd.f32 0.0, %v3654
      %v3656 = vpop.f32.mrf.mxu0
      %v3657 = vadd.f32 0.0, %v3656
      %3658 = vmatprep.mubr.bf16.mxu0 0
      %3659 = vmatmul.mubr.bf16.gmra.mxu0 %v1715
      %v3660 = vpop.f32.mrf.mxu0
      %v3661 = vadd.f32 0.0, %v3660
      %v3662 = vpop.f32.mrf.mxu0
      %v3663 = vadd.f32 0.0, %v3662
      %v3664 = vpop.f32.mrf.mxu0
      %v3665 = vadd.f32 0.0, %v3664
      %v3666 = vpop.f32.mrf.mxu0
      %v3667 = vadd.f32 0.0, %v3666
      %3668 = vmatprep.mubr.bf16.mxu0 0
      %3669 = vmatmul.mubr.bf16.gmra.mxu0 %v1718
      %v3670 = vpop.f32.mrf.mxu0
      %v3671 = vadd.f32 0.0, %v3670
      %v3672 = vpop.f32.mrf.mxu0
      %v3673 = vadd.f32 0.0, %v3672
      %v3674 = vpop.f32.mrf.mxu0
      %v3675 = vadd.f32 0.0, %v3674
      %v3676 = vpop.f32.mrf.mxu0
      %v3677 = vadd.f32 0.0, %v3676
      %3678 = vmatprep.mubr.bf16.mxu0 0
      %3679 = vmatmul.mubr.bf16.gmra.mxu0 %v2617
      %v3680 = vpop.f32.mrf.mxu0
      %v3681 = vadd.f32 0.0, %v3680
      %v3682 = vpop.f32.mrf.mxu0
      %v3683 = vadd.f32 0.0, %v3682
      %v3684 = vpop.f32.mrf.mxu0
      %v3685 = vadd.f32 0.0, %v3684
      %v3686 = vpop.f32.mrf.mxu0
      %v3687 = vadd.f32 0.0, %v3686
      %3688 = vmatprep.mubr.bf16.mxu0 0
      %3689 = vmatmul.mubr.bf16.gmra.mxu0 %v3498
      %v3690 = vpop.f32.mrf.mxu0
      %v3691 = vadd.f32 0.0, %v3690
      %v3692 = vpop.f32.mrf.mxu0
      %v3693 = vadd.f32 0.0, %v3692
      %v3694 = vpop.f32.mrf.mxu0
      %v3695 = vadd.f32 0.0, %v3694
      %v3696 = vpop.f32.mrf.mxu0
      %v3697 = vadd.f32 0.0, %v3696
      %3698 = vdwg.mxu0
      %v3699 = vadd.f32 %v3416, %v3541
      %v3700 = vadd.f32 %v3417, %v3543
      %v3701 = vadd.f32 %v3418, %v3545
      %v3702 = vadd.f32 %v3419, %v3547
      %v3703 = vadd.f32 %v3420, %v3551
      %v3704 = vadd.f32 %v3421, %v3553
      %v3705 = vadd.f32 %v3422, %v3555
      %v3706 = vadd.f32 %v3423, %v3557
      %v3707 = vadd.f32 %v3424, %v3561
      %v3708 = vadd.f32 %v3425, %v3563
      %v3709 = vadd.f32 %v3426, %v3565
      %v3710 = vadd.f32 %v3427, %v3567
      %v3711 = vadd.f32 %v3428, %v3571
      %v3712 = vadd.f32 %v3429, %v3573
      %v3713 = vadd.f32 %v3430, %v3575
      %v3714 = vadd.f32 %v3431, %v3577
      %v3715 = vadd.f32 %v3432, %v3581
      %v3716 = vadd.f32 %v3433, %v3583
      %v3717 = vadd.f32 %v3434, %v3585
      %v3718 = vadd.f32 %v3435, %v3587
      %v3719 = vadd.f32 %v3436, %v3591
      %v3720 = vadd.f32 %v3437, %v3593
      %v3721 = vadd.f32 %v3438, %v3595
      %v3722 = vadd.f32 %v3439, %v3597
      %v3723 = vadd.f32 %v3440, %v3601
      %v3724 = vadd.f32 %v3441, %v3603
      %v3725 = vadd.f32 %v3442, %v3605
      %v3726 = vadd.f32 %v3443, %v3607
      %v3727 = vadd.f32 %v3444, %v3611
      %v3728 = vadd.f32 %v3445, %v3613
      %v3729 = vadd.f32 %v3446, %v3615
      %v3730 = vadd.f32 %v3447, %v3617
      %v3731 = vadd.f32 %v3448, %v3621
      %v3732 = vadd.f32 %v3449, %v3623
      %v3733 = vadd.f32 %v3450, %v3625
      %v3734 = vadd.f32 %v3451, %v3627
      %v3735 = vadd.f32 %v3452, %v3631
      %v3736 = vadd.f32 %v3453, %v3633
      %v3737 = vadd.f32 %v3454, %v3635
      %v3738 = vadd.f32 %v3455, %v3637
      %v3739 = vadd.f32 %v3456, %v3641
      %v3740 = vadd.f32 %v3457, %v3643
      %v3741 = vadd.f32 %v3458, %v3645
      %v3742 = vadd.f32 %v3459, %v3647
      %v3743 = vadd.f32 %v3460, %v3651
      %v3744 = vadd.f32 %v3461, %v3653
      %v3745 = vadd.f32 %v3462, %v3655
      %v3746 = vadd.f32 %v3463, %v3657
      %v3747 = vadd.f32 %v3464, %v3661
      %v3748 = vadd.f32 %v3465, %v3663
      %v3749 = vadd.f32 %v3466, %v3665
      %v3750 = vadd.f32 %v3467, %v3667
      %v3751 = vadd.f32 %v3468, %v3671
      %v3752 = vadd.f32 %v3469, %v3673
      %v3753 = vadd.f32 %v3470, %v3675
      %v3754 = vadd.f32 %v3471, %v3677
      %v3755 = vadd.f32 %v3472, %v3681
      %v3756 = vadd.f32 %v3473, %v3683
      %v3757 = vadd.f32 %v3474, %v3685
      %v3758 = vadd.f32 %v3475, %v3687
      %v3759 = vadd.f32 %v3476, %v3691
      %v3760 = vadd.f32 %v3477, %v3693
      %v3761 = vadd.f32 %v3478, %v3695
      %v3762 = vadd.f32 %v3479, %v3697
      %v3763 = vld [vmem:[%s3] sm:$0x33]
      %v3765 = vshrl.u32 %v385, 16
      %v3767 = vrot.slane %v3765, 4
      %v3768 = vshll.u32 %v385, 16
      %v3770 = vrot.slane %v3768, 5
      %v3771 = vor.u32 %v3767, %v3770
      %v3772 = vrot.slane %v3771, 4
      %v3774 = vshll.u32 %v386, 16
      %v3776 = vrot.slane %v3774, 5
      %v3777 = vsel %vm442, %v3772, %v3776
      %v3778 = vshrl.u32 %v386, 16
      %v3780 = vrot.slane %v3778, 4
      %v3781 = vor.u32 %v3780, %v3776
      %v3782 = vrot.slane %v3781, 4
      %v3784 = vshll.u32 %v387, 16
      %v3786 = vrot.slane %v3784, 5
      %v3787 = vsel %vm442, %v3782, %v3786
      %v3789 = vshrl.u32 %v388, 16
      %v3791 = vrot.slane %v3789, 4
      %v3792 = vshll.u32 %v388, 16
      %v3794 = vrot.slane %v3792, 5
      %v3795 = vor.u32 %v3791, %v3794
      %v3796 = vrot.slane %v3795, 4
      %v3798 = vshll.u32 %v389, 16
      %v3800 = vrot.slane %v3798, 5
      %v3801 = vsel %vm442, %v3796, %v3800
      %v3802 = vshrl.u32 %v389, 16
      %v3804 = vrot.slane %v3802, 4
      %v3805 = vor.u32 %v3804, %v3800
      %v3806 = vrot.slane %v3805, 4
      %v3808 = vshll.u32 %v390, 16
      %v3810 = vrot.slane %v3808, 5
      %v3811 = vsel %vm442, %v3806, %v3810
      %v3813 = vshrl.u32 %v391, 16
      %v3815 = vrot.slane %v3813, 4
      %v3816 = vshll.u32 %v391, 16
      %v3818 = vrot.slane %v3816, 5
      %v3819 = vor.u32 %v3815, %v3818
      %v3820 = vrot.slane %v3819, 4
      %v3822 = vshll.u32 %v392, 16
      %v3824 = vrot.slane %v3822, 5
      %v3825 = vsel %vm442, %v3820, %v3824
      %v3826 = vshrl.u32 %v392, 16
      %v3828 = vrot.slane %v3826, 4
      %v3829 = vor.u32 %v3828, %v3824
      %v3830 = vrot.slane %v3829, 4
      %v3832 = vshll.u32 %v393, 16
      %v3834 = vrot.slane %v3832, 5
      %v3835 = vsel %vm442, %v3830, %v3834
      %v3837 = vshrl.u32 %v394, 16
      %v3839 = vrot.slane %v3837, 4
      %v3840 = vshll.u32 %v394, 16
      %v3842 = vrot.slane %v3840, 5
      %v3843 = vor.u32 %v3839, %v3842
      %v3844 = vrot.slane %v3843, 4
      %v3846 = vshll.u32 %v395, 16
      %v3848 = vrot.slane %v3846, 5
      %v3849 = vsel %vm442, %v3844, %v3848
      %v3850 = vshrl.u32 %v395, 16
      %v3852 = vrot.slane %v3850, 4
      %v3853 = vor.u32 %v3852, %v3848
      %v3854 = vrot.slane %v3853, 4
      %v3856 = vshll.u32 %v396, 16
      %v3858 = vrot.slane %v3856, 5
      %v3859 = vsel %vm442, %v3854, %v3858
      %v3861 = vshrl.u32 %v397, 16
      %v3863 = vrot.slane %v3861, 4
      %v3864 = vshll.u32 %v397, 16
      %v3866 = vrot.slane %v3864, 5
      %v3867 = vor.u32 %v3863, %v3866
      %v3868 = vrot.slane %v3867, 4
      %v3870 = vshll.u32 %v398, 16
      %v3872 = vrot.slane %v3870, 5
      %v3873 = vsel %vm442, %v3868, %v3872
      %v3874 = vshrl.u32 %v398, 16
      %v3876 = vrot.slane %v3874, 4
      %v3877 = vor.u32 %v3876, %v3872
      %v3878 = vrot.slane %v3877, 4
      %v3880 = vshll.u32 %v399, 16
      %v3882 = vrot.slane %v3880, 5
      %v3883 = vsel %vm442, %v3878, %v3882
      %v3885 = vshrl.u32 %v400, 16
      %v3887 = vrot.slane %v3885, 4
      %v3888 = vshll.u32 %v400, 16
      %v3890 = vrot.slane %v3888, 5
      %v3891 = vor.u32 %v3887, %v3890
      %v3892 = vrot.slane %v3891, 4
      %v3894 = vshll.u32 %v401, 16
      %v3896 = vrot.slane %v3894, 5
      %v3897 = vsel %vm442, %v3892, %v3896
      %v3898 = vshrl.u32 %v401, 16
      %v3900 = vrot.slane %v3898, 4
      %v3901 = vor.u32 %v3900, %v3896
      %v3902 = vrot.slane %v3901, 4
      %v3904 = vshll.u32 %v402, 16
      %v3906 = vrot.slane %v3904, 5
      %v3907 = vsel %vm442, %v3902, %v3906
      %v3909 = vshrl.u32 %v403, 16
      %v3911 = vrot.slane %v3909, 4
      %v3912 = vshll.u32 %v403, 16
      %v3914 = vrot.slane %v3912, 5
      %v3915 = vor.u32 %v3911, %v3914
      %v3916 = vrot.slane %v3915, 4
      %v3918 = vshll.u32 %v404, 16
      %v3920 = vrot.slane %v3918, 5
      %v3921 = vsel %vm442, %v3916, %v3920
      %v3922 = vshrl.u32 %v404, 16
      %v3924 = vrot.slane %v3922, 4
      %v3925 = vor.u32 %v3924, %v3920
      %v3926 = vrot.slane %v3925, 4
      %v3928 = vshll.u32 %v405, 16
      %v3930 = vrot.slane %v3928, 5
      %v3931 = vsel %vm442, %v3926, %v3930
      %v3933 = vshrl.u32 %v406, 16
      %v3935 = vrot.slane %v3933, 4
      %v3936 = vshll.u32 %v406, 16
      %v3938 = vrot.slane %v3936, 5
      %v3939 = vor.u32 %v3935, %v3938
      %v3940 = vrot.slane %v3939, 4
      %v3942 = vshll.u32 %v407, 16
      %v3944 = vrot.slane %v3942, 5
      %v3945 = vsel %vm442, %v3940, %v3944
      %v3946 = vshrl.u32 %v407, 16
      %v3948 = vrot.slane %v3946, 4
      %v3949 = vor.u32 %v3948, %v3944
      %v3950 = vrot.slane %v3949, 4
      %v3952 = vshll.u32 %v408, 16
      %v3954 = vrot.slane %v3952, 5
      %v3955 = vsel %vm442, %v3950, %v3954
      %v3957 = vshrl.u32 %v409, 16
      %v3959 = vrot.slane %v3957, 4
      %v3960 = vshll.u32 %v409, 16
      %v3962 = vrot.slane %v3960, 5
      %v3963 = vor.u32 %v3959, %v3962
      %v3964 = vrot.slane %v3963, 4
      %v3966 = vshll.u32 %v410, 16
      %v3968 = vrot.slane %v3966, 5
      %v3969 = vsel %vm442, %v3964, %v3968
      %v3970 = vshrl.u32 %v410, 16
      %v3972 = vrot.slane %v3970, 4
      %v3973 = vor.u32 %v3972, %v3968
      %v3974 = vrot.slane %v3973, 4
      %v3976 = vshll.u32 %v411, 16
      %v3978 = vrot.slane %v3976, 5
      %v3979 = vsel %vm442, %v3974, %v3978
      %v3981 = vshrl.u32 %v412, 16
      %v3983 = vrot.slane %v3981, 4
      %v3984 = vshll.u32 %v412, 16
      %v3986 = vrot.slane %v3984, 5
      %v3987 = vor.u32 %v3983, %v3986
      %v3988 = vrot.slane %v3987, 4
      %v3990 = vshll.u32 %v413, 16
      %v3992 = vrot.slane %v3990, 5
      %v3993 = vsel %vm442, %v3988, %v3992
      %v3994 = vshrl.u32 %v413, 16
      %v3996 = vrot.slane %v3994, 4
      %v3997 = vor.u32 %v3996, %v3992
      %v3998 = vrot.slane %v3997, 4
      %v4000 = vshll.u32 %v414, 16
      %v4002 = vrot.slane %v4000, 5
      %v4003 = vsel %vm442, %v3998, %v4002
      %v4005 = vshrl.u32 %v415, 16
      %v4007 = vrot.slane %v4005, 4
      %v4008 = vshll.u32 %v415, 16
      %v4010 = vrot.slane %v4008, 5
      %v4011 = vor.u32 %v4007, %v4010
      %v4012 = vrot.slane %v4011, 4
      %v4014 = vshll.u32 %v416, 16
      %v4016 = vrot.slane %v4014, 5
      %v4017 = vsel %vm442, %v4012, %v4016
      %v4018 = vshrl.u32 %v416, 16
      %v4020 = vrot.slane %v4018, 4
      %v4021 = vor.u32 %v4020, %v4016
      %v4022 = vrot.slane %v4021, 4
      %v4024 = vshll.u32 %v417, 16
      %v4026 = vrot.slane %v4024, 5
      %v4027 = vsel %vm442, %v4022, %v4026
      %v4029 = vshrl.u32 %v418, 16
      %v4031 = vrot.slane %v4029, 4
      %v4032 = vshll.u32 %v418, 16
      %v4034 = vrot.slane %v4032, 5
      %v4035 = vor.u32 %v4031, %v4034
      %v4036 = vrot.slane %v4035, 4
      %v4038 = vshll.u32 %v419, 16
      %v4040 = vrot.slane %v4038, 5
      %v4041 = vsel %vm442, %v4036, %v4040
      %v4042 = vshrl.u32 %v419, 16
      %v4044 = vrot.slane %v4042, 4
      %v4045 = vor.u32 %v4044, %v4040
      %v4046 = vrot.slane %v4045, 4
      %v4048 = vshll.u32 %v420, 16
      %v4050 = vrot.slane %v4048, 5
      %v4051 = vsel %vm442, %v4046, %v4050
      %v4053 = vshrl.u32 %v421, 16
      %v4055 = vrot.slane %v4053, 4
      %v4056 = vshll.u32 %v421, 16
      %v4058 = vrot.slane %v4056, 5
      %v4059 = vor.u32 %v4055, %v4058
      %v4060 = vrot.slane %v4059, 4
      %v4062 = vshll.u32 %v422, 16
      %v4064 = vrot.slane %v4062, 5
      %v4065 = vsel %vm442, %v4060, %v4064
      %v4066 = vshrl.u32 %v422, 16
      %v4068 = vrot.slane %v4066, 4
      %v4069 = vor.u32 %v4068, %v4064
      %v4070 = vrot.slane %v4069, 4
      %v4072 = vshll.u32 %v423, 16
      %v4074 = vrot.slane %v4072, 5
      %v4075 = vsel %vm442, %v4070, %v4074
      %v4077 = vshrl.u32 %v424, 16
      %v4079 = vrot.slane %v4077, 4
      %v4080 = vshll.u32 %v424, 16
      %v4082 = vrot.slane %v4080, 5
      %v4083 = vor.u32 %v4079, %v4082
      %v4084 = vrot.slane %v4083, 4
      %v4086 = vshll.u32 %v425, 16
      %v4088 = vrot.slane %v4086, 5
      %v4089 = vsel %vm442, %v4084, %v4088
      %v4090 = vshrl.u32 %v425, 16
      %v4092 = vrot.slane %v4090, 4
      %v4093 = vor.u32 %v4092, %v4088
      %v4094 = vrot.slane %v4093, 4
      %v4096 = vshll.u32 %v426, 16
      %v4098 = vrot.slane %v4096, 5
      %v4099 = vsel %vm442, %v4094, %v4098
      %v4101 = vshrl.u32 %v427, 16
      %v4103 = vrot.slane %v4101, 4
      %v4104 = vshll.u32 %v427, 16
      %v4106 = vrot.slane %v4104, 5
      %v4107 = vor.u32 %v4103, %v4106
      %v4108 = vrot.slane %v4107, 4
      %v4110 = vshll.u32 %v428, 16
      %v4112 = vrot.slane %v4110, 5
      %v4113 = vsel %vm442, %v4108, %v4112
      %v4114 = vshrl.u32 %v428, 16
      %v4116 = vrot.slane %v4114, 4
      %v4117 = vor.u32 %v4116, %v4112
      %v4118 = vrot.slane %v4117, 4
      %v4120 = vshll.u32 %v429, 16
      %v4122 = vrot.slane %v4120, 5
      %v4123 = vsel %vm442, %v4118, %v4122
      %v4125 = vshrl.u32 %v430, 16
      %v4127 = vrot.slane %v4125, 4
      %v4128 = vshll.u32 %v430, 16
      %v4130 = vrot.slane %v4128, 5
      %v4131 = vor.u32 %v4127, %v4130
      %v4132 = vrot.slane %v4131, 4
      %v4134 = vshll.u32 %v431, 16
      %v4136 = vrot.slane %v4134, 5
      %v4137 = vsel %vm442, %v4132, %v4136
      %v4138 = vshrl.u32 %v431, 16
      %v4140 = vrot.slane %v4138, 4
      %v4141 = vor.u32 %v4140, %v4136
      %v4142 = vrot.slane %v4141, 4
      %v4144 = vshll.u32 %v432, 16
      %v4146 = vrot.slane %v4144, 5
      %v4147 = vsel %vm442, %v4142, %v4146
      %v4148 = vld [vmem:[%s3] sm:$0xcc]
      %v4149 = vunpack.c.l.b16 %v3777
      %v4150 = vunpack.c.l.b16 %v3787
      %v4151 = vunpack.c.l.b16 %v3801
      %v4152 = vunpack.c.l.b16 %v3811
      %v4153 = vunpack.c.l.b16 %v3825
      %v4154 = vunpack.c.l.b16 %v3835
      %v4155 = vunpack.c.l.b16 %v3849
      %v4156 = vunpack.c.l.b16 %v3859
      %v4157 = vunpack.c.l.b16 %v3873
      %v4158 = vunpack.c.l.b16 %v3883
      %v4159 = vunpack.c.l.b16 %v3897
      %v4160 = vunpack.c.l.b16 %v3907
      %v4161 = vunpack.c.l.b16 %v3921
      %v4162 = vunpack.c.l.b16 %v3931
      %v4163 = vunpack.c.l.b16 %v3945
      %v4164 = vunpack.c.l.b16 %v3955
      %v4165 = vunpack.c.l.b16 %v3969
      %v4166 = vunpack.c.l.b16 %v3979
      %v4167 = vunpack.c.l.b16 %v3993
      %v4168 = vunpack.c.l.b16 %v4003
      %v4169 = vunpack.c.l.b16 %v4017
      %v4170 = vunpack.c.l.b16 %v4027
      %v4171 = vunpack.c.l.b16 %v4041
      %v4172 = vunpack.c.l.b16 %v4051
      %v4173 = vunpack.c.l.b16 %v4065
      %v4174 = vunpack.c.l.b16 %v4075
      %v4175 = vunpack.c.l.b16 %v4089
      %v4176 = vunpack.c.l.b16 %v4099
      %v4177 = vunpack.c.l.b16 %v4113
      %v4178 = vunpack.c.l.b16 %v4123
      %v4179 = vunpack.c.l.b16 %v4137
      %v4180 = vunpack.c.l.b16 %v4147
      %v4181 = vpack.c.b16 %v4150, %v4149
      %v4182 = vpack.c.b16 %v4152, %v4151
      %v4183 = vpack.c.b16 %v4154, %v4153
      %v4184 = vpack.c.b16 %v4156, %v4155
      %v4185 = vpack.c.b16 %v4158, %v4157
      %v4186 = vpack.c.b16 %v4160, %v4159
      %v4187 = vpack.c.b16 %v4162, %v4161
      %v4188 = vpack.c.b16 %v4164, %v4163
      %v4189 = vpack.c.b16 %v4166, %v4165
      %v4190 = vpack.c.b16 %v4168, %v4167
      %v4191 = vpack.c.b16 %v4170, %v4169
      %v4192 = vpack.c.b16 %v4172, %v4171
      %v4193 = vpack.c.b16 %v4174, %v4173
      %v4194 = vpack.c.b16 %v4176, %v4175
      %v4195 = vpack.c.b16 %v4178, %v4177
      %v4196 = vpack.c.b16 %v4180, %v4179
      %v4198 = vunpack.c.l.b16 %v4148
      %v4199 = vunpack.c.h.b16 %v4148
      %v4200 = vpack.c.b16 %v4198, %v4198
      %v4201 = vpack.c.b16 %v4199, %v4199
      %v4202 = vrot.slane %v4200, 2
      %v4203 = vrot.slane %v4201, 2
      %vm4204 = vcmask 31744
      %v4206 = vsel %vm4204, %v4181, 0
      %v4209 = vsel %vm4204, %v4182, 0
      %v4212 = vsel %vm4204, %v4183, 0
      %v4215 = vsel %vm4204, %v4184, 0
      %v4218 = vsel %vm4204, %v4185, 0
      %v4221 = vsel %vm4204, %v4186, 0
      %v4224 = vsel %vm4204, %v4187, 0
      %v4227 = vsel %vm4204, %v4188, 0
      %v4230 = vsel %vm4204, %v4189, 0
      %v4233 = vsel %vm4204, %v4190, 0
      %v4236 = vsel %vm4204, %v4191, 0
      %v4239 = vsel %vm4204, %v4192, 0
      %v4242 = vsel %vm4204, %v4193, 0
      %v4245 = vsel %vm4204, %v4194, 0
      %v4248 = vsel %vm4204, %v4195, 0
      %v4251 = vsel %vm4204, %v4196, 0
      %v4254 = vsel %vm950, %v4202, 0
      %v4257 = vsel %vm950, %v4203, 0
      %4259 = vmatprep.subr.bf16.mxu0 0
      %4260 = vmatpush1.bf16.msra.mxu0 0
      %4261 = vmatprep.subr.bf16.mxu0 0
      %4262 = vmatpush1.bf16.msra.mxu0 0
      %4263 = vmatprep.subr.bf16.mxu0 0
      %4264 = vmatpush1.bf16.msra.mxu0 0
      %4265 = vmatprep.subr.bf16.mxu0 0
      %4266 = vmatpush1.bf16.msra.mxu0 0
      %4267 = vmatprep.subr.bf16.mxu0 0
      %4268 = vmatpush1.bf16.msra.mxu0 0
      %4269 = vmatprep.subr.bf16.mxu0 0
      %4270 = vmatpush1.bf16.msra.mxu0 0
      %4271 = vmatprep.subr.bf16.mxu0 0
      %4272 = vmatpush1.bf16.msra.mxu0 0
      %4273 = vmatprep.subr.bf16.mxu0 %v4257
      %4274 = vmatpush1.bf16.msra.mxu0 %v4254
      %4275 = vmatprep.subr.bf16.mxu0 0
      %4276 = vmatpush2.bf16.msra.mxu0 0
      %4277 = vmatprep.subr.bf16.mxu0 0
      %4278 = vmatpush2.bf16.msra.mxu0 0
      %4279 = vmatprep.subr.bf16.mxu0 0
      %4280 = vmatpush2.bf16.msra.mxu0 0
      %4281 = vmatprep.subr.bf16.mxu0 0
      %4282 = vmatpush2.bf16.msra.mxu0 0
      %4283 = vmatprep.subr.bf16.mxu0 0
      %4284 = vmatpush2.bf16.msra.mxu0 0
      %4285 = vmatprep.subr.bf16.mxu0 0
      %4286 = vmatpush2.bf16.msra.mxu0 0
      %4287 = vmatprep.subr.bf16.mxu0 0
      %4288 = vmatpush2.bf16.msra.mxu0 0
      %4289 = vmatprep.subr.bf16.mxu0 0
      %4290 = vmatpush2.bf16.msra.mxu0 0
      %4291 = vmatprep.mubr.bf16.mxu0 0
      %4292 = vmatmul.mubr.bf16.gmra.mxu0 %v4206
      %v4293 = vpop.f32.mrf.mxu0
      %v4294 = vadd.f32 0.0, %v4293
      %v4295 = vpop.f32.mrf.mxu0
      %v4296 = vadd.f32 0.0, %v4295
      %v4297 = vpop.f32.mrf.mxu0
      %v4298 = vadd.f32 0.0, %v4297
      %v4299 = vpop.f32.mrf.mxu0
      %v4300 = vadd.f32 0.0, %v4299
      %4301 = vmatprep.mubr.bf16.mxu0 0
      %4302 = vmatmul.mubr.bf16.gmra.mxu0 %v4209
      %v4303 = vpop.f32.mrf.mxu0
      %v4304 = vadd.f32 0.0, %v4303
      %v4305 = vpop.f32.mrf.mxu0
      %v4306 = vadd.f32 0.0, %v4305
      %v4307 = vpop.f32.mrf.mxu0
      %v4308 = vadd.f32 0.0, %v4307
      %v4309 = vpop.f32.mrf.mxu0
      %v4310 = vadd.f32 0.0, %v4309
      %4311 = vmatprep.mubr.bf16.mxu0 0
      %4312 = vmatmul.mubr.bf16.gmra.mxu0 %v4212
      %v4313 = vpop.f32.mrf.mxu0
      %v4314 = vadd.f32 0.0, %v4313
      %v4315 = vpop.f32.mrf.mxu0
      %v4316 = vadd.f32 0.0, %v4315
      %v4317 = vpop.f32.mrf.mxu0
      %v4318 = vadd.f32 0.0, %v4317
      %v4319 = vpop.f32.mrf.mxu0
      %v4320 = vadd.f32 0.0, %v4319
      %4321 = vmatprep.mubr.bf16.mxu0 0
      %4322 = vmatmul.mubr.bf16.gmra.mxu0 %v4215
      %v4323 = vpop.f32.mrf.mxu0
      %v4324 = vadd.f32 0.0, %v4323
      %v4325 = vpop.f32.mrf.mxu0
      %v4326 = vadd.f32 0.0, %v4325
      %v4327 = vpop.f32.mrf.mxu0
      %v4328 = vadd.f32 0.0, %v4327
      %v4329 = vpop.f32.mrf.mxu0
      %v4330 = vadd.f32 0.0, %v4329
      %4331 = vmatprep.mubr.bf16.mxu0 0
      %4332 = vmatmul.mubr.bf16.gmra.mxu0 %v4218
      %v4333 = vpop.f32.mrf.mxu0
      %v4334 = vadd.f32 0.0, %v4333
      %v4335 = vpop.f32.mrf.mxu0
      %v4336 = vadd.f32 0.0, %v4335
      %v4337 = vpop.f32.mrf.mxu0
      %v4338 = vadd.f32 0.0, %v4337
      %v4339 = vpop.f32.mrf.mxu0
      %v4340 = vadd.f32 0.0, %v4339
      %4341 = vmatprep.mubr.bf16.mxu0 0
      %4342 = vmatmul.mubr.bf16.gmra.mxu0 %v4221
      %v4343 = vpop.f32.mrf.mxu0
      %v4344 = vadd.f32 0.0, %v4343
      %v4345 = vpop.f32.mrf.mxu0
      %v4346 = vadd.f32 0.0, %v4345
      %v4347 = vpop.f32.mrf.mxu0
      %v4348 = vadd.f32 0.0, %v4347
      %v4349 = vpop.f32.mrf.mxu0
      %v4350 = vadd.f32 0.0, %v4349
      %4351 = vmatprep.mubr.bf16.mxu0 0
      %4352 = vmatmul.mubr.bf16.gmra.mxu0 %v4224
      %v4353 = vpop.f32.mrf.mxu0
      %v4354 = vadd.f32 0.0, %v4353
      %v4355 = vpop.f32.mrf.mxu0
      %v4356 = vadd.f32 0.0, %v4355
      %v4357 = vpop.f32.mrf.mxu0
      %v4358 = vadd.f32 0.0, %v4357
      %v4359 = vpop.f32.mrf.mxu0
      %v4360 = vadd.f32 0.0, %v4359
      %4361 = vmatprep.mubr.bf16.mxu0 0
      %4362 = vmatmul.mubr.bf16.gmra.mxu0 %v4227
      %v4363 = vpop.f32.mrf.mxu0
      %v4364 = vadd.f32 0.0, %v4363
      %v4365 = vpop.f32.mrf.mxu0
      %v4366 = vadd.f32 0.0, %v4365
      %v4367 = vpop.f32.mrf.mxu0
      %v4368 = vadd.f32 0.0, %v4367
      %v4369 = vpop.f32.mrf.mxu0
      %v4370 = vadd.f32 0.0, %v4369
      %4371 = vmatprep.mubr.bf16.mxu0 0
      %4372 = vmatmul.mubr.bf16.gmra.mxu0 %v4230
      %v4373 = vpop.f32.mrf.mxu0
      %v4374 = vadd.f32 0.0, %v4373
      %v4375 = vpop.f32.mrf.mxu0
      %v4376 = vadd.f32 0.0, %v4375
      %v4377 = vpop.f32.mrf.mxu0
      %v4378 = vadd.f32 0.0, %v4377
      %v4379 = vpop.f32.mrf.mxu0
      %v4380 = vadd.f32 0.0, %v4379
      %4381 = vmatprep.mubr.bf16.mxu0 0
      %4382 = vmatmul.mubr.bf16.gmra.mxu0 %v4233
      %v4383 = vpop.f32.mrf.mxu0
      %v4384 = vadd.f32 0.0, %v4383
      %v4385 = vpop.f32.mrf.mxu0
      %v4386 = vadd.f32 0.0, %v4385
      %v4387 = vpop.f32.mrf.mxu0
      %v4388 = vadd.f32 0.0, %v4387
      %v4389 = vpop.f32.mrf.mxu0
      %v4390 = vadd.f32 0.0, %v4389
      %4391 = vmatprep.mubr.bf16.mxu0 0
      %4392 = vmatmul.mubr.bf16.gmra.mxu0 %v4236
      %v4393 = vpop.f32.mrf.mxu0
      %v4394 = vadd.f32 0.0, %v4393
      %v4395 = vpop.f32.mrf.mxu0
      %v4396 = vadd.f32 0.0, %v4395
      %v4397 = vpop.f32.mrf.mxu0
      %v4398 = vadd.f32 0.0, %v4397
      %v4399 = vpop.f32.mrf.mxu0
      %v4400 = vadd.f32 0.0, %v4399
      %4401 = vmatprep.mubr.bf16.mxu0 0
      %4402 = vmatmul.mubr.bf16.gmra.mxu0 %v4239
      %v4403 = vpop.f32.mrf.mxu0
      %v4404 = vadd.f32 0.0, %v4403
      %v4405 = vpop.f32.mrf.mxu0
      %v4406 = vadd.f32 0.0, %v4405
      %v4407 = vpop.f32.mrf.mxu0
      %v4408 = vadd.f32 0.0, %v4407
      %v4409 = vpop.f32.mrf.mxu0
      %v4410 = vadd.f32 0.0, %v4409
      %4411 = vmatprep.mubr.bf16.mxu0 0
      %4412 = vmatmul.mubr.bf16.gmra.mxu0 %v4242
      %v4413 = vpop.f32.mrf.mxu0
      %v4414 = vadd.f32 0.0, %v4413
      %v4415 = vpop.f32.mrf.mxu0
      %v4416 = vadd.f32 0.0, %v4415
      %v4417 = vpop.f32.mrf.mxu0
      %v4418 = vadd.f32 0.0, %v4417
      %v4419 = vpop.f32.mrf.mxu0
      %v4420 = vadd.f32 0.0, %v4419
      %4421 = vmatprep.mubr.bf16.mxu0 0
      %4422 = vmatmul.mubr.bf16.gmra.mxu0 %v4245
      %v4423 = vpop.f32.mrf.mxu0
      %v4424 = vadd.f32 0.0, %v4423
      %v4425 = vpop.f32.mrf.mxu0
      %v4426 = vadd.f32 0.0, %v4425
      %v4427 = vpop.f32.mrf.mxu0
      %v4428 = vadd.f32 0.0, %v4427
      %v4429 = vpop.f32.mrf.mxu0
      %v4430 = vadd.f32 0.0, %v4429
      %4431 = vmatprep.mubr.bf16.mxu0 0
      %4432 = vmatmul.mubr.bf16.gmra.mxu0 %v4248
      %v4433 = vpop.f32.mrf.mxu0
      %v4434 = vadd.f32 0.0, %v4433
      %v4435 = vpop.f32.mrf.mxu0
      %v4436 = vadd.f32 0.0, %v4435
      %v4437 = vpop.f32.mrf.mxu0
      %v4438 = vadd.f32 0.0, %v4437
      %v4439 = vpop.f32.mrf.mxu0
      %v4440 = vadd.f32 0.0, %v4439
      %4441 = vmatprep.mubr.bf16.mxu0 0
      %4442 = vmatmul.mubr.bf16.gmra.mxu0 %v4251
      %v4443 = vpop.f32.mrf.mxu0
      %v4444 = vadd.f32 0.0, %v4443
      %v4445 = vpop.f32.mrf.mxu0
      %v4446 = vadd.f32 0.0, %v4445
      %v4447 = vpop.f32.mrf.mxu0
      %v4448 = vadd.f32 0.0, %v4447
      %v4449 = vpop.f32.mrf.mxu0
      %v4450 = vadd.f32 0.0, %v4449
      %4451 = vdwg.mxu0
      %v4484 = vunpack.c.l.b16 %v385
      %v4485 = vunpack.c.l.b16 %v386
      %v4486 = vunpack.c.l.b16 %v388
      %v4487 = vunpack.c.l.b16 %v389
      %v4488 = vunpack.c.l.b16 %v391
      %v4489 = vunpack.c.l.b16 %v392
      %v4490 = vunpack.c.l.b16 %v394
      %v4491 = vunpack.c.l.b16 %v395
      %v4492 = vunpack.c.l.b16 %v397
      %v4493 = vunpack.c.l.b16 %v398
      %v4494 = vunpack.c.l.b16 %v400
      %v4495 = vunpack.c.l.b16 %v401
      %v4496 = vunpack.c.l.b16 %v403
      %v4497 = vunpack.c.l.b16 %v404
      %v4498 = vunpack.c.l.b16 %v406
      %v4499 = vunpack.c.l.b16 %v407
      %v4500 = vunpack.c.l.b16 %v409
      %v4501 = vunpack.c.l.b16 %v410
      %v4502 = vunpack.c.l.b16 %v412
      %v4503 = vunpack.c.l.b16 %v413
      %v4504 = vunpack.c.l.b16 %v415
      %v4505 = vunpack.c.l.b16 %v416
      %v4506 = vunpack.c.l.b16 %v418
      %v4507 = vunpack.c.l.b16 %v419
      %v4508 = vunpack.c.l.b16 %v421
      %v4509 = vunpack.c.l.b16 %v422
      %v4510 = vunpack.c.l.b16 %v424
      %v4511 = vunpack.c.l.b16 %v425
      %v4512 = vunpack.c.l.b16 %v427
      %v4513 = vunpack.c.l.b16 %v428
      %v4514 = vunpack.c.l.b16 %v430
      %v4515 = vunpack.c.l.b16 %v431
      %v4516 = vpack.c.b16 %v4485, %v4484
      %v4517 = vpack.c.b16 %v4487, %v4486
      %v4518 = vpack.c.b16 %v4489, %v4488
      %v4519 = vpack.c.b16 %v4491, %v4490
      %v4520 = vpack.c.b16 %v4493, %v4492
      %v4521 = vpack.c.b16 %v4495, %v4494
      %v4522 = vpack.c.b16 %v4497, %v4496
      %v4523 = vpack.c.b16 %v4499, %v4498
      %v4524 = vpack.c.b16 %v4501, %v4500
      %v4525 = vpack.c.b16 %v4503, %v4502
      %v4526 = vpack.c.b16 %v4505, %v4504
      %v4527 = vpack.c.b16 %v4507, %v4506
      %v4528 = vpack.c.b16 %v4509, %v4508
      %v4529 = vpack.c.b16 %v4511, %v4510
      %v4530 = vpack.c.b16 %v4513, %v4512
      %v4531 = vpack.c.b16 %v4515, %v4514
      %v4533 = vunpack.c.l.b16 %v3763
      %v4534 = vunpack.c.h.b16 %v3763
      %v4535 = vpack.c.b16 %v4533, %v4533
      %v4536 = vpack.c.b16 %v4534, %v4534
      %v4538 = vsel %vm4204, %v4516, 0
      %v4541 = vsel %vm4204, %v4517, 0
      %v4544 = vsel %vm4204, %v4518, 0
      %v4547 = vsel %vm4204, %v4519, 0
      %v4550 = vsel %vm4204, %v4520, 0
      %v4553 = vsel %vm4204, %v4521, 0
      %v4556 = vsel %vm4204, %v4522, 0
      %v4559 = vsel %vm4204, %v4523, 0
      %v4562 = vsel %vm4204, %v4524, 0
      %v4565 = vsel %vm4204, %v4525, 0
      %v4568 = vsel %vm4204, %v4526, 0
      %v4571 = vsel %vm4204, %v4527, 0
      %v4574 = vsel %vm4204, %v4528, 0
      %v4577 = vsel %vm4204, %v4529, 0
      %v4580 = vsel %vm4204, %v4530, 0
      %v4583 = vsel %vm4204, %v4531, 0
      %v4586 = vsel %vm950, %v4535, 0
      %v4589 = vsel %vm950, %v4536, 0
      %4591 = vmatprep.subr.bf16.mxu0 0
      %4592 = vmatpush1.bf16.msra.mxu0 0
      %4593 = vmatprep.subr.bf16.mxu0 0
      %4594 = vmatpush1.bf16.msra.mxu0 0
      %4595 = vmatprep.subr.bf16.mxu0 0
      %4596 = vmatpush1.bf16.msra.mxu0 0
      %4597 = vmatprep.subr.bf16.mxu0 0
      %4598 = vmatpush1.bf16.msra.mxu0 0
      %4599 = vmatprep.subr.bf16.mxu0 0
      %4600 = vmatpush1.bf16.msra.mxu0 0
      %4601 = vmatprep.subr.bf16.mxu0 0
      %4602 = vmatpush1.bf16.msra.mxu0 0
      %4603 = vmatprep.subr.bf16.mxu0 0
      %4604 = vmatpush1.bf16.msra.mxu0 0
      %4605 = vmatprep.subr.bf16.mxu0 %v4589
      %4606 = vmatpush1.bf16.msra.mxu0 %v4586
      %4607 = vmatprep.subr.bf16.mxu0 0
      %4608 = vmatpush2.bf16.msra.mxu0 0
      %4609 = vmatprep.subr.bf16.mxu0 0
      %4610 = vmatpush2.bf16.msra.mxu0 0
      %4611 = vmatprep.subr.bf16.mxu0 0
      %4612 = vmatpush2.bf16.msra.mxu0 0
      %4613 = vmatprep.subr.bf16.mxu0 0
      %4614 = vmatpush2.bf16.msra.mxu0 0
      %4615 = vmatprep.subr.bf16.mxu0 0
      %4616 = vmatpush2.bf16.msra.mxu0 0
      %4617 = vmatprep.subr.bf16.mxu0 0
      %4618 = vmatpush2.bf16.msra.mxu0 0
      %4619 = vmatprep.subr.bf16.mxu0 0
      %4620 = vmatpush2.bf16.msra.mxu0 0
      %4621 = vmatprep.subr.bf16.mxu0 0
      %4622 = vmatpush2.bf16.msra.mxu0 0
      %4623 = vmatprep.mubr.bf16.mxu0 0
      %4624 = vmatmul.mubr.bf16.gmra.mxu0 %v4538
      %v4625 = vpop.f32.mrf.mxu0
      %v4626 = vadd.f32 %v4294, %v4625
      %v4627 = vpop.f32.mrf.mxu0
      %v4628 = vadd.f32 %v4296, %v4627
      %v4629 = vpop.f32.mrf.mxu0
      %v4630 = vadd.f32 %v4298, %v4629
      %v4631 = vpop.f32.mrf.mxu0
      %v4632 = vadd.f32 %v4300, %v4631
      %4633 = vmatprep.mubr.bf16.mxu0 0
      %4634 = vmatmul.mubr.bf16.gmra.mxu0 %v4541
      %v4635 = vpop.f32.mrf.mxu0
      %v4636 = vadd.f32 %v4304, %v4635
      %v4637 = vpop.f32.mrf.mxu0
      %v4638 = vadd.f32 %v4306, %v4637
      %v4639 = vpop.f32.mrf.mxu0
      %v4640 = vadd.f32 %v4308, %v4639
      %v4641 = vpop.f32.mrf.mxu0
      %v4642 = vadd.f32 %v4310, %v4641
      %4643 = vmatprep.mubr.bf16.mxu0 0
      %4644 = vmatmul.mubr.bf16.gmra.mxu0 %v4544
      %v4645 = vpop.f32.mrf.mxu0
      %v4646 = vadd.f32 %v4314, %v4645
      %v4647 = vpop.f32.mrf.mxu0
      %v4648 = vadd.f32 %v4316, %v4647
      %v4649 = vpop.f32.mrf.mxu0
      %v4650 = vadd.f32 %v4318, %v4649
      %v4651 = vpop.f32.mrf.mxu0
      %v4652 = vadd.f32 %v4320, %v4651
      %4653 = vmatprep.mubr.bf16.mxu0 0
      %4654 = vmatmul.mubr.bf16.gmra.mxu0 %v4547
      %v4655 = vpop.f32.mrf.mxu0
      %v4656 = vadd.f32 %v4324, %v4655
      %v4657 = vpop.f32.mrf.mxu0
      %v4658 = vadd.f32 %v4326, %v4657
      %v4659 = vpop.f32.mrf.mxu0
      %v4660 = vadd.f32 %v4328, %v4659
      %v4661 = vpop.f32.mrf.mxu0
      %v4662 = vadd.f32 %v4330, %v4661
      %4663 = vmatprep.mubr.bf16.mxu0 0
      %4664 = vmatmul.mubr.bf16.gmra.mxu0 %v4550
      %v4665 = vpop.f32.mrf.mxu0
      %v4666 = vadd.f32 %v4334, %v4665
      %v4667 = vpop.f32.mrf.mxu0
      %v4668 = vadd.f32 %v4336, %v4667
      %v4669 = vpop.f32.mrf.mxu0
      %v4670 = vadd.f32 %v4338, %v4669
      %v4671 = vpop.f32.mrf.mxu0
      %v4672 = vadd.f32 %v4340, %v4671
      %4673 = vmatprep.mubr.bf16.mxu0 0
      %4674 = vmatmul.mubr.bf16.gmra.mxu0 %v4553
      %v4675 = vpop.f32.mrf.mxu0
      %v4676 = vadd.f32 %v4344, %v4675
      %v4677 = vpop.f32.mrf.mxu0
      %v4678 = vadd.f32 %v4346, %v4677
      %v4679 = vpop.f32.mrf.mxu0
      %v4680 = vadd.f32 %v4348, %v4679
      %v4681 = vpop.f32.mrf.mxu0
      %v4682 = vadd.f32 %v4350, %v4681
      %4683 = vmatprep.mubr.bf16.mxu0 0
      %4684 = vmatmul.mubr.bf16.gmra.mxu0 %v4556
      %v4685 = vpop.f32.mrf.mxu0
      %v4686 = vadd.f32 %v4354, %v4685
      %v4687 = vpop.f32.mrf.mxu0
      %v4688 = vadd.f32 %v4356, %v4687
      %v4689 = vpop.f32.mrf.mxu0
      %v4690 = vadd.f32 %v4358, %v4689
      %v4691 = vpop.f32.mrf.mxu0
      %v4692 = vadd.f32 %v4360, %v4691
      %4693 = vmatprep.mubr.bf16.mxu0 0
      %4694 = vmatmul.mubr.bf16.gmra.mxu0 %v4559
      %v4695 = vpop.f32.mrf.mxu0
      %v4696 = vadd.f32 %v4364, %v4695
      %v4697 = vpop.f32.mrf.mxu0
      %v4698 = vadd.f32 %v4366, %v4697
      %v4699 = vpop.f32.mrf.mxu0
      %v4700 = vadd.f32 %v4368, %v4699
      %v4701 = vpop.f32.mrf.mxu0
      %v4702 = vadd.f32 %v4370, %v4701
      %4703 = vmatprep.mubr.bf16.mxu0 0
      %4704 = vmatmul.mubr.bf16.gmra.mxu0 %v4562
      %v4705 = vpop.f32.mrf.mxu0
      %v4706 = vadd.f32 %v4374, %v4705
      %v4707 = vpop.f32.mrf.mxu0
      %v4708 = vadd.f32 %v4376, %v4707
      %v4709 = vpop.f32.mrf.mxu0
      %v4710 = vadd.f32 %v4378, %v4709
      %v4711 = vpop.f32.mrf.mxu0
      %v4712 = vadd.f32 %v4380, %v4711
      %4713 = vmatprep.mubr.bf16.mxu0 0
      %4714 = vmatmul.mubr.bf16.gmra.mxu0 %v4565
      %v4715 = vpop.f32.mrf.mxu0
      %v4716 = vadd.f32 %v4384, %v4715
      %v4717 = vpop.f32.mrf.mxu0
      %v4718 = vadd.f32 %v4386, %v4717
      %v4719 = vpop.f32.mrf.mxu0
      %v4720 = vadd.f32 %v4388, %v4719
      %v4721 = vpop.f32.mrf.mxu0
      %v4722 = vadd.f32 %v4390, %v4721
      %4723 = vmatprep.mubr.bf16.mxu0 0
      %4724 = vmatmul.mubr.bf16.gmra.mxu0 %v4568
      %v4725 = vpop.f32.mrf.mxu0
      %v4726 = vadd.f32 %v4394, %v4725
      %v4727 = vpop.f32.mrf.mxu0
      %v4728 = vadd.f32 %v4396, %v4727
      %v4729 = vpop.f32.mrf.mxu0
      %v4730 = vadd.f32 %v4398, %v4729
      %v4731 = vpop.f32.mrf.mxu0
      %v4732 = vadd.f32 %v4400, %v4731
      %4733 = vmatprep.mubr.bf16.mxu0 0
      %4734 = vmatmul.mubr.bf16.gmra.mxu0 %v4571
      %v4735 = vpop.f32.mrf.mxu0
      %v4736 = vadd.f32 %v4404, %v4735
      %v4737 = vpop.f32.mrf.mxu0
      %v4738 = vadd.f32 %v4406, %v4737
      %v4739 = vpop.f32.mrf.mxu0
      %v4740 = vadd.f32 %v4408, %v4739
      %v4741 = vpop.f32.mrf.mxu0
      %v4742 = vadd.f32 %v4410, %v4741
      %4743 = vmatprep.mubr.bf16.mxu0 0
      %4744 = vmatmul.mubr.bf16.gmra.mxu0 %v4574
      %v4745 = vpop.f32.mrf.mxu0
      %v4746 = vadd.f32 %v4414, %v4745
      %v4747 = vpop.f32.mrf.mxu0
      %v4748 = vadd.f32 %v4416, %v4747
      %v4749 = vpop.f32.mrf.mxu0
      %v4750 = vadd.f32 %v4418, %v4749
      %v4751 = vpop.f32.mrf.mxu0
      %v4752 = vadd.f32 %v4420, %v4751
      %4753 = vmatprep.mubr.bf16.mxu0 0
      %4754 = vmatmul.mubr.bf16.gmra.mxu0 %v4577
      %v4755 = vpop.f32.mrf.mxu0
      %v4756 = vadd.f32 %v4424, %v4755
      %v4757 = vpop.f32.mrf.mxu0
      %v4758 = vadd.f32 %v4426, %v4757
      %v4759 = vpop.f32.mrf.mxu0
      %v4760 = vadd.f32 %v4428, %v4759
      %v4761 = vpop.f32.mrf.mxu0
      %v4762 = vadd.f32 %v4430, %v4761
      %4763 = vmatprep.mubr.bf16.mxu0 0
      %4764 = vmatmul.mubr.bf16.gmra.mxu0 %v4580
      %v4765 = vpop.f32.mrf.mxu0
      %v4766 = vadd.f32 %v4434, %v4765
      %v4767 = vpop.f32.mrf.mxu0
      %v4768 = vadd.f32 %v4436, %v4767
      %v4769 = vpop.f32.mrf.mxu0
      %v4770 = vadd.f32 %v4438, %v4769
      %v4771 = vpop.f32.mrf.mxu0
      %v4772 = vadd.f32 %v4440, %v4771
      %4773 = vmatprep.mubr.bf16.mxu0 0
      %4774 = vmatmul.mubr.bf16.gmra.mxu0 %v4583
      %v4775 = vpop.f32.mrf.mxu0
      %v4776 = vadd.f32 %v4444, %v4775
      %v4777 = vpop.f32.mrf.mxu0
      %v4778 = vadd.f32 %v4446, %v4777
      %v4779 = vpop.f32.mrf.mxu0
      %v4780 = vadd.f32 %v4448, %v4779
      %v4781 = vpop.f32.mrf.mxu0
      %v4782 = vadd.f32 %v4450, %v4781
      %4783 = vdwg.mxu0
      %v4800 = vrot.slane %v385, 5
      %v4801 = vrot.slane %v4800, 4
      %v4802 = vrot.slane %v386, 5
      %v4803 = vsel %vm1503, %v4801, %v4802
      %v4804 = vrot.slane %v4802, 4
      %v4805 = vrot.slane %v387, 5
      %v4806 = vsel %vm1503, %v4804, %v4805
      %v4807 = vrot.slane %v388, 5
      %v4808 = vrot.slane %v4807, 4
      %v4809 = vrot.slane %v389, 5
      %v4810 = vsel %vm1503, %v4808, %v4809
      %v4811 = vrot.slane %v4809, 4
      %v4812 = vrot.slane %v390, 5
      %v4813 = vsel %vm1503, %v4811, %v4812
      %v4814 = vrot.slane %v391, 5
      %v4815 = vrot.slane %v4814, 4
      %v4816 = vrot.slane %v392, 5
      %v4817 = vsel %vm1503, %v4815, %v4816
      %v4818 = vrot.slane %v4816, 4
      %v4819 = vrot.slane %v393, 5
      %v4820 = vsel %vm1503, %v4818, %v4819
      %v4821 = vrot.slane %v394, 5
      %v4822 = vrot.slane %v4821, 4
      %v4823 = vrot.slane %v395, 5
      %v4824 = vsel %vm1503, %v4822, %v4823
      %v4825 = vrot.slane %v4823, 4
      %v4826 = vrot.slane %v396, 5
      %v4827 = vsel %vm1503, %v4825, %v4826
      %v4828 = vrot.slane %v397, 5
      %v4829 = vrot.slane %v4828, 4
      %v4830 = vrot.slane %v398, 5
      %v4831 = vsel %vm1503, %v4829, %v4830
      %v4832 = vrot.slane %v4830, 4
      %v4833 = vrot.slane %v399, 5
      %v4834 = vsel %vm1503, %v4832, %v4833
      %v4835 = vrot.slane %v400, 5
      %v4836 = vrot.slane %v4835, 4
      %v4837 = vrot.slane %v401, 5
      %v4838 = vsel %vm1503, %v4836, %v4837
      %v4839 = vrot.slane %v4837, 4
      %v4840 = vrot.slane %v402, 5
      %v4841 = vsel %vm1503, %v4839, %v4840
      %v4842 = vrot.slane %v403, 5
      %v4843 = vrot.slane %v4842, 4
      %v4844 = vrot.slane %v404, 5
      %v4845 = vsel %vm1503, %v4843, %v4844
      %v4846 = vrot.slane %v4844, 4
      %v4847 = vrot.slane %v405, 5
      %v4848 = vsel %vm1503, %v4846, %v4847
      %v4849 = vrot.slane %v406, 5
      %v4850 = vrot.slane %v4849, 4
      %v4851 = vrot.slane %v407, 5
      %v4852 = vsel %vm1503, %v4850, %v4851
      %v4853 = vrot.slane %v4851, 4
      %v4854 = vrot.slane %v408, 5
      %v4855 = vsel %vm1503, %v4853, %v4854
      %v4856 = vrot.slane %v409, 5
      %v4857 = vrot.slane %v4856, 4
      %v4858 = vrot.slane %v410, 5
      %v4859 = vsel %vm1503, %v4857, %v4858
      %v4860 = vrot.slane %v4858, 4
      %v4861 = vrot.slane %v411, 5
      %v4862 = vsel %vm1503, %v4860, %v4861
      %v4863 = vrot.slane %v412, 5
      %v4864 = vrot.slane %v4863, 4
      %v4865 = vrot.slane %v413, 5
      %v4866 = vsel %vm1503, %v4864, %v4865
      %v4867 = vrot.slane %v4865, 4
      %v4868 = vrot.slane %v414, 5
      %v4869 = vsel %vm1503, %v4867, %v4868
      %v4870 = vrot.slane %v415, 5
      %v4871 = vrot.slane %v4870, 4
      %v4872 = vrot.slane %v416, 5
      %v4873 = vsel %vm1503, %v4871, %v4872
      %v4874 = vrot.slane %v4872, 4
      %v4875 = vrot.slane %v417, 5
      %v4876 = vsel %vm1503, %v4874, %v4875
      %v4877 = vrot.slane %v418, 5
      %v4878 = vrot.slane %v4877, 4
      %v4879 = vrot.slane %v419, 5
      %v4880 = vsel %vm1503, %v4878, %v4879
      %v4881 = vrot.slane %v4879, 4
      %v4882 = vrot.slane %v420, 5
      %v4883 = vsel %vm1503, %v4881, %v4882
      %v4884 = vrot.slane %v421, 5
      %v4885 = vrot.slane %v4884, 4
      %v4886 = vrot.slane %v422, 5
      %v4887 = vsel %vm1503, %v4885, %v4886
      %v4888 = vrot.slane %v4886, 4
      %v4889 = vrot.slane %v423, 5
      %v4890 = vsel %vm1503, %v4888, %v4889
      %v4891 = vrot.slane %v424, 5
      %v4892 = vrot.slane %v4891, 4
      %v4893 = vrot.slane %v425, 5
      %v4894 = vsel %vm1503, %v4892, %v4893
      %v4895 = vrot.slane %v4893, 4
      %v4896 = vrot.slane %v426, 5
      %v4897 = vsel %vm1503, %v4895, %v4896
      %v4898 = vrot.slane %v427, 5
      %v4899 = vrot.slane %v4898, 4
      %v4900 = vrot.slane %v428, 5
      %v4901 = vsel %vm1503, %v4899, %v4900
      %v4902 = vrot.slane %v4900, 4
      %v4903 = vrot.slane %v429, 5
      %v4904 = vsel %vm1503, %v4902, %v4903
      %v4905 = vrot.slane %v430, 5
      %v4906 = vrot.slane %v4905, 4
      %v4907 = vrot.slane %v431, 5
      %v4908 = vsel %vm1503, %v4906, %v4907
      %v4909 = vrot.slane %v4907, 4
      %v4910 = vrot.slane %v432, 5
      %v4911 = vsel %vm1503, %v4909, %v4910
      %v4912 = vld [vmem:[%s3 + $0x8] sm:$0x33]
      %v4913 = vunpack.c.l.b16 %v4803
      %v4914 = vunpack.c.l.b16 %v4806
      %v4915 = vunpack.c.l.b16 %v4810
      %v4916 = vunpack.c.l.b16 %v4813
      %v4917 = vunpack.c.l.b16 %v4817
      %v4918 = vunpack.c.l.b16 %v4820
      %v4919 = vunpack.c.l.b16 %v4824
      %v4920 = vunpack.c.l.b16 %v4827
      %v4921 = vunpack.c.l.b16 %v4831
      %v4922 = vunpack.c.l.b16 %v4834
      %v4923 = vunpack.c.l.b16 %v4838
      %v4924 = vunpack.c.l.b16 %v4841
      %v4925 = vunpack.c.l.b16 %v4845
      %v4926 = vunpack.c.l.b16 %v4848
      %v4927 = vunpack.c.l.b16 %v4852
      %v4928 = vunpack.c.l.b16 %v4855
      %v4929 = vunpack.c.l.b16 %v4859
      %v4930 = vunpack.c.l.b16 %v4862
      %v4931 = vunpack.c.l.b16 %v4866
      %v4932 = vunpack.c.l.b16 %v4869
      %v4933 = vunpack.c.l.b16 %v4873
      %v4934 = vunpack.c.l.b16 %v4876
      %v4935 = vunpack.c.l.b16 %v4880
      %v4936 = vunpack.c.l.b16 %v4883
      %v4937 = vunpack.c.l.b16 %v4887
      %v4938 = vunpack.c.l.b16 %v4890
      %v4939 = vunpack.c.l.b16 %v4894
      %v4940 = vunpack.c.l.b16 %v4897
      %v4941 = vunpack.c.l.b16 %v4901
      %v4942 = vunpack.c.l.b16 %v4904
      %v4943 = vunpack.c.l.b16 %v4908
      %v4944 = vunpack.c.l.b16 %v4911
      %v4945 = vpack.c.b16 %v4914, %v4913
      %v4946 = vpack.c.b16 %v4916, %v4915
      %v4947 = vpack.c.b16 %v4918, %v4917
      %v4948 = vpack.c.b16 %v4920, %v4919
      %v4949 = vpack.c.b16 %v4922, %v4921
      %v4950 = vpack.c.b16 %v4924, %v4923
      %v4951 = vpack.c.b16 %v4926, %v4925
      %v4952 = vpack.c.b16 %v4928, %v4927
      %v4953 = vpack.c.b16 %v4930, %v4929
      %v4954 = vpack.c.b16 %v4932, %v4931
      %v4955 = vpack.c.b16 %v4934, %v4933
      %v4956 = vpack.c.b16 %v4936, %v4935
      %v4957 = vpack.c.b16 %v4938, %v4937
      %v4958 = vpack.c.b16 %v4940, %v4939
      %v4959 = vpack.c.b16 %v4942, %v4941
      %v4960 = vpack.c.b16 %v4944, %v4943
      %v4962 = vunpack.c.l.b16 %v4912
      %v4963 = vunpack.c.h.b16 %v4912
      %v4964 = vpack.c.b16 %v4962, %v4962
      %v4965 = vpack.c.b16 %v4963, %v4963
      %v4967 = vsel %vm4204, %v4945, 0
      %v4970 = vsel %vm4204, %v4946, 0
      %v4973 = vsel %vm4204, %v4947, 0
      %v4976 = vsel %vm4204, %v4948, 0
      %v4979 = vsel %vm4204, %v4949, 0
      %v4982 = vsel %vm4204, %v4950, 0
      %v4985 = vsel %vm4204, %v4951, 0
      %v4988 = vsel %vm4204, %v4952, 0
      %v4991 = vsel %vm4204, %v4953, 0
      %v4994 = vsel %vm4204, %v4954, 0
      %v4997 = vsel %vm4204, %v4955, 0
      %v5000 = vsel %vm4204, %v4956, 0
      %v5003 = vsel %vm4204, %v4957, 0
      %v5006 = vsel %vm4204, %v4958, 0
      %v5009 = vsel %vm4204, %v4959, 0
      %v5012 = vsel %vm4204, %v4960, 0
      %v5015 = vsel %vm950, %v4964, 0
      %v5018 = vsel %vm950, %v4965, 0
      %5020 = vmatprep.subr.bf16.mxu0 0
      %5021 = vmatpush1.bf16.msra.mxu0 0
      %5022 = vmatprep.subr.bf16.mxu0 0
      %5023 = vmatpush1.bf16.msra.mxu0 0
      %5024 = vmatprep.subr.bf16.mxu0 0
      %5025 = vmatpush1.bf16.msra.mxu0 0
      %5026 = vmatprep.subr.bf16.mxu0 0
      %5027 = vmatpush1.bf16.msra.mxu0 0
      %5028 = vmatprep.subr.bf16.mxu0 0
      %5029 = vmatpush1.bf16.msra.mxu0 0
      %5030 = vmatprep.subr.bf16.mxu0 0
      %5031 = vmatpush1.bf16.msra.mxu0 0
      %5032 = vmatprep.subr.bf16.mxu0 0
      %5033 = vmatpush1.bf16.msra.mxu0 0
      %5034 = vmatprep.subr.bf16.mxu0 %v5018
      %5035 = vmatpush1.bf16.msra.mxu0 %v5015
      %5036 = vmatprep.subr.bf16.mxu0 0
      %5037 = vmatpush2.bf16.msra.mxu0 0
      %5038 = vmatprep.subr.bf16.mxu0 0
      %5039 = vmatpush2.bf16.msra.mxu0 0
      %5040 = vmatprep.subr.bf16.mxu0 0
      %5041 = vmatpush2.bf16.msra.mxu0 0
      %5042 = vmatprep.subr.bf16.mxu0 0
      %5043 = vmatpush2.bf16.msra.mxu0 0
      %5044 = vmatprep.subr.bf16.mxu0 0
      %5045 = vmatpush2.bf16.msra.mxu0 0
      %5046 = vmatprep.subr.bf16.mxu0 0
      %5047 = vmatpush2.bf16.msra.mxu0 0
      %5048 = vmatprep.subr.bf16.mxu0 0
      %5049 = vmatpush2.bf16.msra.mxu0 0
      %5050 = vmatprep.subr.bf16.mxu0 0
      %5051 = vmatpush2.bf16.msra.mxu0 0
      %5052 = vmatprep.mubr.bf16.mxu0 0
      %5053 = vmatmul.mubr.bf16.gmra.mxu0 %v4967
      %v5054 = vpop.f32.mrf.mxu0
      %v5055 = vadd.f32 0.0, %v5054
      %v5056 = vpop.f32.mrf.mxu0
      %v5057 = vadd.f32 0.0, %v5056
      %v5058 = vpop.f32.mrf.mxu0
      %v5059 = vadd.f32 0.0, %v5058
      %v5060 = vpop.f32.mrf.mxu0
      %v5061 = vadd.f32 0.0, %v5060
      %5062 = vmatprep.mubr.bf16.mxu0 0
      %5063 = vmatmul.mubr.bf16.gmra.mxu0 %v4970
      %v5064 = vpop.f32.mrf.mxu0
      %v5065 = vadd.f32 0.0, %v5064
      %v5066 = vpop.f32.mrf.mxu0
      %v5067 = vadd.f32 0.0, %v5066
      %v5068 = vpop.f32.mrf.mxu0
      %v5069 = vadd.f32 0.0, %v5068
      %v5070 = vpop.f32.mrf.mxu0
      %v5071 = vadd.f32 0.0, %v5070
      %5072 = vmatprep.mubr.bf16.mxu0 0
      %5073 = vmatmul.mubr.bf16.gmra.mxu0 %v4973
      %v5074 = vpop.f32.mrf.mxu0
      %v5075 = vadd.f32 0.0, %v5074
      %v5076 = vpop.f32.mrf.mxu0
      %v5077 = vadd.f32 0.0, %v5076
      %v5078 = vpop.f32.mrf.mxu0
      %v5079 = vadd.f32 0.0, %v5078
      %v5080 = vpop.f32.mrf.mxu0
      %v5081 = vadd.f32 0.0, %v5080
      %5082 = vmatprep.mubr.bf16.mxu0 0
      %5083 = vmatmul.mubr.bf16.gmra.mxu0 %v4976
      %v5084 = vpop.f32.mrf.mxu0
      %v5085 = vadd.f32 0.0, %v5084
      %v5086 = vpop.f32.mrf.mxu0
      %v5087 = vadd.f32 0.0, %v5086
      %v5088 = vpop.f32.mrf.mxu0
      %v5089 = vadd.f32 0.0, %v5088
      %v5090 = vpop.f32.mrf.mxu0
      %v5091 = vadd.f32 0.0, %v5090
      %5092 = vmatprep.mubr.bf16.mxu0 0
      %5093 = vmatmul.mubr.bf16.gmra.mxu0 %v4979
      %v5094 = vpop.f32.mrf.mxu0
      %v5095 = vadd.f32 0.0, %v5094
      %v5096 = vpop.f32.mrf.mxu0
      %v5097 = vadd.f32 0.0, %v5096
      %v5098 = vpop.f32.mrf.mxu0
      %v5099 = vadd.f32 0.0, %v5098
      %v5100 = vpop.f32.mrf.mxu0
      %v5101 = vadd.f32 0.0, %v5100
      %5102 = vmatprep.mubr.bf16.mxu0 0
      %5103 = vmatmul.mubr.bf16.gmra.mxu0 %v4982
      %v5104 = vpop.f32.mrf.mxu0
      %v5105 = vadd.f32 0.0, %v5104
      %v5106 = vpop.f32.mrf.mxu0
      %v5107 = vadd.f32 0.0, %v5106
      %v5108 = vpop.f32.mrf.mxu0
      %v5109 = vadd.f32 0.0, %v5108
      %v5110 = vpop.f32.mrf.mxu0
      %v5111 = vadd.f32 0.0, %v5110
      %5112 = vmatprep.mubr.bf16.mxu0 0
      %5113 = vmatmul.mubr.bf16.gmra.mxu0 %v4985
      %v5114 = vpop.f32.mrf.mxu0
      %v5115 = vadd.f32 0.0, %v5114
      %v5116 = vpop.f32.mrf.mxu0
      %v5117 = vadd.f32 0.0, %v5116
      %v5118 = vpop.f32.mrf.mxu0
      %v5119 = vadd.f32 0.0, %v5118
      %v5120 = vpop.f32.mrf.mxu0
      %v5121 = vadd.f32 0.0, %v5120
      %5122 = vmatprep.mubr.bf16.mxu0 0
      %5123 = vmatmul.mubr.bf16.gmra.mxu0 %v4988
      %v5124 = vpop.f32.mrf.mxu0
      %v5125 = vadd.f32 0.0, %v5124
      %v5126 = vpop.f32.mrf.mxu0
      %v5127 = vadd.f32 0.0, %v5126
      %v5128 = vpop.f32.mrf.mxu0
      %v5129 = vadd.f32 0.0, %v5128
      %v5130 = vpop.f32.mrf.mxu0
      %v5131 = vadd.f32 0.0, %v5130
      %5132 = vmatprep.mubr.bf16.mxu0 0
      %5133 = vmatmul.mubr.bf16.gmra.mxu0 %v4991
      %v5134 = vpop.f32.mrf.mxu0
      %v5135 = vadd.f32 0.0, %v5134
      %v5136 = vpop.f32.mrf.mxu0
      %v5137 = vadd.f32 0.0, %v5136
      %v5138 = vpop.f32.mrf.mxu0
      %v5139 = vadd.f32 0.0, %v5138
      %v5140 = vpop.f32.mrf.mxu0
      %v5141 = vadd.f32 0.0, %v5140
      %5142 = vmatprep.mubr.bf16.mxu0 0
      %5143 = vmatmul.mubr.bf16.gmra.mxu0 %v4994
      %v5144 = vpop.f32.mrf.mxu0
      %v5145 = vadd.f32 0.0, %v5144
      %v5146 = vpop.f32.mrf.mxu0
      %v5147 = vadd.f32 0.0, %v5146
      %v5148 = vpop.f32.mrf.mxu0
      %v5149 = vadd.f32 0.0, %v5148
      %v5150 = vpop.f32.mrf.mxu0
      %v5151 = vadd.f32 0.0, %v5150
      %5152 = vmatprep.mubr.bf16.mxu0 0
      %5153 = vmatmul.mubr.bf16.gmra.mxu0 %v4997
      %v5154 = vpop.f32.mrf.mxu0
      %v5155 = vadd.f32 0.0, %v5154
      %v5156 = vpop.f32.mrf.mxu0
      %v5157 = vadd.f32 0.0, %v5156
      %v5158 = vpop.f32.mrf.mxu0
      %v5159 = vadd.f32 0.0, %v5158
      %v5160 = vpop.f32.mrf.mxu0
      %v5161 = vadd.f32 0.0, %v5160
      %5162 = vmatprep.mubr.bf16.mxu0 0
      %5163 = vmatmul.mubr.bf16.gmra.mxu0 %v5000
      %v5164 = vpop.f32.mrf.mxu0
      %v5165 = vadd.f32 0.0, %v5164
      %v5166 = vpop.f32.mrf.mxu0
      %v5167 = vadd.f32 0.0, %v5166
      %v5168 = vpop.f32.mrf.mxu0
      %v5169 = vadd.f32 0.0, %v5168
      %v5170 = vpop.f32.mrf.mxu0
      %v5171 = vadd.f32 0.0, %v5170
      %5172 = vmatprep.mubr.bf16.mxu0 0
      %5173 = vmatmul.mubr.bf16.gmra.mxu0 %v5003
      %v5174 = vpop.f32.mrf.mxu0
      %v5175 = vadd.f32 0.0, %v5174
      %v5176 = vpop.f32.mrf.mxu0
      %v5177 = vadd.f32 0.0, %v5176
      %v5178 = vpop.f32.mrf.mxu0
      %v5179 = vadd.f32 0.0, %v5178
      %v5180 = vpop.f32.mrf.mxu0
      %v5181 = vadd.f32 0.0, %v5180
      %5182 = vmatprep.mubr.bf16.mxu0 0
      %5183 = vmatmul.mubr.bf16.gmra.mxu0 %v5006
      %v5184 = vpop.f32.mrf.mxu0
      %v5185 = vadd.f32 0.0, %v5184
      %v5186 = vpop.f32.mrf.mxu0
      %v5187 = vadd.f32 0.0, %v5186
      %v5188 = vpop.f32.mrf.mxu0
      %v5189 = vadd.f32 0.0, %v5188
      %v5190 = vpop.f32.mrf.mxu0
      %v5191 = vadd.f32 0.0, %v5190
      %5192 = vmatprep.mubr.bf16.mxu0 0
      %5193 = vmatmul.mubr.bf16.gmra.mxu0 %v5009
      %v5194 = vpop.f32.mrf.mxu0
      %v5195 = vadd.f32 0.0, %v5194
      %v5196 = vpop.f32.mrf.mxu0
      %v5197 = vadd.f32 0.0, %v5196
      %v5198 = vpop.f32.mrf.mxu0
      %v5199 = vadd.f32 0.0, %v5198
      %v5200 = vpop.f32.mrf.mxu0
      %v5201 = vadd.f32 0.0, %v5200
      %5202 = vmatprep.mubr.bf16.mxu0 0
      %5203 = vmatmul.mubr.bf16.gmra.mxu0 %v5012
      %v5204 = vpop.f32.mrf.mxu0
      %v5205 = vadd.f32 0.0, %v5204
      %v5206 = vpop.f32.mrf.mxu0
      %v5207 = vadd.f32 0.0, %v5206
      %v5208 = vpop.f32.mrf.mxu0
      %v5209 = vadd.f32 0.0, %v5208
      %v5210 = vpop.f32.mrf.mxu0
      %v5211 = vadd.f32 0.0, %v5210
      %5212 = vdwg.mxu0
      %v5213 = vadd.f32 %v4626, %v5055
      %v5214 = vadd.f32 %v4628, %v5057
      %v5215 = vadd.f32 %v4630, %v5059
      %v5216 = vadd.f32 %v4632, %v5061
      %v5217 = vadd.f32 %v4636, %v5065
      %v5218 = vadd.f32 %v4638, %v5067
      %v5219 = vadd.f32 %v4640, %v5069
      %v5220 = vadd.f32 %v4642, %v5071
      %v5221 = vadd.f32 %v4646, %v5075
      %v5222 = vadd.f32 %v4648, %v5077
      %v5223 = vadd.f32 %v4650, %v5079
      %v5224 = vadd.f32 %v4652, %v5081
      %v5225 = vadd.f32 %v4656, %v5085
      %v5226 = vadd.f32 %v4658, %v5087
      %v5227 = vadd.f32 %v4660, %v5089
      %v5228 = vadd.f32 %v4662, %v5091
      %v5229 = vadd.f32 %v4666, %v5095
      %v5230 = vadd.f32 %v4668, %v5097
      %v5231 = vadd.f32 %v4670, %v5099
      %v5232 = vadd.f32 %v4672, %v5101
      %v5233 = vadd.f32 %v4676, %v5105
      %v5234 = vadd.f32 %v4678, %v5107
      %v5235 = vadd.f32 %v4680, %v5109
      %v5236 = vadd.f32 %v4682, %v5111
      %v5237 = vadd.f32 %v4686, %v5115
      %v5238 = vadd.f32 %v4688, %v5117
      %v5239 = vadd.f32 %v4690, %v5119
      %v5240 = vadd.f32 %v4692, %v5121
      %v5241 = vadd.f32 %v4696, %v5125
      %v5242 = vadd.f32 %v4698, %v5127
      %v5243 = vadd.f32 %v4700, %v5129
      %v5244 = vadd.f32 %v4702, %v5131
      %v5245 = vadd.f32 %v4706, %v5135
      %v5246 = vadd.f32 %v4708, %v5137
      %v5247 = vadd.f32 %v4710, %v5139
      %v5248 = vadd.f32 %v4712, %v5141
      %v5249 = vadd.f32 %v4716, %v5145
      %v5250 = vadd.f32 %v4718, %v5147
      %v5251 = vadd.f32 %v4720, %v5149
      %v5252 = vadd.f32 %v4722, %v5151
      %v5253 = vadd.f32 %v4726, %v5155
      %v5254 = vadd.f32 %v4728, %v5157
      %v5255 = vadd.f32 %v4730, %v5159
      %v5256 = vadd.f32 %v4732, %v5161
      %v5257 = vadd.f32 %v4736, %v5165
      %v5258 = vadd.f32 %v4738, %v5167
      %v5259 = vadd.f32 %v4740, %v5169
      %v5260 = vadd.f32 %v4742, %v5171
      %v5261 = vadd.f32 %v4746, %v5175
      %v5262 = vadd.f32 %v4748, %v5177
      %v5263 = vadd.f32 %v4750, %v5179
      %v5264 = vadd.f32 %v4752, %v5181
      %v5265 = vadd.f32 %v4756, %v5185
      %v5266 = vadd.f32 %v4758, %v5187
      %v5267 = vadd.f32 %v4760, %v5189
      %v5268 = vadd.f32 %v4762, %v5191
      %v5269 = vadd.f32 %v4766, %v5195
      %v5270 = vadd.f32 %v4768, %v5197
      %v5271 = vadd.f32 %v4770, %v5199
      %v5272 = vadd.f32 %v4772, %v5201
      %v5273 = vadd.f32 %v4776, %v5205
      %v5274 = vadd.f32 %v4778, %v5207
      %v5275 = vadd.f32 %v4780, %v5209
      %v5276 = vadd.f32 %v4782, %v5211
      %v5277 = vld [vmem:[%s3 + $0x8] sm:$0xcc]
      %v5280 = vunpack.c.l.b16 %v433
      %v5281 = vunpack.c.l.b16 %v434
      %v5282 = vpack.c.b16 %v5281, %v5280
      %v5284 = vunpack.c.l.b16 %v5277
      %v5285 = vunpack.c.h.b16 %v5277
      %v5286 = vpack.c.b16 %v5284, %v5284
      %v5287 = vpack.c.b16 %v5285, %v5285
      %v5288 = vrot.slane %v5286, 2
      %v5289 = vrot.slane %v5287, 2
      %v5291 = vsel %vm4204, %v5282, 0
      %v5294 = vsel %vm950, %v5288, 0
      %v5297 = vsel %vm950, %v5289, 0
      %5299 = vmatprep.subr.bf16.mxu0 0
      %5300 = vmatpush1.bf16.msra.mxu0 0
      %5301 = vmatprep.subr.bf16.mxu0 0
      %5302 = vmatpush1.bf16.msra.mxu0 0
      %5303 = vmatprep.subr.bf16.mxu0 0
      %5304 = vmatpush1.bf16.msra.mxu0 0
      %5305 = vmatprep.subr.bf16.mxu0 0
      %5306 = vmatpush1.bf16.msra.mxu0 0
      %5307 = vmatprep.subr.bf16.mxu0 0
      %5308 = vmatpush1.bf16.msra.mxu0 0
      %5309 = vmatprep.subr.bf16.mxu0 0
      %5310 = vmatpush1.bf16.msra.mxu0 0
      %5311 = vmatprep.subr.bf16.mxu0 0
      %5312 = vmatpush1.bf16.msra.mxu0 0
      %5313 = vmatprep.subr.bf16.mxu0 %v5297
      %5314 = vmatpush1.bf16.msra.mxu0 %v5294
      %5315 = vmatprep.subr.bf16.mxu0 0
      %5316 = vmatpush2.bf16.msra.mxu0 0
      %5317 = vmatprep.subr.bf16.mxu0 0
      %5318 = vmatpush2.bf16.msra.mxu0 0
      %5319 = vmatprep.subr.bf16.mxu0 0
      %5320 = vmatpush2.bf16.msra.mxu0 0
      %5321 = vmatprep.subr.bf16.mxu0 0
      %5322 = vmatpush2.bf16.msra.mxu0 0
      %5323 = vmatprep.subr.bf16.mxu0 0
      %5324 = vmatpush2.bf16.msra.mxu0 0
      %5325 = vmatprep.subr.bf16.mxu0 0
      %5326 = vmatpush2.bf16.msra.mxu0 0
      %5327 = vmatprep.subr.bf16.mxu0 0
      %5328 = vmatpush2.bf16.msra.mxu0 0
      %5329 = vmatprep.subr.bf16.mxu0 0
      %5330 = vmatpush2.bf16.msra.mxu0 0
      %5331 = vmatprep.mubr.bf16.mxu0 0
      %5332 = vmatmul.mubr.bf16.gmra.mxu0 %v4541
      %v5333 = vpop.f32.mrf.mxu0
      %v5334 = vadd.f32 0.0, %v5333
      %v5335 = vpop.f32.mrf.mxu0
      %v5336 = vadd.f32 0.0, %v5335
      %v5337 = vpop.f32.mrf.mxu0
      %v5338 = vadd.f32 0.0, %v5337
      %v5339 = vpop.f32.mrf.mxu0
      %v5340 = vadd.f32 0.0, %v5339
      %5341 = vmatprep.mubr.bf16.mxu0 0
      %5342 = vmatmul.mubr.bf16.gmra.mxu0 %v4544
      %v5343 = vpop.f32.mrf.mxu0
      %v5344 = vadd.f32 0.0, %v5343
      %v5345 = vpop.f32.mrf.mxu0
      %v5346 = vadd.f32 0.0, %v5345
      %v5347 = vpop.f32.mrf.mxu0
      %v5348 = vadd.f32 0.0, %v5347
      %v5349 = vpop.f32.mrf.mxu0
      %v5350 = vadd.f32 0.0, %v5349
      %5351 = vmatprep.mubr.bf16.mxu0 0
      %5352 = vmatmul.mubr.bf16.gmra.mxu0 %v4547
      %v5353 = vpop.f32.mrf.mxu0
      %v5354 = vadd.f32 0.0, %v5353
      %v5355 = vpop.f32.mrf.mxu0
      %v5356 = vadd.f32 0.0, %v5355
      %v5357 = vpop.f32.mrf.mxu0
      %v5358 = vadd.f32 0.0, %v5357
      %v5359 = vpop.f32.mrf.mxu0
      %v5360 = vadd.f32 0.0, %v5359
      %5361 = vmatprep.mubr.bf16.mxu0 0
      %5362 = vmatmul.mubr.bf16.gmra.mxu0 %v4550
      %v5363 = vpop.f32.mrf.mxu0
      %v5364 = vadd.f32 0.0, %v5363
      %v5365 = vpop.f32.mrf.mxu0
      %v5366 = vadd.f32 0.0, %v5365
      %v5367 = vpop.f32.mrf.mxu0
      %v5368 = vadd.f32 0.0, %v5367
      %v5369 = vpop.f32.mrf.mxu0
      %v5370 = vadd.f32 0.0, %v5369
      %5371 = vmatprep.mubr.bf16.mxu0 0
      %5372 = vmatmul.mubr.bf16.gmra.mxu0 %v4553
      %v5373 = vpop.f32.mrf.mxu0
      %v5374 = vadd.f32 0.0, %v5373
      %v5375 = vpop.f32.mrf.mxu0
      %v5376 = vadd.f32 0.0, %v5375
      %v5377 = vpop.f32.mrf.mxu0
      %v5378 = vadd.f32 0.0, %v5377
      %v5379 = vpop.f32.mrf.mxu0
      %v5380 = vadd.f32 0.0, %v5379
      %5381 = vmatprep.mubr.bf16.mxu0 0
      %5382 = vmatmul.mubr.bf16.gmra.mxu0 %v4556
      %v5383 = vpop.f32.mrf.mxu0
      %v5384 = vadd.f32 0.0, %v5383
      %v5385 = vpop.f32.mrf.mxu0
      %v5386 = vadd.f32 0.0, %v5385
      %v5387 = vpop.f32.mrf.mxu0
      %v5388 = vadd.f32 0.0, %v5387
      %v5389 = vpop.f32.mrf.mxu0
      %v5390 = vadd.f32 0.0, %v5389
      %5391 = vmatprep.mubr.bf16.mxu0 0
      %5392 = vmatmul.mubr.bf16.gmra.mxu0 %v4559
      %v5393 = vpop.f32.mrf.mxu0
      %v5394 = vadd.f32 0.0, %v5393
      %v5395 = vpop.f32.mrf.mxu0
      %v5396 = vadd.f32 0.0, %v5395
      %v5397 = vpop.f32.mrf.mxu0
      %v5398 = vadd.f32 0.0, %v5397
      %v5399 = vpop.f32.mrf.mxu0
      %v5400 = vadd.f32 0.0, %v5399
      %5401 = vmatprep.mubr.bf16.mxu0 0
      %5402 = vmatmul.mubr.bf16.gmra.mxu0 %v4562
      %v5403 = vpop.f32.mrf.mxu0
      %v5404 = vadd.f32 0.0, %v5403
      %v5405 = vpop.f32.mrf.mxu0
      %v5406 = vadd.f32 0.0, %v5405
      %v5407 = vpop.f32.mrf.mxu0
      %v5408 = vadd.f32 0.0, %v5407
      %v5409 = vpop.f32.mrf.mxu0
      %v5410 = vadd.f32 0.0, %v5409
      %5411 = vmatprep.mubr.bf16.mxu0 0
      %5412 = vmatmul.mubr.bf16.gmra.mxu0 %v4565
      %v5413 = vpop.f32.mrf.mxu0
      %v5414 = vadd.f32 0.0, %v5413
      %v5415 = vpop.f32.mrf.mxu0
      %v5416 = vadd.f32 0.0, %v5415
      %v5417 = vpop.f32.mrf.mxu0
      %v5418 = vadd.f32 0.0, %v5417
      %v5419 = vpop.f32.mrf.mxu0
      %v5420 = vadd.f32 0.0, %v5419
      %5421 = vmatprep.mubr.bf16.mxu0 0
      %5422 = vmatmul.mubr.bf16.gmra.mxu0 %v4568
      %v5423 = vpop.f32.mrf.mxu0
      %v5424 = vadd.f32 0.0, %v5423
      %v5425 = vpop.f32.mrf.mxu0
      %v5426 = vadd.f32 0.0, %v5425
      %v5427 = vpop.f32.mrf.mxu0
      %v5428 = vadd.f32 0.0, %v5427
      %v5429 = vpop.f32.mrf.mxu0
      %v5430 = vadd.f32 0.0, %v5429
      %5431 = vmatprep.mubr.bf16.mxu0 0
      %5432 = vmatmul.mubr.bf16.gmra.mxu0 %v4571
      %v5433 = vpop.f32.mrf.mxu0
      %v5434 = vadd.f32 0.0, %v5433
      %v5435 = vpop.f32.mrf.mxu0
      %v5436 = vadd.f32 0.0, %v5435
      %v5437 = vpop.f32.mrf.mxu0
      %v5438 = vadd.f32 0.0, %v5437
      %v5439 = vpop.f32.mrf.mxu0
      %v5440 = vadd.f32 0.0, %v5439
      %5441 = vmatprep.mubr.bf16.mxu0 0
      %5442 = vmatmul.mubr.bf16.gmra.mxu0 %v4574
      %v5443 = vpop.f32.mrf.mxu0
      %v5444 = vadd.f32 0.0, %v5443
      %v5445 = vpop.f32.mrf.mxu0
      %v5446 = vadd.f32 0.0, %v5445
      %v5447 = vpop.f32.mrf.mxu0
      %v5448 = vadd.f32 0.0, %v5447
      %v5449 = vpop.f32.mrf.mxu0
      %v5450 = vadd.f32 0.0, %v5449
      %5451 = vmatprep.mubr.bf16.mxu0 0
      %5452 = vmatmul.mubr.bf16.gmra.mxu0 %v4577
      %v5453 = vpop.f32.mrf.mxu0
      %v5454 = vadd.f32 0.0, %v5453
      %v5455 = vpop.f32.mrf.mxu0
      %v5456 = vadd.f32 0.0, %v5455
      %v5457 = vpop.f32.mrf.mxu0
      %v5458 = vadd.f32 0.0, %v5457
      %v5459 = vpop.f32.mrf.mxu0
      %v5460 = vadd.f32 0.0, %v5459
      %5461 = vmatprep.mubr.bf16.mxu0 0
      %5462 = vmatmul.mubr.bf16.gmra.mxu0 %v4580
      %v5463 = vpop.f32.mrf.mxu0
      %v5464 = vadd.f32 0.0, %v5463
      %v5465 = vpop.f32.mrf.mxu0
      %v5466 = vadd.f32 0.0, %v5465
      %v5467 = vpop.f32.mrf.mxu0
      %v5468 = vadd.f32 0.0, %v5467
      %v5469 = vpop.f32.mrf.mxu0
      %v5470 = vadd.f32 0.0, %v5469
      %5471 = vmatprep.mubr.bf16.mxu0 0
      %5472 = vmatmul.mubr.bf16.gmra.mxu0 %v4583
      %v5473 = vpop.f32.mrf.mxu0
      %v5474 = vadd.f32 0.0, %v5473
      %v5475 = vpop.f32.mrf.mxu0
      %v5476 = vadd.f32 0.0, %v5475
      %v5477 = vpop.f32.mrf.mxu0
      %v5478 = vadd.f32 0.0, %v5477
      %v5479 = vpop.f32.mrf.mxu0
      %v5480 = vadd.f32 0.0, %v5479
      %5481 = vmatprep.mubr.bf16.mxu0 0
      %5482 = vmatmul.mubr.bf16.gmra.mxu0 %v5291
      %v5483 = vpop.f32.mrf.mxu0
      %v5484 = vadd.f32 0.0, %v5483
      %v5485 = vpop.f32.mrf.mxu0
      %v5486 = vadd.f32 0.0, %v5485
      %v5487 = vpop.f32.mrf.mxu0
      %v5488 = vadd.f32 0.0, %v5487
      %v5489 = vpop.f32.mrf.mxu0
      %v5490 = vadd.f32 0.0, %v5489
      %5491 = vdwg.mxu0
      %v5492 = vadd.f32 %v5213, %v5334
      %v5493 = vadd.f32 %v5214, %v5336
      %v5494 = vadd.f32 %v5215, %v5338
      %v5495 = vadd.f32 %v5216, %v5340
      %v5496 = vadd.f32 %v5217, %v5344
      %v5497 = vadd.f32 %v5218, %v5346
      %v5498 = vadd.f32 %v5219, %v5348
      %v5499 = vadd.f32 %v5220, %v5350
      %v5500 = vadd.f32 %v5221, %v5354
      %v5501 = vadd.f32 %v5222, %v5356
      %v5502 = vadd.f32 %v5223, %v5358
      %v5503 = vadd.f32 %v5224, %v5360
      %v5504 = vadd.f32 %v5225, %v5364
      %v5505 = vadd.f32 %v5226, %v5366
      %v5506 = vadd.f32 %v5227, %v5368
      %v5507 = vadd.f32 %v5228, %v5370
      %v5508 = vadd.f32 %v5229, %v5374
      %v5509 = vadd.f32 %v5230, %v5376
      %v5510 = vadd.f32 %v5231, %v5378
      %v5511 = vadd.f32 %v5232, %v5380
      %v5512 = vadd.f32 %v5233, %v5384
      %v5513 = vadd.f32 %v5234, %v5386
      %v5514 = vadd.f32 %v5235, %v5388
      %v5515 = vadd.f32 %v5236, %v5390
      %v5516 = vadd.f32 %v5237, %v5394
      %v5517 = vadd.f32 %v5238, %v5396
      %v5518 = vadd.f32 %v5239, %v5398
      %v5519 = vadd.f32 %v5240, %v5400
      %v5520 = vadd.f32 %v5241, %v5404
      %v5521 = vadd.f32 %v5242, %v5406
      %v5522 = vadd.f32 %v5243, %v5408
      %v5523 = vadd.f32 %v5244, %v5410
      %v5524 = vadd.f32 %v5245, %v5414
      %v5525 = vadd.f32 %v5246, %v5416
      %v5526 = vadd.f32 %v5247, %v5418
      %v5527 = vadd.f32 %v5248, %v5420
      %v5528 = vadd.f32 %v5249, %v5424
      %v5529 = vadd.f32 %v5250, %v5426
      %v5530 = vadd.f32 %v5251, %v5428
      %v5531 = vadd.f32 %v5252, %v5430
      %v5532 = vadd.f32 %v5253, %v5434
      %v5533 = vadd.f32 %v5254, %v5436
      %v5534 = vadd.f32 %v5255, %v5438
      %v5535 = vadd.f32 %v5256, %v5440
      %v5536 = vadd.f32 %v5257, %v5444
      %v5537 = vadd.f32 %v5258, %v5446
      %v5538 = vadd.f32 %v5259, %v5448
      %v5539 = vadd.f32 %v5260, %v5450
      %v5540 = vadd.f32 %v5261, %v5454
      %v5541 = vadd.f32 %v5262, %v5456
      %v5542 = vadd.f32 %v5263, %v5458
      %v5543 = vadd.f32 %v5264, %v5460
      %v5544 = vadd.f32 %v5265, %v5464
      %v5545 = vadd.f32 %v5266, %v5466
      %v5546 = vadd.f32 %v5267, %v5468
      %v5547 = vadd.f32 %v5268, %v5470
      %v5548 = vadd.f32 %v5269, %v5474
      %v5549 = vadd.f32 %v5270, %v5476
      %v5550 = vadd.f32 %v5271, %v5478
      %v5551 = vadd.f32 %v5272, %v5480
      %v5552 = vadd.f32 %v5273, %v5484
      %v5553 = vadd.f32 %v5274, %v5486
      %v5554 = vadd.f32 %v5275, %v5488
      %v5555 = vadd.f32 %v5276, %v5490
      %v5557 = vshrl.u32 %v433, 16
      %v5559 = vrot.slane %v5557, 4
      %v5560 = vshll.u32 %v433, 16
      %v5562 = vrot.slane %v5560, 5
      %v5563 = vor.u32 %v5559, %v5562
      %v5564 = vrot.slane %v5563, 4
      %v5566 = vshll.u32 %v434, 16
      %v5568 = vrot.slane %v5566, 5
      %v5569 = vsel %vm442, %v5564, %v5568
      %v5570 = vshrl.u32 %v434, 16
      %v5572 = vrot.slane %v5570, 4
      %v5573 = vor.u32 %v5572, %v5568
      %v5574 = vrot.slane %v5573, 4
      %v5576 = vshll.u32 %v435, 16
      %v5578 = vrot.slane %v5576, 5
      %v5579 = vsel %vm442, %v5574, %v5578
      %v5580 = vld [vmem:[%s3 + $0x10] sm:$0x33]
      %v5581 = vunpack.c.l.b16 %v5569
      %v5582 = vunpack.c.l.b16 %v5579
      %v5583 = vpack.c.b16 %v5582, %v5581
      %v5585 = vunpack.c.l.b16 %v5580
      %v5586 = vunpack.c.h.b16 %v5580
      %v5587 = vpack.c.b16 %v5585, %v5585
      %v5588 = vpack.c.b16 %v5586, %v5586
      %v5590 = vsel %vm4204, %v5583, 0
      %v5593 = vsel %vm950, %v5587, 0
      %v5596 = vsel %vm950, %v5588, 0
      %5598 = vmatprep.subr.bf16.mxu0 0
      %5599 = vmatpush1.bf16.msra.mxu0 0
      %5600 = vmatprep.subr.bf16.mxu0 0
      %5601 = vmatpush1.bf16.msra.mxu0 0
      %5602 = vmatprep.subr.bf16.mxu0 0
      %5603 = vmatpush1.bf16.msra.mxu0 0
      %5604 = vmatprep.subr.bf16.mxu0 0
      %5605 = vmatpush1.bf16.msra.mxu0 0
      %5606 = vmatprep.subr.bf16.mxu0 0
      %5607 = vmatpush1.bf16.msra.mxu0 0
      %5608 = vmatprep.subr.bf16.mxu0 0
      %5609 = vmatpush1.bf16.msra.mxu0 0
      %5610 = vmatprep.subr.bf16.mxu0 0
      %5611 = vmatpush1.bf16.msra.mxu0 0
      %5612 = vmatprep.subr.bf16.mxu0 %v5596
      %5613 = vmatpush1.bf16.msra.mxu0 %v5593
      %5614 = vmatprep.subr.bf16.mxu0 0
      %5615 = vmatpush2.bf16.msra.mxu0 0
      %5616 = vmatprep.subr.bf16.mxu0 0
      %5617 = vmatpush2.bf16.msra.mxu0 0
      %5618 = vmatprep.subr.bf16.mxu0 0
      %5619 = vmatpush2.bf16.msra.mxu0 0
      %5620 = vmatprep.subr.bf16.mxu0 0
      %5621 = vmatpush2.bf16.msra.mxu0 0
      %5622 = vmatprep.subr.bf16.mxu0 0
      %5623 = vmatpush2.bf16.msra.mxu0 0
      %5624 = vmatprep.subr.bf16.mxu0 0
      %5625 = vmatpush2.bf16.msra.mxu0 0
      %5626 = vmatprep.subr.bf16.mxu0 0
      %5627 = vmatpush2.bf16.msra.mxu0 0
      %5628 = vmatprep.subr.bf16.mxu0 0
      %5629 = vmatpush2.bf16.msra.mxu0 0
      %5630 = vmatprep.mubr.bf16.mxu0 0
      %5631 = vmatmul.mubr.bf16.gmra.mxu0 %v4209
      %v5632 = vpop.f32.mrf.mxu0
      %v5633 = vadd.f32 0.0, %v5632
      %v5634 = vpop.f32.mrf.mxu0
      %v5635 = vadd.f32 0.0, %v5634
      %v5636 = vpop.f32.mrf.mxu0
      %v5637 = vadd.f32 0.0, %v5636
      %v5638 = vpop.f32.mrf.mxu0
      %v5639 = vadd.f32 0.0, %v5638
      %5640 = vmatprep.mubr.bf16.mxu0 0
      %5641 = vmatmul.mubr.bf16.gmra.mxu0 %v4212
      %v5642 = vpop.f32.mrf.mxu0
      %v5643 = vadd.f32 0.0, %v5642
      %v5644 = vpop.f32.mrf.mxu0
      %v5645 = vadd.f32 0.0, %v5644
      %v5646 = vpop.f32.mrf.mxu0
      %v5647 = vadd.f32 0.0, %v5646
      %v5648 = vpop.f32.mrf.mxu0
      %v5649 = vadd.f32 0.0, %v5648
      %5650 = vmatprep.mubr.bf16.mxu0 0
      %5651 = vmatmul.mubr.bf16.gmra.mxu0 %v4215
      %v5652 = vpop.f32.mrf.mxu0
      %v5653 = vadd.f32 0.0, %v5652
      %v5654 = vpop.f32.mrf.mxu0
      %v5655 = vadd.f32 0.0, %v5654
      %v5656 = vpop.f32.mrf.mxu0
      %v5657 = vadd.f32 0.0, %v5656
      %v5658 = vpop.f32.mrf.mxu0
      %v5659 = vadd.f32 0.0, %v5658
      %5660 = vmatprep.mubr.bf16.mxu0 0
      %5661 = vmatmul.mubr.bf16.gmra.mxu0 %v4218
      %v5662 = vpop.f32.mrf.mxu0
      %v5663 = vadd.f32 0.0, %v5662
      %v5664 = vpop.f32.mrf.mxu0
      %v5665 = vadd.f32 0.0, %v5664
      %v5666 = vpop.f32.mrf.mxu0
      %v5667 = vadd.f32 0.0, %v5666
      %v5668 = vpop.f32.mrf.mxu0
      %v5669 = vadd.f32 0.0, %v5668
      %5670 = vmatprep.mubr.bf16.mxu0 0
      %5671 = vmatmul.mubr.bf16.gmra.mxu0 %v4221
      %v5672 = vpop.f32.mrf.mxu0
      %v5673 = vadd.f32 0.0, %v5672
      %v5674 = vpop.f32.mrf.mxu0
      %v5675 = vadd.f32 0.0, %v5674
      %v5676 = vpop.f32.mrf.mxu0
      %v5677 = vadd.f32 0.0, %v5676
      %v5678 = vpop.f32.mrf.mxu0
      %v5679 = vadd.f32 0.0, %v5678
      %5680 = vmatprep.mubr.bf16.mxu0 0
      %5681 = vmatmul.mubr.bf16.gmra.mxu0 %v4224
      %v5682 = vpop.f32.mrf.mxu0
      %v5683 = vadd.f32 0.0, %v5682
      %v5684 = vpop.f32.mrf.mxu0
      %v5685 = vadd.f32 0.0, %v5684
      %v5686 = vpop.f32.mrf.mxu0
      %v5687 = vadd.f32 0.0, %v5686
      %v5688 = vpop.f32.mrf.mxu0
      %v5689 = vadd.f32 0.0, %v5688
      %5690 = vmatprep.mubr.bf16.mxu0 0
      %5691 = vmatmul.mubr.bf16.gmra.mxu0 %v4227
      %v5692 = vpop.f32.mrf.mxu0
      %v5693 = vadd.f32 0.0, %v5692
      %v5694 = vpop.f32.mrf.mxu0
      %v5695 = vadd.f32 0.0, %v5694
      %v5696 = vpop.f32.mrf.mxu0
      %v5697 = vadd.f32 0.0, %v5696
      %v5698 = vpop.f32.mrf.mxu0
      %v5699 = vadd.f32 0.0, %v5698
      %5700 = vmatprep.mubr.bf16.mxu0 0
      %5701 = vmatmul.mubr.bf16.gmra.mxu0 %v4230
      %v5702 = vpop.f32.mrf.mxu0
      %v5703 = vadd.f32 0.0, %v5702
      %v5704 = vpop.f32.mrf.mxu0
      %v5705 = vadd.f32 0.0, %v5704
      %v5706 = vpop.f32.mrf.mxu0
      %v5707 = vadd.f32 0.0, %v5706
      %v5708 = vpop.f32.mrf.mxu0
      %v5709 = vadd.f32 0.0, %v5708
      %5710 = vmatprep.mubr.bf16.mxu0 0
      %5711 = vmatmul.mubr.bf16.gmra.mxu0 %v4233
      %v5712 = vpop.f32.mrf.mxu0
      %v5713 = vadd.f32 0.0, %v5712
      %v5714 = vpop.f32.mrf.mxu0
      %v5715 = vadd.f32 0.0, %v5714
      %v5716 = vpop.f32.mrf.mxu0
      %v5717 = vadd.f32 0.0, %v5716
      %v5718 = vpop.f32.mrf.mxu0
      %v5719 = vadd.f32 0.0, %v5718
      %5720 = vmatprep.mubr.bf16.mxu0 0
      %5721 = vmatmul.mubr.bf16.gmra.mxu0 %v4236
      %v5722 = vpop.f32.mrf.mxu0
      %v5723 = vadd.f32 0.0, %v5722
      %v5724 = vpop.f32.mrf.mxu0
      %v5725 = vadd.f32 0.0, %v5724
      %v5726 = vpop.f32.mrf.mxu0
      %v5727 = vadd.f32 0.0, %v5726
      %v5728 = vpop.f32.mrf.mxu0
      %v5729 = vadd.f32 0.0, %v5728
      %5730 = vmatprep.mubr.bf16.mxu0 0
      %5731 = vmatmul.mubr.bf16.gmra.mxu0 %v4239
      %v5732 = vpop.f32.mrf.mxu0
      %v5733 = vadd.f32 0.0, %v5732
      %v5734 = vpop.f32.mrf.mxu0
      %v5735 = vadd.f32 0.0, %v5734
      %v5736 = vpop.f32.mrf.mxu0
      %v5737 = vadd.f32 0.0, %v5736
      %v5738 = vpop.f32.mrf.mxu0
      %v5739 = vadd.f32 0.0, %v5738
      %5740 = vmatprep.mubr.bf16.mxu0 0
      %5741 = vmatmul.mubr.bf16.gmra.mxu0 %v4242
      %v5742 = vpop.f32.mrf.mxu0
      %v5743 = vadd.f32 0.0, %v5742
      %v5744 = vpop.f32.mrf.mxu0
      %v5745 = vadd.f32 0.0, %v5744
      %v5746 = vpop.f32.mrf.mxu0
      %v5747 = vadd.f32 0.0, %v5746
      %v5748 = vpop.f32.mrf.mxu0
      %v5749 = vadd.f32 0.0, %v5748
      %5750 = vmatprep.mubr.bf16.mxu0 0
      %5751 = vmatmul.mubr.bf16.gmra.mxu0 %v4245
      %v5752 = vpop.f32.mrf.mxu0
      %v5753 = vadd.f32 0.0, %v5752
      %v5754 = vpop.f32.mrf.mxu0
      %v5755 = vadd.f32 0.0, %v5754
      %v5756 = vpop.f32.mrf.mxu0
      %v5757 = vadd.f32 0.0, %v5756
      %v5758 = vpop.f32.mrf.mxu0
      %v5759 = vadd.f32 0.0, %v5758
      %5760 = vmatprep.mubr.bf16.mxu0 0
      %5761 = vmatmul.mubr.bf16.gmra.mxu0 %v4248
      %v5762 = vpop.f32.mrf.mxu0
      %v5763 = vadd.f32 0.0, %v5762
      %v5764 = vpop.f32.mrf.mxu0
      %v5765 = vadd.f32 0.0, %v5764
      %v5766 = vpop.f32.mrf.mxu0
      %v5767 = vadd.f32 0.0, %v5766
      %v5768 = vpop.f32.mrf.mxu0
      %v5769 = vadd.f32 0.0, %v5768
      %5770 = vmatprep.mubr.bf16.mxu0 0
      %5771 = vmatmul.mubr.bf16.gmra.mxu0 %v4251
      %v5772 = vpop.f32.mrf.mxu0
      %v5773 = vadd.f32 0.0, %v5772
      %v5774 = vpop.f32.mrf.mxu0
      %v5775 = vadd.f32 0.0, %v5774
      %v5776 = vpop.f32.mrf.mxu0
      %v5777 = vadd.f32 0.0, %v5776
      %v5778 = vpop.f32.mrf.mxu0
      %v5779 = vadd.f32 0.0, %v5778
      %5780 = vmatprep.mubr.bf16.mxu0 0
      %5781 = vmatmul.mubr.bf16.gmra.mxu0 %v5590
      %v5782 = vpop.f32.mrf.mxu0
      %v5783 = vadd.f32 0.0, %v5782
      %v5784 = vpop.f32.mrf.mxu0
      %v5785 = vadd.f32 0.0, %v5784
      %v5786 = vpop.f32.mrf.mxu0
      %v5787 = vadd.f32 0.0, %v5786
      %v5788 = vpop.f32.mrf.mxu0
      %v5789 = vadd.f32 0.0, %v5788
      %5790 = vdwg.mxu0
      %v5791 = vadd.f32 %v5492, %v5633
      %v5792 = vadd.f32 %v5493, %v5635
      %v5793 = vadd.f32 %v5494, %v5637
      %v5794 = vadd.f32 %v5495, %v5639
      %v5795 = vadd.f32 %v5496, %v5643
      %v5796 = vadd.f32 %v5497, %v5645
      %v5797 = vadd.f32 %v5498, %v5647
      %v5798 = vadd.f32 %v5499, %v5649
      %v5799 = vadd.f32 %v5500, %v5653
      %v5800 = vadd.f32 %v5501, %v5655
      %v5801 = vadd.f32 %v5502, %v5657
      %v5802 = vadd.f32 %v5503, %v5659
      %v5803 = vadd.f32 %v5504, %v5663
      %v5804 = vadd.f32 %v5505, %v5665
      %v5805 = vadd.f32 %v5506, %v5667
      %v5806 = vadd.f32 %v5507, %v5669
      %v5807 = vadd.f32 %v5508, %v5673
      %v5808 = vadd.f32 %v5509, %v5675
      %v5809 = vadd.f32 %v5510, %v5677
      %v5810 = vadd.f32 %v5511, %v5679
      %v5811 = vadd.f32 %v5512, %v5683
      %v5812 = vadd.f32 %v5513, %v5685
      %v5813 = vadd.f32 %v5514, %v5687
      %v5814 = vadd.f32 %v5515, %v5689
      %v5815 = vadd.f32 %v5516, %v5693
      %v5816 = vadd.f32 %v5517, %v5695
      %v5817 = vadd.f32 %v5518, %v5697
      %v5818 = vadd.f32 %v5519, %v5699
      %v5819 = vadd.f32 %v5520, %v5703
      %v5820 = vadd.f32 %v5521, %v5705
      %v5821 = vadd.f32 %v5522, %v5707
      %v5822 = vadd.f32 %v5523, %v5709
      %v5823 = vadd.f32 %v5524, %v5713
      %v5824 = vadd.f32 %v5525, %v5715
      %v5825 = vadd.f32 %v5526, %v5717
      %v5826 = vadd.f32 %v5527, %v5719
      %v5827 = vadd.f32 %v5528, %v5723
      %v5828 = vadd.f32 %v5529, %v5725
      %v5829 = vadd.f32 %v5530, %v5727
      %v5830 = vadd.f32 %v5531, %v5729
      %v5831 = vadd.f32 %v5532, %v5733
      %v5832 = vadd.f32 %v5533, %v5735
      %v5833 = vadd.f32 %v5534, %v5737
      %v5834 = vadd.f32 %v5535, %v5739
      %v5835 = vadd.f32 %v5536, %v5743
      %v5836 = vadd.f32 %v5537, %v5745
      %v5837 = vadd.f32 %v5538, %v5747
      %v5838 = vadd.f32 %v5539, %v5749
      %v5839 = vadd.f32 %v5540, %v5753
      %v5840 = vadd.f32 %v5541, %v5755
      %v5841 = vadd.f32 %v5542, %v5757
      %v5842 = vadd.f32 %v5543, %v5759
      %v5843 = vadd.f32 %v5544, %v5763
      %v5844 = vadd.f32 %v5545, %v5765
      %v5845 = vadd.f32 %v5546, %v5767
      %v5846 = vadd.f32 %v5547, %v5769
      %v5847 = vadd.f32 %v5548, %v5773
      %v5848 = vadd.f32 %v5549, %v5775
      %v5849 = vadd.f32 %v5550, %v5777
      %v5850 = vadd.f32 %v5551, %v5779
      %v5851 = vadd.f32 %v5552, %v5783
      %v5852 = vadd.f32 %v5553, %v5785
      %v5853 = vadd.f32 %v5554, %v5787
      %v5854 = vadd.f32 %v5555, %v5789
      %v5856 = vrot.slane %v433, 5
      %v5857 = vrot.slane %v5856, 4
      %v5858 = vrot.slane %v434, 5
      %v5859 = vsel %vm1503, %v5857, %v5858
      %v5860 = vrot.slane %v5858, 4
      %v5861 = vrot.slane %v435, 5
      %v5862 = vsel %vm1503, %v5860, %v5861
      %v5863 = vld [vmem:[%s3 + $0x10] sm:$0xcc]
      %v5864 = vunpack.c.l.b16 %v5859
      %v5865 = vunpack.c.l.b16 %v5862
      %v5866 = vpack.c.b16 %v5865, %v5864
      %v5868 = vunpack.c.l.b16 %v5863
      %v5869 = vunpack.c.h.b16 %v5863
      %v5870 = vpack.c.b16 %v5868, %v5868
      %v5871 = vpack.c.b16 %v5869, %v5869
      %v5872 = vrot.slane %v5870, 2
      %v5873 = vrot.slane %v5871, 2
      %v5875 = vsel %vm4204, %v5866, 0
      %v5878 = vsel %vm950, %v5872, 0
      %v5881 = vsel %vm950, %v5873, 0
      %5883 = vmatprep.subr.bf16.mxu0 0
      %5884 = vmatpush1.bf16.msra.mxu0 0
      %5885 = vmatprep.subr.bf16.mxu0 0
      %5886 = vmatpush1.bf16.msra.mxu0 0
      %5887 = vmatprep.subr.bf16.mxu0 0
      %5888 = vmatpush1.bf16.msra.mxu0 0
      %5889 = vmatprep.subr.bf16.mxu0 0
      %5890 = vmatpush1.bf16.msra.mxu0 0
      %5891 = vmatprep.subr.bf16.mxu0 0
      %5892 = vmatpush1.bf16.msra.mxu0 0
      %5893 = vmatprep.subr.bf16.mxu0 0
      %5894 = vmatpush1.bf16.msra.mxu0 0
      %5895 = vmatprep.subr.bf16.mxu0 0
      %5896 = vmatpush1.bf16.msra.mxu0 0
      %5897 = vmatprep.subr.bf16.mxu0 %v5881
      %5898 = vmatpush1.bf16.msra.mxu0 %v5878
      %5899 = vmatprep.subr.bf16.mxu0 0
      %5900 = vmatpush2.bf16.msra.mxu0 0
      %5901 = vmatprep.subr.bf16.mxu0 0
      %5902 = vmatpush2.bf16.msra.mxu0 0
      %5903 = vmatprep.subr.bf16.mxu0 0
      %5904 = vmatpush2.bf16.msra.mxu0 0
      %5905 = vmatprep.subr.bf16.mxu0 0
      %5906 = vmatpush2.bf16.msra.mxu0 0
      %5907 = vmatprep.subr.bf16.mxu0 0
      %5908 = vmatpush2.bf16.msra.mxu0 0
      %5909 = vmatprep.subr.bf16.mxu0 0
      %5910 = vmatpush2.bf16.msra.mxu0 0
      %5911 = vmatprep.subr.bf16.mxu0 0
      %5912 = vmatpush2.bf16.msra.mxu0 0
      %5913 = vmatprep.subr.bf16.mxu0 0
      %5914 = vmatpush2.bf16.msra.mxu0 0
      %5915 = vmatprep.mubr.bf16.mxu0 0
      %5916 = vmatmul.mubr.bf16.gmra.mxu0 %v4970
      %v5917 = vpop.f32.mrf.mxu0
      %v5918 = vadd.f32 0.0, %v5917
      %v5919 = vpop.f32.mrf.mxu0
      %v5920 = vadd.f32 0.0, %v5919
      %v5921 = vpop.f32.mrf.mxu0
      %v5922 = vadd.f32 0.0, %v5921
      %v5923 = vpop.f32.mrf.mxu0
      %v5924 = vadd.f32 0.0, %v5923
      %5925 = vmatprep.mubr.bf16.mxu0 0
      %5926 = vmatmul.mubr.bf16.gmra.mxu0 %v4973
      %v5927 = vpop.f32.mrf.mxu0
      %v5928 = vadd.f32 0.0, %v5927
      %v5929 = vpop.f32.mrf.mxu0
      %v5930 = vadd.f32 0.0, %v5929
      %v5931 = vpop.f32.mrf.mxu0
      %v5932 = vadd.f32 0.0, %v5931
      %v5933 = vpop.f32.mrf.mxu0
      %v5934 = vadd.f32 0.0, %v5933
      %5935 = vmatprep.mubr.bf16.mxu0 0
      %5936 = vmatmul.mubr.bf16.gmra.mxu0 %v4976
      %v5937 = vpop.f32.mrf.mxu0
      %v5938 = vadd.f32 0.0, %v5937
      %v5939 = vpop.f32.mrf.mxu0
      %v5940 = vadd.f32 0.0, %v5939
      %v5941 = vpop.f32.mrf.mxu0
      %v5942 = vadd.f32 0.0, %v5941
      %v5943 = vpop.f32.mrf.mxu0
      %v5944 = vadd.f32 0.0, %v5943
      %5945 = vmatprep.mubr.bf16.mxu0 0
      %5946 = vmatmul.mubr.bf16.gmra.mxu0 %v4979
      %v5947 = vpop.f32.mrf.mxu0
      %v5948 = vadd.f32 0.0, %v5947
      %v5949 = vpop.f32.mrf.mxu0
      %v5950 = vadd.f32 0.0, %v5949
      %v5951 = vpop.f32.mrf.mxu0
      %v5952 = vadd.f32 0.0, %v5951
      %v5953 = vpop.f32.mrf.mxu0
      %v5954 = vadd.f32 0.0, %v5953
      %5955 = vmatprep.mubr.bf16.mxu0 0
      %5956 = vmatmul.mubr.bf16.gmra.mxu0 %v4982
      %v5957 = vpop.f32.mrf.mxu0
      %v5958 = vadd.f32 0.0, %v5957
      %v5959 = vpop.f32.mrf.mxu0
      %v5960 = vadd.f32 0.0, %v5959
      %v5961 = vpop.f32.mrf.mxu0
      %v5962 = vadd.f32 0.0, %v5961
      %v5963 = vpop.f32.mrf.mxu0
      %v5964 = vadd.f32 0.0, %v5963
      %5965 = vmatprep.mubr.bf16.mxu0 0
      %5966 = vmatmul.mubr.bf16.gmra.mxu0 %v4985
      %v5967 = vpop.f32.mrf.mxu0
      %v5968 = vadd.f32 0.0, %v5967
      %v5969 = vpop.f32.mrf.mxu0
      %v5970 = vadd.f32 0.0, %v5969
      %v5971 = vpop.f32.mrf.mxu0
      %v5972 = vadd.f32 0.0, %v5971
      %v5973 = vpop.f32.mrf.mxu0
      %v5974 = vadd.f32 0.0, %v5973
      %5975 = vmatprep.mubr.bf16.mxu0 0
      %5976 = vmatmul.mubr.bf16.gmra.mxu0 %v4988
      %v5977 = vpop.f32.mrf.mxu0
      %v5978 = vadd.f32 0.0, %v5977
      %v5979 = vpop.f32.mrf.mxu0
      %v5980 = vadd.f32 0.0, %v5979
      %v5981 = vpop.f32.mrf.mxu0
      %v5982 = vadd.f32 0.0, %v5981
      %v5983 = vpop.f32.mrf.mxu0
      %v5984 = vadd.f32 0.0, %v5983
      %5985 = vmatprep.mubr.bf16.mxu0 0
      %5986 = vmatmul.mubr.bf16.gmra.mxu0 %v4991
      %v5987 = vpop.f32.mrf.mxu0
      %v5988 = vadd.f32 0.0, %v5987
      %v5989 = vpop.f32.mrf.mxu0
      %v5990 = vadd.f32 0.0, %v5989
      %v5991 = vpop.f32.mrf.mxu0
      %v5992 = vadd.f32 0.0, %v5991
      %v5993 = vpop.f32.mrf.mxu0
      %v5994 = vadd.f32 0.0, %v5993
      %5995 = vmatprep.mubr.bf16.mxu0 0
      %5996 = vmatmul.mubr.bf16.gmra.mxu0 %v4994
      %v5997 = vpop.f32.mrf.mxu0
      %v5998 = vadd.f32 0.0, %v5997
      %v5999 = vpop.f32.mrf.mxu0
      %v6000 = vadd.f32 0.0, %v5999
      %v6001 = vpop.f32.mrf.mxu0
      %v6002 = vadd.f32 0.0, %v6001
      %v6003 = vpop.f32.mrf.mxu0
      %v6004 = vadd.f32 0.0, %v6003
      %6005 = vmatprep.mubr.bf16.mxu0 0
      %6006 = vmatmul.mubr.bf16.gmra.mxu0 %v4997
      %v6007 = vpop.f32.mrf.mxu0
      %v6008 = vadd.f32 0.0, %v6007
      %v6009 = vpop.f32.mrf.mxu0
      %v6010 = vadd.f32 0.0, %v6009
      %v6011 = vpop.f32.mrf.mxu0
      %v6012 = vadd.f32 0.0, %v6011
      %v6013 = vpop.f32.mrf.mxu0
      %v6014 = vadd.f32 0.0, %v6013
      %6015 = vmatprep.mubr.bf16.mxu0 0
      %6016 = vmatmul.mubr.bf16.gmra.mxu0 %v5000
      %v6017 = vpop.f32.mrf.mxu0
      %v6018 = vadd.f32 0.0, %v6017
      %v6019 = vpop.f32.mrf.mxu0
      %v6020 = vadd.f32 0.0, %v6019
      %v6021 = vpop.f32.mrf.mxu0
      %v6022 = vadd.f32 0.0, %v6021
      %v6023 = vpop.f32.mrf.mxu0
      %v6024 = vadd.f32 0.0, %v6023
      %6025 = vmatprep.mubr.bf16.mxu0 0
      %6026 = vmatmul.mubr.bf16.gmra.mxu0 %v5003
      %v6027 = vpop.f32.mrf.mxu0
      %v6028 = vadd.f32 0.0, %v6027
      %v6029 = vpop.f32.mrf.mxu0
      %v6030 = vadd.f32 0.0, %v6029
      %v6031 = vpop.f32.mrf.mxu0
      %v6032 = vadd.f32 0.0, %v6031
      %v6033 = vpop.f32.mrf.mxu0
      %v6034 = vadd.f32 0.0, %v6033
      %6035 = vmatprep.mubr.bf16.mxu0 0
      %6036 = vmatmul.mubr.bf16.gmra.mxu0 %v5006
      %v6037 = vpop.f32.mrf.mxu0
      %v6038 = vadd.f32 0.0, %v6037
      %v6039 = vpop.f32.mrf.mxu0
      %v6040 = vadd.f32 0.0, %v6039
      %v6041 = vpop.f32.mrf.mxu0
      %v6042 = vadd.f32 0.0, %v6041
      %v6043 = vpop.f32.mrf.mxu0
      %v6044 = vadd.f32 0.0, %v6043
      %6045 = vmatprep.mubr.bf16.mxu0 0
      %6046 = vmatmul.mubr.bf16.gmra.mxu0 %v5009
      %v6047 = vpop.f32.mrf.mxu0
      %v6048 = vadd.f32 0.0, %v6047
      %v6049 = vpop.f32.mrf.mxu0
      %v6050 = vadd.f32 0.0, %v6049
      %v6051 = vpop.f32.mrf.mxu0
      %v6052 = vadd.f32 0.0, %v6051
      %v6053 = vpop.f32.mrf.mxu0
      %v6054 = vadd.f32 0.0, %v6053
      %6055 = vmatprep.mubr.bf16.mxu0 0
      %6056 = vmatmul.mubr.bf16.gmra.mxu0 %v5012
      %v6057 = vpop.f32.mrf.mxu0
      %v6058 = vadd.f32 0.0, %v6057
      %v6059 = vpop.f32.mrf.mxu0
      %v6060 = vadd.f32 0.0, %v6059
      %v6061 = vpop.f32.mrf.mxu0
      %v6062 = vadd.f32 0.0, %v6061
      %v6063 = vpop.f32.mrf.mxu0
      %v6064 = vadd.f32 0.0, %v6063
      %6065 = vmatprep.mubr.bf16.mxu0 0
      %6066 = vmatmul.mubr.bf16.gmra.mxu0 %v5875
      %v6067 = vpop.f32.mrf.mxu0
      %v6068 = vadd.f32 0.0, %v6067
      %v6069 = vpop.f32.mrf.mxu0
      %v6070 = vadd.f32 0.0, %v6069
      %v6071 = vpop.f32.mrf.mxu0
      %v6072 = vadd.f32 0.0, %v6071
      %v6073 = vpop.f32.mrf.mxu0
      %v6074 = vadd.f32 0.0, %v6073
      %6075 = vdwg.mxu0
      %v6076 = vadd.f32 %v5791, %v5918
      %v6077 = vadd.f32 %v5792, %v5920
      %v6078 = vadd.f32 %v5793, %v5922
      %v6079 = vadd.f32 %v5794, %v5924
      %v6080 = vadd.f32 %v5795, %v5928
      %v6081 = vadd.f32 %v5796, %v5930
      %v6082 = vadd.f32 %v5797, %v5932
      %v6083 = vadd.f32 %v5798, %v5934
      %v6084 = vadd.f32 %v5799, %v5938
      %v6085 = vadd.f32 %v5800, %v5940
      %v6086 = vadd.f32 %v5801, %v5942
      %v6087 = vadd.f32 %v5802, %v5944
      %v6088 = vadd.f32 %v5803, %v5948
      %v6089 = vadd.f32 %v5804, %v5950
      %v6090 = vadd.f32 %v5805, %v5952
      %v6091 = vadd.f32 %v5806, %v5954
      %v6092 = vadd.f32 %v5807, %v5958
      %v6093 = vadd.f32 %v5808, %v5960
      %v6094 = vadd.f32 %v5809, %v5962
      %v6095 = vadd.f32 %v5810, %v5964
      %v6096 = vadd.f32 %v5811, %v5968
      %v6097 = vadd.f32 %v5812, %v5970
      %v6098 = vadd.f32 %v5813, %v5972
      %v6099 = vadd.f32 %v5814, %v5974
      %v6100 = vadd.f32 %v5815, %v5978
      %v6101 = vadd.f32 %v5816, %v5980
      %v6102 = vadd.f32 %v5817, %v5982
      %v6103 = vadd.f32 %v5818, %v5984
      %v6104 = vadd.f32 %v5819, %v5988
      %v6105 = vadd.f32 %v5820, %v5990
      %v6106 = vadd.f32 %v5821, %v5992
      %v6107 = vadd.f32 %v5822, %v5994
      %v6108 = vadd.f32 %v5823, %v5998
      %v6109 = vadd.f32 %v5824, %v6000
      %v6110 = vadd.f32 %v5825, %v6002
      %v6111 = vadd.f32 %v5826, %v6004
      %v6112 = vadd.f32 %v5827, %v6008
      %v6113 = vadd.f32 %v5828, %v6010
      %v6114 = vadd.f32 %v5829, %v6012
      %v6115 = vadd.f32 %v5830, %v6014
      %v6116 = vadd.f32 %v5831, %v6018
      %v6117 = vadd.f32 %v5832, %v6020
      %v6118 = vadd.f32 %v5833, %v6022
      %v6119 = vadd.f32 %v5834, %v6024
      %v6120 = vadd.f32 %v5835, %v6028
      %v6121 = vadd.f32 %v5836, %v6030
      %v6122 = vadd.f32 %v5837, %v6032
      %v6123 = vadd.f32 %v5838, %v6034
      %v6124 = vadd.f32 %v5839, %v6038
      %v6125 = vadd.f32 %v5840, %v6040
      %v6126 = vadd.f32 %v5841, %v6042
      %v6127 = vadd.f32 %v5842, %v6044
      %v6128 = vadd.f32 %v5843, %v6048
      %v6129 = vadd.f32 %v5844, %v6050
      %v6130 = vadd.f32 %v5845, %v6052
      %v6131 = vadd.f32 %v5846, %v6054
      %v6132 = vadd.f32 %v5847, %v6058
      %v6133 = vadd.f32 %v5848, %v6060
      %v6134 = vadd.f32 %v5849, %v6062
      %v6135 = vadd.f32 %v5850, %v6064
      %v6136 = vadd.f32 %v5851, %v6068
      %v6137 = vadd.f32 %v5852, %v6070
      %v6138 = vadd.f32 %v5853, %v6072
      %v6139 = vadd.f32 %v5854, %v6074
      %v6140 = vld [vmem:[%s3 + $0x18] sm:$0x33]
      %v6143 = vunpack.c.l.b16 %v436
      %v6144 = vunpack.c.l.b16 %v437
      %v6145 = vpack.c.b16 %v6144, %v6143
      %v6147 = vunpack.c.l.b16 %v6140
      %v6148 = vunpack.c.h.b16 %v6140
      %v6149 = vpack.c.b16 %v6147, %v6147
      %v6150 = vpack.c.b16 %v6148, %v6148
      %v6152 = vsel %vm4204, %v6145, 0
      %v6155 = vsel %vm950, %v6149, 0
      %v6158 = vsel %vm950, %v6150, 0
      %6160 = vmatprep.subr.bf16.mxu0 0
      %6161 = vmatpush1.bf16.msra.mxu0 0
      %6162 = vmatprep.subr.bf16.mxu0 0
      %6163 = vmatpush1.bf16.msra.mxu0 0
      %6164 = vmatprep.subr.bf16.mxu0 0
      %6165 = vmatpush1.bf16.msra.mxu0 0
      %6166 = vmatprep.subr.bf16.mxu0 0
      %6167 = vmatpush1.bf16.msra.mxu0 0
      %6168 = vmatprep.subr.bf16.mxu0 0
      %6169 = vmatpush1.bf16.msra.mxu0 0
      %6170 = vmatprep.subr.bf16.mxu0 0
      %6171 = vmatpush1.bf16.msra.mxu0 0
      %6172 = vmatprep.subr.bf16.mxu0 0
      %6173 = vmatpush1.bf16.msra.mxu0 0
      %6174 = vmatprep.subr.bf16.mxu0 %v6158
      %6175 = vmatpush1.bf16.msra.mxu0 %v6155
      %6176 = vmatprep.subr.bf16.mxu0 0
      %6177 = vmatpush2.bf16.msra.mxu0 0
      %6178 = vmatprep.subr.bf16.mxu0 0
      %6179 = vmatpush2.bf16.msra.mxu0 0
      %6180 = vmatprep.subr.bf16.mxu0 0
      %6181 = vmatpush2.bf16.msra.mxu0 0
      %6182 = vmatprep.subr.bf16.mxu0 0
      %6183 = vmatpush2.bf16.msra.mxu0 0
      %6184 = vmatprep.subr.bf16.mxu0 0
      %6185 = vmatpush2.bf16.msra.mxu0 0
      %6186 = vmatprep.subr.bf16.mxu0 0
      %6187 = vmatpush2.bf16.msra.mxu0 0
      %6188 = vmatprep.subr.bf16.mxu0 0
      %6189 = vmatpush2.bf16.msra.mxu0 0
      %6190 = vmatprep.subr.bf16.mxu0 0
      %6191 = vmatpush2.bf16.msra.mxu0 0
      %6192 = vmatprep.mubr.bf16.mxu0 0
      %6193 = vmatmul.mubr.bf16.gmra.mxu0 %v4544
      %v6194 = vpop.f32.mrf.mxu0
      %v6195 = vadd.f32 0.0, %v6194
      %v6196 = vpop.f32.mrf.mxu0
      %v6197 = vadd.f32 0.0, %v6196
      %v6198 = vpop.f32.mrf.mxu0
      %v6199 = vadd.f32 0.0, %v6198
      %v6200 = vpop.f32.mrf.mxu0
      %v6201 = vadd.f32 0.0, %v6200
      %6202 = vmatprep.mubr.bf16.mxu0 0
      %6203 = vmatmul.mubr.bf16.gmra.mxu0 %v4547
      %v6204 = vpop.f32.mrf.mxu0
      %v6205 = vadd.f32 0.0, %v6204
      %v6206 = vpop.f32.mrf.mxu0
      %v6207 = vadd.f32 0.0, %v6206
      %v6208 = vpop.f32.mrf.mxu0
      %v6209 = vadd.f32 0.0, %v6208
      %v6210 = vpop.f32.mrf.mxu0
      %v6211 = vadd.f32 0.0, %v6210
      %6212 = vmatprep.mubr.bf16.mxu0 0
      %6213 = vmatmul.mubr.bf16.gmra.mxu0 %v4550
      %v6214 = vpop.f32.mrf.mxu0
      %v6215 = vadd.f32 0.0, %v6214
      %v6216 = vpop.f32.mrf.mxu0
      %v6217 = vadd.f32 0.0, %v6216
      %v6218 = vpop.f32.mrf.mxu0
      %v6219 = vadd.f32 0.0, %v6218
      %v6220 = vpop.f32.mrf.mxu0
      %v6221 = vadd.f32 0.0, %v6220
      %6222 = vmatprep.mubr.bf16.mxu0 0
      %6223 = vmatmul.mubr.bf16.gmra.mxu0 %v4553
      %v6224 = vpop.f32.mrf.mxu0
      %v6225 = vadd.f32 0.0, %v6224
      %v6226 = vpop.f32.mrf.mxu0
      %v6227 = vadd.f32 0.0, %v6226
      %v6228 = vpop.f32.mrf.mxu0
      %v6229 = vadd.f32 0.0, %v6228
      %v6230 = vpop.f32.mrf.mxu0
      %v6231 = vadd.f32 0.0, %v6230
      %6232 = vmatprep.mubr.bf16.mxu0 0
      %6233 = vmatmul.mubr.bf16.gmra.mxu0 %v4556
      %v6234 = vpop.f32.mrf.mxu0
      %v6235 = vadd.f32 0.0, %v6234
      %v6236 = vpop.f32.mrf.mxu0
      %v6237 = vadd.f32 0.0, %v6236
      %v6238 = vpop.f32.mrf.mxu0
      %v6239 = vadd.f32 0.0, %v6238
      %v6240 = vpop.f32.mrf.mxu0
      %v6241 = vadd.f32 0.0, %v6240
      %6242 = vmatprep.mubr.bf16.mxu0 0
      %6243 = vmatmul.mubr.bf16.gmra.mxu0 %v4559
      %v6244 = vpop.f32.mrf.mxu0
      %v6245 = vadd.f32 0.0, %v6244
      %v6246 = vpop.f32.mrf.mxu0
      %v6247 = vadd.f32 0.0, %v6246
      %v6248 = vpop.f32.mrf.mxu0
      %v6249 = vadd.f32 0.0, %v6248
      %v6250 = vpop.f32.mrf.mxu0
      %v6251 = vadd.f32 0.0, %v6250
      %6252 = vmatprep.mubr.bf16.mxu0 0
      %6253 = vmatmul.mubr.bf16.gmra.mxu0 %v4562
      %v6254 = vpop.f32.mrf.mxu0
      %v6255 = vadd.f32 0.0, %v6254
      %v6256 = vpop.f32.mrf.mxu0
      %v6257 = vadd.f32 0.0, %v6256
      %v6258 = vpop.f32.mrf.mxu0
      %v6259 = vadd.f32 0.0, %v6258
      %v6260 = vpop.f32.mrf.mxu0
      %v6261 = vadd.f32 0.0, %v6260
      %6262 = vmatprep.mubr.bf16.mxu0 0
      %6263 = vmatmul.mubr.bf16.gmra.mxu0 %v4565
      %v6264 = vpop.f32.mrf.mxu0
      %v6265 = vadd.f32 0.0, %v6264
      %v6266 = vpop.f32.mrf.mxu0
      %v6267 = vadd.f32 0.0, %v6266
      %v6268 = vpop.f32.mrf.mxu0
      %v6269 = vadd.f32 0.0, %v6268
      %v6270 = vpop.f32.mrf.mxu0
      %v6271 = vadd.f32 0.0, %v6270
      %6272 = vmatprep.mubr.bf16.mxu0 0
      %6273 = vmatmul.mubr.bf16.gmra.mxu0 %v4568
      %v6274 = vpop.f32.mrf.mxu0
      %v6275 = vadd.f32 0.0, %v6274
      %v6276 = vpop.f32.mrf.mxu0
      %v6277 = vadd.f32 0.0, %v6276
      %v6278 = vpop.f32.mrf.mxu0
      %v6279 = vadd.f32 0.0, %v6278
      %v6280 = vpop.f32.mrf.mxu0
      %v6281 = vadd.f32 0.0, %v6280
      %6282 = vmatprep.mubr.bf16.mxu0 0
      %6283 = vmatmul.mubr.bf16.gmra.mxu0 %v4571
      %v6284 = vpop.f32.mrf.mxu0
      %v6285 = vadd.f32 0.0, %v6284
      %v6286 = vpop.f32.mrf.mxu0
      %v6287 = vadd.f32 0.0, %v6286
      %v6288 = vpop.f32.mrf.mxu0
      %v6289 = vadd.f32 0.0, %v6288
      %v6290 = vpop.f32.mrf.mxu0
      %v6291 = vadd.f32 0.0, %v6290
      %6292 = vmatprep.mubr.bf16.mxu0 0
      %6293 = vmatmul.mubr.bf16.gmra.mxu0 %v4574
      %v6294 = vpop.f32.mrf.mxu0
      %v6295 = vadd.f32 0.0, %v6294
      %v6296 = vpop.f32.mrf.mxu0
      %v6297 = vadd.f32 0.0, %v6296
      %v6298 = vpop.f32.mrf.mxu0
      %v6299 = vadd.f32 0.0, %v6298
      %v6300 = vpop.f32.mrf.mxu0
      %v6301 = vadd.f32 0.0, %v6300
      %6302 = vmatprep.mubr.bf16.mxu0 0
      %6303 = vmatmul.mubr.bf16.gmra.mxu0 %v4577
      %v6304 = vpop.f32.mrf.mxu0
      %v6305 = vadd.f32 0.0, %v6304
      %v6306 = vpop.f32.mrf.mxu0
      %v6307 = vadd.f32 0.0, %v6306
      %v6308 = vpop.f32.mrf.mxu0
      %v6309 = vadd.f32 0.0, %v6308
      %v6310 = vpop.f32.mrf.mxu0
      %v6311 = vadd.f32 0.0, %v6310
      %6312 = vmatprep.mubr.bf16.mxu0 0
      %6313 = vmatmul.mubr.bf16.gmra.mxu0 %v4580
      %v6314 = vpop.f32.mrf.mxu0
      %v6315 = vadd.f32 0.0, %v6314
      %v6316 = vpop.f32.mrf.mxu0
      %v6317 = vadd.f32 0.0, %v6316
      %v6318 = vpop.f32.mrf.mxu0
      %v6319 = vadd.f32 0.0, %v6318
      %v6320 = vpop.f32.mrf.mxu0
      %v6321 = vadd.f32 0.0, %v6320
      %6322 = vmatprep.mubr.bf16.mxu0 0
      %6323 = vmatmul.mubr.bf16.gmra.mxu0 %v4583
      %v6324 = vpop.f32.mrf.mxu0
      %v6325 = vadd.f32 0.0, %v6324
      %v6326 = vpop.f32.mrf.mxu0
      %v6327 = vadd.f32 0.0, %v6326
      %v6328 = vpop.f32.mrf.mxu0
      %v6329 = vadd.f32 0.0, %v6328
      %v6330 = vpop.f32.mrf.mxu0
      %v6331 = vadd.f32 0.0, %v6330
      %6332 = vmatprep.mubr.bf16.mxu0 0
      %6333 = vmatmul.mubr.bf16.gmra.mxu0 %v5291
      %v6334 = vpop.f32.mrf.mxu0
      %v6335 = vadd.f32 0.0, %v6334
      %v6336 = vpop.f32.mrf.mxu0
      %v6337 = vadd.f32 0.0, %v6336
      %v6338 = vpop.f32.mrf.mxu0
      %v6339 = vadd.f32 0.0, %v6338
      %v6340 = vpop.f32.mrf.mxu0
      %v6341 = vadd.f32 0.0, %v6340
      %6342 = vmatprep.mubr.bf16.mxu0 0
      %6343 = vmatmul.mubr.bf16.gmra.mxu0 %v6152
      %v6344 = vpop.f32.mrf.mxu0
      %v6345 = vadd.f32 0.0, %v6344
      %v6346 = vpop.f32.mrf.mxu0
      %v6347 = vadd.f32 0.0, %v6346
      %v6348 = vpop.f32.mrf.mxu0
      %v6349 = vadd.f32 0.0, %v6348
      %v6350 = vpop.f32.mrf.mxu0
      %v6351 = vadd.f32 0.0, %v6350
      %6352 = vdwg.mxu0
      %v6353 = vadd.f32 %v6076, %v6195
      %v6354 = vadd.f32 %v6077, %v6197
      %v6355 = vadd.f32 %v6078, %v6199
      %v6356 = vadd.f32 %v6079, %v6201
      %v6357 = vadd.f32 %v6080, %v6205
      %v6358 = vadd.f32 %v6081, %v6207
      %v6359 = vadd.f32 %v6082, %v6209
      %v6360 = vadd.f32 %v6083, %v6211
      %v6361 = vadd.f32 %v6084, %v6215
      %v6362 = vadd.f32 %v6085, %v6217
      %v6363 = vadd.f32 %v6086, %v6219
      %v6364 = vadd.f32 %v6087, %v6221
      %v6365 = vadd.f32 %v6088, %v6225
      %v6366 = vadd.f32 %v6089, %v6227
      %v6367 = vadd.f32 %v6090, %v6229
      %v6368 = vadd.f32 %v6091, %v6231
      %v6369 = vadd.f32 %v6092, %v6235
      %v6370 = vadd.f32 %v6093, %v6237
      %v6371 = vadd.f32 %v6094, %v6239
      %v6372 = vadd.f32 %v6095, %v6241
      %v6373 = vadd.f32 %v6096, %v6245
      %v6374 = vadd.f32 %v6097, %v6247
      %v6375 = vadd.f32 %v6098, %v6249
      %v6376 = vadd.f32 %v6099, %v6251
      %v6377 = vadd.f32 %v6100, %v6255
      %v6378 = vadd.f32 %v6101, %v6257
      %v6379 = vadd.f32 %v6102, %v6259
      %v6380 = vadd.f32 %v6103, %v6261
      %v6381 = vadd.f32 %v6104, %v6265
      %v6382 = vadd.f32 %v6105, %v6267
      %v6383 = vadd.f32 %v6106, %v6269
      %v6384 = vadd.f32 %v6107, %v6271
      %v6385 = vadd.f32 %v6108, %v6275
      %v6386 = vadd.f32 %v6109, %v6277
      %v6387 = vadd.f32 %v6110, %v6279
      %v6388 = vadd.f32 %v6111, %v6281
      %v6389 = vadd.f32 %v6112, %v6285
      %v6390 = vadd.f32 %v6113, %v6287
      %v6391 = vadd.f32 %v6114, %v6289
      %v6392 = vadd.f32 %v6115, %v6291
      %v6393 = vadd.f32 %v6116, %v6295
      %v6394 = vadd.f32 %v6117, %v6297
      %v6395 = vadd.f32 %v6118, %v6299
      %v6396 = vadd.f32 %v6119, %v6301
      %v6397 = vadd.f32 %v6120, %v6305
      %v6398 = vadd.f32 %v6121, %v6307
      %v6399 = vadd.f32 %v6122, %v6309
      %v6400 = vadd.f32 %v6123, %v6311
      %v6401 = vadd.f32 %v6124, %v6315
      %v6402 = vadd.f32 %v6125, %v6317
      %v6403 = vadd.f32 %v6126, %v6319
      %v6404 = vadd.f32 %v6127, %v6321
      %v6405 = vadd.f32 %v6128, %v6325
      %v6406 = vadd.f32 %v6129, %v6327
      %v6407 = vadd.f32 %v6130, %v6329
      %v6408 = vadd.f32 %v6131, %v6331
      %v6409 = vadd.f32 %v6132, %v6335
      %v6410 = vadd.f32 %v6133, %v6337
      %v6411 = vadd.f32 %v6134, %v6339
      %v6412 = vadd.f32 %v6135, %v6341
      %v6413 = vadd.f32 %v6136, %v6345
      %v6414 = vadd.f32 %v6137, %v6347
      %v6415 = vadd.f32 %v6138, %v6349
      %v6416 = vadd.f32 %v6139, %v6351
      %v6418 = vshrl.u32 %v436, 16
      %v6420 = vrot.slane %v6418, 4
      %v6421 = vshll.u32 %v436, 16
      %v6423 = vrot.slane %v6421, 5
      %v6424 = vor.u32 %v6420, %v6423
      %v6425 = vrot.slane %v6424, 4
      %v6427 = vshll.u32 %v437, 16
      %v6429 = vrot.slane %v6427, 5
      %v6430 = vsel %vm442, %v6425, %v6429
      %v6431 = vshrl.u32 %v437, 16
      %v6433 = vrot.slane %v6431, 4
      %v6434 = vor.u32 %v6433, %v6429
      %v6435 = vrot.slane %v6434, 4
      %v6437 = vshll.u32 %v438, 16
      %v6439 = vrot.slane %v6437, 5
      %v6440 = vsel %vm442, %v6435, %v6439
      %v6441 = vld [vmem:[%s3 + $0x18] sm:$0xcc]
      %v6442 = vunpack.c.l.b16 %v6430
      %v6443 = vunpack.c.l.b16 %v6440
      %v6444 = vpack.c.b16 %v6443, %v6442
      %v6446 = vunpack.c.l.b16 %v6441
      %v6447 = vunpack.c.h.b16 %v6441
      %v6448 = vpack.c.b16 %v6446, %v6446
      %v6449 = vpack.c.b16 %v6447, %v6447
      %v6450 = vrot.slane %v6448, 2
      %v6451 = vrot.slane %v6449, 2
      %v6453 = vsel %vm4204, %v6444, 0
      %v6456 = vsel %vm950, %v6450, 0
      %v6459 = vsel %vm950, %v6451, 0
      %6461 = vmatprep.subr.bf16.mxu0 0
      %6462 = vmatpush1.bf16.msra.mxu0 0
      %6463 = vmatprep.subr.bf16.mxu0 0
      %6464 = vmatpush1.bf16.msra.mxu0 0
      %6465 = vmatprep.subr.bf16.mxu0 0
      %6466 = vmatpush1.bf16.msra.mxu0 0
      %6467 = vmatprep.subr.bf16.mxu0 0
      %6468 = vmatpush1.bf16.msra.mxu0 0
      %6469 = vmatprep.subr.bf16.mxu0 0
      %6470 = vmatpush1.bf16.msra.mxu0 0
      %6471 = vmatprep.subr.bf16.mxu0 0
      %6472 = vmatpush1.bf16.msra.mxu0 0
      %6473 = vmatprep.subr.bf16.mxu0 0
      %6474 = vmatpush1.bf16.msra.mxu0 0
      %6475 = vmatprep.subr.bf16.mxu0 %v6459
      %6476 = vmatpush1.bf16.msra.mxu0 %v6456
      %6477 = vmatprep.subr.bf16.mxu0 0
      %6478 = vmatpush2.bf16.msra.mxu0 0
      %6479 = vmatprep.subr.bf16.mxu0 0
      %6480 = vmatpush2.bf16.msra.mxu0 0
      %6481 = vmatprep.subr.bf16.mxu0 0
      %6482 = vmatpush2.bf16.msra.mxu0 0
      %6483 = vmatprep.subr.bf16.mxu0 0
      %6484 = vmatpush2.bf16.msra.mxu0 0
      %6485 = vmatprep.subr.bf16.mxu0 0
      %6486 = vmatpush2.bf16.msra.mxu0 0
      %6487 = vmatprep.subr.bf16.mxu0 0
      %6488 = vmatpush2.bf16.msra.mxu0 0
      %6489 = vmatprep.subr.bf16.mxu0 0
      %6490 = vmatpush2.bf16.msra.mxu0 0
      %6491 = vmatprep.subr.bf16.mxu0 0
      %6492 = vmatpush2.bf16.msra.mxu0 0
      %6493 = vmatprep.mubr.bf16.mxu0 0
      %6494 = vmatmul.mubr.bf16.gmra.mxu0 %v4212
      %v6495 = vpop.f32.mrf.mxu0
      %v6496 = vadd.f32 0.0, %v6495
      %v6497 = vpop.f32.mrf.mxu0
      %v6498 = vadd.f32 0.0, %v6497
      %v6499 = vpop.f32.mrf.mxu0
      %v6500 = vadd.f32 0.0, %v6499
      %v6501 = vpop.f32.mrf.mxu0
      %v6502 = vadd.f32 0.0, %v6501
      %6503 = vmatprep.mubr.bf16.mxu0 0
      %6504 = vmatmul.mubr.bf16.gmra.mxu0 %v4215
      %v6505 = vpop.f32.mrf.mxu0
      %v6506 = vadd.f32 0.0, %v6505
      %v6507 = vpop.f32.mrf.mxu0
      %v6508 = vadd.f32 0.0, %v6507
      %v6509 = vpop.f32.mrf.mxu0
      %v6510 = vadd.f32 0.0, %v6509
      %v6511 = vpop.f32.mrf.mxu0
      %v6512 = vadd.f32 0.0, %v6511
      %6513 = vmatprep.mubr.bf16.mxu0 0
      %6514 = vmatmul.mubr.bf16.gmra.mxu0 %v4218
      %v6515 = vpop.f32.mrf.mxu0
      %v6516 = vadd.f32 0.0, %v6515
      %v6517 = vpop.f32.mrf.mxu0
      %v6518 = vadd.f32 0.0, %v6517
      %v6519 = vpop.f32.mrf.mxu0
      %v6520 = vadd.f32 0.0, %v6519
      %v6521 = vpop.f32.mrf.mxu0
      %v6522 = vadd.f32 0.0, %v6521
      %6523 = vmatprep.mubr.bf16.mxu0 0
      %6524 = vmatmul.mubr.bf16.gmra.mxu0 %v4221
      %v6525 = vpop.f32.mrf.mxu0
      %v6526 = vadd.f32 0.0, %v6525
      %v6527 = vpop.f32.mrf.mxu0
      %v6528 = vadd.f32 0.0, %v6527
      %v6529 = vpop.f32.mrf.mxu0
      %v6530 = vadd.f32 0.0, %v6529
      %v6531 = vpop.f32.mrf.mxu0
      %v6532 = vadd.f32 0.0, %v6531
      %6533 = vmatprep.mubr.bf16.mxu0 0
      %6534 = vmatmul.mubr.bf16.gmra.mxu0 %v4224
      %v6535 = vpop.f32.mrf.mxu0
      %v6536 = vadd.f32 0.0, %v6535
      %v6537 = vpop.f32.mrf.mxu0
      %v6538 = vadd.f32 0.0, %v6537
      %v6539 = vpop.f32.mrf.mxu0
      %v6540 = vadd.f32 0.0, %v6539
      %v6541 = vpop.f32.mrf.mxu0
      %v6542 = vadd.f32 0.0, %v6541
      %6543 = vmatprep.mubr.bf16.mxu0 0
      %6544 = vmatmul.mubr.bf16.gmra.mxu0 %v4227
      %v6545 = vpop.f32.mrf.mxu0
      %v6546 = vadd.f32 0.0, %v6545
      %v6547 = vpop.f32.mrf.mxu0
      %v6548 = vadd.f32 0.0, %v6547
      %v6549 = vpop.f32.mrf.mxu0
      %v6550 = vadd.f32 0.0, %v6549
      %v6551 = vpop.f32.mrf.mxu0
      %v6552 = vadd.f32 0.0, %v6551
      %6553 = vmatprep.mubr.bf16.mxu0 0
      %6554 = vmatmul.mubr.bf16.gmra.mxu0 %v4230
      %v6555 = vpop.f32.mrf.mxu0
      %v6556 = vadd.f32 0.0, %v6555
      %v6557 = vpop.f32.mrf.mxu0
      %v6558 = vadd.f32 0.0, %v6557
      %v6559 = vpop.f32.mrf.mxu0
      %v6560 = vadd.f32 0.0, %v6559
      %v6561 = vpop.f32.mrf.mxu0
      %v6562 = vadd.f32 0.0, %v6561
      %6563 = vmatprep.mubr.bf16.mxu0 0
      %6564 = vmatmul.mubr.bf16.gmra.mxu0 %v4233
      %v6565 = vpop.f32.mrf.mxu0
      %v6566 = vadd.f32 0.0, %v6565
      %v6567 = vpop.f32.mrf.mxu0
      %v6568 = vadd.f32 0.0, %v6567
      %v6569 = vpop.f32.mrf.mxu0
      %v6570 = vadd.f32 0.0, %v6569
      %v6571 = vpop.f32.mrf.mxu0
      %v6572 = vadd.f32 0.0, %v6571
      %6573 = vmatprep.mubr.bf16.mxu0 0
      %6574 = vmatmul.mubr.bf16.gmra.mxu0 %v4236
      %v6575 = vpop.f32.mrf.mxu0
      %v6576 = vadd.f32 0.0, %v6575
      %v6577 = vpop.f32.mrf.mxu0
      %v6578 = vadd.f32 0.0, %v6577
      %v6579 = vpop.f32.mrf.mxu0
      %v6580 = vadd.f32 0.0, %v6579
      %v6581 = vpop.f32.mrf.mxu0
      %v6582 = vadd.f32 0.0, %v6581
      %6583 = vmatprep.mubr.bf16.mxu0 0
      %6584 = vmatmul.mubr.bf16.gmra.mxu0 %v4239
      %v6585 = vpop.f32.mrf.mxu0
      %v6586 = vadd.f32 0.0, %v6585
      %v6587 = vpop.f32.mrf.mxu0
      %v6588 = vadd.f32 0.0, %v6587
      %v6589 = vpop.f32.mrf.mxu0
      %v6590 = vadd.f32 0.0, %v6589
      %v6591 = vpop.f32.mrf.mxu0
      %v6592 = vadd.f32 0.0, %v6591
      %6593 = vmatprep.mubr.bf16.mxu0 0
      %6594 = vmatmul.mubr.bf16.gmra.mxu0 %v4242
      %v6595 = vpop.f32.mrf.mxu0
      %v6596 = vadd.f32 0.0, %v6595
      %v6597 = vpop.f32.mrf.mxu0
      %v6598 = vadd.f32 0.0, %v6597
      %v6599 = vpop.f32.mrf.mxu0
      %v6600 = vadd.f32 0.0, %v6599
      %v6601 = vpop.f32.mrf.mxu0
      %v6602 = vadd.f32 0.0, %v6601
      %6603 = vmatprep.mubr.bf16.mxu0 0
      %6604 = vmatmul.mubr.bf16.gmra.mxu0 %v4245
      %v6605 = vpop.f32.mrf.mxu0
      %v6606 = vadd.f32 0.0, %v6605
      %v6607 = vpop.f32.mrf.mxu0
      %v6608 = vadd.f32 0.0, %v6607
      %v6609 = vpop.f32.mrf.mxu0
      %v6610 = vadd.f32 0.0, %v6609
      %v6611 = vpop.f32.mrf.mxu0
      %v6612 = vadd.f32 0.0, %v6611
      %6613 = vmatprep.mubr.bf16.mxu0 0
      %6614 = vmatmul.mubr.bf16.gmra.mxu0 %v4248
      %v6615 = vpop.f32.mrf.mxu0
      %v6616 = vadd.f32 0.0, %v6615
      %v6617 = vpop.f32.mrf.mxu0
      %v6618 = vadd.f32 0.0, %v6617
      %v6619 = vpop.f32.mrf.mxu0
      %v6620 = vadd.f32 0.0, %v6619
      %v6621 = vpop.f32.mrf.mxu0
      %v6622 = vadd.f32 0.0, %v6621
      %6623 = vmatprep.mubr.bf16.mxu0 0
      %6624 = vmatmul.mubr.bf16.gmra.mxu0 %v4251
      %v6625 = vpop.f32.mrf.mxu0
      %v6626 = vadd.f32 0.0, %v6625
      %v6627 = vpop.f32.mrf.mxu0
      %v6628 = vadd.f32 0.0, %v6627
      %v6629 = vpop.f32.mrf.mxu0
      %v6630 = vadd.f32 0.0, %v6629
      %v6631 = vpop.f32.mrf.mxu0
      %v6632 = vadd.f32 0.0, %v6631
      %6633 = vmatprep.mubr.bf16.mxu0 0
      %6634 = vmatmul.mubr.bf16.gmra.mxu0 %v5590
      %v6635 = vpop.f32.mrf.mxu0
      %v6636 = vadd.f32 0.0, %v6635
      %v6637 = vpop.f32.mrf.mxu0
      %v6638 = vadd.f32 0.0, %v6637
      %v6639 = vpop.f32.mrf.mxu0
      %v6640 = vadd.f32 0.0, %v6639
      %v6641 = vpop.f32.mrf.mxu0
      %v6642 = vadd.f32 0.0, %v6641
      %6643 = vmatprep.mubr.bf16.mxu0 0
      %6644 = vmatmul.mubr.bf16.gmra.mxu0 %v6453
      %v6645 = vpop.f32.mrf.mxu0
      %v6646 = vadd.f32 0.0, %v6645
      %v6647 = vpop.f32.mrf.mxu0
      %v6648 = vadd.f32 0.0, %v6647
      %v6649 = vpop.f32.mrf.mxu0
      %v6650 = vadd.f32 0.0, %v6649
      %v6651 = vpop.f32.mrf.mxu0
      %v6652 = vadd.f32 0.0, %v6651
      %6653 = vdwg.mxu0
      %v6654 = vadd.f32 %v6353, %v6496
      %v6655 = vadd.f32 %v6354, %v6498
      %v6656 = vadd.f32 %v6355, %v6500
      %v6657 = vadd.f32 %v6356, %v6502
      %v6658 = vadd.f32 %v6357, %v6506
      %v6659 = vadd.f32 %v6358, %v6508
      %v6660 = vadd.f32 %v6359, %v6510
      %v6661 = vadd.f32 %v6360, %v6512
      %v6662 = vadd.f32 %v6361, %v6516
      %v6663 = vadd.f32 %v6362, %v6518
      %v6664 = vadd.f32 %v6363, %v6520
      %v6665 = vadd.f32 %v6364, %v6522
      %v6666 = vadd.f32 %v6365, %v6526
      %v6667 = vadd.f32 %v6366, %v6528
      %v6668 = vadd.f32 %v6367, %v6530
      %v6669 = vadd.f32 %v6368, %v6532
      %v6670 = vadd.f32 %v6369, %v6536
      %v6671 = vadd.f32 %v6370, %v6538
      %v6672 = vadd.f32 %v6371, %v6540
      %v6673 = vadd.f32 %v6372, %v6542
      %v6674 = vadd.f32 %v6373, %v6546
      %v6675 = vadd.f32 %v6374, %v6548
      %v6676 = vadd.f32 %v6375, %v6550
      %v6677 = vadd.f32 %v6376, %v6552
      %v6678 = vadd.f32 %v6377, %v6556
      %v6679 = vadd.f32 %v6378, %v6558
      %v6680 = vadd.f32 %v6379, %v6560
      %v6681 = vadd.f32 %v6380, %v6562
      %v6682 = vadd.f32 %v6381, %v6566
      %v6683 = vadd.f32 %v6382, %v6568
      %v6684 = vadd.f32 %v6383, %v6570
      %v6685 = vadd.f32 %v6384, %v6572
      %v6686 = vadd.f32 %v6385, %v6576
      %v6687 = vadd.f32 %v6386, %v6578
      %v6688 = vadd.f32 %v6387, %v6580
      %v6689 = vadd.f32 %v6388, %v6582
      %v6690 = vadd.f32 %v6389, %v6586
      %v6691 = vadd.f32 %v6390, %v6588
      %v6692 = vadd.f32 %v6391, %v6590
      %v6693 = vadd.f32 %v6392, %v6592
      %v6694 = vadd.f32 %v6393, %v6596
      %v6695 = vadd.f32 %v6394, %v6598
      %v6696 = vadd.f32 %v6395, %v6600
      %v6697 = vadd.f32 %v6396, %v6602
      %v6698 = vadd.f32 %v6397, %v6606
      %v6699 = vadd.f32 %v6398, %v6608
      %v6700 = vadd.f32 %v6399, %v6610
      %v6701 = vadd.f32 %v6400, %v6612
      %v6702 = vadd.f32 %v6401, %v6616
      %v6703 = vadd.f32 %v6402, %v6618
      %v6704 = vadd.f32 %v6403, %v6620
      %v6705 = vadd.f32 %v6404, %v6622
      %v6706 = vadd.f32 %v6405, %v6626
      %v6707 = vadd.f32 %v6406, %v6628
      %v6708 = vadd.f32 %v6407, %v6630
      %v6709 = vadd.f32 %v6408, %v6632
      %v6710 = vadd.f32 %v6409, %v6636
      %v6711 = vadd.f32 %v6410, %v6638
      %v6712 = vadd.f32 %v6411, %v6640
      %v6713 = vadd.f32 %v6412, %v6642
      %v6714 = vadd.f32 %v6413, %v6646
      %v6715 = vadd.f32 %v6414, %v6648
      %v6716 = vadd.f32 %v6415, %v6650
      %v6717 = vadd.f32 %v6416, %v6652
      %v6719 = vrot.slane %v436, 5
      %v6720 = vrot.slane %v6719, 4
      %v6721 = vrot.slane %v437, 5
      %v6722 = vsel %vm1503, %v6720, %v6721
      %v6723 = vrot.slane %v6721, 4
      %v6724 = vrot.slane %v438, 5
      %v6725 = vsel %vm1503, %v6723, %v6724
      %v6726 = vld [vmem:[%s3 + $0x20] sm:$0x33]
      %v6727 = vunpack.c.l.b16 %v6722
      %v6728 = vunpack.c.l.b16 %v6725
      %v6729 = vpack.c.b16 %v6728, %v6727
      %v6731 = vunpack.c.l.b16 %v6726
      %v6732 = vunpack.c.h.b16 %v6726
      %v6733 = vpack.c.b16 %v6731, %v6731
      %v6734 = vpack.c.b16 %v6732, %v6732
      %v6736 = vsel %vm4204, %v6729, 0
      %v6739 = vsel %vm950, %v6733, 0
      %v6742 = vsel %vm950, %v6734, 0
      %6744 = vmatprep.subr.bf16.mxu0 0
      %6745 = vmatpush1.bf16.msra.mxu0 0
      %6746 = vmatprep.subr.bf16.mxu0 0
      %6747 = vmatpush1.bf16.msra.mxu0 0
      %6748 = vmatprep.subr.bf16.mxu0 0
      %6749 = vmatpush1.bf16.msra.mxu0 0
      %6750 = vmatprep.subr.bf16.mxu0 0
      %6751 = vmatpush1.bf16.msra.mxu0 0
      %6752 = vmatprep.subr.bf16.mxu0 0
      %6753 = vmatpush1.bf16.msra.mxu0 0
      %6754 = vmatprep.subr.bf16.mxu0 0
      %6755 = vmatpush1.bf16.msra.mxu0 0
      %6756 = vmatprep.subr.bf16.mxu0 0
      %6757 = vmatpush1.bf16.msra.mxu0 0
      %6758 = vmatprep.subr.bf16.mxu0 %v6742
      %6759 = vmatpush1.bf16.msra.mxu0 %v6739
      %6760 = vmatprep.subr.bf16.mxu0 0
      %6761 = vmatpush2.bf16.msra.mxu0 0
      %6762 = vmatprep.subr.bf16.mxu0 0
      %6763 = vmatpush2.bf16.msra.mxu0 0
      %6764 = vmatprep.subr.bf16.mxu0 0
      %6765 = vmatpush2.bf16.msra.mxu0 0
      %6766 = vmatprep.subr.bf16.mxu0 0
      %6767 = vmatpush2.bf16.msra.mxu0 0
      %6768 = vmatprep.subr.bf16.mxu0 0
      %6769 = vmatpush2.bf16.msra.mxu0 0
      %6770 = vmatprep.subr.bf16.mxu0 0
      %6771 = vmatpush2.bf16.msra.mxu0 0
      %6772 = vmatprep.subr.bf16.mxu0 0
      %6773 = vmatpush2.bf16.msra.mxu0 0
      %6774 = vmatprep.subr.bf16.mxu0 0
      %6775 = vmatpush2.bf16.msra.mxu0 0
      %6776 = vmatprep.mubr.bf16.mxu0 0
      %6777 = vmatmul.mubr.bf16.gmra.mxu0 %v4973
      %v6778 = vpop.f32.mrf.mxu0
      %v6779 = vadd.f32 0.0, %v6778
      %v6780 = vpop.f32.mrf.mxu0
      %v6781 = vadd.f32 0.0, %v6780
      %v6782 = vpop.f32.mrf.mxu0
      %v6783 = vadd.f32 0.0, %v6782
      %v6784 = vpop.f32.mrf.mxu0
      %v6785 = vadd.f32 0.0, %v6784
      %6786 = vmatprep.mubr.bf16.mxu0 0
      %6787 = vmatmul.mubr.bf16.gmra.mxu0 %v4976
      %v6788 = vpop.f32.mrf.mxu0
      %v6789 = vadd.f32 0.0, %v6788
      %v6790 = vpop.f32.mrf.mxu0
      %v6791 = vadd.f32 0.0, %v6790
      %v6792 = vpop.f32.mrf.mxu0
      %v6793 = vadd.f32 0.0, %v6792
      %v6794 = vpop.f32.mrf.mxu0
      %v6795 = vadd.f32 0.0, %v6794
      %6796 = vmatprep.mubr.bf16.mxu0 0
      %6797 = vmatmul.mubr.bf16.gmra.mxu0 %v4979
      %v6798 = vpop.f32.mrf.mxu0
      %v6799 = vadd.f32 0.0, %v6798
      %v6800 = vpop.f32.mrf.mxu0
      %v6801 = vadd.f32 0.0, %v6800
      %v6802 = vpop.f32.mrf.mxu0
      %v6803 = vadd.f32 0.0, %v6802
      %v6804 = vpop.f32.mrf.mxu0
      %v6805 = vadd.f32 0.0, %v6804
      %6806 = vmatprep.mubr.bf16.mxu0 0
      %6807 = vmatmul.mubr.bf16.gmra.mxu0 %v4982
      %v6808 = vpop.f32.mrf.mxu0
      %v6809 = vadd.f32 0.0, %v6808
      %v6810 = vpop.f32.mrf.mxu0
      %v6811 = vadd.f32 0.0, %v6810
      %v6812 = vpop.f32.mrf.mxu0
      %v6813 = vadd.f32 0.0, %v6812
      %v6814 = vpop.f32.mrf.mxu0
      %v6815 = vadd.f32 0.0, %v6814
      %6816 = vmatprep.mubr.bf16.mxu0 0
      %6817 = vmatmul.mubr.bf16.gmra.mxu0 %v4985
      %v6818 = vpop.f32.mrf.mxu0
      %v6819 = vadd.f32 0.0, %v6818
      %v6820 = vpop.f32.mrf.mxu0
      %v6821 = vadd.f32 0.0, %v6820
      %v6822 = vpop.f32.mrf.mxu0
      %v6823 = vadd.f32 0.0, %v6822
      %v6824 = vpop.f32.mrf.mxu0
      %v6825 = vadd.f32 0.0, %v6824
      %6826 = vmatprep.mubr.bf16.mxu0 0
      %6827 = vmatmul.mubr.bf16.gmra.mxu0 %v4988
      %v6828 = vpop.f32.mrf.mxu0
      %v6829 = vadd.f32 0.0, %v6828
      %v6830 = vpop.f32.mrf.mxu0
      %v6831 = vadd.f32 0.0, %v6830
      %v6832 = vpop.f32.mrf.mxu0
      %v6833 = vadd.f32 0.0, %v6832
      %v6834 = vpop.f32.mrf.mxu0
      %v6835 = vadd.f32 0.0, %v6834
      %6836 = vmatprep.mubr.bf16.mxu0 0
      %6837 = vmatmul.mubr.bf16.gmra.mxu0 %v4991
      %v6838 = vpop.f32.mrf.mxu0
      %v6839 = vadd.f32 0.0, %v6838
      %v6840 = vpop.f32.mrf.mxu0
      %v6841 = vadd.f32 0.0, %v6840
      %v6842 = vpop.f32.mrf.mxu0
      %v6843 = vadd.f32 0.0, %v6842
      %v6844 = vpop.f32.mrf.mxu0
      %v6845 = vadd.f32 0.0, %v6844
      %6846 = vmatprep.mubr.bf16.mxu0 0
      %6847 = vmatmul.mubr.bf16.gmra.mxu0 %v4994
      %v6848 = vpop.f32.mrf.mxu0
      %v6849 = vadd.f32 0.0, %v6848
      %v6850 = vpop.f32.mrf.mxu0
      %v6851 = vadd.f32 0.0, %v6850
      %v6852 = vpop.f32.mrf.mxu0
      %v6853 = vadd.f32 0.0, %v6852
      %v6854 = vpop.f32.mrf.mxu0
      %v6855 = vadd.f32 0.0, %v6854
      %6856 = vmatprep.mubr.bf16.mxu0 0
      %6857 = vmatmul.mubr.bf16.gmra.mxu0 %v4997
      %v6858 = vpop.f32.mrf.mxu0
      %v6859 = vadd.f32 0.0, %v6858
      %v6860 = vpop.f32.mrf.mxu0
      %v6861 = vadd.f32 0.0, %v6860
      %v6862 = vpop.f32.mrf.mxu0
      %v6863 = vadd.f32 0.0, %v6862
      %v6864 = vpop.f32.mrf.mxu0
      %v6865 = vadd.f32 0.0, %v6864
      %6866 = vmatprep.mubr.bf16.mxu0 0
      %6867 = vmatmul.mubr.bf16.gmra.mxu0 %v5000
      %v6868 = vpop.f32.mrf.mxu0
      %v6869 = vadd.f32 0.0, %v6868
      %v6870 = vpop.f32.mrf.mxu0
      %v6871 = vadd.f32 0.0, %v6870
      %v6872 = vpop.f32.mrf.mxu0
      %v6873 = vadd.f32 0.0, %v6872
      %v6874 = vpop.f32.mrf.mxu0
      %v6875 = vadd.f32 0.0, %v6874
      %6876 = vmatprep.mubr.bf16.mxu0 0
      %6877 = vmatmul.mubr.bf16.gmra.mxu0 %v5003
      %v6878 = vpop.f32.mrf.mxu0
      %v6879 = vadd.f32 0.0, %v6878
      %v6880 = vpop.f32.mrf.mxu0
      %v6881 = vadd.f32 0.0, %v6880
      %v6882 = vpop.f32.mrf.mxu0
      %v6883 = vadd.f32 0.0, %v6882
      %v6884 = vpop.f32.mrf.mxu0
      %v6885 = vadd.f32 0.0, %v6884
      %6886 = vmatprep.mubr.bf16.mxu0 0
      %6887 = vmatmul.mubr.bf16.gmra.mxu0 %v5006
      %v6888 = vpop.f32.mrf.mxu0
      %v6889 = vadd.f32 0.0, %v6888
      %v6890 = vpop.f32.mrf.mxu0
      %v6891 = vadd.f32 0.0, %v6890
      %v6892 = vpop.f32.mrf.mxu0
      %v6893 = vadd.f32 0.0, %v6892
      %v6894 = vpop.f32.mrf.mxu0
      %v6895 = vadd.f32 0.0, %v6894
      %6896 = vmatprep.mubr.bf16.mxu0 0
      %6897 = vmatmul.mubr.bf16.gmra.mxu0 %v5009
      %v6898 = vpop.f32.mrf.mxu0
      %v6899 = vadd.f32 0.0, %v6898
      %v6900 = vpop.f32.mrf.mxu0
      %v6901 = vadd.f32 0.0, %v6900
      %v6902 = vpop.f32.mrf.mxu0
      %v6903 = vadd.f32 0.0, %v6902
      %v6904 = vpop.f32.mrf.mxu0
      %v6905 = vadd.f32 0.0, %v6904
      %6906 = vmatprep.mubr.bf16.mxu0 0
      %6907 = vmatmul.mubr.bf16.gmra.mxu0 %v5012
      %v6908 = vpop.f32.mrf.mxu0
      %v6909 = vadd.f32 0.0, %v6908
      %v6910 = vpop.f32.mrf.mxu0
      %v6911 = vadd.f32 0.0, %v6910
      %v6912 = vpop.f32.mrf.mxu0
      %v6913 = vadd.f32 0.0, %v6912
      %v6914 = vpop.f32.mrf.mxu0
      %v6915 = vadd.f32 0.0, %v6914
      %6916 = vmatprep.mubr.bf16.mxu0 0
      %6917 = vmatmul.mubr.bf16.gmra.mxu0 %v5875
      %v6918 = vpop.f32.mrf.mxu0
      %v6919 = vadd.f32 0.0, %v6918
      %v6920 = vpop.f32.mrf.mxu0
      %v6921 = vadd.f32 0.0, %v6920
      %v6922 = vpop.f32.mrf.mxu0
      %v6923 = vadd.f32 0.0, %v6922
      %v6924 = vpop.f32.mrf.mxu0
      %v6925 = vadd.f32 0.0, %v6924
      %6926 = vmatprep.mubr.bf16.mxu0 0
      %6927 = vmatmul.mubr.bf16.gmra.mxu0 %v6736
      %v6928 = vpop.f32.mrf.mxu0
      %v6929 = vadd.f32 0.0, %v6928
      %v6930 = vpop.f32.mrf.mxu0
      %v6931 = vadd.f32 0.0, %v6930
      %v6932 = vpop.f32.mrf.mxu0
      %v6933 = vadd.f32 0.0, %v6932
      %v6934 = vpop.f32.mrf.mxu0
      %v6935 = vadd.f32 0.0, %v6934
      %6936 = vdwg.mxu0
      %v6937 = vadd.f32 %v6654, %v6779
      %v6938 = vadd.f32 %v6655, %v6781
      %v6939 = vadd.f32 %v6656, %v6783
      %v6940 = vadd.f32 %v6657, %v6785
      %v6941 = vadd.f32 %v6658, %v6789
      %v6942 = vadd.f32 %v6659, %v6791
      %v6943 = vadd.f32 %v6660, %v6793
      %v6944 = vadd.f32 %v6661, %v6795
      %v6945 = vadd.f32 %v6662, %v6799
      %v6946 = vadd.f32 %v6663, %v6801
      %v6947 = vadd.f32 %v6664, %v6803
      %v6948 = vadd.f32 %v6665, %v6805
      %v6949 = vadd.f32 %v6666, %v6809
      %v6950 = vadd.f32 %v6667, %v6811
      %v6951 = vadd.f32 %v6668, %v6813
      %v6952 = vadd.f32 %v6669, %v6815
      %v6953 = vadd.f32 %v6670, %v6819
      %v6954 = vadd.f32 %v6671, %v6821
      %v6955 = vadd.f32 %v6672, %v6823
      %v6956 = vadd.f32 %v6673, %v6825
      %v6957 = vadd.f32 %v6674, %v6829
      %v6958 = vadd.f32 %v6675, %v6831
      %v6959 = vadd.f32 %v6676, %v6833
      %v6960 = vadd.f32 %v6677, %v6835
      %v6961 = vadd.f32 %v6678, %v6839
      %v6962 = vadd.f32 %v6679, %v6841
      %v6963 = vadd.f32 %v6680, %v6843
      %v6964 = vadd.f32 %v6681, %v6845
      %v6965 = vadd.f32 %v6682, %v6849
      %v6966 = vadd.f32 %v6683, %v6851
      %v6967 = vadd.f32 %v6684, %v6853
      %v6968 = vadd.f32 %v6685, %v6855
      %v6969 = vadd.f32 %v6686, %v6859
      %v6970 = vadd.f32 %v6687, %v6861
      %v6971 = vadd.f32 %v6688, %v6863
      %v6972 = vadd.f32 %v6689, %v6865
      %v6973 = vadd.f32 %v6690, %v6869
      %v6974 = vadd.f32 %v6691, %v6871
      %v6975 = vadd.f32 %v6692, %v6873
      %v6976 = vadd.f32 %v6693, %v6875
      %v6977 = vadd.f32 %v6694, %v6879
      %v6978 = vadd.f32 %v6695, %v6881
      %v6979 = vadd.f32 %v6696, %v6883
      %v6980 = vadd.f32 %v6697, %v6885
      %v6981 = vadd.f32 %v6698, %v6889
      %v6982 = vadd.f32 %v6699, %v6891
      %v6983 = vadd.f32 %v6700, %v6893
      %v6984 = vadd.f32 %v6701, %v6895
      %v6985 = vadd.f32 %v6702, %v6899
      %v6986 = vadd.f32 %v6703, %v6901
      %v6987 = vadd.f32 %v6704, %v6903
      %v6988 = vadd.f32 %v6705, %v6905
      %v6989 = vadd.f32 %v6706, %v6909
      %v6990 = vadd.f32 %v6707, %v6911
      %v6991 = vadd.f32 %v6708, %v6913
      %v6992 = vadd.f32 %v6709, %v6915
      %v6993 = vadd.f32 %v6710, %v6919
      %v6994 = vadd.f32 %v6711, %v6921
      %v6995 = vadd.f32 %v6712, %v6923
      %v6996 = vadd.f32 %v6713, %v6925
      %v6997 = vadd.f32 %v6714, %v6929
      %v6998 = vadd.f32 %v6715, %v6931
      %v6999 = vadd.f32 %v6716, %v6933
      %v7000 = vadd.f32 %v6717, %v6935
      %v7001 = vadd.f32 %v3699, %v6937
      %v7002 = vadd.f32 %v3700, %v6938
      %v7003 = vadd.f32 %v3701, %v6939
      %v7004 = vadd.f32 %v3702, %v6940
      %v7005 = vadd.f32 %v3703, %v6941
      %v7006 = vadd.f32 %v3704, %v6942
      %v7007 = vadd.f32 %v3705, %v6943
      %v7008 = vadd.f32 %v3706, %v6944
      %v7009 = vadd.f32 %v3707, %v6945
      %v7010 = vadd.f32 %v3708, %v6946
      %v7011 = vadd.f32 %v3709, %v6947
      %v7012 = vadd.f32 %v3710, %v6948
      %v7013 = vadd.f32 %v3711, %v6949
      %v7014 = vadd.f32 %v3712, %v6950
      %v7015 = vadd.f32 %v3713, %v6951
      %v7016 = vadd.f32 %v3714, %v6952
      %v7017 = vadd.f32 %v3715, %v6953
      %v7018 = vadd.f32 %v3716, %v6954
      %v7019 = vadd.f32 %v3717, %v6955
      %v7020 = vadd.f32 %v3718, %v6956
      %v7021 = vadd.f32 %v3719, %v6957
      %v7022 = vadd.f32 %v3720, %v6958
      %v7023 = vadd.f32 %v3721, %v6959
      %v7024 = vadd.f32 %v3722, %v6960
      %v7025 = vadd.f32 %v3723, %v6961
      %v7026 = vadd.f32 %v3724, %v6962
      %v7027 = vadd.f32 %v3725, %v6963
      %v7028 = vadd.f32 %v3726, %v6964
      %v7029 = vadd.f32 %v3727, %v6965
      %v7030 = vadd.f32 %v3728, %v6966
      %v7031 = vadd.f32 %v3729, %v6967
      %v7032 = vadd.f32 %v3730, %v6968
      %v7033 = vadd.f32 %v3731, %v6969
      %v7034 = vadd.f32 %v3732, %v6970
      %v7035 = vadd.f32 %v3733, %v6971
      %v7036 = vadd.f32 %v3734, %v6972
      %v7037 = vadd.f32 %v3735, %v6973
      %v7038 = vadd.f32 %v3736, %v6974
      %v7039 = vadd.f32 %v3737, %v6975
      %v7040 = vadd.f32 %v3738, %v6976
      %v7041 = vadd.f32 %v3739, %v6977
      %v7042 = vadd.f32 %v3740, %v6978
      %v7043 = vadd.f32 %v3741, %v6979
      %v7044 = vadd.f32 %v3742, %v6980
      %v7045 = vadd.f32 %v3743, %v6981
      %v7046 = vadd.f32 %v3744, %v6982
      %v7047 = vadd.f32 %v3745, %v6983
      %v7048 = vadd.f32 %v3746, %v6984
      %v7049 = vadd.f32 %v3747, %v6985
      %v7050 = vadd.f32 %v3748, %v6986
      %v7051 = vadd.f32 %v3749, %v6987
      %v7052 = vadd.f32 %v3750, %v6988
      %v7053 = vadd.f32 %v3751, %v6989
      %v7054 = vadd.f32 %v3752, %v6990
      %v7055 = vadd.f32 %v3753, %v6991
      %v7056 = vadd.f32 %v3754, %v6992
      %v7057 = vadd.f32 %v3755, %v6993
      %v7058 = vadd.f32 %v3756, %v6994
      %v7059 = vadd.f32 %v3757, %v6995
      %v7060 = vadd.f32 %v3758, %v6996
      %v7061 = vadd.f32 %v3759, %v6997
      %v7062 = vadd.f32 %v3760, %v6998
      %v7063 = vadd.f32 %v3761, %v6999
      %v7064 = vadd.f32 %v3762, %v7000
      %v7065 = vld [vmem:[%s4] sm:$0x3]
      %v7067 = vlaneseq
      %v7068 = vshrl.u32 %v7067, 7
      %v7069 = vsub.s32 0, %v7068
      %v7070 = vrot.slane %v7065, %v7069
      %v7071 = vlaneseq
      %v7072 = vshrl.u32 %v7071, 7
      %v7073 = vsub.s32 1, %v7072
      %v7074 = vrot.slane %v7065, %v7073
      %v7077 = vadd.f32 %v7001, %v7070
      %v7078 = vadd.f32 %v7002, %v7074
      %v7079 = vadd.f32 %v7003, %v7070
      %v7080 = vadd.f32 %v7004, %v7074
      %v7081 = vadd.f32 %v7005, %v7070
      %v7082 = vadd.f32 %v7006, %v7074
      %v7083 = vadd.f32 %v7007, %v7070
      %v7084 = vadd.f32 %v7008, %v7074
      %v7085 = vadd.f32 %v7009, %v7070
      %v7086 = vadd.f32 %v7010, %v7074
      %v7087 = vadd.f32 %v7011, %v7070
      %v7088 = vadd.f32 %v7012, %v7074
      %v7089 = vadd.f32 %v7013, %v7070
      %v7090 = vadd.f32 %v7014, %v7074
      %v7091 = vadd.f32 %v7015, %v7070
      %v7092 = vadd.f32 %v7016, %v7074
      %v7093 = vadd.f32 %v7017, %v7070
      %v7094 = vadd.f32 %v7018, %v7074
      %v7095 = vadd.f32 %v7019, %v7070
      %v7096 = vadd.f32 %v7020, %v7074
      %v7097 = vadd.f32 %v7021, %v7070
      %v7098 = vadd.f32 %v7022, %v7074
      %v7099 = vadd.f32 %v7023, %v7070
      %v7100 = vadd.f32 %v7024, %v7074
      %v7101 = vadd.f32 %v7025, %v7070
      %v7102 = vadd.f32 %v7026, %v7074
      %v7103 = vadd.f32 %v7027, %v7070
      %v7104 = vadd.f32 %v7028, %v7074
      %v7105 = vadd.f32 %v7029, %v7070
      %v7106 = vadd.f32 %v7030, %v7074
      %v7107 = vadd.f32 %v7031, %v7070
      %v7108 = vadd.f32 %v7032, %v7074
      %v7109 = vadd.f32 %v7033, %v7070
      %v7110 = vadd.f32 %v7034, %v7074
      %v7111 = vadd.f32 %v7035, %v7070
      %v7112 = vadd.f32 %v7036, %v7074
      %v7113 = vadd.f32 %v7037, %v7070
      %v7114 = vadd.f32 %v7038, %v7074
      %v7115 = vadd.f32 %v7039, %v7070
      %v7116 = vadd.f32 %v7040, %v7074
      %v7117 = vadd.f32 %v7041, %v7070
      %v7118 = vadd.f32 %v7042, %v7074
      %v7119 = vadd.f32 %v7043, %v7070
      %v7120 = vadd.f32 %v7044, %v7074
      %v7121 = vadd.f32 %v7045, %v7070
      %v7122 = vadd.f32 %v7046, %v7074
      %v7123 = vadd.f32 %v7047, %v7070
      %v7124 = vadd.f32 %v7048, %v7074
      %v7125 = vadd.f32 %v7049, %v7070
      %v7126 = vadd.f32 %v7050, %v7074
      %v7127 = vadd.f32 %v7051, %v7070
      %v7128 = vadd.f32 %v7052, %v7074
      %v7129 = vadd.f32 %v7053, %v7070
      %v7130 = vadd.f32 %v7054, %v7074
      %v7131 = vadd.f32 %v7055, %v7070
      %v7132 = vadd.f32 %v7056, %v7074
      %v7133 = vadd.f32 %v7057, %v7070
      %v7134 = vadd.f32 %v7058, %v7074
      %v7135 = vadd.f32 %v7059, %v7070
      %v7136 = vadd.f32 %v7060, %v7074
      %v7137 = vadd.f32 %v7061, %v7070
      %v7138 = vadd.f32 %v7062, %v7074
      %v7139 = vadd.f32 %v7063, %v7070
      %v7140 = vadd.f32 %v7064, %v7074
      %v7141 = vpack.c.bf16 %v7079, %v7077
      %v7142 = vpack.c.bf16 %v7080, %v7078
      %v7143 = vpack.c.bf16 %v7083, %v7081
      %v7144 = vpack.c.bf16 %v7084, %v7082
      %v7145 = vpack.c.bf16 %v7087, %v7085
      %v7146 = vpack.c.bf16 %v7088, %v7086
      %v7147 = vpack.c.bf16 %v7091, %v7089
      %v7148 = vpack.c.bf16 %v7092, %v7090
      %v7149 = vpack.c.bf16 %v7095, %v7093
      %v7150 = vpack.c.bf16 %v7096, %v7094
      %v7151 = vpack.c.bf16 %v7099, %v7097
      %v7152 = vpack.c.bf16 %v7100, %v7098
      %v7153 = vpack.c.bf16 %v7103, %v7101
      %v7154 = vpack.c.bf16 %v7104, %v7102
      %v7155 = vpack.c.bf16 %v7107, %v7105
      %v7156 = vpack.c.bf16 %v7108, %v7106
      %v7157 = vpack.c.bf16 %v7111, %v7109
      %v7158 = vpack.c.bf16 %v7112, %v7110
      %v7159 = vpack.c.bf16 %v7115, %v7113
      %v7160 = vpack.c.bf16 %v7116, %v7114
      %v7161 = vpack.c.bf16 %v7119, %v7117
      %v7162 = vpack.c.bf16 %v7120, %v7118
      %v7163 = vpack.c.bf16 %v7123, %v7121
      %v7164 = vpack.c.bf16 %v7124, %v7122
      %v7165 = vpack.c.bf16 %v7127, %v7125
      %v7166 = vpack.c.bf16 %v7128, %v7126
      %v7167 = vpack.c.bf16 %v7131, %v7129
      %v7168 = vpack.c.bf16 %v7132, %v7130
      %v7169 = vpack.c.bf16 %v7135, %v7133
      %v7170 = vpack.c.bf16 %v7136, %v7134
      %v7171 = vpack.c.bf16 %v7139, %v7137
      %v7172 = vpack.c.bf16 %v7140, %v7138
      %v7173 = vld [vmem:[%s5] sm:$0xf]
      %v7174 = vld [vmem:[%s5 + $0x4] sm:$0xf]
      %v7175 = vld [vmem:[%s5 + $0x8] sm:$0xf]
      %v7176 = vld [vmem:[%s5 + $0xc] sm:$0xf]
      %v7177 = vld [vmem:[%s5 + $0x10] sm:$0xf]
      %v7178 = vld [vmem:[%s5 + $0x14] sm:$0xf]
      %v7179 = vld [vmem:[%s5 + $0x18] sm:$0xf]
      %v7180 = vld [vmem:[%s5 + $0x1c] sm:$0xf]
      %v7181 = vld [vmem:[%s5 + $0x20] sm:$0xf]
      %v7182 = vld [vmem:[%s5 + $0x24] sm:$0xf]
      %v7183 = vld [vmem:[%s5 + $0x28] sm:$0xf]
      %v7184 = vld [vmem:[%s5 + $0x2c] sm:$0xf]
      %v7185 = vld [vmem:[%s5 + $0x30] sm:$0xf]
      %v7186 = vld [vmem:[%s5 + $0x34] sm:$0xf]
      %v7187 = vld [vmem:[%s5 + $0x38] sm:$0xf]
      %v7188 = vld [vmem:[%s5 + $0x3c] sm:$0xf]
      %v7189 = vld [vmem:[%s5 + $0x40] sm:$0xf]
      %v7190 = vld [vmem:[%s5 + $0x44] sm:$0xf]
      %v7191 = vld [vmem:[%s5 + $0x48] sm:$0xf]
      %v7192 = vld [vmem:[%s5 + $0x4c] sm:$0xf]
      %v7193 = vld [vmem:[%s5 + $0x50] sm:$0xf]
      %v7194 = vld [vmem:[%s5 + $0x54] sm:$0xf]
      %v7195 = vld [vmem:[%s5 + $0x58] sm:$0xf]
      %v7196 = vld [vmem:[%s5 + $0x5c] sm:$0xf]
      %v7197 = vld [vmem:[%s5 + $0x60] sm:$0xf]
      %v7198 = vld [vmem:[%s5 + $0x64] sm:$0xf]
      %v7199 = vld [vmem:[%s5 + $0x68] sm:$0xf]
      %v7200 = vld [vmem:[%s5 + $0x6c] sm:$0xf]
      %v7201 = vld [vmem:[%s5 + $0x70] sm:$0xf]
      %v7202 = vld [vmem:[%s5 + $0x74] sm:$0xf]
      %v7203 = vld [vmem:[%s5 + $0x78] sm:$0xf]
      %v7204 = vld [vmem:[%s5 + $0x7c] sm:$0xf]
      %v7205 = vld [vmem:[%s6] sm:$0x1]
      %v7207 = vlaneseq
      %v7208 = vshrl.u32 %v7207, 7
      %v7209 = vsub.s32 0, %v7208
      %v7210 = vrot.slane %v7205, %v7209
      %v7244 = vunpack.c.l.b16 %v7173
      %v7245 = vunpack.c.l.b16 %v7174
      %v7246 = vunpack.c.l.b16 %v7175
      %v7247 = vunpack.c.l.b16 %v7176
      %v7248 = vunpack.c.l.b16 %v7177
      %v7249 = vunpack.c.l.b16 %v7178
      %v7250 = vunpack.c.l.b16 %v7179
      %v7251 = vunpack.c.l.b16 %v7180
      %v7252 = vunpack.c.l.b16 %v7181
      %v7253 = vunpack.c.l.b16 %v7182
      %v7254 = vunpack.c.l.b16 %v7183
      %v7255 = vunpack.c.l.b16 %v7184
      %v7256 = vunpack.c.l.b16 %v7185
      %v7257 = vunpack.c.l.b16 %v7186
      %v7258 = vunpack.c.l.b16 %v7187
      %v7259 = vunpack.c.l.b16 %v7188
      %v7260 = vunpack.c.l.b16 %v7189
      %v7261 = vunpack.c.l.b16 %v7190
      %v7262 = vunpack.c.l.b16 %v7191
      %v7263 = vunpack.c.l.b16 %v7192
      %v7264 = vunpack.c.l.b16 %v7193
      %v7265 = vunpack.c.l.b16 %v7194
      %v7266 = vunpack.c.l.b16 %v7195
      %v7267 = vunpack.c.l.b16 %v7196
      %v7268 = vunpack.c.l.b16 %v7197
      %v7269 = vunpack.c.l.b16 %v7198
      %v7270 = vunpack.c.l.b16 %v7199
      %v7271 = vunpack.c.l.b16 %v7200
      %v7272 = vunpack.c.l.b16 %v7201
      %v7273 = vunpack.c.l.b16 %v7202
      %v7274 = vunpack.c.l.b16 %v7203
      %v7275 = vunpack.c.l.b16 %v7204
      %v7276 = vpack.c.b16 %v7245, %v7244
      %v7277 = vpack.c.b16 %v7247, %v7246
      %v7278 = vpack.c.b16 %v7249, %v7248
      %v7279 = vpack.c.b16 %v7251, %v7250
      %v7280 = vpack.c.b16 %v7253, %v7252
      %v7281 = vpack.c.b16 %v7255, %v7254
      %v7282 = vpack.c.b16 %v7257, %v7256
      %v7283 = vpack.c.b16 %v7259, %v7258
      %v7284 = vpack.c.b16 %v7261, %v7260
      %v7285 = vpack.c.b16 %v7263, %v7262
      %v7286 = vpack.c.b16 %v7265, %v7264
      %v7287 = vpack.c.b16 %v7267, %v7266
      %v7288 = vpack.c.b16 %v7269, %v7268
      %v7289 = vpack.c.b16 %v7271, %v7270
      %v7290 = vpack.c.b16 %v7273, %v7272
      %v7291 = vpack.c.b16 %v7275, %v7274
      %7308 = vmatprep.subr.bf16.mxu0 0
      %7309 = vmatpush1.bf16.msra.mxu0 %v7283
      %7310 = vmatprep.subr.bf16.mxu0 0
      %7311 = vmatpush1.bf16.msra.mxu0 %v7282
      %7312 = vmatprep.subr.bf16.mxu0 0
      %7313 = vmatpush1.bf16.msra.mxu0 %v7281
      %7314 = vmatprep.subr.bf16.mxu0 0
      %7315 = vmatpush1.bf16.msra.mxu0 %v7280
      %7316 = vmatprep.subr.bf16.mxu0 0
      %7317 = vmatpush1.bf16.msra.mxu0 %v7279
      %7318 = vmatprep.subr.bf16.mxu0 0
      %7319 = vmatpush1.bf16.msra.mxu0 %v7278
      %7320 = vmatprep.subr.bf16.mxu0 0
      %7321 = vmatpush1.bf16.msra.mxu0 %v7277
      %7322 = vmatprep.subr.bf16.mxu0 0
      %7323 = vmatpush1.bf16.msra.mxu0 %v7276
      %7324 = vmatprep.subr.bf16.mxu0 0
      %7325 = vmatpush2.bf16.msra.mxu0 %v7291
      %7326 = vmatprep.subr.bf16.mxu0 0
      %7327 = vmatpush2.bf16.msra.mxu0 %v7290
      %7328 = vmatprep.subr.bf16.mxu0 0
      %7329 = vmatpush2.bf16.msra.mxu0 %v7289
      %7330 = vmatprep.subr.bf16.mxu0 0
      %7331 = vmatpush2.bf16.msra.mxu0 %v7288
      %7332 = vmatprep.subr.bf16.mxu0 0
      %7333 = vmatpush2.bf16.msra.mxu0 %v7287
      %7334 = vmatprep.subr.bf16.mxu0 0
      %7335 = vmatpush2.bf16.msra.mxu0 %v7286
      %7336 = vmatprep.subr.bf16.mxu0 0
      %7337 = vmatpush2.bf16.msra.mxu0 %v7285
      %7338 = vmatprep.subr.bf16.mxu0 0
      %7339 = vmatpush2.bf16.msra.mxu0 %v7284
      %7340 = vmatprep.mubr.bf16.mxu0 %v7142
      %7341 = vmatmul.mubr.bf16.gmra.mxu0 %v7141
      %v7342 = vpop.f32.mrf.mxu0
      %v7343 = vadd.f32 %v7210, %v7342
      %v7344 = vpop.f32.mrf.mxu0
      %v7345 = vpop.f32.mrf.mxu0
      %v7346 = vadd.f32 %v7210, %v7345
      %v7347 = vpop.f32.mrf.mxu0
      %7348 = vmatprep.mubr.bf16.mxu0 %v7144
      %7349 = vmatmul.mubr.bf16.gmra.mxu0 %v7143
      %v7350 = vpop.f32.mrf.mxu0
      %v7351 = vadd.f32 %v7210, %v7350
      %v7352 = vpop.f32.mrf.mxu0
      %v7353 = vpop.f32.mrf.mxu0
      %v7354 = vadd.f32 %v7210, %v7353
      %v7355 = vpop.f32.mrf.mxu0
      %7356 = vmatprep.mubr.bf16.mxu0 %v7146
      %7357 = vmatmul.mubr.bf16.gmra.mxu0 %v7145
      %v7358 = vpop.f32.mrf.mxu0
      %v7359 = vadd.f32 %v7210, %v7358
      %v7360 = vpop.f32.mrf.mxu0
      %v7361 = vpop.f32.mrf.mxu0
      %v7362 = vadd.f32 %v7210, %v7361
      %v7363 = vpop.f32.mrf.mxu0
      %7364 = vmatprep.mubr.bf16.mxu0 %v7148
      %7365 = vmatmul.mubr.bf16.gmra.mxu0 %v7147
      %v7366 = vpop.f32.mrf.mxu0
      %v7367 = vadd.f32 %v7210, %v7366
      %v7368 = vpop.f32.mrf.mxu0
      %v7369 = vpop.f32.mrf.mxu0
      %v7370 = vadd.f32 %v7210, %v7369
      %v7371 = vpop.f32.mrf.mxu0
      %7372 = vmatprep.mubr.bf16.mxu0 %v7150
      %7373 = vmatmul.mubr.bf16.gmra.mxu0 %v7149
      %v7374 = vpop.f32.mrf.mxu0
      %v7375 = vadd.f32 %v7210, %v7374
      %v7376 = vpop.f32.mrf.mxu0
      %v7377 = vpop.f32.mrf.mxu0
      %v7378 = vadd.f32 %v7210, %v7377
      %v7379 = vpop.f32.mrf.mxu0
      %7380 = vmatprep.mubr.bf16.mxu0 %v7152
      %7381 = vmatmul.mubr.bf16.gmra.mxu0 %v7151
      %v7382 = vpop.f32.mrf.mxu0
      %v7383 = vadd.f32 %v7210, %v7382
      %v7384 = vpop.f32.mrf.mxu0
      %v7385 = vpop.f32.mrf.mxu0
      %v7386 = vadd.f32 %v7210, %v7385
      %v7387 = vpop.f32.mrf.mxu0
      %7388 = vmatprep.mubr.bf16.mxu0 %v7154
      %7389 = vmatmul.mubr.bf16.gmra.mxu0 %v7153
      %v7390 = vpop.f32.mrf.mxu0
      %v7391 = vadd.f32 %v7210, %v7390
      %v7392 = vpop.f32.mrf.mxu0
      %v7393 = vpop.f32.mrf.mxu0
      %v7394 = vadd.f32 %v7210, %v7393
      %v7395 = vpop.f32.mrf.mxu0
      %7396 = vmatprep.mubr.bf16.mxu0 %v7156
      %7397 = vmatmul.mubr.bf16.gmra.mxu0 %v7155
      %v7398 = vpop.f32.mrf.mxu0
      %v7399 = vadd.f32 %v7210, %v7398
      %v7400 = vpop.f32.mrf.mxu0
      %v7401 = vpop.f32.mrf.mxu0
      %v7402 = vadd.f32 %v7210, %v7401
      %v7403 = vpop.f32.mrf.mxu0
      %7404 = vmatprep.mubr.bf16.mxu0 %v7158
      %7405 = vmatmul.mubr.bf16.gmra.mxu0 %v7157
      %v7406 = vpop.f32.mrf.mxu0
      %v7407 = vadd.f32 %v7210, %v7406
      %v7408 = vpop.f32.mrf.mxu0
      %v7409 = vpop.f32.mrf.mxu0
      %v7410 = vadd.f32 %v7210, %v7409
      %v7411 = vpop.f32.mrf.mxu0
      %7412 = vmatprep.mubr.bf16.mxu0 %v7160
      %7413 = vmatmul.mubr.bf16.gmra.mxu0 %v7159
      %v7414 = vpop.f32.mrf.mxu0
      %v7415 = vadd.f32 %v7210, %v7414
      %v7416 = vpop.f32.mrf.mxu0
      %v7417 = vpop.f32.mrf.mxu0
      %v7418 = vadd.f32 %v7210, %v7417
      %v7419 = vpop.f32.mrf.mxu0
      %7420 = vmatprep.mubr.bf16.mxu0 %v7162
      %7421 = vmatmul.mubr.bf16.gmra.mxu0 %v7161
      %v7422 = vpop.f32.mrf.mxu0
      %v7423 = vadd.f32 %v7210, %v7422
      %v7424 = vpop.f32.mrf.mxu0
      %v7425 = vpop.f32.mrf.mxu0
      %v7426 = vadd.f32 %v7210, %v7425
      %v7427 = vpop.f32.mrf.mxu0
      %7428 = vmatprep.mubr.bf16.mxu0 %v7164
      %7429 = vmatmul.mubr.bf16.gmra.mxu0 %v7163
      %v7430 = vpop.f32.mrf.mxu0
      %v7431 = vadd.f32 %v7210, %v7430
      %v7432 = vpop.f32.mrf.mxu0
      %v7433 = vpop.f32.mrf.mxu0
      %v7434 = vadd.f32 %v7210, %v7433
      %v7435 = vpop.f32.mrf.mxu0
      %7436 = vmatprep.mubr.bf16.mxu0 %v7166
      %7437 = vmatmul.mubr.bf16.gmra.mxu0 %v7165
      %v7438 = vpop.f32.mrf.mxu0
      %v7439 = vadd.f32 %v7210, %v7438
      %v7440 = vpop.f32.mrf.mxu0
      %v7441 = vpop.f32.mrf.mxu0
      %v7442 = vadd.f32 %v7210, %v7441
      %v7443 = vpop.f32.mrf.mxu0
      %7444 = vmatprep.mubr.bf16.mxu0 %v7168
      %7445 = vmatmul.mubr.bf16.gmra.mxu0 %v7167
      %v7446 = vpop.f32.mrf.mxu0
      %v7447 = vadd.f32 %v7210, %v7446
      %v7448 = vpop.f32.mrf.mxu0
      %v7449 = vpop.f32.mrf.mxu0
      %v7450 = vadd.f32 %v7210, %v7449
      %v7451 = vpop.f32.mrf.mxu0
      %7452 = vmatprep.mubr.bf16.mxu0 %v7170
      %7453 = vmatmul.mubr.bf16.gmra.mxu0 %v7169
      %v7454 = vpop.f32.mrf.mxu0
      %v7455 = vadd.f32 %v7210, %v7454
      %v7456 = vpop.f32.mrf.mxu0
      %v7457 = vpop.f32.mrf.mxu0
      %v7458 = vadd.f32 %v7210, %v7457
      %v7459 = vpop.f32.mrf.mxu0
      %7460 = vmatprep.mubr.bf16.mxu0 %v7172
      %7461 = vmatmul.mubr.bf16.gmra.mxu0 %v7171
      %v7462 = vpop.f32.mrf.mxu0
      %v7463 = vadd.f32 %v7210, %v7462
      %v7464 = vpop.f32.mrf.mxu0
      %v7465 = vpop.f32.mrf.mxu0
      %v7466 = vadd.f32 %v7210, %v7465
      %v7467 = vpop.f32.mrf.mxu0
      %7468 = vdwg.mxu0
      %7469 = vst [vmem:[%s322] sm:$0xff] %v7343
      %7470 = vst [vmem:[%s322 + $0x8] sm:$0xff] %v7346
      %7471 = vst [vmem:[%s322 + $0x10] sm:$0xff] %v7351
      %7472 = vst [vmem:[%s322 + $0x18] sm:$0xff] %v7354
      %7473 = vst [vmem:[%s322 + $0x20] sm:$0xff] %v7359
      %7474 = vst [vmem:[%s322 + $0x28] sm:$0xff] %v7362
      %7475 = vst [vmem:[%s322 + $0x30] sm:$0xff] %v7367
      %7476 = vst [vmem:[%s322 + $0x38] sm:$0xff] %v7370
      %7477 = vst [vmem:[%s322 + $0x40] sm:$0xff] %v7375
      %7478 = vst [vmem:[%s322 + $0x48] sm:$0xff] %v7378
      %7479 = vst [vmem:[%s322 + $0x50] sm:$0xff] %v7383
      %7480 = vst [vmem:[%s322 + $0x58] sm:$0xff] %v7386
      %7481 = vst [vmem:[%s322 + $0x60] sm:$0xff] %v7391
      %7482 = vst [vmem:[%s322 + $0x68] sm:$0xff] %v7394
      %7483 = vst [vmem:[%s322 + $0x70] sm:$0xff] %v7399
      %7484 = vst [vmem:[%s322 + $0x78] sm:$0xff] %v7402
      %7485 = vst [vmem:[%s322 + $0x80] sm:$0xff] %v7407
      %7486 = vst [vmem:[%s322 + $0x88] sm:$0xff] %v7410
      %7487 = vst [vmem:[%s322 + $0x90] sm:$0xff] %v7415
      %7488 = vst [vmem:[%s322 + $0x98] sm:$0xff] %v7418
      %7489 = vst [vmem:[%s322 + $0xa0] sm:$0xff] %v7423
      %7490 = vst [vmem:[%s322 + $0xa8] sm:$0xff] %v7426
      %7491 = vst [vmem:[%s322 + $0xb0] sm:$0xff] %v7431
      %7492 = vst [vmem:[%s322 + $0xb8] sm:$0xff] %v7434
      %7493 = vst [vmem:[%s322 + $0xc0] sm:$0xff] %v7439
      %7494 = vst [vmem:[%s322 + $0xc8] sm:$0xff] %v7442
      %7495 = vst [vmem:[%s322 + $0xd0] sm:$0xff] %v7447
      %7496 = vst [vmem:[%s322 + $0xd8] sm:$0xff] %v7450
      %7497 = vst [vmem:[%s322 + $0xe0] sm:$0xff] %v7455
      %7498 = vst [vmem:[%s322 + $0xe8] sm:$0xff] %v7458
      %7499 = vst [vmem:[%s322 + $0xf0] sm:$0xff] %v7463
      %7500 = vst [vmem:[%s322 + $0xf8] sm:$0xff] %v7466
      %s7501 = smul.u32 16, %s23
      %p7502 = scmp.lt.s32.totalorder %s22, 1
      %s7503 = scalar_select %p7502, %s22, 1
      %p7504 = scmp.lt.s32.totalorder %s7501, 15
      %s7505 = scalar_select %p7504, %s7501, 15
      %s7506 = smul.addr %s7505, 2
      %s7507 = smul.addr %s7503, 32
      %s7508 = sadd.s32 %s7506, %s7507
      %s7509 = smul.addr %s7508, 8
      %s7510 = scalar_lea.vmem %s7, %s7509
      // Predicated region
      $region49: #{decoder_forward.1} parent=47 // pred_check
        %p7511 = pneg %p207
      $region50: #{decoder_forward.1} parent=47 // pred_check_branch
        %7513 = sbr.rel (%p7511) target = $region52
      $region51: #{decoder_forward.1} parent=47 // pred_region
        %s7514 = smul.u32 16, %s23
      $region52: #{decoder_forward.1} parent=47 // pred_fallthru
        _
    $region48: #{decoder_forward.1} parent=5 // pred_fallthru
      _
    %p7515 = scmp.le.s32.totalorder 2, %s13
    // Predicated region
    $region53: #{decoder_forward.1} parent=5 // pred_check
      %p7516 = pneg %p7515
    $region54: #{decoder_forward.1} parent=5 // pred_check_branch
      %7518 = sbr.rel (%p7516) target = $region56
    $region55: #{decoder_forward.1} parent=5 // pred_region
      %s7519 = ssub.s32 %s13, 2
      // Predicated region
      $region57: #{decoder_forward.1} parent=55 // pred_check
        %p7520 = pneg %p213
      $region58: #{decoder_forward.1} parent=55 // pred_check_branch
        %7522 = sbr.rel (%p7520) target = $region60
      $region59: #{decoder_forward.1} parent=55 // pred_region
        %s7523 = smul.u32 16, %s25
        %p7524 = scmp.lt.s32.totalorder %s24, 1
        %s7525 = scalar_select %p7524, %s24, 1
        %p7526 = scmp.lt.s32.totalorder %s7523, 15
        %s7527 = scalar_select %p7526, %s7523, 15
        %s7528 = smul.addr %s7527, 2
        %s7529 = smul.addr %s7525, 32
        %s7530 = sadd.s32 %s7528, %s7529
        %s7531 = smul.addr %s7530, 8
        %s7532 = scalar_lea.vmem %s7, %s7531
      $region60: #{decoder_forward.1} parent=55 // pred_fallthru
        _
    $region56: #{decoder_forward.1} parent=5 // pred_fallthru
      _
  $region6: #{decoder_forward.1} parent=0 // loop_footer
    %s17 = sadd.s32 1, %s13
  $region7: #{decoder_forward.1} parent=0 // loop_footer_branch
    %12 = sbr.rel target = $region3
  $region8: #{decoder_forward.1} parent=0 // loop_exit
    _

</llo_original>
